<compile_context>
chip_gen: v5e
topology: v5e:2x2
jax: 0.10.0
libtpu: 0.0.40
codegen_flags: <defaults>
</compile_context>

<pallas_src>
from functools import partial

import jax
import jax.numpy as jnp
from jax.experimental import pallas as pl
from jax.experimental.pallas import tpu as pltpu


_INV_SQRT2 = 0.7071067811865476


def _erf(x):
    # Abramowitz & Stegun 7.1.26 rational approximation (max abs err ~1.5e-7).
    # Keeps erf-exact GELU semantics (torch.nn.GELU default) within the 1e-3
    # validation tolerance; exp already rides the EUP slot.
    p = 0.3275911
    a1, a2, a3, a4, a5 = (0.254829592, -0.284496736, 1.421413741,
                          -1.453152027, 1.061405429)
    sign = jnp.where(x >= 0.0, 1.0, -1.0)
    ax = jnp.abs(x)
    t = 1.0 / (1.0 + p * ax)
    poly = ((((a5 * t + a4) * t + a3) * t + a2) * t + a1) * t
    return sign * (1.0 - poly * jnp.exp(-ax * ax))


def _gelu(x):
    # exact (erf-based) GELU, matching torch.nn.GELU() default
    return 0.5 * x * (1.0 + _erf(x * _INV_SQRT2))


def _convnext_block_kernel(x_ref, cond_ref, masks_ref, wds_ref, bds_ref,
                           g1_ref, be1_ref, w1_ref, bc1_ref,
                           g2_ref, be2_ref, w2_ref, bc2_ref,
                           wres_ref, bres_ref, o_ref,
                           stack1_ref, stack2_ref,
                           *, H, W, dw_k, maxpad, eps):
    N = H * W
    x = x_ref[0].astype(jnp.float32)              # (C, N), tokens on lanes
    masks = masks_ref[...].astype(jnp.float32)    # (2*(2*maxpad+1), N) of {0,1}
    K = 2 * maxpad + 1

    def rmask(dy):                                # row-validity of vertical shift dy
        i = dy + maxpad
        return masks[i:i + 1, :]                  # (1, N)

    def cmask(dx):                                # col-validity of horizontal shift dx
        i = K + dx + maxpad
        return masks[i:i + 1, :]

    def roll_tokens(a, off):
        """result[:, p] = a[:, (p + off) mod N] -- XLU lane rotate, free vs VALU."""
        if off == 0:
            return a
        return pltpu.roll(a, shift=(-off) % N, axis=1)

    # --- depthwise 7x7 conv (groups=dim): VPU multiply-accumulate per tap ---
    # outer-dy / inner-dx: the dy roll + row mask is applied dw_k times, not dw_k^2.
    pad = dw_k // 2
    h = jnp.zeros_like(x)
    for ky in range(dw_k):
        dy = ky - pad
        xr = roll_tokens(x, dy * W)
        if dy != 0:
            xr = rmask(dy) * xr                   # zero rows that wrapped vertically
        for kx in range(dw_k):
            dx = kx - pad
            v = roll_tokens(xr, dx)
            if dx != 0:
                v = cmask(dx) * v                 # zero cols that wrapped horizontally
            h = h + wds_ref[ky * dw_k + kx] * v   # (C,1) per-channel tap weight
    # bias + time conditioning (Linear(GELU(t)) precomputed in the wrapper)
    h = h + bds_ref[...] + cond_ref[0]

    def groupnorm(a, gamma, beta):
        # single-pass statistics: var = E[x^2] - mean^2, f32 accumulators
        inv_n = 1.0 / (a.shape[0] * a.shape[1])
        s = jnp.sum(jnp.sum(a, axis=1, keepdims=True), axis=0, keepdims=True)
        s2 = jnp.sum(jnp.sum(a * a, axis=1, keepdims=True), axis=0, keepdims=True)
        mean = s * inv_n
        var = s2 * inv_n - mean * mean
        scale = jax.lax.rsqrt(var + eps) * gamma
        return (a - mean) * scale + beta

    def stack_shifted_3x3(a, stack_ref):
        """Write the 9 shifted/masked copies of `a` into stack_ref ((9*Ca, N))."""
        Ca = a.shape[0]
        for ky in range(3):
            dy = ky - 1
            ar = roll_tokens(a, dy * W)
            if dy != 0:
                ar = rmask(dy) * ar
            for kx in range(3):
                dx = kx - 1
                v = roll_tokens(ar, dx)
                if dx != 0:
                    v = cmask(dx) * v
                stack_ref[pl.ds((ky * 3 + kx) * Ca, Ca), :] = v

    # --- net: GN -> conv3x3 -> GELU -> GN -> conv3x3; each conv is ONE matmul ---
    h = groupnorm(h, g1_ref[...], be1_ref[...])
    stack_shifted_3x3(h, stack1_ref)
    h1 = jnp.dot(w1_ref[...], stack1_ref[...],
                 preferred_element_type=jnp.float32) + bc1_ref[...]
    h1 = _gelu(h1)
    h1 = groupnorm(h1, g2_ref[...], be2_ref[...])
    stack_shifted_3x3(h1, stack2_ref)
    h2 = jnp.dot(w2_ref[...], stack2_ref[...],
                 preferred_element_type=jnp.float32) + bc2_ref[...]

    # --- residual 1x1 conv (identity weights when dim == dim_out) ---
    res = jnp.dot(wres_ref[...], x, preferred_element_type=jnp.float32) + bres_ref[...]
    o_ref[0] = (h2 + res).astype(o_ref.dtype)


def convnext_block_forward(x, time_emb, params, *, eps=1e-5):
    """ConvNeXtBlock forward.  x: (B, dim, H, W) NCHW; time_emb: (B, T) or None."""
    B, C, H, W = x.shape
    N = H * W
    dw_k = params["w_ds"].shape[-1]
    Cm = params["w1"].shape[0]          # dim_out * mult
    Cout = params["w2"].shape[0]        # dim_out
    maxpad = max(dw_k // 2, 1)
    K = 2 * maxpad + 1

    # channel-major flatten -- free reshape, no HBM transpose round-trip
    x_flat = x.reshape(B, C, N)

    # time conditioning computed in plain JAX (tiny), passed as (B, C, 1)
    if time_emb is not None and "w_mlp" in params:
        cond = (jax.nn.gelu(time_emb, approximate=False) @ params["w_mlp"].T
                + params["b_mlp"])
        cond = cond.reshape(B, C, 1).astype(x.dtype)
    elif time_emb is not None:
        cond = time_emb.reshape(B, C, 1).astype(x.dtype)
    else:
        cond = jnp.zeros((B, C, 1), x.dtype)

    # precomputed {0,1} boundary-mask table: rows 0..K-1 = row-validity for
    # dy = -maxpad..maxpad; rows K..2K-1 = col-validity for dx = -maxpad..maxpad
    rows = jnp.repeat(jnp.arange(H, dtype=jnp.int32), W)[None, :]     # (1, N)
    cols = jnp.tile(jnp.arange(W, dtype=jnp.int32), H)[None, :]
    d = jnp.arange(-maxpad, maxpad + 1, dtype=jnp.int32)[:, None]     # (K, 1)
    row_valid = ((rows + d >= 0) & (rows + d < H)).astype(jnp.float32)
    col_valid = ((cols + d >= 0) & (cols + d < W)).astype(jnp.float32)
    masks = jnp.concatenate([row_valid, col_valid], axis=0)           # (2K, N)

    # depthwise taps: (C, 1, k, k) -> (k*k, C, 1)
    w_ds = jnp.transpose(params["w_ds"].reshape(C, dw_k * dw_k), (1, 0))[..., None]
    b_ds = params["b_ds"].reshape(C, 1)
    g1 = params["gn1_g"].reshape(C, 1)
    be1 = params["gn1_b"].reshape(C, 1)
    # 3x3 conv weights fused over taps: (O, I, 3, 3) -> (O, 9*I), matching the
    # (tap, channel) stacking order used in-kernel -> one stacked-K MXU matmul
    w1 = jnp.transpose(params["w1"], (0, 2, 3, 1)).reshape(Cm, 9 * C)
    b1 = params["b1"].reshape(Cm, 1)
    g2 = params["gn2_g"].reshape(Cm, 1)
    be2 = params["gn2_b"].reshape(Cm, 1)
    w2 = jnp.transpose(params["w2"], (0, 2, 3, 1)).reshape(Cout, 9 * Cm)
    b2 = params["b2"].reshape(Cout, 1)

    if "w_res" in params:               # dim != dim_out -> real 1x1 conv
        w_res = params["w_res"].reshape(Cout, C)
        b_res = params["b_res"].reshape(Cout, 1)
    else:                               # identity residual (only valid if dims match)
        assert C == Cout, "identity residual path requires dim == dim_out"
        w_res = jnp.eye(C, dtype=x.dtype)
        b_res = jnp.zeros((C, 1), x.dtype)

    kernel = partial(_convnext_block_kernel, H=H, W=W, dw_k=dw_k,
                     maxpad=maxpad, eps=eps)
    const2 = lambda *_: (0, 0)
    const3 = lambda *_: (0, 0, 0)

    out_flat = pl.pallas_call(
        kernel,
        out_shape=jax.ShapeDtypeStruct((B, Cout, N), x.dtype),
        grid_spec=pltpu.PrefetchScalarGridSpec(
            num_scalar_prefetch=0,
            grid=(B,),
            in_specs=[
                pl.BlockSpec((1, C, N), lambda b: (b, 0, 0)),      # x
                pl.BlockSpec((1, C, 1), lambda b: (b, 0, 0)),      # time cond vector
                pl.BlockSpec((2 * K, N), const2),                  # boundary masks
                pl.BlockSpec((dw_k * dw_k, C, 1), const3),         # depthwise taps
                pl.BlockSpec((C, 1), const2),                      # b_ds
                pl.BlockSpec((C, 1), const2),                      # gn1 gamma
                pl.BlockSpec((C, 1), const2),                      # gn1 beta
                pl.BlockSpec((Cm, 9 * C), const2),                 # w1 (taps fused)
                pl.BlockSpec((Cm, 1), const2),                     # b1
                pl.BlockSpec((Cm, 1), const2),                     # gn2 gamma
                pl.BlockSpec((Cm, 1), const2),                     # gn2 beta
                pl.BlockSpec((Cout, 9 * Cm), const2),              # w2 (taps fused)
                pl.BlockSpec((Cout, 1), const2),                   # b2
                pl.BlockSpec((Cout, C), const2),                   # w_res
                pl.BlockSpec((Cout, 1), const2),                   # b_res
            ],
            out_specs=pl.BlockSpec((1, Cout, N), lambda b: (b, 0, 0)),
            scratch_shapes=[
                pltpu.VMEM((9 * C, N), jnp.float32),    # stacked shifted h
                pltpu.VMEM((9 * Cm, N), jnp.float32),   # stacked shifted h1
            ],
        ),
        compiler_params=pltpu.CompilerParams(
            dimension_semantics=("parallel",),
            vmem_limit_bytes=32 * 1024 * 1024),
    )(x_flat, cond, masks, w_ds, b_ds, g1, be1,
      w1, b1, g2, be2, w2, b2, w_res, b_res)

    return out_flat.reshape(B, Cout, H, W)


def convnext_block_reference(x, time_emb, params, *, eps=1e-5):
    """Pure-JAX reference matching the PyTorch ConvNeXtBlock.forward exactly."""
    C = x.shape[1]
    dimnums = ("NCHW", "OIHW", "NCHW")

    def conv(a, w, padding, groups=1):
        return jax.lax.conv_general_dilated(
            a, w, window_strides=(1, 1), padding=padding,
            dimension_numbers=dimnums, feature_group_count=groups)

    kd = params["w_ds"].shape[-1]
    pd = kd // 2
    h = conv(x, params["w_ds"], ((pd, pd), (pd, pd)), groups=C)
    h = h + params["b_ds"][None, :, None, None]

    if time_emb is not None:
        cond = (jax.nn.gelu(time_emb, approximate=False) @ params["w_mlp"].T
                + params["b_mlp"])
        h = h + cond[:, :, None, None]

    def gn(a, g, b):
        m = a.mean(axis=(1, 2, 3), keepdims=True)
        v = a.var(axis=(1, 2, 3), keepdims=True)
        return ((a - m) / jnp.sqrt(v + eps) * g[None, :, None, None]
                + b[None, :, None, None])

    h = gn(h, params["gn1_g"], params["gn1_b"])
    h = conv(h, params["w1"], ((1, 1), (1, 1))) + params["b1"][None, :, None, None]
    h = jax.nn.gelu(h, approximate=False)
    h = gn(h, params["gn2_g"], params["gn2_b"])
    h = conv(h, params["w2"], ((1, 1), (1, 1))) + params["b2"][None, :, None, None]

    if "w_res" in params:
        res = conv(x, params["w_res"], ((0, 0), (0, 0)))
        res = res + params["b_res"][None, :, None, None]
    else:
        res = x
    return h + res


if __name__ == "__main__":
    B, DIM, DIM_OUT, MULT = 2, 16, 32, 2
    H = W = 16
    TIME_DIM = 32
    CM = DIM_OUT * MULT

    key = jax.random.PRNGKey(0)
    ks = jax.random.split(key, 16)

    x = jax.random.normal(ks[0], (B, DIM, H, W), dtype=jnp.float32)
    t_emb = jax.random.normal(ks[1], (B, TIME_DIM), dtype=jnp.float32)

    params = {
        "w_ds": jax.random.normal(ks[2], (DIM, 1, 7, 7), jnp.float32) * 0.1,
        "b_ds": jax.random.normal(ks[3], (DIM,), jnp.float32) * 0.1,
        "w_mlp": jax.random.normal(ks[4], (DIM, TIME_DIM), jnp.float32) * 0.1,
        "b_mlp": jax.random.normal(ks[5], (DIM,), jnp.float32) * 0.1,
        "gn1_g": 1.0 + 0.1 * jax.random.normal(ks[6], (DIM,), jnp.float32),
        "gn1_b": 0.1 * jax.random.normal(ks[7], (DIM,), jnp.float32),
        "w1": jax.random.normal(ks[8], (CM, DIM, 3, 3), jnp.float32) * 0.1,
        "b1": jax.random.normal(ks[9], (CM,), jnp.float32) * 0.1,
        "gn2_g": 1.0 + 0.1 * jax.random.normal(ks[10], (CM,), jnp.float32),
        "gn2_b": 0.1 * jax.random.normal(ks[11], (CM,), jnp.float32),
        "w2": jax.random.normal(ks[12], (DIM_OUT, CM, 3, 3), jnp.float32) * 0.1,
        "b2": jax.random.normal(ks[13], (DIM_OUT,), jnp.float32) * 0.1,
        "w_res": jax.random.normal(ks[14], (DIM_OUT, DIM, 1, 1), jnp.float32) * 0.1,
        "b_res": jax.random.normal(ks[15], (DIM_OUT,), jnp.float32) * 0.1,
    }

    y = convnext_block_forward(x, t_emb, params)
    y = jax.block_until_ready(y)

    y_ref = convnext_block_reference(x, t_emb, params)
    assert y.shape == (B, DIM_OUT, H, W)
    assert jnp.allclose(y, y_ref, atol=1e-3, rtol=1e-3), \
        float(jnp.max(jnp.abs(y - y_ref)))

    print("KERNEL_OK")
</pallas_src>

<mosaic_0001>
module attributes {stable_mosaic.version = 11 : i64} {
  func.func @_convnext_block_kernel(%arg0: i32, %arg1: memref<1x16x256xf32, #tpu.memory_space<vmem>>, %arg2: memref<1x16x1xf32, #tpu.memory_space<vmem>>, %arg3: memref<14x256xf32, #tpu.memory_space<vmem>>, %arg4: memref<49x16x1xf32, #tpu.memory_space<vmem>>, %arg5: memref<16x1xf32, #tpu.memory_space<vmem>>, %arg6: memref<16x1xf32, #tpu.memory_space<vmem>>, %arg7: memref<16x1xf32, #tpu.memory_space<vmem>>, %arg8: memref<64x144xf32, #tpu.memory_space<vmem>>, %arg9: memref<64x1xf32, #tpu.memory_space<vmem>>, %arg10: memref<64x1xf32, #tpu.memory_space<vmem>>, %arg11: memref<64x1xf32, #tpu.memory_space<vmem>>, %arg12: memref<32x576xf32, #tpu.memory_space<vmem>>, %arg13: memref<32x1xf32, #tpu.memory_space<vmem>>, %arg14: memref<32x16xf32, #tpu.memory_space<vmem>>, %arg15: memref<32x1xf32, #tpu.memory_space<vmem>>, %arg16: memref<1x32x256xf32, #tpu.memory_space<vmem>>, %arg17: memref<144x256xf32, #tpu.memory_space<vmem>>, %arg18: memref<576x256xf32, #tpu.memory_space<vmem>>) attributes {dimension_semantics = [#tpu.dimension_semantics<parallel>], iteration_bounds = array<i64: 2>, scalar_prefetch = 0 : i64, scratch_operands = 2 : i64, tpu.core_type = #tpu.core_type<tc>, window_params = [{transform_indices = @transform_0, window_bounds = array<i64: 1, 16, 256>}, {transform_indices = @transform_1, window_bounds = array<i64: 1, 16, 1>}, {pipeline_mode = #tpu.pipeline_mode<synchronous>, transform_indices = @transform_2, window_bounds = array<i64: 14, 256>}, {pipeline_mode = #tpu.pipeline_mode<synchronous>, transform_indices = @transform_3, window_bounds = array<i64: 49, 16, 1>}, {pipeline_mode = #tpu.pipeline_mode<synchronous>, transform_indices = @transform_4, window_bounds = array<i64: 16, 1>}, {pipeline_mode = #tpu.pipeline_mode<synchronous>, transform_indices = @transform_5, window_bounds = array<i64: 16, 1>}, {pipeline_mode = #tpu.pipeline_mode<synchronous>, transform_indices = @transform_6, window_bounds = array<i64: 16, 1>}, {pipeline_mode = #tpu.pipeline_mode<synchronous>, transform_indices = @transform_7, window_bounds = array<i64: 64, 144>}, {pipeline_mode = #tpu.pipeline_mode<synchronous>, transform_indices = @transform_8, window_bounds = array<i64: 64, 1>}, {pipeline_mode = #tpu.pipeline_mode<synchronous>, transform_indices = @transform_9, window_bounds = array<i64: 64, 1>}, {pipeline_mode = #tpu.pipeline_mode<synchronous>, transform_indices = @transform_10, window_bounds = array<i64: 64, 1>}, {pipeline_mode = #tpu.pipeline_mode<synchronous>, transform_indices = @transform_11, window_bounds = array<i64: 32, 576>}, {pipeline_mode = #tpu.pipeline_mode<synchronous>, transform_indices = @transform_12, window_bounds = array<i64: 32, 1>}, {pipeline_mode = #tpu.pipeline_mode<synchronous>, transform_indices = @transform_13, window_bounds = array<i64: 32, 16>}, {pipeline_mode = #tpu.pipeline_mode<synchronous>, transform_indices = @transform_14, window_bounds = array<i64: 32, 1>}, {transform_indices = @transform_15, window_bounds = array<i64: 1, 32, 256>}]} {
    %c0 = arith.constant 0 : index
    %c0_0 = arith.constant 0 : index
    %c0_1 = arith.constant 0 : index
    %0 = vector.load %arg1[%c0, %c0_0, %c0_1] : memref<1x16x256xf32, #tpu.memory_space<vmem>>, vector<1x16x256xf32>
    %1 = vector.shape_cast %0 : vector<1x16x256xf32> to vector<16x256xf32>
    %c0_2 = arith.constant 0 : index
    %c0_3 = arith.constant 0 : index
    %2 = vector.load %arg3[%c0_2, %c0_3] : memref<14x256xf32, #tpu.memory_space<vmem>>, vector<14x256xf32>
    %cst = arith.constant 0.000000e+00 : f32
    %3 = vector.broadcast %cst : f32 to vector<16x256xf32>
    %c48_i32 = arith.constant 48 : i32
    %4 = tpu.dynamic_rotate %1 by %c48_i32 dim 1 : vector<16x256xf32>, i32 -> vector<16x256xf32>
    %5 = vector.extract_strided_slice %2 {offsets = [0, 0], sizes = [1, 256], strides = [1, 1]} : vector<14x256xf32> to vector<1x256xf32>
    %6 = vector.broadcast %5 : vector<1x256xf32> to vector<16x256xf32>
    %7 = arith.mulf %6, %4 : vector<16x256xf32>
    %c3_i32 = arith.constant 3 : i32
    %8 = tpu.dynamic_rotate %7 by %c3_i32 dim 1 : vector<16x256xf32>, i32 -> vector<16x256xf32>
    %9 = vector.extract_strided_slice %2 {offsets = [7, 0], sizes = [1, 256], strides = [1, 1]} : vector<14x256xf32> to vector<1x256xf32>
    %10 = vector.broadcast %9 : vector<1x256xf32> to vector<16x256xf32>
    %11 = arith.mulf %10, %8 : vector<16x256xf32>
    %c0_4 = arith.constant 0 : index
    %c0_5 = arith.constant 0 : index
    %c0_6 = arith.constant 0 : index
    %12 = vector.load %arg4[%c0_4, %c0_5, %c0_6] : memref<49x16x1xf32, #tpu.memory_space<vmem>>, vector<1x16x1xf32>
    %13 = vector.shape_cast %12 : vector<1x16x1xf32> to vector<16x1xf32>
    %14 = vector.broadcast %13 : vector<16x1xf32> to vector<16x256xf32>
    %15 = arith.mulf %14, %11 : vector<16x256xf32>
    %16 = arith.addf %3, %15 : vector<16x256xf32>
    %c2_i32 = arith.constant 2 : i32
    %17 = tpu.dynamic_rotate %7 by %c2_i32 dim 1 : vector<16x256xf32>, i32 -> vector<16x256xf32>
    %18 = vector.extract_strided_slice %2 {offsets = [8, 0], sizes = [1, 256], strides = [1, 1]} : vector<14x256xf32> to vector<1x256xf32>
    %19 = vector.broadcast %18 : vector<1x256xf32> to vector<16x256xf32>
    %20 = arith.mulf %19, %17 : vector<16x256xf32>
    %c1 = arith.constant 1 : index
    %c0_7 = arith.constant 0 : index
    %c0_8 = arith.constant 0 : index
    %21 = vector.load %arg4[%c1, %c0_7, %c0_8] : memref<49x16x1xf32, #tpu.memory_space<vmem>>, vector<1x16x1xf32>
    %22 = vector.shape_cast %21 : vector<1x16x1xf32> to vector<16x1xf32>
    %23 = vector.broadcast %22 : vector<16x1xf32> to vector<16x256xf32>
    %24 = arith.mulf %23, %20 : vector<16x256xf32>
    %25 = arith.addf %16, %24 : vector<16x256xf32>
    %c1_i32 = arith.constant 1 : i32
    %26 = tpu.dynamic_rotate %7 by %c1_i32 dim 1 : vector<16x256xf32>, i32 -> vector<16x256xf32>
    %27 = vector.extract_strided_slice %2 {offsets = [9, 0], sizes = [1, 256], strides = [1, 1]} : vector<14x256xf32> to vector<1x256xf32>
    %28 = vector.broadcast %27 : vector<1x256xf32> to vector<16x256xf32>
    %29 = arith.mulf %28, %26 : vector<16x256xf32>
    %c2 = arith.constant 2 : index
    %c0_9 = arith.constant 0 : index
    %c0_10 = arith.constant 0 : index
    %30 = vector.load %arg4[%c2, %c0_9, %c0_10] : memref<49x16x1xf32, #tpu.memory_space<vmem>>, vector<1x16x1xf32>
    %31 = vector.shape_cast %30 : vector<1x16x1xf32> to vector<16x1xf32>
    %32 = vector.broadcast %31 : vector<16x1xf32> to vector<16x256xf32>
    %33 = arith.mulf %32, %29 : vector<16x256xf32>
    %34 = arith.addf %25, %33 : vector<16x256xf32>
    %c3 = arith.constant 3 : index
    %c0_11 = arith.constant 0 : index
    %c0_12 = arith.constant 0 : index
    %35 = vector.load %arg4[%c3, %c0_11, %c0_12] : memref<49x16x1xf32, #tpu.memory_space<vmem>>, vector<1x16x1xf32>
    %36 = vector.shape_cast %35 : vector<1x16x1xf32> to vector<16x1xf32>
    %37 = vector.broadcast %36 : vector<16x1xf32> to vector<16x256xf32>
    %38 = arith.mulf %37, %7 : vector<16x256xf32>
    %39 = arith.addf %34, %38 : vector<16x256xf32>
    %c255_i32 = arith.constant 255 : i32
    %40 = tpu.dynamic_rotate %7 by %c255_i32 dim 1 : vector<16x256xf32>, i32 -> vector<16x256xf32>
    %41 = vector.extract_strided_slice %2 {offsets = [11, 0], sizes = [1, 256], strides = [1, 1]} : vector<14x256xf32> to vector<1x256xf32>
    %42 = vector.broadcast %41 : vector<1x256xf32> to vector<16x256xf32>
    %43 = arith.mulf %42, %40 : vector<16x256xf32>
    %c4 = arith.constant 4 : index
    %c0_13 = arith.constant 0 : index
    %c0_14 = arith.constant 0 : index
    %44 = vector.load %arg4[%c4, %c0_13, %c0_14] : memref<49x16x1xf32, #tpu.memory_space<vmem>>, vector<1x16x1xf32>
    %45 = vector.shape_cast %44 : vector<1x16x1xf32> to vector<16x1xf32>
    %46 = vector.broadcast %45 : vector<16x1xf32> to vector<16x256xf32>
    %47 = arith.mulf %46, %43 : vector<16x256xf32>
    %48 = arith.addf %39, %47 : vector<16x256xf32>
    %c254_i32 = arith.constant 254 : i32
    %49 = tpu.dynamic_rotate %7 by %c254_i32 dim 1 : vector<16x256xf32>, i32 -> vector<16x256xf32>
    %50 = vector.extract_strided_slice %2 {offsets = [12, 0], sizes = [1, 256], strides = [1, 1]} : vector<14x256xf32> to vector<1x256xf32>
    %51 = vector.broadcast %50 : vector<1x256xf32> to vector<16x256xf32>
    %52 = arith.mulf %51, %49 : vector<16x256xf32>
    %c5 = arith.constant 5 : index
    %c0_15 = arith.constant 0 : index
    %c0_16 = arith.constant 0 : index
    %53 = vector.load %arg4[%c5, %c0_15, %c0_16] : memref<49x16x1xf32, #tpu.memory_space<vmem>>, vector<1x16x1xf32>
    %54 = vector.shape_cast %53 : vector<1x16x1xf32> to vector<16x1xf32>
    %55 = vector.broadcast %54 : vector<16x1xf32> to vector<16x256xf32>
    %56 = arith.mulf %55, %52 : vector<16x256xf32>
    %57 = arith.addf %48, %56 : vector<16x256xf32>
    %c253_i32 = arith.constant 253 : i32
    %58 = tpu.dynamic_rotate %7 by %c253_i32 dim 1 : vector<16x256xf32>, i32 -> vector<16x256xf32>
    %59 = vector.extract_strided_slice %2 {offsets = [13, 0], sizes = [1, 256], strides = [1, 1]} : vector<14x256xf32> to vector<1x256xf32>
    %60 = vector.broadcast %59 : vector<1x256xf32> to vector<16x256xf32>
    %61 = arith.mulf %60, %58 : vector<16x256xf32>
    %c6 = arith.constant 6 : index
    %c0_17 = arith.constant 0 : index
    %c0_18 = arith.constant 0 : index
    %62 = vector.load %arg4[%c6, %c0_17, %c0_18] : memref<49x16x1xf32, #tpu.memory_space<vmem>>, vector<1x16x1xf32>
    %63 = vector.shape_cast %62 : vector<1x16x1xf32> to vector<16x1xf32>
    %64 = vector.broadcast %63 : vector<16x1xf32> to vector<16x256xf32>
    %65 = arith.mulf %64, %61 : vector<16x256xf32>
    %66 = arith.addf %57, %65 : vector<16x256xf32>
    %c32_i32 = arith.constant 32 : i32
    %67 = tpu.dynamic_rotate %1 by %c32_i32 dim 1 : vector<16x256xf32>, i32 -> vector<16x256xf32>
    %68 = vector.extract_strided_slice %2 {offsets = [1, 0], sizes = [1, 256], strides = [1, 1]} : vector<14x256xf32> to vector<1x256xf32>
    %69 = vector.broadcast %68 : vector<1x256xf32> to vector<16x256xf32>
    %70 = arith.mulf %69, %67 : vector<16x256xf32>
    %c3_i32_19 = arith.constant 3 : i32
    %71 = tpu.dynamic_rotate %70 by %c3_i32_19 dim 1 : vector<16x256xf32>, i32 -> vector<16x256xf32>
    %72 = vector.extract_strided_slice %2 {offsets = [7, 0], sizes = [1, 256], strides = [1, 1]} : vector<14x256xf32> to vector<1x256xf32>
    %73 = vector.broadcast %72 : vector<1x256xf32> to vector<16x256xf32>
    %74 = arith.mulf %73, %71 : vector<16x256xf32>
    %c7 = arith.constant 7 : index
    %c0_20 = arith.constant 0 : index
    %c0_21 = arith.constant 0 : index
    %75 = vector.load %arg4[%c7, %c0_20, %c0_21] : memref<49x16x1xf32, #tpu.memory_space<vmem>>, vector<1x16x1xf32>
    %76 = vector.shape_cast %75 : vector<1x16x1xf32> to vector<16x1xf32>
    %77 = vector.broadcast %76 : vector<16x1xf32> to vector<16x256xf32>
    %78 = arith.mulf %77, %74 : vector<16x256xf32>
    %79 = arith.addf %66, %78 : vector<16x256xf32>
    %c2_i32_22 = arith.constant 2 : i32
    %80 = tpu.dynamic_rotate %70 by %c2_i32_22 dim 1 : vector<16x256xf32>, i32 -> vector<16x256xf32>
    %81 = vector.extract_strided_slice %2 {offsets = [8, 0], sizes = [1, 256], strides = [1, 1]} : vector<14x256xf32> to vector<1x256xf32>
    %82 = vector.broadcast %81 : vector<1x256xf32> to vector<16x256xf32>
    %83 = arith.mulf %82, %80 : vector<16x256xf32>
    %c8 = arith.constant 8 : index
    %c0_23 = arith.constant 0 : index
    %c0_24 = arith.constant 0 : index
    %84 = vector.load %arg4[%c8, %c0_23, %c0_24] : memref<49x16x1xf32, #tpu.memory_space<vmem>>, vector<1x16x1xf32>
    %85 = vector.shape_cast %84 : vector<1x16x1xf32> to vector<16x1xf32>
    %86 = vector.broadcast %85 : vector<16x1xf32> to vector<16x256xf32>
    %87 = arith.mulf %86, %83 : vector<16x256xf32>
    %88 = arith.addf %79, %87 : vector<16x256xf32>
    %c1_i32_25 = arith.constant 1 : i32
    %89 = tpu.dynamic_rotate %70 by %c1_i32_25 dim 1 : vector<16x256xf32>, i32 -> vector<16x256xf32>
    %90 = vector.extract_strided_slice %2 {offsets = [9, 0], sizes = [1, 256], strides = [1, 1]} : vector<14x256xf32> to vector<1x256xf32>
    %91 = vector.broadcast %90 : vector<1x256xf32> to vector<16x256xf32>
    %92 = arith.mulf %91, %89 : vector<16x256xf32>
    %c9 = arith.constant 9 : index
    %c0_26 = arith.constant 0 : index
    %c0_27 = arith.constant 0 : index
    %93 = vector.load %arg4[%c9, %c0_26, %c0_27] : memref<49x16x1xf32, #tpu.memory_space<vmem>>, vector<1x16x1xf32>
    %94 = vector.shape_cast %93 : vector<1x16x1xf32> to vector<16x1xf32>
    %95 = vector.broadcast %94 : vector<16x1xf32> to vector<16x256xf32>
    %96 = arith.mulf %95, %92 : vector<16x256xf32>
    %97 = arith.addf %88, %96 : vector<16x256xf32>
    %c10 = arith.constant 10 : index
    %c0_28 = arith.constant 0 : index
    %c0_29 = arith.constant 0 : index
    %98 = vector.load %arg4[%c10, %c0_28, %c0_29] : memref<49x16x1xf32, #tpu.memory_space<vmem>>, vector<1x16x1xf32>
    %99 = vector.shape_cast %98 : vector<1x16x1xf32> to vector<16x1xf32>
    %100 = vector.broadcast %99 : vector<16x1xf32> to vector<16x256xf32>
    %101 = arith.mulf %100, %70 : vector<16x256xf32>
    %102 = arith.addf %97, %101 : vector<16x256xf32>
    %c255_i32_30 = arith.constant 255 : i32
    %103 = tpu.dynamic_rotate %70 by %c255_i32_30 dim 1 : vector<16x256xf32>, i32 -> vector<16x256xf32>
    %104 = vector.extract_strided_slice %2 {offsets = [11, 0], sizes = [1, 256], strides = [1, 1]} : vector<14x256xf32> to vector<1x256xf32>
    %105 = vector.broadcast %104 : vector<1x256xf32> to vector<16x256xf32>
    %106 = arith.mulf %105, %103 : vector<16x256xf32>
    %c11 = arith.constant 11 : index
    %c0_31 = arith.constant 0 : index
    %c0_32 = arith.constant 0 : index
    %107 = vector.load %arg4[%c11, %c0_31, %c0_32] : memref<49x16x1xf32, #tpu.memory_space<vmem>>, vector<1x16x1xf32>
    %108 = vector.shape_cast %107 : vector<1x16x1xf32> to vector<16x1xf32>
    %109 = vector.broadcast %108 : vector<16x1xf32> to vector<16x256xf32>
    %110 = arith.mulf %109, %106 : vector<16x256xf32>
    %111 = arith.addf %102, %110 : vector<16x256xf32>
    %c254_i32_33 = arith.constant 254 : i32
    %112 = tpu.dynamic_rotate %70 by %c254_i32_33 dim 1 : vector<16x256xf32>, i32 -> vector<16x256xf32>
    %113 = vector.extract_strided_slice %2 {offsets = [12, 0], sizes = [1, 256], strides = [1, 1]} : vector<14x256xf32> to vector<1x256xf32>
    %114 = vector.broadcast %113 : vector<1x256xf32> to vector<16x256xf32>
    %115 = arith.mulf %114, %112 : vector<16x256xf32>
    %c12 = arith.constant 12 : index
    %c0_34 = arith.constant 0 : index
    %c0_35 = arith.constant 0 : index
    %116 = vector.load %arg4[%c12, %c0_34, %c0_35] : memref<49x16x1xf32, #tpu.memory_space<vmem>>, vector<1x16x1xf32>
    %117 = vector.shape_cast %116 : vector<1x16x1xf32> to vector<16x1xf32>
    %118 = vector.broadcast %117 : vector<16x1xf32> to vector<16x256xf32>
    %119 = arith.mulf %118, %115 : vector<16x256xf32>
    %120 = arith.addf %111, %119 : vector<16x256xf32>
    %c253_i32_36 = arith.constant 253 : i32
    %121 = tpu.dynamic_rotate %70 by %c253_i32_36 dim 1 : vector<16x256xf32>, i32 -> vector<16x256xf32>
    %122 = vector.extract_strided_slice %2 {offsets = [13, 0], sizes = [1, 256], strides = [1, 1]} : vector<14x256xf32> to vector<1x256xf32>
    %123 = vector.broadcast %122 : vector<1x256xf32> to vector<16x256xf32>
    %124 = arith.mulf %123, %121 : vector<16x256xf32>
    %c13 = arith.constant 13 : index
    %c0_37 = arith.constant 0 : index
    %c0_38 = arith.constant 0 : index
    %125 = vector.load %arg4[%c13, %c0_37, %c0_38] : memref<49x16x1xf32, #tpu.memory_space<vmem>>, vector<1x16x1xf32>
    %126 = vector.shape_cast %125 : vector<1x16x1xf32> to vector<16x1xf32>
    %127 = vector.broadcast %126 : vector<16x1xf32> to vector<16x256xf32>
    %128 = arith.mulf %127, %124 : vector<16x256xf32>
    %129 = arith.addf %120, %128 : vector<16x256xf32>
    %c16_i32 = arith.constant 16 : i32
    %130 = tpu.dynamic_rotate %1 by %c16_i32 dim 1 : vector<16x256xf32>, i32 -> vector<16x256xf32>
    %131 = vector.extract_strided_slice %2 {offsets = [2, 0], sizes = [1, 256], strides = [1, 1]} : vector<14x256xf32> to vector<1x256xf32>
    %132 = vector.broadcast %131 : vector<1x256xf32> to vector<16x256xf32>
    %133 = arith.mulf %132, %130 : vector<16x256xf32>
    %c3_i32_39 = arith.constant 3 : i32
    %134 = tpu.dynamic_rotate %133 by %c3_i32_39 dim 1 : vector<16x256xf32>, i32 -> vector<16x256xf32>
    %135 = vector.extract_strided_slice %2 {offsets = [7, 0], sizes = [1, 256], strides = [1, 1]} : vector<14x256xf32> to vector<1x256xf32>
    %136 = vector.broadcast %135 : vector<1x256xf32> to vector<16x256xf32>
    %137 = arith.mulf %136, %134 : vector<16x256xf32>
    %c14 = arith.constant 14 : index
    %c0_40 = arith.constant 0 : index
    %c0_41 = arith.constant 0 : index
    %138 = vector.load %arg4[%c14, %c0_40, %c0_41] : memref<49x16x1xf32, #tpu.memory_space<vmem>>, vector<1x16x1xf32>
    %139 = vector.shape_cast %138 : vector<1x16x1xf32> to vector<16x1xf32>
    %140 = vector.broadcast %139 : vector<16x1xf32> to vector<16x256xf32>
    %141 = arith.mulf %140, %137 : vector<16x256xf32>
    %142 = arith.addf %129, %141 : vector<16x256xf32>
    %c2_i32_42 = arith.constant 2 : i32
    %143 = tpu.dynamic_rotate %133 by %c2_i32_42 dim 1 : vector<16x256xf32>, i32 -> vector<16x256xf32>
    %144 = vector.extract_strided_slice %2 {offsets = [8, 0], sizes = [1, 256], strides = [1, 1]} : vector<14x256xf32> to vector<1x256xf32>
    %145 = vector.broadcast %144 : vector<1x256xf32> to vector<16x256xf32>
    %146 = arith.mulf %145, %143 : vector<16x256xf32>
    %c15 = arith.constant 15 : index
    %c0_43 = arith.constant 0 : index
    %c0_44 = arith.constant 0 : index
    %147 = vector.load %arg4[%c15, %c0_43, %c0_44] : memref<49x16x1xf32, #tpu.memory_space<vmem>>, vector<1x16x1xf32>
    %148 = vector.shape_cast %147 : vector<1x16x1xf32> to vector<16x1xf32>
    %149 = vector.broadcast %148 : vector<16x1xf32> to vector<16x256xf32>
    %150 = arith.mulf %149, %146 : vector<16x256xf32>
    %151 = arith.addf %142, %150 : vector<16x256xf32>
    %c1_i32_45 = arith.constant 1 : i32
    %152 = tpu.dynamic_rotate %133 by %c1_i32_45 dim 1 : vector<16x256xf32>, i32 -> vector<16x256xf32>
    %153 = vector.extract_strided_slice %2 {offsets = [9, 0], sizes = [1, 256], strides = [1, 1]} : vector<14x256xf32> to vector<1x256xf32>
    %154 = vector.broadcast %153 : vector<1x256xf32> to vector<16x256xf32>
    %155 = arith.mulf %154, %152 : vector<16x256xf32>
    %c16 = arith.constant 16 : index
    %c0_46 = arith.constant 0 : index
    %c0_47 = arith.constant 0 : index
    %156 = vector.load %arg4[%c16, %c0_46, %c0_47] : memref<49x16x1xf32, #tpu.memory_space<vmem>>, vector<1x16x1xf32>
    %157 = vector.shape_cast %156 : vector<1x16x1xf32> to vector<16x1xf32>
    %158 = vector.broadcast %157 : vector<16x1xf32> to vector<16x256xf32>
    %159 = arith.mulf %158, %155 : vector<16x256xf32>
    %160 = arith.addf %151, %159 : vector<16x256xf32>
    %c17 = arith.constant 17 : index
    %c0_48 = arith.constant 0 : index
    %c0_49 = arith.constant 0 : index
    %161 = vector.load %arg4[%c17, %c0_48, %c0_49] : memref<49x16x1xf32, #tpu.memory_space<vmem>>, vector<1x16x1xf32>
    %162 = vector.shape_cast %161 : vector<1x16x1xf32> to vector<16x1xf32>
    %163 = vector.broadcast %162 : vector<16x1xf32> to vector<16x256xf32>
    %164 = arith.mulf %163, %133 : vector<16x256xf32>
    %165 = arith.addf %160, %164 : vector<16x256xf32>
    %c255_i32_50 = arith.constant 255 : i32
    %166 = tpu.dynamic_rotate %133 by %c255_i32_50 dim 1 : vector<16x256xf32>, i32 -> vector<16x256xf32>
    %167 = vector.extract_strided_slice %2 {offsets = [11, 0], sizes = [1, 256], strides = [1, 1]} : vector<14x256xf32> to vector<1x256xf32>
    %168 = vector.broadcast %167 : vector<1x256xf32> to vector<16x256xf32>
    %169 = arith.mulf %168, %166 : vector<16x256xf32>
    %c18 = arith.constant 18 : index
    %c0_51 = arith.constant 0 : index
    %c0_52 = arith.constant 0 : index
    %170 = vector.load %arg4[%c18, %c0_51, %c0_52] : memref<49x16x1xf32, #tpu.memory_space<vmem>>, vector<1x16x1xf32>
    %171 = vector.shape_cast %170 : vector<1x16x1xf32> to vector<16x1xf32>
    %172 = vector.broadcast %171 : vector<16x1xf32> to vector<16x256xf32>
    %173 = arith.mulf %172, %169 : vector<16x256xf32>
    %174 = arith.addf %165, %173 : vector<16x256xf32>
    %c254_i32_53 = arith.constant 254 : i32
    %175 = tpu.dynamic_rotate %133 by %c254_i32_53 dim 1 : vector<16x256xf32>, i32 -> vector<16x256xf32>
    %176 = vector.extract_strided_slice %2 {offsets = [12, 0], sizes = [1, 256], strides = [1, 1]} : vector<14x256xf32> to vector<1x256xf32>
    %177 = vector.broadcast %176 : vector<1x256xf32> to vector<16x256xf32>
    %178 = arith.mulf %177, %175 : vector<16x256xf32>
    %c19 = arith.constant 19 : index
    %c0_54 = arith.constant 0 : index
    %c0_55 = arith.constant 0 : index
    %179 = vector.load %arg4[%c19, %c0_54, %c0_55] : memref<49x16x1xf32, #tpu.memory_space<vmem>>, vector<1x16x1xf32>
    %180 = vector.shape_cast %179 : vector<1x16x1xf32> to vector<16x1xf32>
    %181 = vector.broadcast %180 : vector<16x1xf32> to vector<16x256xf32>
    %182 = arith.mulf %181, %178 : vector<16x256xf32>
    %183 = arith.addf %174, %182 : vector<16x256xf32>
    %c253_i32_56 = arith.constant 253 : i32
    %184 = tpu.dynamic_rotate %133 by %c253_i32_56 dim 1 : vector<16x256xf32>, i32 -> vector<16x256xf32>
    %185 = vector.extract_strided_slice %2 {offsets = [13, 0], sizes = [1, 256], strides = [1, 1]} : vector<14x256xf32> to vector<1x256xf32>
    %186 = vector.broadcast %185 : vector<1x256xf32> to vector<16x256xf32>
    %187 = arith.mulf %186, %184 : vector<16x256xf32>
    %c20 = arith.constant 20 : index
    %c0_57 = arith.constant 0 : index
    %c0_58 = arith.constant 0 : index
    %188 = vector.load %arg4[%c20, %c0_57, %c0_58] : memref<49x16x1xf32, #tpu.memory_space<vmem>>, vector<1x16x1xf32>
    %189 = vector.shape_cast %188 : vector<1x16x1xf32> to vector<16x1xf32>
    %190 = vector.broadcast %189 : vector<16x1xf32> to vector<16x256xf32>
    %191 = arith.mulf %190, %187 : vector<16x256xf32>
    %192 = arith.addf %183, %191 : vector<16x256xf32>
    %c3_i32_59 = arith.constant 3 : i32
    %193 = tpu.dynamic_rotate %1 by %c3_i32_59 dim 1 : vector<16x256xf32>, i32 -> vector<16x256xf32>
    %194 = vector.extract_strided_slice %2 {offsets = [7, 0], sizes = [1, 256], strides = [1, 1]} : vector<14x256xf32> to vector<1x256xf32>
    %195 = vector.broadcast %194 : vector<1x256xf32> to vector<16x256xf32>
    %196 = arith.mulf %195, %193 : vector<16x256xf32>
    %c21 = arith.constant 21 : index
    %c0_60 = arith.constant 0 : index
    %c0_61 = arith.constant 0 : index
    %197 = vector.load %arg4[%c21, %c0_60, %c0_61] : memref<49x16x1xf32, #tpu.memory_space<vmem>>, vector<1x16x1xf32>
    %198 = vector.shape_cast %197 : vector<1x16x1xf32> to vector<16x1xf32>
    %199 = vector.broadcast %198 : vector<16x1xf32> to vector<16x256xf32>
    %200 = arith.mulf %199, %196 : vector<16x256xf32>
    %201 = arith.addf %192, %200 : vector<16x256xf32>
    %c2_i32_62 = arith.constant 2 : i32
    %202 = tpu.dynamic_rotate %1 by %c2_i32_62 dim 1 : vector<16x256xf32>, i32 -> vector<16x256xf32>
    %203 = vector.extract_strided_slice %2 {offsets = [8, 0], sizes = [1, 256], strides = [1, 1]} : vector<14x256xf32> to vector<1x256xf32>
    %204 = vector.broadcast %203 : vector<1x256xf32> to vector<16x256xf32>
    %205 = arith.mulf %204, %202 : vector<16x256xf32>
    %c22 = arith.constant 22 : index
    %c0_63 = arith.constant 0 : index
    %c0_64 = arith.constant 0 : index
    %206 = vector.load %arg4[%c22, %c0_63, %c0_64] : memref<49x16x1xf32, #tpu.memory_space<vmem>>, vector<1x16x1xf32>
    %207 = vector.shape_cast %206 : vector<1x16x1xf32> to vector<16x1xf32>
    %208 = vector.broadcast %207 : vector<16x1xf32> to vector<16x256xf32>
    %209 = arith.mulf %208, %205 : vector<16x256xf32>
    %210 = arith.addf %201, %209 : vector<16x256xf32>
    %c1_i32_65 = arith.constant 1 : i32
    %211 = tpu.dynamic_rotate %1 by %c1_i32_65 dim 1 : vector<16x256xf32>, i32 -> vector<16x256xf32>
    %212 = vector.extract_strided_slice %2 {offsets = [9, 0], sizes = [1, 256], strides = [1, 1]} : vector<14x256xf32> to vector<1x256xf32>
    %213 = vector.broadcast %212 : vector<1x256xf32> to vector<16x256xf32>
    %214 = arith.mulf %213, %211 : vector<16x256xf32>
    %c23 = arith.constant 23 : index
    %c0_66 = arith.constant 0 : index
    %c0_67 = arith.constant 0 : index
    %215 = vector.load %arg4[%c23, %c0_66, %c0_67] : memref<49x16x1xf32, #tpu.memory_space<vmem>>, vector<1x16x1xf32>
    %216 = vector.shape_cast %215 : vector<1x16x1xf32> to vector<16x1xf32>
    %217 = vector.broadcast %216 : vector<16x1xf32> to vector<16x256xf32>
    %218 = arith.mulf %217, %214 : vector<16x256xf32>
    %219 = arith.addf %210, %218 : vector<16x256xf32>
    %c24 = arith.constant 24 : index
    %c0_68 = arith.constant 0 : index
    %c0_69 = arith.constant 0 : index
    %220 = vector.load %arg4[%c24, %c0_68, %c0_69] : memref<49x16x1xf32, #tpu.memory_space<vmem>>, vector<1x16x1xf32>
    %221 = vector.shape_cast %220 : vector<1x16x1xf32> to vector<16x1xf32>
    %222 = vector.broadcast %221 : vector<16x1xf32> to vector<16x256xf32>
    %223 = arith.mulf %222, %1 : vector<16x256xf32>
    %224 = arith.addf %219, %223 : vector<16x256xf32>
    %c255_i32_70 = arith.constant 255 : i32
    %225 = tpu.dynamic_rotate %1 by %c255_i32_70 dim 1 : vector<16x256xf32>, i32 -> vector<16x256xf32>
    %226 = vector.extract_strided_slice %2 {offsets = [11, 0], sizes = [1, 256], strides = [1, 1]} : vector<14x256xf32> to vector<1x256xf32>
    %227 = vector.broadcast %226 : vector<1x256xf32> to vector<16x256xf32>
    %228 = arith.mulf %227, %225 : vector<16x256xf32>
    %c25 = arith.constant 25 : index
    %c0_71 = arith.constant 0 : index
    %c0_72 = arith.constant 0 : index
    %229 = vector.load %arg4[%c25, %c0_71, %c0_72] : memref<49x16x1xf32, #tpu.memory_space<vmem>>, vector<1x16x1xf32>
    %230 = vector.shape_cast %229 : vector<1x16x1xf32> to vector<16x1xf32>
    %231 = vector.broadcast %230 : vector<16x1xf32> to vector<16x256xf32>
    %232 = arith.mulf %231, %228 : vector<16x256xf32>
    %233 = arith.addf %224, %232 : vector<16x256xf32>
    %c254_i32_73 = arith.constant 254 : i32
    %234 = tpu.dynamic_rotate %1 by %c254_i32_73 dim 1 : vector<16x256xf32>, i32 -> vector<16x256xf32>
    %235 = vector.extract_strided_slice %2 {offsets = [12, 0], sizes = [1, 256], strides = [1, 1]} : vector<14x256xf32> to vector<1x256xf32>
    %236 = vector.broadcast %235 : vector<1x256xf32> to vector<16x256xf32>
    %237 = arith.mulf %236, %234 : vector<16x256xf32>
    %c26 = arith.constant 26 : index
    %c0_74 = arith.constant 0 : index
    %c0_75 = arith.constant 0 : index
    %238 = vector.load %arg4[%c26, %c0_74, %c0_75] : memref<49x16x1xf32, #tpu.memory_space<vmem>>, vector<1x16x1xf32>
    %239 = vector.shape_cast %238 : vector<1x16x1xf32> to vector<16x1xf32>
    %240 = vector.broadcast %239 : vector<16x1xf32> to vector<16x256xf32>
    %241 = arith.mulf %240, %237 : vector<16x256xf32>
    %242 = arith.addf %233, %241 : vector<16x256xf32>
    %c253_i32_76 = arith.constant 253 : i32
    %243 = tpu.dynamic_rotate %1 by %c253_i32_76 dim 1 : vector<16x256xf32>, i32 -> vector<16x256xf32>
    %244 = vector.extract_strided_slice %2 {offsets = [13, 0], sizes = [1, 256], strides = [1, 1]} : vector<14x256xf32> to vector<1x256xf32>
    %245 = vector.broadcast %244 : vector<1x256xf32> to vector<16x256xf32>
    %246 = arith.mulf %245, %243 : vector<16x256xf32>
    %c27 = arith.constant 27 : index
    %c0_77 = arith.constant 0 : index
    %c0_78 = arith.constant 0 : index
    %247 = vector.load %arg4[%c27, %c0_77, %c0_78] : memref<49x16x1xf32, #tpu.memory_space<vmem>>, vector<1x16x1xf32>
    %248 = vector.shape_cast %247 : vector<1x16x1xf32> to vector<16x1xf32>
    %249 = vector.broadcast %248 : vector<16x1xf32> to vector<16x256xf32>
    %250 = arith.mulf %249, %246 : vector<16x256xf32>
    %251 = arith.addf %242, %250 : vector<16x256xf32>
    %c240_i32 = arith.constant 240 : i32
    %252 = tpu.dynamic_rotate %1 by %c240_i32 dim 1 : vector<16x256xf32>, i32 -> vector<16x256xf32>
    %253 = vector.extract_strided_slice %2 {offsets = [4, 0], sizes = [1, 256], strides = [1, 1]} : vector<14x256xf32> to vector<1x256xf32>
    %254 = vector.broadcast %253 : vector<1x256xf32> to vector<16x256xf32>
    %255 = arith.mulf %254, %252 : vector<16x256xf32>
    %c3_i32_79 = arith.constant 3 : i32
    %256 = tpu.dynamic_rotate %255 by %c3_i32_79 dim 1 : vector<16x256xf32>, i32 -> vector<16x256xf32>
    %257 = vector.extract_strided_slice %2 {offsets = [7, 0], sizes = [1, 256], strides = [1, 1]} : vector<14x256xf32> to vector<1x256xf32>
    %258 = vector.broadcast %257 : vector<1x256xf32> to vector<16x256xf32>
    %259 = arith.mulf %258, %256 : vector<16x256xf32>
    %c28 = arith.constant 28 : index
    %c0_80 = arith.constant 0 : index
    %c0_81 = arith.constant 0 : index
    %260 = vector.load %arg4[%c28, %c0_80, %c0_81] : memref<49x16x1xf32, #tpu.memory_space<vmem>>, vector<1x16x1xf32>
    %261 = vector.shape_cast %260 : vector<1x16x1xf32> to vector<16x1xf32>
    %262 = vector.broadcast %261 : vector<16x1xf32> to vector<16x256xf32>
    %263 = arith.mulf %262, %259 : vector<16x256xf32>
    %264 = arith.addf %251, %263 : vector<16x256xf32>
    %c2_i32_82 = arith.constant 2 : i32
    %265 = tpu.dynamic_rotate %255 by %c2_i32_82 dim 1 : vector<16x256xf32>, i32 -> vector<16x256xf32>
    %266 = vector.extract_strided_slice %2 {offsets = [8, 0], sizes = [1, 256], strides = [1, 1]} : vector<14x256xf32> to vector<1x256xf32>
    %267 = vector.broadcast %266 : vector<1x256xf32> to vector<16x256xf32>
    %268 = arith.mulf %267, %265 : vector<16x256xf32>
    %c29 = arith.constant 29 : index
    %c0_83 = arith.constant 0 : index
    %c0_84 = arith.constant 0 : index
    %269 = vector.load %arg4[%c29, %c0_83, %c0_84] : memref<49x16x1xf32, #tpu.memory_space<vmem>>, vector<1x16x1xf32>
    %270 = vector.shape_cast %269 : vector<1x16x1xf32> to vector<16x1xf32>
    %271 = vector.broadcast %270 : vector<16x1xf32> to vector<16x256xf32>
    %272 = arith.mulf %271, %268 : vector<16x256xf32>
    %273 = arith.addf %264, %272 : vector<16x256xf32>
    %c1_i32_85 = arith.constant 1 : i32
    %274 = tpu.dynamic_rotate %255 by %c1_i32_85 dim 1 : vector<16x256xf32>, i32 -> vector<16x256xf32>
    %275 = vector.extract_strided_slice %2 {offsets = [9, 0], sizes = [1, 256], strides = [1, 1]} : vector<14x256xf32> to vector<1x256xf32>
    %276 = vector.broadcast %275 : vector<1x256xf32> to vector<16x256xf32>
    %277 = arith.mulf %276, %274 : vector<16x256xf32>
    %c30 = arith.constant 30 : index
    %c0_86 = arith.constant 0 : index
    %c0_87 = arith.constant 0 : index
    %278 = vector.load %arg4[%c30, %c0_86, %c0_87] : memref<49x16x1xf32, #tpu.memory_space<vmem>>, vector<1x16x1xf32>
    %279 = vector.shape_cast %278 : vector<1x16x1xf32> to vector<16x1xf32>
    %280 = vector.broadcast %279 : vector<16x1xf32> to vector<16x256xf32>
    %281 = arith.mulf %280, %277 : vector<16x256xf32>
    %282 = arith.addf %273, %281 : vector<16x256xf32>
    %c31 = arith.constant 31 : index
    %c0_88 = arith.constant 0 : index
    %c0_89 = arith.constant 0 : index
    %283 = vector.load %arg4[%c31, %c0_88, %c0_89] : memref<49x16x1xf32, #tpu.memory_space<vmem>>, vector<1x16x1xf32>
    %284 = vector.shape_cast %283 : vector<1x16x1xf32> to vector<16x1xf32>
    %285 = vector.broadcast %284 : vector<16x1xf32> to vector<16x256xf32>
    %286 = arith.mulf %285, %255 : vector<16x256xf32>
    %287 = arith.addf %282, %286 : vector<16x256xf32>
    %c255_i32_90 = arith.constant 255 : i32
    %288 = tpu.dynamic_rotate %255 by %c255_i32_90 dim 1 : vector<16x256xf32>, i32 -> vector<16x256xf32>
    %289 = vector.extract_strided_slice %2 {offsets = [11, 0], sizes = [1, 256], strides = [1, 1]} : vector<14x256xf32> to vector<1x256xf32>
    %290 = vector.broadcast %289 : vector<1x256xf32> to vector<16x256xf32>
    %291 = arith.mulf %290, %288 : vector<16x256xf32>
    %c32 = arith.constant 32 : index
    %c0_91 = arith.constant 0 : index
    %c0_92 = arith.constant 0 : index
    %292 = vector.load %arg4[%c32, %c0_91, %c0_92] : memref<49x16x1xf32, #tpu.memory_space<vmem>>, vector<1x16x1xf32>
    %293 = vector.shape_cast %292 : vector<1x16x1xf32> to vector<16x1xf32>
    %294 = vector.broadcast %293 : vector<16x1xf32> to vector<16x256xf32>
    %295 = arith.mulf %294, %291 : vector<16x256xf32>
    %296 = arith.addf %287, %295 : vector<16x256xf32>
    %c254_i32_93 = arith.constant 254 : i32
    %297 = tpu.dynamic_rotate %255 by %c254_i32_93 dim 1 : vector<16x256xf32>, i32 -> vector<16x256xf32>
    %298 = vector.extract_strided_slice %2 {offsets = [12, 0], sizes = [1, 256], strides = [1, 1]} : vector<14x256xf32> to vector<1x256xf32>
    %299 = vector.broadcast %298 : vector<1x256xf32> to vector<16x256xf32>
    %300 = arith.mulf %299, %297 : vector<16x256xf32>
    %c33 = arith.constant 33 : index
    %c0_94 = arith.constant 0 : index
    %c0_95 = arith.constant 0 : index
    %301 = vector.load %arg4[%c33, %c0_94, %c0_95] : memref<49x16x1xf32, #tpu.memory_space<vmem>>, vector<1x16x1xf32>
    %302 = vector.shape_cast %301 : vector<1x16x1xf32> to vector<16x1xf32>
    %303 = vector.broadcast %302 : vector<16x1xf32> to vector<16x256xf32>
    %304 = arith.mulf %303, %300 : vector<16x256xf32>
    %305 = arith.addf %296, %304 : vector<16x256xf32>
    %c253_i32_96 = arith.constant 253 : i32
    %306 = tpu.dynamic_rotate %255 by %c253_i32_96 dim 1 : vector<16x256xf32>, i32 -> vector<16x256xf32>
    %307 = vector.extract_strided_slice %2 {offsets = [13, 0], sizes = [1, 256], strides = [1, 1]} : vector<14x256xf32> to vector<1x256xf32>
    %308 = vector.broadcast %307 : vector<1x256xf32> to vector<16x256xf32>
    %309 = arith.mulf %308, %306 : vector<16x256xf32>
    %c34 = arith.constant 34 : index
    %c0_97 = arith.constant 0 : index
    %c0_98 = arith.constant 0 : index
    %310 = vector.load %arg4[%c34, %c0_97, %c0_98] : memref<49x16x1xf32, #tpu.memory_space<vmem>>, vector<1x16x1xf32>
    %311 = vector.shape_cast %310 : vector<1x16x1xf32> to vector<16x1xf32>
    %312 = vector.broadcast %311 : vector<16x1xf32> to vector<16x256xf32>
    %313 = arith.mulf %312, %309 : vector<16x256xf32>
    %314 = arith.addf %305, %313 : vector<16x256xf32>
    %c224_i32 = arith.constant 224 : i32
    %315 = tpu.dynamic_rotate %1 by %c224_i32 dim 1 : vector<16x256xf32>, i32 -> vector<16x256xf32>
    %316 = vector.extract_strided_slice %2 {offsets = [5, 0], sizes = [1, 256], strides = [1, 1]} : vector<14x256xf32> to vector<1x256xf32>
    %317 = vector.broadcast %316 : vector<1x256xf32> to vector<16x256xf32>
    %318 = arith.mulf %317, %315 : vector<16x256xf32>
    %c3_i32_99 = arith.constant 3 : i32
    %319 = tpu.dynamic_rotate %318 by %c3_i32_99 dim 1 : vector<16x256xf32>, i32 -> vector<16x256xf32>
    %320 = vector.extract_strided_slice %2 {offsets = [7, 0], sizes = [1, 256], strides = [1, 1]} : vector<14x256xf32> to vector<1x256xf32>
    %321 = vector.broadcast %320 : vector<1x256xf32> to vector<16x256xf32>
    %322 = arith.mulf %321, %319 : vector<16x256xf32>
    %c35 = arith.constant 35 : index
    %c0_100 = arith.constant 0 : index
    %c0_101 = arith.constant 0 : index
    %323 = vector.load %arg4[%c35, %c0_100, %c0_101] : memref<49x16x1xf32, #tpu.memory_space<vmem>>, vector<1x16x1xf32>
    %324 = vector.shape_cast %323 : vector<1x16x1xf32> to vector<16x1xf32>
    %325 = vector.broadcast %324 : vector<16x1xf32> to vector<16x256xf32>
    %326 = arith.mulf %325, %322 : vector<16x256xf32>
    %327 = arith.addf %314, %326 : vector<16x256xf32>
    %c2_i32_102 = arith.constant 2 : i32
    %328 = tpu.dynamic_rotate %318 by %c2_i32_102 dim 1 : vector<16x256xf32>, i32 -> vector<16x256xf32>
    %329 = vector.extract_strided_slice %2 {offsets = [8, 0], sizes = [1, 256], strides = [1, 1]} : vector<14x256xf32> to vector<1x256xf32>
    %330 = vector.broadcast %329 : vector<1x256xf32> to vector<16x256xf32>
    %331 = arith.mulf %330, %328 : vector<16x256xf32>
    %c36 = arith.constant 36 : index
    %c0_103 = arith.constant 0 : index
    %c0_104 = arith.constant 0 : index
    %332 = vector.load %arg4[%c36, %c0_103, %c0_104] : memref<49x16x1xf32, #tpu.memory_space<vmem>>, vector<1x16x1xf32>
    %333 = vector.shape_cast %332 : vector<1x16x1xf32> to vector<16x1xf32>
    %334 = vector.broadcast %333 : vector<16x1xf32> to vector<16x256xf32>
    %335 = arith.mulf %334, %331 : vector<16x256xf32>
    %336 = arith.addf %327, %335 : vector<16x256xf32>
    %c1_i32_105 = arith.constant 1 : i32
    %337 = tpu.dynamic_rotate %318 by %c1_i32_105 dim 1 : vector<16x256xf32>, i32 -> vector<16x256xf32>
    %338 = vector.extract_strided_slice %2 {offsets = [9, 0], sizes = [1, 256], strides = [1, 1]} : vector<14x256xf32> to vector<1x256xf32>
    %339 = vector.broadcast %338 : vector<1x256xf32> to vector<16x256xf32>
    %340 = arith.mulf %339, %337 : vector<16x256xf32>
    %c37 = arith.constant 37 : index
    %c0_106 = arith.constant 0 : index
    %c0_107 = arith.constant 0 : index
    %341 = vector.load %arg4[%c37, %c0_106, %c0_107] : memref<49x16x1xf32, #tpu.memory_space<vmem>>, vector<1x16x1xf32>
    %342 = vector.shape_cast %341 : vector<1x16x1xf32> to vector<16x1xf32>
    %343 = vector.broadcast %342 : vector<16x1xf32> to vector<16x256xf32>
    %344 = arith.mulf %343, %340 : vector<16x256xf32>
    %345 = arith.addf %336, %344 : vector<16x256xf32>
    %c38 = arith.constant 38 : index
    %c0_108 = arith.constant 0 : index
    %c0_109 = arith.constant 0 : index
    %346 = vector.load %arg4[%c38, %c0_108, %c0_109] : memref<49x16x1xf32, #tpu.memory_space<vmem>>, vector<1x16x1xf32>
    %347 = vector.shape_cast %346 : vector<1x16x1xf32> to vector<16x1xf32>
    %348 = vector.broadcast %347 : vector<16x1xf32> to vector<16x256xf32>
    %349 = arith.mulf %348, %318 : vector<16x256xf32>
    %350 = arith.addf %345, %349 : vector<16x256xf32>
    %c255_i32_110 = arith.constant 255 : i32
    %351 = tpu.dynamic_rotate %318 by %c255_i32_110 dim 1 : vector<16x256xf32>, i32 -> vector<16x256xf32>
    %352 = vector.extract_strided_slice %2 {offsets = [11, 0], sizes = [1, 256], strides = [1, 1]} : vector<14x256xf32> to vector<1x256xf32>
    %353 = vector.broadcast %352 : vector<1x256xf32> to vector<16x256xf32>
    %354 = arith.mulf %353, %351 : vector<16x256xf32>
    %c39 = arith.constant 39 : index
    %c0_111 = arith.constant 0 : index
    %c0_112 = arith.constant 0 : index
    %355 = vector.load %arg4[%c39, %c0_111, %c0_112] : memref<49x16x1xf32, #tpu.memory_space<vmem>>, vector<1x16x1xf32>
    %356 = vector.shape_cast %355 : vector<1x16x1xf32> to vector<16x1xf32>
    %357 = vector.broadcast %356 : vector<16x1xf32> to vector<16x256xf32>
    %358 = arith.mulf %357, %354 : vector<16x256xf32>
    %359 = arith.addf %350, %358 : vector<16x256xf32>
    %c254_i32_113 = arith.constant 254 : i32
    %360 = tpu.dynamic_rotate %318 by %c254_i32_113 dim 1 : vector<16x256xf32>, i32 -> vector<16x256xf32>
    %361 = vector.extract_strided_slice %2 {offsets = [12, 0], sizes = [1, 256], strides = [1, 1]} : vector<14x256xf32> to vector<1x256xf32>
    %362 = vector.broadcast %361 : vector<1x256xf32> to vector<16x256xf32>
    %363 = arith.mulf %362, %360 : vector<16x256xf32>
    %c40 = arith.constant 40 : index
    %c0_114 = arith.constant 0 : index
    %c0_115 = arith.constant 0 : index
    %364 = vector.load %arg4[%c40, %c0_114, %c0_115] : memref<49x16x1xf32, #tpu.memory_space<vmem>>, vector<1x16x1xf32>
    %365 = vector.shape_cast %364 : vector<1x16x1xf32> to vector<16x1xf32>
    %366 = vector.broadcast %365 : vector<16x1xf32> to vector<16x256xf32>
    %367 = arith.mulf %366, %363 : vector<16x256xf32>
    %368 = arith.addf %359, %367 : vector<16x256xf32>
    %c253_i32_116 = arith.constant 253 : i32
    %369 = tpu.dynamic_rotate %318 by %c253_i32_116 dim 1 : vector<16x256xf32>, i32 -> vector<16x256xf32>
    %370 = vector.extract_strided_slice %2 {offsets = [13, 0], sizes = [1, 256], strides = [1, 1]} : vector<14x256xf32> to vector<1x256xf32>
    %371 = vector.broadcast %370 : vector<1x256xf32> to vector<16x256xf32>
    %372 = arith.mulf %371, %369 : vector<16x256xf32>
    %c41 = arith.constant 41 : index
    %c0_117 = arith.constant 0 : index
    %c0_118 = arith.constant 0 : index
    %373 = vector.load %arg4[%c41, %c0_117, %c0_118] : memref<49x16x1xf32, #tpu.memory_space<vmem>>, vector<1x16x1xf32>
    %374 = vector.shape_cast %373 : vector<1x16x1xf32> to vector<16x1xf32>
    %375 = vector.broadcast %374 : vector<16x1xf32> to vector<16x256xf32>
    %376 = arith.mulf %375, %372 : vector<16x256xf32>
    %377 = arith.addf %368, %376 : vector<16x256xf32>
    %c208_i32 = arith.constant 208 : i32
    %378 = tpu.dynamic_rotate %1 by %c208_i32 dim 1 : vector<16x256xf32>, i32 -> vector<16x256xf32>
    %379 = vector.extract_strided_slice %2 {offsets = [6, 0], sizes = [1, 256], strides = [1, 1]} : vector<14x256xf32> to vector<1x256xf32>
    %380 = vector.broadcast %379 : vector<1x256xf32> to vector<16x256xf32>
    %381 = arith.mulf %380, %378 : vector<16x256xf32>
    %c3_i32_119 = arith.constant 3 : i32
    %382 = tpu.dynamic_rotate %381 by %c3_i32_119 dim 1 : vector<16x256xf32>, i32 -> vector<16x256xf32>
    %383 = vector.extract_strided_slice %2 {offsets = [7, 0], sizes = [1, 256], strides = [1, 1]} : vector<14x256xf32> to vector<1x256xf32>
    %384 = vector.broadcast %383 : vector<1x256xf32> to vector<16x256xf32>
    %385 = arith.mulf %384, %382 : vector<16x256xf32>
    %c42 = arith.constant 42 : index
    %c0_120 = arith.constant 0 : index
    %c0_121 = arith.constant 0 : index
    %386 = vector.load %arg4[%c42, %c0_120, %c0_121] : memref<49x16x1xf32, #tpu.memory_space<vmem>>, vector<1x16x1xf32>
    %387 = vector.shape_cast %386 : vector<1x16x1xf32> to vector<16x1xf32>
    %388 = vector.broadcast %387 : vector<16x1xf32> to vector<16x256xf32>
    %389 = arith.mulf %388, %385 : vector<16x256xf32>
    %390 = arith.addf %377, %389 : vector<16x256xf32>
    %c2_i32_122 = arith.constant 2 : i32
    %391 = tpu.dynamic_rotate %381 by %c2_i32_122 dim 1 : vector<16x256xf32>, i32 -> vector<16x256xf32>
    %392 = vector.extract_strided_slice %2 {offsets = [8, 0], sizes = [1, 256], strides = [1, 1]} : vector<14x256xf32> to vector<1x256xf32>
    %393 = vector.broadcast %392 : vector<1x256xf32> to vector<16x256xf32>
    %394 = arith.mulf %393, %391 : vector<16x256xf32>
    %c43 = arith.constant 43 : index
    %c0_123 = arith.constant 0 : index
    %c0_124 = arith.constant 0 : index
    %395 = vector.load %arg4[%c43, %c0_123, %c0_124] : memref<49x16x1xf32, #tpu.memory_space<vmem>>, vector<1x16x1xf32>
    %396 = vector.shape_cast %395 : vector<1x16x1xf32> to vector<16x1xf32>
    %397 = vector.broadcast %396 : vector<16x1xf32> to vector<16x256xf32>
    %398 = arith.mulf %397, %394 : vector<16x256xf32>
    %399 = arith.addf %390, %398 : vector<16x256xf32>
    %c1_i32_125 = arith.constant 1 : i32
    %400 = tpu.dynamic_rotate %381 by %c1_i32_125 dim 1 : vector<16x256xf32>, i32 -> vector<16x256xf32>
    %401 = vector.extract_strided_slice %2 {offsets = [9, 0], sizes = [1, 256], strides = [1, 1]} : vector<14x256xf32> to vector<1x256xf32>
    %402 = vector.broadcast %401 : vector<1x256xf32> to vector<16x256xf32>
    %403 = arith.mulf %402, %400 : vector<16x256xf32>
    %c44 = arith.constant 44 : index
    %c0_126 = arith.constant 0 : index
    %c0_127 = arith.constant 0 : index
    %404 = vector.load %arg4[%c44, %c0_126, %c0_127] : memref<49x16x1xf32, #tpu.memory_space<vmem>>, vector<1x16x1xf32>
    %405 = vector.shape_cast %404 : vector<1x16x1xf32> to vector<16x1xf32>
    %406 = vector.broadcast %405 : vector<16x1xf32> to vector<16x256xf32>
    %407 = arith.mulf %406, %403 : vector<16x256xf32>
    %408 = arith.addf %399, %407 : vector<16x256xf32>
    %c45 = arith.constant 45 : index
    %c0_128 = arith.constant 0 : index
    %c0_129 = arith.constant 0 : index
    %409 = vector.load %arg4[%c45, %c0_128, %c0_129] : memref<49x16x1xf32, #tpu.memory_space<vmem>>, vector<1x16x1xf32>
    %410 = vector.shape_cast %409 : vector<1x16x1xf32> to vector<16x1xf32>
    %411 = vector.broadcast %410 : vector<16x1xf32> to vector<16x256xf32>
    %412 = arith.mulf %411, %381 : vector<16x256xf32>
    %413 = arith.addf %408, %412 : vector<16x256xf32>
    %c255_i32_130 = arith.constant 255 : i32
    %414 = tpu.dynamic_rotate %381 by %c255_i32_130 dim 1 : vector<16x256xf32>, i32 -> vector<16x256xf32>
    %415 = vector.extract_strided_slice %2 {offsets = [11, 0], sizes = [1, 256], strides = [1, 1]} : vector<14x256xf32> to vector<1x256xf32>
    %416 = vector.broadcast %415 : vector<1x256xf32> to vector<16x256xf32>
    %417 = arith.mulf %416, %414 : vector<16x256xf32>
    %c46 = arith.constant 46 : index
    %c0_131 = arith.constant 0 : index
    %c0_132 = arith.constant 0 : index
    %418 = vector.load %arg4[%c46, %c0_131, %c0_132] : memref<49x16x1xf32, #tpu.memory_space<vmem>>, vector<1x16x1xf32>
    %419 = vector.shape_cast %418 : vector<1x16x1xf32> to vector<16x1xf32>
    %420 = vector.broadcast %419 : vector<16x1xf32> to vector<16x256xf32>
    %421 = arith.mulf %420, %417 : vector<16x256xf32>
    %422 = arith.addf %413, %421 : vector<16x256xf32>
    %c254_i32_133 = arith.constant 254 : i32
    %423 = tpu.dynamic_rotate %381 by %c254_i32_133 dim 1 : vector<16x256xf32>, i32 -> vector<16x256xf32>
    %424 = vector.extract_strided_slice %2 {offsets = [12, 0], sizes = [1, 256], strides = [1, 1]} : vector<14x256xf32> to vector<1x256xf32>
    %425 = vector.broadcast %424 : vector<1x256xf32> to vector<16x256xf32>
    %426 = arith.mulf %425, %423 : vector<16x256xf32>
    %c47 = arith.constant 47 : index
    %c0_134 = arith.constant 0 : index
    %c0_135 = arith.constant 0 : index
    %427 = vector.load %arg4[%c47, %c0_134, %c0_135] : memref<49x16x1xf32, #tpu.memory_space<vmem>>, vector<1x16x1xf32>
    %428 = vector.shape_cast %427 : vector<1x16x1xf32> to vector<16x1xf32>
    %429 = vector.broadcast %428 : vector<16x1xf32> to vector<16x256xf32>
    %430 = arith.mulf %429, %426 : vector<16x256xf32>
    %431 = arith.addf %422, %430 : vector<16x256xf32>
    %c253_i32_136 = arith.constant 253 : i32
    %432 = tpu.dynamic_rotate %381 by %c253_i32_136 dim 1 : vector<16x256xf32>, i32 -> vector<16x256xf32>
    %433 = vector.extract_strided_slice %2 {offsets = [13, 0], sizes = [1, 256], strides = [1, 1]} : vector<14x256xf32> to vector<1x256xf32>
    %434 = vector.broadcast %433 : vector<1x256xf32> to vector<16x256xf32>
    %435 = arith.mulf %434, %432 : vector<16x256xf32>
    %c48 = arith.constant 48 : index
    %c0_137 = arith.constant 0 : index
    %c0_138 = arith.constant 0 : index
    %436 = vector.load %arg4[%c48, %c0_137, %c0_138] : memref<49x16x1xf32, #tpu.memory_space<vmem>>, vector<1x16x1xf32>
    %437 = vector.shape_cast %436 : vector<1x16x1xf32> to vector<16x1xf32>
    %438 = vector.broadcast %437 : vector<16x1xf32> to vector<16x256xf32>
    %439 = arith.mulf %438, %435 : vector<16x256xf32>
    %440 = arith.addf %431, %439 : vector<16x256xf32>
    %c0_139 = arith.constant 0 : index
    %c0_140 = arith.constant 0 : index
    %441 = vector.load %arg5[%c0_139, %c0_140] : memref<16x1xf32, #tpu.memory_space<vmem>>, vector<16x1xf32>
    %442 = vector.broadcast %441 : vector<16x1xf32> to vector<16x256xf32>
    %443 = arith.addf %440, %442 : vector<16x256xf32>
    %c0_141 = arith.constant 0 : index
    %c0_142 = arith.constant 0 : index
    %c0_143 = arith.constant 0 : index
    %444 = vector.load %arg2[%c0_141, %c0_142, %c0_143] : memref<1x16x1xf32, #tpu.memory_space<vmem>>, vector<1x16x1xf32>
    %445 = vector.shape_cast %444 : vector<1x16x1xf32> to vector<16x1xf32>
    %446 = vector.broadcast %445 : vector<16x1xf32> to vector<16x256xf32>
    %447 = arith.addf %443, %446 : vector<16x256xf32>
    %c0_144 = arith.constant 0 : index
    %c0_145 = arith.constant 0 : index
    %448 = vector.load %arg6[%c0_144, %c0_145] : memref<16x1xf32, #tpu.memory_space<vmem>>, vector<16x1xf32>
    %c0_146 = arith.constant 0 : index
    %c0_147 = arith.constant 0 : index
    %449 = vector.load %arg7[%c0_146, %c0_147] : memref<16x1xf32, #tpu.memory_space<vmem>>, vector<16x1xf32>
    %cst_148 = arith.constant dense<0.000000e+00> : vector<16xf32>
    %450 = vector.multi_reduction <add>, %447, %cst_148 [1] : vector<16x256xf32> to vector<16xf32>
    %451 = vector.shape_cast %450 : vector<16xf32> to vector<16x1xf32>
    %cst_149 = arith.constant dense<0.000000e+00> : vector<1xf32>
    %452 = vector.multi_reduction <add>, %451, %cst_149 [0] : vector<16x1xf32> to vector<1xf32>
    %453 = vector.shape_cast %452 : vector<1xf32> to vector<1x1xf32>
    %454 = arith.mulf %447, %447 : vector<16x256xf32>
    %cst_150 = arith.constant dense<0.000000e+00> : vector<16xf32>
    %455 = vector.multi_reduction <add>, %454, %cst_150 [1] : vector<16x256xf32> to vector<16xf32>
    %456 = vector.shape_cast %455 : vector<16xf32> to vector<16x1xf32>
    %cst_151 = arith.constant dense<0.000000e+00> : vector<1xf32>
    %457 = vector.multi_reduction <add>, %456, %cst_151 [0] : vector<16x1xf32> to vector<1xf32>
    %458 = vector.shape_cast %457 : vector<1xf32> to vector<1x1xf32>
    %cst_152 = arith.constant 2.44140625E-4 : f32
    %459 = vector.broadcast %cst_152 : f32 to vector<1x1xf32>
    %460 = arith.mulf %453, %459 : vector<1x1xf32>
    %cst_153 = arith.constant 2.44140625E-4 : f32
    %461 = vector.broadcast %cst_153 : f32 to vector<1x1xf32>
    %462 = arith.mulf %458, %461 : vector<1x1xf32>
    %463 = arith.mulf %460, %460 : vector<1x1xf32>
    %464 = arith.subf %462, %463 : vector<1x1xf32>
    %cst_154 = arith.constant 9.99999974E-6 : f32
    %465 = vector.broadcast %cst_154 : f32 to vector<1x1xf32>
    %466 = arith.addf %464, %465 : vector<1x1xf32>
    %467 = math.rsqrt %466 : vector<1x1xf32>
    %468 = vector.broadcast %467 : vector<1x1xf32> to vector<16x1xf32>
    %469 = arith.mulf %468, %448 : vector<16x1xf32>
    %470 = vector.broadcast %460 : vector<1x1xf32> to vector<16x256xf32>
    %471 = arith.subf %447, %470 : vector<16x256xf32>
    %472 = vector.broadcast %469 : vector<16x1xf32> to vector<16x256xf32>
    %473 = arith.mulf %471, %472 : vector<16x256xf32>
    %474 = vector.broadcast %449 : vector<16x1xf32> to vector<16x256xf32>
    %475 = arith.addf %473, %474 : vector<16x256xf32>
    %c16_i32_155 = arith.constant 16 : i32
    %476 = tpu.dynamic_rotate %475 by %c16_i32_155 dim 1 : vector<16x256xf32>, i32 -> vector<16x256xf32>
    %477 = vector.extract_strided_slice %2 {offsets = [2, 0], sizes = [1, 256], strides = [1, 1]} : vector<14x256xf32> to vector<1x256xf32>
    %478 = vector.broadcast %477 : vector<1x256xf32> to vector<16x256xf32>
    %479 = arith.mulf %478, %476 : vector<16x256xf32>
    %c1_i32_156 = arith.constant 1 : i32
    %480 = tpu.dynamic_rotate %479 by %c1_i32_156 dim 1 : vector<16x256xf32>, i32 -> vector<16x256xf32>
    %481 = vector.extract_strided_slice %2 {offsets = [9, 0], sizes = [1, 256], strides = [1, 1]} : vector<14x256xf32> to vector<1x256xf32>
    %482 = vector.broadcast %481 : vector<1x256xf32> to vector<16x256xf32>
    %483 = arith.mulf %482, %480 : vector<16x256xf32>
    %c0_157 = arith.constant 0 : index
    %c0_158 = arith.constant 0 : index
    %484 = vector.load %arg17[%c0_157, %c0_158] : memref<144x256xf32, #tpu.memory_space<vmem>>, vector<16x256xf32>
    tpu.vector_store %arg17[%c0_157, %c0_158], %483 {strides = array<i32>} : memref<144x256xf32, #tpu.memory_space<vmem>>, vector<16x256xf32>,
    %c16_159 = arith.constant 16 : index
    %c0_160 = arith.constant 0 : index
    %485 = vector.load %arg17[%c16_159, %c0_160] : memref<144x256xf32, #tpu.memory_space<vmem>>, vector<16x256xf32>
    tpu.vector_store %arg17[%c16_159, %c0_160], %479 {strides = array<i32>} : memref<144x256xf32, #tpu.memory_space<vmem>>, vector<16x256xf32>,
    %c255_i32_161 = arith.constant 255 : i32
    %486 = tpu.dynamic_rotate %479 by %c255_i32_161 dim 1 : vector<16x256xf32>, i32 -> vector<16x256xf32>
    %487 = vector.extract_strided_slice %2 {offsets = [11, 0], sizes = [1, 256], strides = [1, 1]} : vector<14x256xf32> to vector<1x256xf32>
    %488 = vector.broadcast %487 : vector<1x256xf32> to vector<16x256xf32>
    %489 = arith.mulf %488, %486 : vector<16x256xf32>
    %c32_162 = arith.constant 32 : index
    %c0_163 = arith.constant 0 : index
    %490 = vector.load %arg17[%c32_162, %c0_163] : memref<144x256xf32, #tpu.memory_space<vmem>>, vector<16x256xf32>
    tpu.vector_store %arg17[%c32_162, %c0_163], %489 {strides = array<i32>} : memref<144x256xf32, #tpu.memory_space<vmem>>, vector<16x256xf32>,
    %c1_i32_164 = arith.constant 1 : i32
    %491 = tpu.dynamic_rotate %475 by %c1_i32_164 dim 1 : vector<16x256xf32>, i32 -> vector<16x256xf32>
    %492 = vector.extract_strided_slice %2 {offsets = [9, 0], sizes = [1, 256], strides = [1, 1]} : vector<14x256xf32> to vector<1x256xf32>
    %493 = vector.broadcast %492 : vector<1x256xf32> to vector<16x256xf32>
    %494 = arith.mulf %493, %491 : vector<16x256xf32>
    %c48_165 = arith.constant 48 : index
    %c0_166 = arith.constant 0 : index
    %495 = vector.load %arg17[%c48_165, %c0_166] : memref<144x256xf32, #tpu.memory_space<vmem>>, vector<16x256xf32>
    tpu.vector_store %arg17[%c48_165, %c0_166], %494 {strides = array<i32>} : memref<144x256xf32, #tpu.memory_space<vmem>>, vector<16x256xf32>,
    %c64 = arith.constant 64 : index
    %c0_167 = arith.constant 0 : index
    %496 = vector.load %arg17[%c64, %c0_167] : memref<144x256xf32, #tpu.memory_space<vmem>>, vector<16x256xf32>
    tpu.vector_store %arg17[%c64, %c0_167], %475 {strides = array<i32>} : memref<144x256xf32, #tpu.memory_space<vmem>>, vector<16x256xf32>,
    %c255_i32_168 = arith.constant 255 : i32
    %497 = tpu.dynamic_rotate %475 by %c255_i32_168 dim 1 : vector<16x256xf32>, i32 -> vector<16x256xf32>
    %498 = vector.extract_strided_slice %2 {offsets = [11, 0], sizes = [1, 256], strides = [1, 1]} : vector<14x256xf32> to vector<1x256xf32>
    %499 = vector.broadcast %498 : vector<1x256xf32> to vector<16x256xf32>
    %500 = arith.mulf %499, %497 : vector<16x256xf32>
    %c80 = arith.constant 80 : index
    %c0_169 = arith.constant 0 : index
    %501 = vector.load %arg17[%c80, %c0_169] : memref<144x256xf32, #tpu.memory_space<vmem>>, vector<16x256xf32>
    tpu.vector_store %arg17[%c80, %c0_169], %500 {strides = array<i32>} : memref<144x256xf32, #tpu.memory_space<vmem>>, vector<16x256xf32>,
    %c240_i32_170 = arith.constant 240 : i32
    %502 = tpu.dynamic_rotate %475 by %c240_i32_170 dim 1 : vector<16x256xf32>, i32 -> vector<16x256xf32>
    %503 = vector.extract_strided_slice %2 {offsets = [4, 0], sizes = [1, 256], strides = [1, 1]} : vector<14x256xf32> to vector<1x256xf32>
    %504 = vector.broadcast %503 : vector<1x256xf32> to vector<16x256xf32>
    %505 = arith.mulf %504, %502 : vector<16x256xf32>
    %c1_i32_171 = arith.constant 1 : i32
    %506 = tpu.dynamic_rotate %505 by %c1_i32_171 dim 1 : vector<16x256xf32>, i32 -> vector<16x256xf32>
    %507 = vector.extract_strided_slice %2 {offsets = [9, 0], sizes = [1, 256], strides = [1, 1]} : vector<14x256xf32> to vector<1x256xf32>
    %508 = vector.broadcast %507 : vector<1x256xf32> to vector<16x256xf32>
    %509 = arith.mulf %508, %506 : vector<16x256xf32>
    %c96 = arith.constant 96 : index
    %c0_172 = arith.constant 0 : index
    %510 = vector.load %arg17[%c96, %c0_172] : memref<144x256xf32, #tpu.memory_space<vmem>>, vector<16x256xf32>
    tpu.vector_store %arg17[%c96, %c0_172], %509 {strides = array<i32>} : memref<144x256xf32, #tpu.memory_space<vmem>>, vector<16x256xf32>,
    %c112 = arith.constant 112 : index
    %c0_173 = arith.constant 0 : index
    %511 = vector.load %arg17[%c112, %c0_173] : memref<144x256xf32, #tpu.memory_space<vmem>>, vector<16x256xf32>
    tpu.vector_store %arg17[%c112, %c0_173], %505 {strides = array<i32>} : memref<144x256xf32, #tpu.memory_space<vmem>>, vector<16x256xf32>,
    %c255_i32_174 = arith.constant 255 : i32
    %512 = tpu.dynamic_rotate %505 by %c255_i32_174 dim 1 : vector<16x256xf32>, i32 -> vector<16x256xf32>
    %513 = vector.extract_strided_slice %2 {offsets = [11, 0], sizes = [1, 256], strides = [1, 1]} : vector<14x256xf32> to vector<1x256xf32>
    %514 = vector.broadcast %513 : vector<1x256xf32> to vector<16x256xf32>
    %515 = arith.mulf %514, %512 : vector<16x256xf32>
    %c128 = arith.constant 128 : index
    %c0_175 = arith.constant 0 : index
    %516 = vector.load %arg17[%c128, %c0_175] : memref<144x256xf32, #tpu.memory_space<vmem>>, vector<16x256xf32>
    tpu.vector_store %arg17[%c128, %c0_175], %515 {strides = array<i32>} : memref<144x256xf32, #tpu.memory_space<vmem>>, vector<16x256xf32>,
    %c0_176 = arith.constant 0 : index
    %c0_177 = arith.constant 0 : index
    %517 = vector.load %arg8[%c0_176, %c0_177] : memref<64x144xf32, #tpu.memory_space<vmem>>, vector<64x144xf32>
    %c0_178 = arith.constant 0 : index
    %c0_179 = arith.constant 0 : index
    %518 = vector.load %arg17[%c0_178, %c0_179] : memref<144x256xf32, #tpu.memory_space<vmem>>, vector<144x256xf32>
    %cst_180 = arith.constant dense<0.000000e+00> : vector<64x256xf32>
    %519 = tpu.matmul %517, %518, %cst_180 {dimension_numbers = #tpu.dot_dimension_numbers<[1], [0], [0], [1], [0, 0, 1, 1], [], []>} : vector<64x144xf32>, vector<144x256xf32>, vector<64x256xf32> -> vector<64x256xf32>
    %c0_181 = arith.constant 0 : index
    %c0_182 = arith.constant 0 : index
    %520 = vector.load %arg9[%c0_181, %c0_182] : memref<64x1xf32, #tpu.memory_space<vmem>>, vector<64x1xf32>
    %521 = vector.broadcast %520 : vector<64x1xf32> to vector<64x256xf32>
    %522 = arith.addf %519, %521 : vector<64x256xf32>
    %cst_183 = arith.constant 5.000000e-01 : f32
    %523 = vector.broadcast %cst_183 : f32 to vector<64x256xf32>
    %524 = arith.mulf %523, %522 : vector<64x256xf32>
    %cst_184 = arith.constant 0.707106769 : f32
    %525 = vector.broadcast %cst_184 : f32 to vector<64x256xf32>
    %526 = arith.mulf %522, %525 : vector<64x256xf32>
    %cst_185 = arith.constant 0.000000e+00 : f32
    %527 = vector.broadcast %cst_185 : f32 to vector<64x256xf32>
    %528 = arith.cmpf oge, %526, %527 : vector<64x256xf32>
    %cst_186 = arith.constant 1.000000e+00 : f32
    %cst_187 = arith.constant -1.000000e+00 : f32
    %529 = vector.broadcast %cst_186 : f32 to vector<64x256xf32>
    %530 = vector.broadcast %cst_187 : f32 to vector<64x256xf32>
    %531 = arith.select %528, %529, %530 : vector<64x256xi1>, vector<64x256xf32>
    %532 = math.absf %526 : vector<64x256xf32>
    %cst_188 = arith.constant 0.327591091 : f32
    %533 = vector.broadcast %cst_188 : f32 to vector<64x256xf32>
    %534 = arith.mulf %533, %532 : vector<64x256xf32>
    %cst_189 = arith.constant 1.000000e+00 : f32
    %535 = vector.broadcast %cst_189 : f32 to vector<64x256xf32>
    %536 = arith.addf %535, %534 : vector<64x256xf32>
    %cst_190 = arith.constant 1.000000e+00 : f32
    %537 = vector.broadcast %cst_190 : f32 to vector<64x256xf32>
    %538 = arith.divf %537, %536 : vector<64x256xf32>
    %cst_191 = arith.constant 1.06140542 : f32
    %539 = vector.broadcast %cst_191 : f32 to vector<64x256xf32>
    %540 = arith.mulf %539, %538 : vector<64x256xf32>
    %cst_192 = arith.constant -1.45315206 : f32
    %541 = vector.broadcast %cst_192 : f32 to vector<64x256xf32>
    %542 = arith.addf %540, %541 : vector<64x256xf32>
    %543 = arith.mulf %542, %538 : vector<64x256xf32>
    %cst_193 = arith.constant 1.42141378 : f32
    %544 = vector.broadcast %cst_193 : f32 to vector<64x256xf32>
    %545 = arith.addf %543, %544 : vector<64x256xf32>
    %546 = arith.mulf %545, %538 : vector<64x256xf32>
    %cst_194 = arith.constant -0.284496725 : f32
    %547 = vector.broadcast %cst_194 : f32 to vector<64x256xf32>
    %548 = arith.addf %546, %547 : vector<64x256xf32>
    %549 = arith.mulf %548, %538 : vector<64x256xf32>
    %cst_195 = arith.constant 0.254829586 : f32
    %550 = vector.broadcast %cst_195 : f32 to vector<64x256xf32>
    %551 = arith.addf %549, %550 : vector<64x256xf32>
    %552 = arith.mulf %551, %538 : vector<64x256xf32>
    %cst_196 = arith.constant 0.000000e+00 : f32
    %553 = vector.broadcast %cst_196 : f32 to vector<64x256xf32>
    %554 = arith.subf %553, %532 : vector<64x256xf32>
    %555 = arith.mulf %554, %532 : vector<64x256xf32>
    %556 = math.exp %555 : vector<64x256xf32>
    %557 = arith.mulf %552, %556 : vector<64x256xf32>
    %cst_197 = arith.constant 1.000000e+00 : f32
    %558 = vector.broadcast %cst_197 : f32 to vector<64x256xf32>
    %559 = arith.subf %558, %557 : vector<64x256xf32>
    %560 = arith.mulf %531, %559 : vector<64x256xf32>
    %cst_198 = arith.constant 1.000000e+00 : f32
    %561 = vector.broadcast %cst_198 : f32 to vector<64x256xf32>
    %562 = arith.addf %561, %560 : vector<64x256xf32>
    %563 = arith.mulf %524, %562 : vector<64x256xf32>
    %c0_199 = arith.constant 0 : index
    %c0_200 = arith.constant 0 : index
    %564 = vector.load %arg10[%c0_199, %c0_200] : memref<64x1xf32, #tpu.memory_space<vmem>>, vector<64x1xf32>
    %c0_201 = arith.constant 0 : index
    %c0_202 = arith.constant 0 : index
    %565 = vector.load %arg11[%c0_201, %c0_202] : memref<64x1xf32, #tpu.memory_space<vmem>>, vector<64x1xf32>
    %cst_203 = arith.constant dense<0.000000e+00> : vector<64xf32>
    %566 = vector.multi_reduction <add>, %563, %cst_203 [1] : vector<64x256xf32> to vector<64xf32>
    %567 = vector.shape_cast %566 : vector<64xf32> to vector<64x1xf32>
    %cst_204 = arith.constant dense<0.000000e+00> : vector<1xf32>
    %568 = vector.multi_reduction <add>, %567, %cst_204 [0] : vector<64x1xf32> to vector<1xf32>
    %569 = vector.shape_cast %568 : vector<1xf32> to vector<1x1xf32>
    %570 = arith.mulf %563, %563 : vector<64x256xf32>
    %cst_205 = arith.constant dense<0.000000e+00> : vector<64xf32>
    %571 = vector.multi_reduction <add>, %570, %cst_205 [1] : vector<64x256xf32> to vector<64xf32>
    %572 = vector.shape_cast %571 : vector<64xf32> to vector<64x1xf32>
    %cst_206 = arith.constant dense<0.000000e+00> : vector<1xf32>
    %573 = vector.multi_reduction <add>, %572, %cst_206 [0] : vector<64x1xf32> to vector<1xf32>
    %574 = vector.shape_cast %573 : vector<1xf32> to vector<1x1xf32>
    %cst_207 = arith.constant 6.10351563E-5 : f32
    %575 = vector.broadcast %cst_207 : f32 to vector<1x1xf32>
    %576 = arith.mulf %569, %575 : vector<1x1xf32>
    %cst_208 = arith.constant 6.10351563E-5 : f32
    %577 = vector.broadcast %cst_208 : f32 to vector<1x1xf32>
    %578 = arith.mulf %574, %577 : vector<1x1xf32>
    %579 = arith.mulf %576, %576 : vector<1x1xf32>
    %580 = arith.subf %578, %579 : vector<1x1xf32>
    %cst_209 = arith.constant 9.99999974E-6 : f32
    %581 = vector.broadcast %cst_209 : f32 to vector<1x1xf32>
    %582 = arith.addf %580, %581 : vector<1x1xf32>
    %583 = math.rsqrt %582 : vector<1x1xf32>
    %584 = vector.broadcast %583 : vector<1x1xf32> to vector<64x1xf32>
    %585 = arith.mulf %584, %564 : vector<64x1xf32>
    %586 = vector.broadcast %576 : vector<1x1xf32> to vector<64x256xf32>
    %587 = arith.subf %563, %586 : vector<64x256xf32>
    %588 = vector.broadcast %585 : vector<64x1xf32> to vector<64x256xf32>
    %589 = arith.mulf %587, %588 : vector<64x256xf32>
    %590 = vector.broadcast %565 : vector<64x1xf32> to vector<64x256xf32>
    %591 = arith.addf %589, %590 : vector<64x256xf32>
    %c16_i32_210 = arith.constant 16 : i32
    %592 = tpu.dynamic_rotate %591 by %c16_i32_210 dim 1 : vector<64x256xf32>, i32 -> vector<64x256xf32>
    %593 = vector.extract_strided_slice %2 {offsets = [2, 0], sizes = [1, 256], strides = [1, 1]} : vector<14x256xf32> to vector<1x256xf32>
    %594 = vector.broadcast %593 : vector<1x256xf32> to vector<64x256xf32>
    %595 = arith.mulf %594, %592 : vector<64x256xf32>
    %c1_i32_211 = arith.constant 1 : i32
    %596 = tpu.dynamic_rotate %595 by %c1_i32_211 dim 1 : vector<64x256xf32>, i32 -> vector<64x256xf32>
    %597 = vector.extract_strided_slice %2 {offsets = [9, 0], sizes = [1, 256], strides = [1, 1]} : vector<14x256xf32> to vector<1x256xf32>
    %598 = vector.broadcast %597 : vector<1x256xf32> to vector<64x256xf32>
    %599 = arith.mulf %598, %596 : vector<64x256xf32>
    %c0_212 = arith.constant 0 : index
    %c0_213 = arith.constant 0 : index
    %600 = vector.load %arg18[%c0_212, %c0_213] : memref<576x256xf32, #tpu.memory_space<vmem>>, vector<64x256xf32>
    tpu.vector_store %arg18[%c0_212, %c0_213], %599 {strides = array<i32>} : memref<576x256xf32, #tpu.memory_space<vmem>>, vector<64x256xf32>,
    %c64_214 = arith.constant 64 : index
    %c0_215 = arith.constant 0 : index
    %601 = vector.load %arg18[%c64_214, %c0_215] : memref<576x256xf32, #tpu.memory_space<vmem>>, vector<64x256xf32>
    tpu.vector_store %arg18[%c64_214, %c0_215], %595 {strides = array<i32>} : memref<576x256xf32, #tpu.memory_space<vmem>>, vector<64x256xf32>,
    %c255_i32_216 = arith.constant 255 : i32
    %602 = tpu.dynamic_rotate %595 by %c255_i32_216 dim 1 : vector<64x256xf32>, i32 -> vector<64x256xf32>
    %603 = vector.extract_strided_slice %2 {offsets = [11, 0], sizes = [1, 256], strides = [1, 1]} : vector<14x256xf32> to vector<1x256xf32>
    %604 = vector.broadcast %603 : vector<1x256xf32> to vector<64x256xf32>
    %605 = arith.mulf %604, %602 : vector<64x256xf32>
    %c128_217 = arith.constant 128 : index
    %c0_218 = arith.constant 0 : index
    %606 = vector.load %arg18[%c128_217, %c0_218] : memref<576x256xf32, #tpu.memory_space<vmem>>, vector<64x256xf32>
    tpu.vector_store %arg18[%c128_217, %c0_218], %605 {strides = array<i32>} : memref<576x256xf32, #tpu.memory_space<vmem>>, vector<64x256xf32>,
    %c1_i32_219 = arith.constant 1 : i32
    %607 = tpu.dynamic_rotate %591 by %c1_i32_219 dim 1 : vector<64x256xf32>, i32 -> vector<64x256xf32>
    %608 = vector.extract_strided_slice %2 {offsets = [9, 0], sizes = [1, 256], strides = [1, 1]} : vector<14x256xf32> to vector<1x256xf32>
    %609 = vector.broadcast %608 : vector<1x256xf32> to vector<64x256xf32>
    %610 = arith.mulf %609, %607 : vector<64x256xf32>
    %c192 = arith.constant 192 : index
    %c0_220 = arith.constant 0 : index
    %611 = vector.load %arg18[%c192, %c0_220] : memref<576x256xf32, #tpu.memory_space<vmem>>, vector<64x256xf32>
    tpu.vector_store %arg18[%c192, %c0_220], %610 {strides = array<i32>} : memref<576x256xf32, #tpu.memory_space<vmem>>, vector<64x256xf32>,
    %c256 = arith.constant 256 : index
    %c0_221 = arith.constant 0 : index
    %612 = vector.load %arg18[%c256, %c0_221] : memref<576x256xf32, #tpu.memory_space<vmem>>, vector<64x256xf32>
    tpu.vector_store %arg18[%c256, %c0_221], %591 {strides = array<i32>} : memref<576x256xf32, #tpu.memory_space<vmem>>, vector<64x256xf32>,
    %c255_i32_222 = arith.constant 255 : i32
    %613 = tpu.dynamic_rotate %591 by %c255_i32_222 dim 1 : vector<64x256xf32>, i32 -> vector<64x256xf32>
    %614 = vector.extract_strided_slice %2 {offsets = [11, 0], sizes = [1, 256], strides = [1, 1]} : vector<14x256xf32> to vector<1x256xf32>
    %615 = vector.broadcast %614 : vector<1x256xf32> to vector<64x256xf32>
    %616 = arith.mulf %615, %613 : vector<64x256xf32>
    %c320 = arith.constant 320 : index
    %c0_223 = arith.constant 0 : index
    %617 = vector.load %arg18[%c320, %c0_223] : memref<576x256xf32, #tpu.memory_space<vmem>>, vector<64x256xf32>
    tpu.vector_store %arg18[%c320, %c0_223], %616 {strides = array<i32>} : memref<576x256xf32, #tpu.memory_space<vmem>>, vector<64x256xf32>,
    %c240_i32_224 = arith.constant 240 : i32
    %618 = tpu.dynamic_rotate %591 by %c240_i32_224 dim 1 : vector<64x256xf32>, i32 -> vector<64x256xf32>
    %619 = vector.extract_strided_slice %2 {offsets = [4, 0], sizes = [1, 256], strides = [1, 1]} : vector<14x256xf32> to vector<1x256xf32>
    %620 = vector.broadcast %619 : vector<1x256xf32> to vector<64x256xf32>
    %621 = arith.mulf %620, %618 : vector<64x256xf32>
    %c1_i32_225 = arith.constant 1 : i32
    %622 = tpu.dynamic_rotate %621 by %c1_i32_225 dim 1 : vector<64x256xf32>, i32 -> vector<64x256xf32>
    %623 = vector.extract_strided_slice %2 {offsets = [9, 0], sizes = [1, 256], strides = [1, 1]} : vector<14x256xf32> to vector<1x256xf32>
    %624 = vector.broadcast %623 : vector<1x256xf32> to vector<64x256xf32>
    %625 = arith.mulf %624, %622 : vector<64x256xf32>
    %c384 = arith.constant 384 : index
    %c0_226 = arith.constant 0 : index
    %626 = vector.load %arg18[%c384, %c0_226] : memref<576x256xf32, #tpu.memory_space<vmem>>, vector<64x256xf32>
    tpu.vector_store %arg18[%c384, %c0_226], %625 {strides = array<i32>} : memref<576x256xf32, #tpu.memory_space<vmem>>, vector<64x256xf32>,
    %c448 = arith.constant 448 : index
    %c0_227 = arith.constant 0 : index
    %627 = vector.load %arg18[%c448, %c0_227] : memref<576x256xf32, #tpu.memory_space<vmem>>, vector<64x256xf32>
    tpu.vector_store %arg18[%c448, %c0_227], %621 {strides = array<i32>} : memref<576x256xf32, #tpu.memory_space<vmem>>, vector<64x256xf32>,
    %c255_i32_228 = arith.constant 255 : i32
    %628 = tpu.dynamic_rotate %621 by %c255_i32_228 dim 1 : vector<64x256xf32>, i32 -> vector<64x256xf32>
    %629 = vector.extract_strided_slice %2 {offsets = [11, 0], sizes = [1, 256], strides = [1, 1]} : vector<14x256xf32> to vector<1x256xf32>
    %630 = vector.broadcast %629 : vector<1x256xf32> to vector<64x256xf32>
    %631 = arith.mulf %630, %628 : vector<64x256xf32>
    %c512 = arith.constant 512 : index
    %c0_229 = arith.constant 0 : index
    %632 = vector.load %arg18[%c512, %c0_229] : memref<576x256xf32, #tpu.memory_space<vmem>>, vector<64x256xf32>
    tpu.vector_store %arg18[%c512, %c0_229], %631 {strides = array<i32>} : memref<576x256xf32, #tpu.memory_space<vmem>>, vector<64x256xf32>,
    %c0_230 = arith.constant 0 : index
    %c0_231 = arith.constant 0 : index
    %633 = vector.load %arg12[%c0_230, %c0_231] : memref<32x576xf32, #tpu.memory_space<vmem>>, vector<32x576xf32>
    %c0_232 = arith.constant 0 : index
    %c0_233 = arith.constant 0 : index
    %634 = vector.load %arg18[%c0_232, %c0_233] : memref<576x256xf32, #tpu.memory_space<vmem>>, vector<576x256xf32>
    %cst_234 = arith.constant dense<0.000000e+00> : vector<32x256xf32>
    %635 = tpu.matmul %633, %634, %cst_234 {dimension_numbers = #tpu.dot_dimension_numbers<[1], [0], [0], [1], [0, 0, 1, 1], [], []>} : vector<32x576xf32>, vector<576x256xf32>, vector<32x256xf32> -> vector<32x256xf32>
    %c0_235 = arith.constant 0 : index
    %c0_236 = arith.constant 0 : index
    %636 = vector.load %arg13[%c0_235, %c0_236] : memref<32x1xf32, #tpu.memory_space<vmem>>, vector<32x1xf32>
    %637 = vector.broadcast %636 : vector<32x1xf32> to vector<32x256xf32>
    %638 = arith.addf %635, %637 : vector<32x256xf32>
    %c0_237 = arith.constant 0 : index
    %c0_238 = arith.constant 0 : index
    %639 = vector.load %arg14[%c0_237, %c0_238] : memref<32x16xf32, #tpu.memory_space<vmem>>, vector<32x16xf32>
    %cst_239 = arith.constant dense<0.000000e+00> : vector<32x256xf32>
    %640 = tpu.matmul %639, %1, %cst_239 {dimension_numbers = #tpu.dot_dimension_numbers<[1], [0], [0], [1], [0, 0, 1, 1], [], []>} : vector<32x16xf32>, vector<16x256xf32>, vector<32x256xf32> -> vector<32x256xf32>
    %c0_240 = arith.constant 0 : index
    %c0_241 = arith.constant 0 : index
    %641 = vector.load %arg15[%c0_240, %c0_241] : memref<32x1xf32, #tpu.memory_space<vmem>>, vector<32x1xf32>
    %642 = vector.broadcast %641 : vector<32x1xf32> to vector<32x256xf32>
    %643 = arith.addf %640, %642 : vector<32x256xf32>
    %644 = arith.addf %638, %643 : vector<32x256xf32>
    %c0_242 = arith.constant 0 : index
    %c0_243 = arith.constant 0 : index
    %c0_244 = arith.constant 0 : index
    %645 = vector.load %arg16[%c0_242, %c0_243, %c0_244] : memref<1x32x256xf32, #tpu.memory_space<vmem>>, vector<1x32x256xf32>
    %646 = vector.shape_cast %645 : vector<1x32x256xf32> to vector<32x256xf32>
    %647 = vector.shape_cast %644 : vector<32x256xf32> to vector<1x32x256xf32>
    tpu.vector_store %arg16[%c0_242, %c0_243, %c0_244], %647 {strides = array<i32>} : memref<1x32x256xf32, #tpu.memory_space<vmem>>, vector<1x32x256xf32>,
    return
  }
  func.func @transform_0(%arg0: i32) -> (i32, i32, i32) {
    %c0_i32 = arith.constant 0 : i32
    %c0_i32_0 = arith.constant 0 : i32
    %c0_i32_1 = arith.constant 0 : i32
    return %arg0, %c0_i32, %c0_i32_0 : i32, i32, i32
  }
  func.func @transform_1(%arg0: i32) -> (i32, i32, i32) {
    %c0_i32 = arith.constant 0 : i32
    %c0_i32_0 = arith.constant 0 : i32
    %c0_i32_1 = arith.constant 0 : i32
    return %arg0, %c0_i32, %c0_i32_0 : i32, i32, i32
  }
  func.func @transform_2(%arg0: i32) -> (i32, i32) {
    %c0_i32 = arith.constant 0 : i32
    %c0_i32_0 = arith.constant 0 : i32
    %c0_i32_1 = arith.constant 0 : i32
    return %c0_i32, %c0_i32_0 : i32, i32
  }
  func.func @transform_3(%arg0: i32) -> (i32, i32, i32) {
    %c0_i32 = arith.constant 0 : i32
    %c0_i32_0 = arith.constant 0 : i32
    %c0_i32_1 = arith.constant 0 : i32
    %c0_i32_2 = arith.constant 0 : i32
    return %c0_i32, %c0_i32_0, %c0_i32_1 : i32, i32, i32
  }
  func.func @transform_4(%arg0: i32) -> (i32, i32) {
    %c0_i32 = arith.constant 0 : i32
    %c0_i32_0 = arith.constant 0 : i32
    %c0_i32_1 = arith.constant 0 : i32
    return %c0_i32, %c0_i32_0 : i32, i32
  }
  func.func @transform_5(%arg0: i32) -> (i32, i32) {
    %c0_i32 = arith.constant 0 : i32
    %c0_i32_0 = arith.constant 0 : i32
    %c0_i32_1 = arith.constant 0 : i32
    return %c0_i32, %c0_i32_0 : i32, i32
  }
  func.func @transform_6(%arg0: i32) -> (i32, i32) {
    %c0_i32 = arith.constant 0 : i32
    %c0_i32_0 = arith.constant 0 : i32
    %c0_i32_1 = arith.constant 0 : i32
    return %c0_i32, %c0_i32_0 : i32, i32
  }
  func.func @transform_7(%arg0: i32) -> (i32, i32) {
    %c0_i32 = arith.constant 0 : i32
    %c0_i32_0 = arith.constant 0 : i32
    %c0_i32_1 = arith.constant 0 : i32
    return %c0_i32, %c0_i32_0 : i32, i32
  }
  func.func @transform_8(%arg0: i32) -> (i32, i32) {
    %c0_i32 = arith.constant 0 : i32
    %c0_i32_0 = arith.constant 0 : i32
    %c0_i32_1 = arith.constant 0 : i32
    return %c0_i32, %c0_i32_0 : i32, i32
  }
  func.func @transform_9(%arg0: i32) -> (i32, i32) {
    %c0_i32 = arith.constant 0 : i32
    %c0_i32_0 = arith.constant 0 : i32
    %c0_i32_1 = arith.constant 0 : i32
    return %c0_i32, %c0_i32_0 : i32, i32
  }
  func.func @transform_10(%arg0: i32) -> (i32, i32) {
    %c0_i32 = arith.constant 0 : i32
    %c0_i32_0 = arith.constant 0 : i32
    %c0_i32_1 = arith.constant 0 : i32
    return %c0_i32, %c0_i32_0 : i32, i32
  }
  func.func @transform_11(%arg0: i32) -> (i32, i32) {
    %c0_i32 = arith.constant 0 : i32
    %c0_i32_0 = arith.constant 0 : i32
    %c0_i32_1 = arith.constant 0 : i32
    return %c0_i32, %c0_i32_0 : i32, i32
  }
  func.func @transform_12(%arg0: i32) -> (i32, i32) {
    %c0_i32 = arith.constant 0 : i32
    %c0_i32_0 = arith.constant 0 : i32
    %c0_i32_1 = arith.constant 0 : i32
    return %c0_i32, %c0_i32_0 : i32, i32
  }
  func.func @transform_13(%arg0: i32) -> (i32, i32) {
    %c0_i32 = arith.constant 0 : i32
    %c0_i32_0 = arith.constant 0 : i32
    %c0_i32_1 = arith.constant 0 : i32
    return %c0_i32, %c0_i32_0 : i32, i32
  }
  func.func @transform_14(%arg0: i32) -> (i32, i32) {
    %c0_i32 = arith.constant 0 : i32
    %c0_i32_0 = arith.constant 0 : i32
    %c0_i32_1 = arith.constant 0 : i32
    return %c0_i32, %c0_i32_0 : i32, i32
  }
  func.func @transform_15(%arg0: i32) -> (i32, i32, i32) {
    %c0_i32 = arith.constant 0 : i32
    %c0_i32_0 = arith.constant 0 : i32
    %c0_i32_1 = arith.constant 0 : i32
    return %arg0, %c0_i32, %c0_i32_0 : i32, i32, i32
  }
}

</mosaic_0001>

<llo_original>
// kernel: tpu_custom_call.1
$region0: #{tpu_custom_call.1}
  #allocation0 [shape = 'u32[]', space=smem, size = 0x4, offset = 0x4, fixed_abs, tag = 'smem constant byte address 0x4 - core index']
  #allocation1 [shape = 'u32[72,128]{1,0:T(1,128)}', space=vmem, size = 0x9000, scoped, tag = 'internal scratch']
  #allocation2 [shape = 'f32[144,256]{1,0:T(8,128)}', space=vmem, size = 0x24000, scoped, tag = 'scratch operand']
  #allocation3 [shape = 'f32[576,256]{1,0:T(8,128)}', space=vmem, size = 0x90000, scoped, tag = 'scratch operand']
  %s0 = inlined_call_operand.vmem [shape: f32[2,16,256], index: 0, kind: input, shape index: {}]
  %s1 = inlined_call_operand.vmem [shape: f32[2,16,1], index: 1, kind: input, shape index: {}]
  %s2 = inlined_call_operand.vmem [shape: f32[14,256], index: 2, kind: input, shape index: {}]
  %s3 = inlined_call_operand.vmem [shape: f32[49,16,1], index: 3, kind: input, shape index: {}]
  %s4 = inlined_call_operand.vmem [shape: f32[16,1], index: 4, kind: input, shape index: {}]
  %s5 = inlined_call_operand.vmem [shape: f32[16,1], index: 5, kind: input, shape index: {}]
  %s6 = inlined_call_operand.vmem [shape: f32[16,1], index: 6, kind: input, shape index: {}]
  %s7 = inlined_call_operand.vmem [shape: f32[64,144], index: 7, kind: input, shape index: {}]
  %s8 = inlined_call_operand.vmem [shape: f32[64,1], index: 8, kind: input, shape index: {}]
  %s9 = inlined_call_operand.vmem [shape: f32[64,1], index: 9, kind: input, shape index: {}]
  %s10 = inlined_call_operand.vmem [shape: f32[64,1], index: 10, kind: input, shape index: {}]
  %s11 = inlined_call_operand.vmem [shape: f32[32,576], index: 11, kind: input, shape index: {}]
  %s12 = inlined_call_operand.vmem [shape: f32[32,1], index: 12, kind: input, shape index: {}]
  %s13 = inlined_call_operand.vmem [shape: f32[32,16], index: 13, kind: input, shape index: {}]
  %s14 = inlined_call_operand.vmem [shape: f32[32,1], index: 14, kind: input, shape index: {}]
  %s15 = inlined_call_operand.hbm [shape: f32[2,32,256], index: 15, kind: output, shape index: {}]
  %s16 = sld [smem:[#allocation0]]
  $region93: #{tpu_custom_call.1} parent=0
    _
  %s18 = ssub.s32 1, %s16
  %s19 = scalar_select 0, %s18, %s16
  $region1: #{tpu_custom_call.1} parent=0
    #allocation4 [shape = 'u8[65536]{0}', space=vmem, size = 0x10000, scoped, tag = 'output window, operand 0']
    #allocation5 [shape = 's32[2]{0}', space=sflag, size = 0x8, scoped, tag = 'scoped memory for tpu_custom_call.1']
    %20 = vsyncpa [#allocation5], 0
    %s21 = scalar_lea.sflag [#allocation5], 1
    %22 = vsyncpa %s21, 0
    loop: start=0, step=1, limit=4
    $region2: #{tpu_custom_call.1} parent=1 // loop_pre_header
      _
    $region3: #{tpu_custom_call.1} parent=1 // loop_header
      %s24 = sphi 0, %s28
      %p25 = scmp.ge.s32.totalorder %s24, 4
      %s34 = sphi 0, %s36
      %s37 = sphi 0, %s34
      %s38 = sphi 0, %s37
      %s54 = sphi 0, %s38
      %s60 = sphi 0, %s62
      %s63 = sphi 0, %s60
      %s64 = sphi 0, %s63
      %s80 = sphi 0, %s64
      %s84 = sphi 0, %s84
      %s86 = sphi 0, %s84
      %s87 = sphi 0, %s86
      %s101 = sphi 0, %s87
      %s105 = sphi 0, %s105
      %s107 = sphi 0, %s105
      %s108 = sphi 0, %s107
      %s122 = sphi 0, %s108
      %s126 = sphi 0, %s126
      %s128 = sphi 0, %s126
      %s129 = sphi 0, %s128
      %s143 = sphi 0, %s129
      %s147 = sphi 0, %s147
      %s149 = sphi 0, %s147
      %s150 = sphi 0, %s149
      %s164 = sphi 0, %s150
      %s168 = sphi 0, %s168
      %s170 = sphi 0, %s168
      %s171 = sphi 0, %s170
      %s185 = sphi 0, %s171
      %s189 = sphi 0, %s189
      %s191 = sphi 0, %s189
      %s192 = sphi 0, %s191
      %s206 = sphi 0, %s192
      %s210 = sphi 0, %s210
      %s212 = sphi 0, %s210
      %s213 = sphi 0, %s212
      %s227 = sphi 0, %s213
      %s231 = sphi 0, %s231
      %s233 = sphi 0, %s231
      %s234 = sphi 0, %s233
      %s248 = sphi 0, %s234
      %s252 = sphi 0, %s252
      %s254 = sphi 0, %s252
      %s255 = sphi 0, %s254
      %s269 = sphi 0, %s255
      %s273 = sphi 0, %s273
      %s275 = sphi 0, %s273
      %s276 = sphi 0, %s275
      %s290 = sphi 0, %s276
      %s294 = sphi 0, %s294
      %s296 = sphi 0, %s294
      %s297 = sphi 0, %s296
      %s311 = sphi 0, %s297
      %s315 = sphi 0, %s315
      %s317 = sphi 0, %s315
      %s318 = sphi 0, %s317
      %s332 = sphi 0, %s318
      %s336 = sphi 0, %s336
      %s338 = sphi 0, %s336
      %s339 = sphi 0, %s338
      %s353 = sphi 0, %s339
      %s359 = sphi 0, %s361
      %s362 = sphi 0, %s359
      %s363 = sphi 0, %s362
      %s379 = sphi 0, %s363
    $region4: #{tpu_custom_call.1} parent=1 // loop_header_branch
      %27 = sbr.rel (%p25) target = $region8
    $region5: #{tpu_custom_call.1} parent=1 // loop_body
      %s29 = ssub.s32 %s24, 1
      %s30 = ssub.s32 %s24, 2
      %s31 = sadd.s32 %s24, 1
      %s32 = ssub.s32 %s24, %s31
      %p33 = scmp.eq.s32.totalorder %s32, 0
      %s35 = sadd.s32 %s34, 1
      %s36 = scalar_select %p33, %s34, %s35
      %p39 = pneg %p33
      %p40 = scmp.eq.s32.totalorder %s24, 1
      %p41 = por %p39, %p40
      %p42 = scmp.ne.s32.totalorder %s34, %s37
      %p43 = scmp.eq.s32.totalorder %s24, 0
      %p44 = por %p42, %p43
      %p45 = scmp.ne.s32.totalorder %s34, %s37
      %p46 = scmp.eq.s32.totalorder %s29, 1
      %p47 = por %p45, %p46
      %p48 = scmp.ne.s32.totalorder %s37, %s38
      %p49 = scmp.eq.s32.totalorder %s29, 0
      %p50 = por %p48, %p49
      %p51 = scmp.ne.s32.totalorder %s37, %s38
      %p52 = scmp.eq.s32.totalorder %s30, 1
      %p53 = por %p51, %p52
      %p55 = scmp.ne.s32.totalorder %s38, %s54
      %p56 = scmp.eq.s32.totalorder %s30, 0
      %p57 = por %p55, %p56
      %s58 = ssub.s32 %s24, %s31
      %p59 = scmp.eq.s32.totalorder %s58, 0
      %s61 = sadd.s32 %s60, 1
      %s62 = scalar_select %p59, %s60, %s61
      %p65 = pneg %p59
      %p66 = scmp.eq.s32.totalorder %s24, 1
      %p67 = por %p65, %p66
      %p68 = scmp.ne.s32.totalorder %s60, %s63
      %p69 = scmp.eq.s32.totalorder %s24, 0
      %p70 = por %p68, %p69
      %p71 = scmp.ne.s32.totalorder %s60, %s63
      %p72 = scmp.eq.s32.totalorder %s29, 1
      %p73 = por %p71, %p72
      %p74 = scmp.ne.s32.totalorder %s63, %s64
      %p75 = scmp.eq.s32.totalorder %s29, 0
      %p76 = por %p74, %p75
      %p77 = scmp.ne.s32.totalorder %s63, %s64
      %p78 = scmp.eq.s32.totalorder %s30, 1
      %p79 = por %p77, %p78
      %p81 = scmp.ne.s32.totalorder %s64, %s80
      %p82 = scmp.eq.s32.totalorder %s30, 0
      %p83 = por %p81, %p82
      %s85 = sadd.s32 %s84, 1
      %p88 = scmp.eq.s32.totalorder %s24, 1
      %p89 = scmp.ne.s32.totalorder %s84, %s86
      %p90 = scmp.eq.s32.totalorder %s24, 0
      %p91 = por %p89, %p90
      %p92 = scmp.ne.s32.totalorder %s84, %s86
      %p93 = scmp.eq.s32.totalorder %s29, 1
      %p94 = por %p92, %p93
      %p95 = scmp.ne.s32.totalorder %s86, %s87
      %p96 = scmp.eq.s32.totalorder %s29, 0
      %p97 = por %p95, %p96
      %p98 = scmp.ne.s32.totalorder %s86, %s87
      %p99 = scmp.eq.s32.totalorder %s30, 1
      %p100 = por %p98, %p99
      %p102 = scmp.ne.s32.totalorder %s87, %s101
      %p103 = scmp.eq.s32.totalorder %s30, 0
      %p104 = por %p102, %p103
      %s106 = sadd.s32 %s105, 1
      %p109 = scmp.eq.s32.totalorder %s24, 1
      %p110 = scmp.ne.s32.totalorder %s105, %s107
      %p111 = scmp.eq.s32.totalorder %s24, 0
      %p112 = por %p110, %p111
      %p113 = scmp.ne.s32.totalorder %s105, %s107
      %p114 = scmp.eq.s32.totalorder %s29, 1
      %p115 = por %p113, %p114
      %p116 = scmp.ne.s32.totalorder %s107, %s108
      %p117 = scmp.eq.s32.totalorder %s29, 0
      %p118 = por %p116, %p117
      %p119 = scmp.ne.s32.totalorder %s107, %s108
      %p120 = scmp.eq.s32.totalorder %s30, 1
      %p121 = por %p119, %p120
      %p123 = scmp.ne.s32.totalorder %s108, %s122
      %p124 = scmp.eq.s32.totalorder %s30, 0
      %p125 = por %p123, %p124
      %s127 = sadd.s32 %s126, 1
      %p130 = scmp.eq.s32.totalorder %s24, 1
      %p131 = scmp.ne.s32.totalorder %s126, %s128
      %p132 = scmp.eq.s32.totalorder %s24, 0
      %p133 = por %p131, %p132
      %p134 = scmp.ne.s32.totalorder %s126, %s128
      %p135 = scmp.eq.s32.totalorder %s29, 1
      %p136 = por %p134, %p135
      %p137 = scmp.ne.s32.totalorder %s128, %s129
      %p138 = scmp.eq.s32.totalorder %s29, 0
      %p139 = por %p137, %p138
      %p140 = scmp.ne.s32.totalorder %s128, %s129
      %p141 = scmp.eq.s32.totalorder %s30, 1
      %p142 = por %p140, %p141
      %p144 = scmp.ne.s32.totalorder %s129, %s143
      %p145 = scmp.eq.s32.totalorder %s30, 0
      %p146 = por %p144, %p145
      %s148 = sadd.s32 %s147, 1
      %p151 = scmp.eq.s32.totalorder %s24, 1
      %p152 = scmp.ne.s32.totalorder %s147, %s149
      %p153 = scmp.eq.s32.totalorder %s24, 0
      %p154 = por %p152, %p153
      %p155 = scmp.ne.s32.totalorder %s147, %s149
      %p156 = scmp.eq.s32.totalorder %s29, 1
      %p157 = por %p155, %p156
      %p158 = scmp.ne.s32.totalorder %s149, %s150
      %p159 = scmp.eq.s32.totalorder %s29, 0
      %p160 = por %p158, %p159
      %p161 = scmp.ne.s32.totalorder %s149, %s150
      %p162 = scmp.eq.s32.totalorder %s30, 1
      %p163 = por %p161, %p162
      %p165 = scmp.ne.s32.totalorder %s150, %s164
      %p166 = scmp.eq.s32.totalorder %s30, 0
      %p167 = por %p165, %p166
      %s169 = sadd.s32 %s168, 1
      %p172 = scmp.eq.s32.totalorder %s24, 1
      %p173 = scmp.ne.s32.totalorder %s168, %s170
      %p174 = scmp.eq.s32.totalorder %s24, 0
      %p175 = por %p173, %p174
      %p176 = scmp.ne.s32.totalorder %s168, %s170
      %p177 = scmp.eq.s32.totalorder %s29, 1
      %p178 = por %p176, %p177
      %p179 = scmp.ne.s32.totalorder %s170, %s171
      %p180 = scmp.eq.s32.totalorder %s29, 0
      %p181 = por %p179, %p180
      %p182 = scmp.ne.s32.totalorder %s170, %s171
      %p183 = scmp.eq.s32.totalorder %s30, 1
      %p184 = por %p182, %p183
      %p186 = scmp.ne.s32.totalorder %s171, %s185
      %p187 = scmp.eq.s32.totalorder %s30, 0
      %p188 = por %p186, %p187
      %s190 = sadd.s32 %s189, 1
      %p193 = scmp.eq.s32.totalorder %s24, 1
      %p194 = scmp.ne.s32.totalorder %s189, %s191
      %p195 = scmp.eq.s32.totalorder %s24, 0
      %p196 = por %p194, %p195
      %p197 = scmp.ne.s32.totalorder %s189, %s191
      %p198 = scmp.eq.s32.totalorder %s29, 1
      %p199 = por %p197, %p198
      %p200 = scmp.ne.s32.totalorder %s191, %s192
      %p201 = scmp.eq.s32.totalorder %s29, 0
      %p202 = por %p200, %p201
      %p203 = scmp.ne.s32.totalorder %s191, %s192
      %p204 = scmp.eq.s32.totalorder %s30, 1
      %p205 = por %p203, %p204
      %p207 = scmp.ne.s32.totalorder %s192, %s206
      %p208 = scmp.eq.s32.totalorder %s30, 0
      %p209 = por %p207, %p208
      %s211 = sadd.s32 %s210, 1
      %p214 = scmp.eq.s32.totalorder %s24, 1
      %p215 = scmp.ne.s32.totalorder %s210, %s212
      %p216 = scmp.eq.s32.totalorder %s24, 0
      %p217 = por %p215, %p216
      %p218 = scmp.ne.s32.totalorder %s210, %s212
      %p219 = scmp.eq.s32.totalorder %s29, 1
      %p220 = por %p218, %p219
      %p221 = scmp.ne.s32.totalorder %s212, %s213
      %p222 = scmp.eq.s32.totalorder %s29, 0
      %p223 = por %p221, %p222
      %p224 = scmp.ne.s32.totalorder %s212, %s213
      %p225 = scmp.eq.s32.totalorder %s30, 1
      %p226 = por %p224, %p225
      %p228 = scmp.ne.s32.totalorder %s213, %s227
      %p229 = scmp.eq.s32.totalorder %s30, 0
      %p230 = por %p228, %p229
      %s232 = sadd.s32 %s231, 1
      %p235 = scmp.eq.s32.totalorder %s24, 1
      %p236 = scmp.ne.s32.totalorder %s231, %s233
      %p237 = scmp.eq.s32.totalorder %s24, 0
      %p238 = por %p236, %p237
      %p239 = scmp.ne.s32.totalorder %s231, %s233
      %p240 = scmp.eq.s32.totalorder %s29, 1
      %p241 = por %p239, %p240
      %p242 = scmp.ne.s32.totalorder %s233, %s234
      %p243 = scmp.eq.s32.totalorder %s29, 0
      %p244 = por %p242, %p243
      %p245 = scmp.ne.s32.totalorder %s233, %s234
      %p246 = scmp.eq.s32.totalorder %s30, 1
      %p247 = por %p245, %p246
      %p249 = scmp.ne.s32.totalorder %s234, %s248
      %p250 = scmp.eq.s32.totalorder %s30, 0
      %p251 = por %p249, %p250
      %s253 = sadd.s32 %s252, 1
      %p256 = scmp.eq.s32.totalorder %s24, 1
      %p257 = scmp.ne.s32.totalorder %s252, %s254
      %p258 = scmp.eq.s32.totalorder %s24, 0
      %p259 = por %p257, %p258
      %p260 = scmp.ne.s32.totalorder %s252, %s254
      %p261 = scmp.eq.s32.totalorder %s29, 1
      %p262 = por %p260, %p261
      %p263 = scmp.ne.s32.totalorder %s254, %s255
      %p264 = scmp.eq.s32.totalorder %s29, 0
      %p265 = por %p263, %p264
      %p266 = scmp.ne.s32.totalorder %s254, %s255
      %p267 = scmp.eq.s32.totalorder %s30, 1
      %p268 = por %p266, %p267
      %p270 = scmp.ne.s32.totalorder %s255, %s269
      %p271 = scmp.eq.s32.totalorder %s30, 0
      %p272 = por %p270, %p271
      %s274 = sadd.s32 %s273, 1
      %p277 = scmp.eq.s32.totalorder %s24, 1
      %p278 = scmp.ne.s32.totalorder %s273, %s275
      %p279 = scmp.eq.s32.totalorder %s24, 0
      %p280 = por %p278, %p279
      %p281 = scmp.ne.s32.totalorder %s273, %s275
      %p282 = scmp.eq.s32.totalorder %s29, 1
      %p283 = por %p281, %p282
      %p284 = scmp.ne.s32.totalorder %s275, %s276
      %p285 = scmp.eq.s32.totalorder %s29, 0
      %p286 = por %p284, %p285
      %p287 = scmp.ne.s32.totalorder %s275, %s276
      %p288 = scmp.eq.s32.totalorder %s30, 1
      %p289 = por %p287, %p288
      %p291 = scmp.ne.s32.totalorder %s276, %s290
      %p292 = scmp.eq.s32.totalorder %s30, 0
      %p293 = por %p291, %p292
      %s295 = sadd.s32 %s294, 1
      %p298 = scmp.eq.s32.totalorder %s24, 1
      %p299 = scmp.ne.s32.totalorder %s294, %s296
      %p300 = scmp.eq.s32.totalorder %s24, 0
      %p301 = por %p299, %p300
      %p302 = scmp.ne.s32.totalorder %s294, %s296
      %p303 = scmp.eq.s32.totalorder %s29, 1
      %p304 = por %p302, %p303
      %p305 = scmp.ne.s32.totalorder %s296, %s297
      %p306 = scmp.eq.s32.totalorder %s29, 0
      %p307 = por %p305, %p306
      %p308 = scmp.ne.s32.totalorder %s296, %s297
      %p309 = scmp.eq.s32.totalorder %s30, 1
      %p310 = por %p308, %p309
      %p312 = scmp.ne.s32.totalorder %s297, %s311
      %p313 = scmp.eq.s32.totalorder %s30, 0
      %p314 = por %p312, %p313
      %s316 = sadd.s32 %s315, 1
      %p319 = scmp.eq.s32.totalorder %s24, 1
      %p320 = scmp.ne.s32.totalorder %s315, %s317
      %p321 = scmp.eq.s32.totalorder %s24, 0
      %p322 = por %p320, %p321
      %p323 = scmp.ne.s32.totalorder %s315, %s317
      %p324 = scmp.eq.s32.totalorder %s29, 1
      %p325 = por %p323, %p324
      %p326 = scmp.ne.s32.totalorder %s317, %s318
      %p327 = scmp.eq.s32.totalorder %s29, 0
      %p328 = por %p326, %p327
      %p329 = scmp.ne.s32.totalorder %s317, %s318
      %p330 = scmp.eq.s32.totalorder %s30, 1
      %p331 = por %p329, %p330
      %p333 = scmp.ne.s32.totalorder %s318, %s332
      %p334 = scmp.eq.s32.totalorder %s30, 0
      %p335 = por %p333, %p334
      %s337 = sadd.s32 %s336, 1
      %p340 = scmp.eq.s32.totalorder %s24, 1
      %p341 = scmp.ne.s32.totalorder %s336, %s338
      %p342 = scmp.eq.s32.totalorder %s24, 0
      %p343 = por %p341, %p342
      %p344 = scmp.ne.s32.totalorder %s336, %s338
      %p345 = scmp.eq.s32.totalorder %s29, 1
      %p346 = por %p344, %p345
      %p347 = scmp.ne.s32.totalorder %s338, %s339
      %p348 = scmp.eq.s32.totalorder %s29, 0
      %p349 = por %p347, %p348
      %p350 = scmp.ne.s32.totalorder %s338, %s339
      %p351 = scmp.eq.s32.totalorder %s30, 1
      %p352 = por %p350, %p351
      %p354 = scmp.ne.s32.totalorder %s339, %s353
      %p355 = scmp.eq.s32.totalorder %s30, 0
      %p356 = por %p354, %p355
      %s357 = ssub.s32 %s24, %s31
      %p358 = scmp.eq.s32.totalorder %s357, 0
      %s360 = sadd.s32 %s359, 1
      %s361 = scalar_select %p358, %s359, %s360
      %p364 = pneg %p358
      %p365 = scmp.eq.s32.totalorder %s24, 1
      %p366 = por %p364, %p365
      %p367 = scmp.ne.s32.totalorder %s359, %s362
      %p368 = scmp.eq.s32.totalorder %s24, 0
      %p369 = por %p367, %p368
      %p370 = scmp.ne.s32.totalorder %s359, %s362
      %p371 = scmp.eq.s32.totalorder %s29, 1
      %p372 = por %p370, %p371
      %p373 = scmp.ne.s32.totalorder %s362, %s363
      %p374 = scmp.eq.s32.totalorder %s29, 0
      %p375 = por %p373, %p374
      %p376 = scmp.ne.s32.totalorder %s362, %s363
      %p377 = scmp.eq.s32.totalorder %s30, 1
      %p378 = por %p376, %p377
      %p380 = scmp.ne.s32.totalorder %s363, %s379
      %p381 = scmp.eq.s32.totalorder %s30, 0
      %p382 = por %p380, %p381
      %p383 = scmp.le.s32.totalorder 1, %s24
      %p384 = scmp.lt.s32.totalorder %s24, 3
      %p385 = pnand %p383, %p384
      %p386 = pneg %p385
      // Predicated region
      $region9: #{tpu_custom_call.1} parent=5 // pred_check
        _
      $region10: #{tpu_custom_call.1} parent=5 // pred_check_branch
        %388 = sbr.rel (%p385) target = $region12
      $region11: #{tpu_custom_call.1} parent=5 // pred_region
        %s389 = ssub.s32 %s24, 1
        // Predicated region
        $region13: #{tpu_custom_call.1} parent=11 // pred_check
          %p390 = pneg %p97
        $region14: #{tpu_custom_call.1} parent=11 // pred_check_branch
          %392 = sbr.rel (%p390) target = $region16
        $region15: #{tpu_custom_call.1} parent=11 // pred_region
          _
        $region16: #{tpu_custom_call.1} parent=11 // pred_fallthru
          _
        // Predicated region
        $region17: #{tpu_custom_call.1} parent=11 // pred_check
          %p393 = pneg %p118
        $region18: #{tpu_custom_call.1} parent=11 // pred_check_branch
          %395 = sbr.rel (%p393) target = $region20
        $region19: #{tpu_custom_call.1} parent=11 // pred_region
          _
        $region20: #{tpu_custom_call.1} parent=11 // pred_fallthru
          _
        // Predicated region
        $region21: #{tpu_custom_call.1} parent=11 // pred_check
          %p396 = pneg %p139
        $region22: #{tpu_custom_call.1} parent=11 // pred_check_branch
          %398 = sbr.rel (%p396) target = $region24
        $region23: #{tpu_custom_call.1} parent=11 // pred_region
          _
        $region24: #{tpu_custom_call.1} parent=11 // pred_fallthru
          _
        // Predicated region
        $region25: #{tpu_custom_call.1} parent=11 // pred_check
          %p399 = pneg %p160
        $region26: #{tpu_custom_call.1} parent=11 // pred_check_branch
          %401 = sbr.rel (%p399) target = $region28
        $region27: #{tpu_custom_call.1} parent=11 // pred_region
          _
        $region28: #{tpu_custom_call.1} parent=11 // pred_fallthru
          _
        // Predicated region
        $region29: #{tpu_custom_call.1} parent=11 // pred_check
          %p402 = pneg %p181
        $region30: #{tpu_custom_call.1} parent=11 // pred_check_branch
          %404 = sbr.rel (%p402) target = $region32
        $region31: #{tpu_custom_call.1} parent=11 // pred_region
          _
        $region32: #{tpu_custom_call.1} parent=11 // pred_fallthru
          _
        // Predicated region
        $region33: #{tpu_custom_call.1} parent=11 // pred_check
          %p405 = pneg %p202
        $region34: #{tpu_custom_call.1} parent=11 // pred_check_branch
          %407 = sbr.rel (%p405) target = $region36
        $region35: #{tpu_custom_call.1} parent=11 // pred_region
          _
        $region36: #{tpu_custom_call.1} parent=11 // pred_fallthru
          _
        // Predicated region
        $region37: #{tpu_custom_call.1} parent=11 // pred_check
          %p408 = pneg %p223
        $region38: #{tpu_custom_call.1} parent=11 // pred_check_branch
          %410 = sbr.rel (%p408) target = $region40
        $region39: #{tpu_custom_call.1} parent=11 // pred_region
          _
        $region40: #{tpu_custom_call.1} parent=11 // pred_fallthru
          _
        // Predicated region
        $region41: #{tpu_custom_call.1} parent=11 // pred_check
          %p411 = pneg %p244
        $region42: #{tpu_custom_call.1} parent=11 // pred_check_branch
          %413 = sbr.rel (%p411) target = $region44
        $region43: #{tpu_custom_call.1} parent=11 // pred_region
          _
        $region44: #{tpu_custom_call.1} parent=11 // pred_fallthru
          _
        // Predicated region
        $region45: #{tpu_custom_call.1} parent=11 // pred_check
          %p414 = pneg %p265
        $region46: #{tpu_custom_call.1} parent=11 // pred_check_branch
          %416 = sbr.rel (%p414) target = $region48
        $region47: #{tpu_custom_call.1} parent=11 // pred_region
          _
        $region48: #{tpu_custom_call.1} parent=11 // pred_fallthru
          _
        // Predicated region
        $region49: #{tpu_custom_call.1} parent=11 // pred_check
          %p417 = pneg %p286
        $region50: #{tpu_custom_call.1} parent=11 // pred_check_branch
          %419 = sbr.rel (%p417) target = $region52
        $region51: #{tpu_custom_call.1} parent=11 // pred_region
          _
        $region52: #{tpu_custom_call.1} parent=11 // pred_fallthru
          _
        // Predicated region
        $region53: #{tpu_custom_call.1} parent=11 // pred_check
          %p420 = pneg %p307
        $region54: #{tpu_custom_call.1} parent=11 // pred_check_branch
          %422 = sbr.rel (%p420) target = $region56
        $region55: #{tpu_custom_call.1} parent=11 // pred_region
          _
        $region56: #{tpu_custom_call.1} parent=11 // pred_fallthru
          _
        // Predicated region
        $region57: #{tpu_custom_call.1} parent=11 // pred_check
          %p423 = pneg %p328
        $region58: #{tpu_custom_call.1} parent=11 // pred_check_branch
          %425 = sbr.rel (%p423) target = $region60
        $region59: #{tpu_custom_call.1} parent=11 // pred_region
          _
        $region60: #{tpu_custom_call.1} parent=11 // pred_fallthru
          _
        // Predicated region
        $region61: #{tpu_custom_call.1} parent=11 // pred_check
          %p426 = pneg %p349
        $region62: #{tpu_custom_call.1} parent=11 // pred_check_branch
          %428 = sbr.rel (%p426) target = $region64
        $region63: #{tpu_custom_call.1} parent=11 // pred_region
          _
        $region64: #{tpu_custom_call.1} parent=11 // pred_fallthru
          _
      $region12: #{tpu_custom_call.1} parent=5 // pred_fallthru
        _
      %p429 = scmp.lt.s32.totalorder %s24, 2
      // Predicated region
      $region65: #{tpu_custom_call.1} parent=5 // pred_check
        %p430 = pneg %p429
      $region66: #{tpu_custom_call.1} parent=5 // pred_check_branch
        %432 = sbr.rel (%p430) target = $region68
      $region67: #{tpu_custom_call.1} parent=5 // pred_region
        // Predicated region
        $region69: #{tpu_custom_call.1} parent=67 // pred_check
          %p433 = pneg %p44
        $region70: #{tpu_custom_call.1} parent=67 // pred_check_branch
          %435 = sbr.rel (%p433) target = $region72
        $region71: #{tpu_custom_call.1} parent=67 // pred_region
          %p436 = scmp.lt.s32.totalorder %s24, 1
          %s437 = scalar_select %p436, %s24, 1
          %s438 = smul.addr %s437, 4
          %s439 = smul.addr %s438, 8
          %s440 = scalar_lea.vmem %s0, %s439
        $region72: #{tpu_custom_call.1} parent=67 // pred_fallthru
          _
        // Predicated region
        $region73: #{tpu_custom_call.1} parent=67 // pred_check
          %p441 = pneg %p70
        $region74: #{tpu_custom_call.1} parent=67 // pred_check_branch
          %443 = sbr.rel (%p441) target = $region76
        $region75: #{tpu_custom_call.1} parent=67 // pred_region
          %p444 = scmp.lt.s32.totalorder %s24, 1
          %s445 = scalar_select %p444, %s24, 1
          %s446 = smul.addr %s445, 2
          %s447 = smul.addr %s446, 8
          %s448 = scalar_lea.vmem %s1, %s447
        $region76: #{tpu_custom_call.1} parent=67 // pred_fallthru
          _
      $region68: #{tpu_custom_call.1} parent=5 // pred_fallthru
        _
      %p449 = scmp.le.s32.totalorder 1, %s24
      %p450 = scmp.lt.s32.totalorder %s24, 3
      %p451 = pnand %p449, %p450
      %p452 = pneg %p451
      // Predicated region
      $region77: #{tpu_custom_call.1} parent=5 // pred_check
        _
      $region78: #{tpu_custom_call.1} parent=5 // pred_check_branch
        %454 = sbr.rel (%p451) target = $region80
      $region79: #{tpu_custom_call.1} parent=5 // pred_region
        %s455 = ssub.s32 %s24, 1
        %p456 = scmp.lt.s32.totalorder %s29, 1
        %s457 = scalar_select %p456, %s29, 1
        %s458 = smul.addr %s457, 4
        %s459 = smul.addr %s458, 8
        %s460 = scalar_lea.vmem %s0, %s459
        %p461 = pneg %p50
        %p462 = pneg %p47
        %p463 = scmp.lt.s32.totalorder %s29, 1
        %s464 = scalar_select %p463, %s29, 1
        %s465 = smul.addr %s464, 2
        %s466 = smul.addr %s465, 8
        %s467 = scalar_lea.vmem %s1, %s466
        %p468 = pneg %p76
        %p469 = pneg %p73
        %p470 = pneg %p97
        %p471 = pneg %p94
        %p472 = pneg %p118
        %p473 = pneg %p115
        %p474 = pneg %p139
        %p475 = pneg %p136
        %p476 = pneg %p160
        %p477 = pneg %p157
        %p478 = pneg %p181
        %p479 = pneg %p178
        %p480 = pneg %p202
        %p481 = pneg %p199
        %p482 = pneg %p223
        %p483 = pneg %p220
        %p484 = pneg %p244
        %p485 = pneg %p241
        %p486 = pneg %p265
        %p487 = pneg %p262
        %p488 = pneg %p286
        %p489 = pneg %p283
        %p490 = pneg %p307
        %p491 = pneg %p304
        %p492 = pneg %p328
        %p493 = pneg %p325
        %p494 = pneg %p349
        %p495 = pneg %p346
        %p496 = pneg %p375
        %p497 = pneg %p372
        %s498 = sand.u32 %s362, 1
        %s499 = scalar_lea.sflag [#allocation5], %s498
        %s500 = sand.u32 %s362, 1
        %s501 = smul.addr %s500, 64
        %s502 = scalar_lea.vmem [#allocation4], %s501
        %p503 = scmp.lt.s32.totalorder %s29, 1
        %s504 = scalar_select %p503, %s29, 1
        %s505 = smul.addr %s504, 4
        %s506 = smul.addr %s505, 8
        %s507 = scalar_lea.vmem %s0, %s506
        %p508 = scmp.lt.s32.totalorder %s29, 1
        %s509 = scalar_select %p508, %s29, 1
        %s510 = smul.addr %s509, 2
        %s511 = smul.addr %s510, 8
        %s512 = scalar_lea.vmem %s1, %s511
        %v513 = vld [vmem:[%s507] sm:$0xff]
        %v514 = vld [vmem:[%s507 + $0x8] sm:$0xff]
        %v515 = vld [vmem:[%s507 + $0x10] sm:$0xff]
        %v516 = vld [vmem:[%s507 + $0x18] sm:$0xff]
        %v517 = vld [vmem:[%s2] sm:$0xff]
        %v518 = vld [vmem:[%s2 + $0x8] sm:$0xff]
        %v519 = vld [vmem:[%s2 + $0x10] sm:$0x3f]
        %v520 = vld [vmem:[%s2 + $0x18] sm:$0x3f]
        %521 = vrot.lane.b32.xlu0 %v513, 48
        %v522 = vpop.permute.xlu0 %521
        %523 = vrot.lane.b32.xlu0 %v515, 48
        %v524 = vpop.permute.xlu0 %523
        %525 = vrot.lane.b32.xlu0 %v514, 48
        %v526 = vpop.permute.xlu0 %525
        %527 = vrot.lane.b32.xlu0 %v516, 48
        %v528 = vpop.permute.xlu0 %527
        %v529 = vlaneseq
        %v530 = vand.u32 %v529, 127
        %vm531 = vcmp.lt.s32.totalorder %v530, 48
        %v532 = vsel %vm531, %v522, %v526
        %v533 = vsel %vm531, %v524, %v528
        %v534 = vsel %vm531, %v526, %v522
        %v535 = vsel %vm531, %v528, %v524
        %v536 = vperm.slane %v517, 0
        %v537 = vperm.slane %v518, 0
        %v538 = vmul.f32 %v536, %v534
        %v539 = vmul.f32 %v537, %v532
        %v540 = vmul.f32 %v536, %v535
        %v541 = vmul.f32 %v537, %v533
        %542 = vrot.lane.b32.xlu0 %v538, 3
        %v543 = vpop.permute.xlu0 %542
        %544 = vrot.lane.b32.xlu0 %v540, 3
        %v545 = vpop.permute.xlu0 %544
        %546 = vrot.lane.b32.xlu0 %v539, 3
        %v547 = vpop.permute.xlu0 %546
        %548 = vrot.lane.b32.xlu0 %v541, 3
        %v549 = vpop.permute.xlu0 %548
        %vm550 = vcmp.lt.s32.totalorder %v530, 3
        %v551 = vsel %vm550, %v543, %v547
        %v552 = vsel %vm550, %v545, %v549
        %v553 = vsel %vm550, %v547, %v543
        %v554 = vsel %vm550, %v549, %v545
        %v555 = vperm.slane %v517, 7
        %v556 = vperm.slane %v518, 7
        %v557 = vmul.f32 %v555, %v553
        %v558 = vmul.f32 %v556, %v551
        %v559 = vmul.f32 %v555, %v554
        %v560 = vmul.f32 %v556, %v552
        %v561 = vld [vmem:[%s3] sm:$0xff]
        %v562 = vld [vmem:[%s3 + $0x8] sm:$0xff]
        %564 = vset.pattern.permute.xlu0 0
        %565 = vperm.xlu0 %564, %v561
        %v566 = vpop.permute.xlu0 %565
        %569 = vset.pattern.permute.xlu0 0
        %570 = vperm.xlu0 %569, %v562
        %v571 = vpop.permute.xlu0 %570
        %v573 = vmul.f32 %v566, %v557
        %v574 = vmul.f32 %v566, %v558
        %v575 = vmul.f32 %v571, %v559
        %v576 = vmul.f32 %v571, %v560
        %v577 = vadd.f32 %v573, 0.0
        %v578 = vadd.f32 %v574, 0.0
        %v579 = vadd.f32 %v575, 0.0
        %v580 = vadd.f32 %v576, 0.0
        %581 = vrot.lane.b32.xlu0 %v538, 2
        %v582 = vpop.permute.xlu0 %581
        %583 = vrot.lane.b32.xlu0 %v540, 2
        %v584 = vpop.permute.xlu0 %583
        %585 = vrot.lane.b32.xlu0 %v539, 2
        %v586 = vpop.permute.xlu0 %585
        %587 = vrot.lane.b32.xlu0 %v541, 2
        %v588 = vpop.permute.xlu0 %587
        %vm589 = vcmp.lt.s32.totalorder %v530, 2
        %v590 = vsel %vm589, %v582, %v586
        %v591 = vsel %vm589, %v584, %v588
        %v592 = vsel %vm589, %v586, %v582
        %v593 = vsel %vm589, %v588, %v584
        %v594 = vperm.slane %v519, 0
        %v595 = vperm.slane %v520, 0
        %v596 = vmul.f32 %v594, %v592
        %v597 = vmul.f32 %v595, %v590
        %v598 = vmul.f32 %v594, %v593
        %v599 = vmul.f32 %v595, %v591
        %s600 = scalar_lea.vmem %s3, 16
        %v601 = vld [vmem:[%s600] sm:$0xff]
        %v602 = vld [vmem:[%s600 + $0x8] sm:$0xff]
        %604 = vset.pattern.permute.xlu0 0
        %605 = vperm.xlu0 %604, %v601
        %v606 = vpop.permute.xlu0 %605
        %609 = vset.pattern.permute.xlu0 0
        %610 = vperm.xlu0 %609, %v602
        %v611 = vpop.permute.xlu0 %610
        %v613 = vmul.f32 %v606, %v596
        %v614 = vmul.f32 %v606, %v597
        %v615 = vmul.f32 %v611, %v598
        %v616 = vmul.f32 %v611, %v599
        %v617 = vadd.f32 %v577, %v613
        %v618 = vadd.f32 %v578, %v614
        %v619 = vadd.f32 %v579, %v615
        %v620 = vadd.f32 %v580, %v616
        %621 = vrot.lane.b32.xlu0 %v538, 1
        %v622 = vpop.permute.xlu0 %621
        %623 = vrot.lane.b32.xlu0 %v540, 1
        %v624 = vpop.permute.xlu0 %623
        %625 = vrot.lane.b32.xlu0 %v539, 1
        %v626 = vpop.permute.xlu0 %625
        %627 = vrot.lane.b32.xlu0 %v541, 1
        %v628 = vpop.permute.xlu0 %627
        %vm629 = vcmp.lt.s32.totalorder %v530, 1
        %v630 = vsel %vm629, %v622, %v626
        %v631 = vsel %vm629, %v624, %v628
        %v632 = vsel %vm629, %v626, %v622
        %v633 = vsel %vm629, %v628, %v624
        %v634 = vperm.slane %v519, 1
        %v635 = vperm.slane %v520, 1
        %v636 = vmul.f32 %v634, %v632
        %v637 = vmul.f32 %v635, %v630
        %v638 = vmul.f32 %v634, %v633
        %v639 = vmul.f32 %v635, %v631
        %s640 = scalar_lea.vmem %s3, 32
        %v641 = vld [vmem:[%s640] sm:$0xff]
        %v642 = vld [vmem:[%s640 + $0x8] sm:$0xff]
        %644 = vset.pattern.permute.xlu0 0
        %645 = vperm.xlu0 %644, %v641
        %v646 = vpop.permute.xlu0 %645
        %649 = vset.pattern.permute.xlu0 0
        %650 = vperm.xlu0 %649, %v642
        %v651 = vpop.permute.xlu0 %650
        %v653 = vmul.f32 %v646, %v636
        %v654 = vmul.f32 %v646, %v637
        %v655 = vmul.f32 %v651, %v638
        %v656 = vmul.f32 %v651, %v639
        %v657 = vadd.f32 %v617, %v653
        %v658 = vadd.f32 %v618, %v654
        %v659 = vadd.f32 %v619, %v655
        %v660 = vadd.f32 %v620, %v656
        %s661 = scalar_lea.vmem %s3, 48
        %v662 = vld [vmem:[%s661] sm:$0xff]
        %v663 = vld [vmem:[%s661 + $0x8] sm:$0xff]
        %665 = vset.pattern.permute.xlu0 0
        %666 = vperm.xlu0 %665, %v662
        %v667 = vpop.permute.xlu0 %666
        %670 = vset.pattern.permute.xlu0 0
        %671 = vperm.xlu0 %670, %v663
        %v672 = vpop.permute.xlu0 %671
        %v674 = vmul.f32 %v667, %v538
        %v675 = vmul.f32 %v667, %v539
        %v676 = vmul.f32 %v672, %v540
        %v677 = vmul.f32 %v672, %v541
        %v678 = vadd.f32 %v657, %v674
        %v679 = vadd.f32 %v658, %v675
        %v680 = vadd.f32 %v659, %v676
        %v681 = vadd.f32 %v660, %v677
        %682 = vrot.lane.b32.xlu0 %v538, 127
        %v683 = vpop.permute.xlu0 %682
        %684 = vrot.lane.b32.xlu0 %v540, 127
        %v685 = vpop.permute.xlu0 %684
        %686 = vrot.lane.b32.xlu0 %v539, 127
        %v687 = vpop.permute.xlu0 %686
        %688 = vrot.lane.b32.xlu0 %v541, 127
        %v689 = vpop.permute.xlu0 %688
        %vm690 = vcmp.lt.s32.totalorder %v530, 127
        %v691 = vsel %vm690, %v683, %v687
        %v692 = vsel %vm690, %v685, %v689
        %v693 = vsel %vm690, %v687, %v683
        %v694 = vsel %vm690, %v689, %v685
        %v695 = vperm.slane %v519, 3
        %v696 = vperm.slane %v520, 3
        %v697 = vmul.f32 %v695, %v691
        %v698 = vmul.f32 %v696, %v693
        %v699 = vmul.f32 %v695, %v692
        %v700 = vmul.f32 %v696, %v694
        %s701 = scalar_lea.vmem %s3, 64
        %v702 = vld [vmem:[%s701] sm:$0xff]
        %v703 = vld [vmem:[%s701 + $0x8] sm:$0xff]
        %705 = vset.pattern.permute.xlu0 0
        %706 = vperm.xlu0 %705, %v702
        %v707 = vpop.permute.xlu0 %706
        %710 = vset.pattern.permute.xlu0 0
        %711 = vperm.xlu0 %710, %v703
        %v712 = vpop.permute.xlu0 %711
        %v714 = vmul.f32 %v707, %v697
        %v715 = vmul.f32 %v707, %v698
        %v716 = vmul.f32 %v712, %v699
        %v717 = vmul.f32 %v712, %v700
        %v718 = vadd.f32 %v678, %v714
        %v719 = vadd.f32 %v679, %v715
        %v720 = vadd.f32 %v680, %v716
        %v721 = vadd.f32 %v681, %v717
        %722 = vrot.lane.b32.xlu0 %v538, 126
        %v723 = vpop.permute.xlu0 %722
        %724 = vrot.lane.b32.xlu0 %v540, 126
        %v725 = vpop.permute.xlu0 %724
        %726 = vrot.lane.b32.xlu0 %v539, 126
        %v727 = vpop.permute.xlu0 %726
        %728 = vrot.lane.b32.xlu0 %v541, 126
        %v729 = vpop.permute.xlu0 %728
        %vm730 = vcmp.lt.s32.totalorder %v530, 126
        %v731 = vsel %vm730, %v723, %v727
        %v732 = vsel %vm730, %v725, %v729
        %v733 = vsel %vm730, %v727, %v723
        %v734 = vsel %vm730, %v729, %v725
        %v735 = vperm.slane %v519, 4
        %v736 = vperm.slane %v520, 4
        %v737 = vmul.f32 %v735, %v731
        %v738 = vmul.f32 %v736, %v733
        %v739 = vmul.f32 %v735, %v732
        %v740 = vmul.f32 %v736, %v734
        %s741 = scalar_lea.vmem %s3, 80
        %v742 = vld [vmem:[%s741] sm:$0xff]
        %v743 = vld [vmem:[%s741 + $0x8] sm:$0xff]
        %745 = vset.pattern.permute.xlu0 0
        %746 = vperm.xlu0 %745, %v742
        %v747 = vpop.permute.xlu0 %746
        %750 = vset.pattern.permute.xlu0 0
        %751 = vperm.xlu0 %750, %v743
        %v752 = vpop.permute.xlu0 %751
        %v754 = vmul.f32 %v747, %v737
        %v755 = vmul.f32 %v747, %v738
        %v756 = vmul.f32 %v752, %v739
        %v757 = vmul.f32 %v752, %v740
        %v758 = vadd.f32 %v718, %v754
        %v759 = vadd.f32 %v719, %v755
        %v760 = vadd.f32 %v720, %v756
        %v761 = vadd.f32 %v721, %v757
        %762 = vrot.lane.b32.xlu0 %v538, 125
        %v763 = vpop.permute.xlu0 %762
        %764 = vrot.lane.b32.xlu0 %v540, 125
        %v765 = vpop.permute.xlu0 %764
        %766 = vrot.lane.b32.xlu0 %v539, 125
        %v767 = vpop.permute.xlu0 %766
        %768 = vrot.lane.b32.xlu0 %v541, 125
        %v769 = vpop.permute.xlu0 %768
        %vm770 = vcmp.lt.s32.totalorder %v530, 125
        %v771 = vsel %vm770, %v763, %v767
        %v772 = vsel %vm770, %v765, %v769
        %v773 = vsel %vm770, %v767, %v763
        %v774 = vsel %vm770, %v769, %v765
        %v775 = vperm.slane %v519, 5
        %v776 = vperm.slane %v520, 5
        %v777 = vmul.f32 %v775, %v771
        %v778 = vmul.f32 %v776, %v773
        %v779 = vmul.f32 %v775, %v772
        %v780 = vmul.f32 %v776, %v774
        %s781 = scalar_lea.vmem %s3, 96
        %v782 = vld [vmem:[%s781] sm:$0xff]
        %v783 = vld [vmem:[%s781 + $0x8] sm:$0xff]
        %785 = vset.pattern.permute.xlu0 0
        %786 = vperm.xlu0 %785, %v782
        %v787 = vpop.permute.xlu0 %786
        %790 = vset.pattern.permute.xlu0 0
        %791 = vperm.xlu0 %790, %v783
        %v792 = vpop.permute.xlu0 %791
        %v794 = vmul.f32 %v787, %v777
        %v795 = vmul.f32 %v787, %v778
        %v796 = vmul.f32 %v792, %v779
        %v797 = vmul.f32 %v792, %v780
        %v798 = vadd.f32 %v758, %v794
        %v799 = vadd.f32 %v759, %v795
        %v800 = vadd.f32 %v760, %v796
        %v801 = vadd.f32 %v761, %v797
        %802 = vrot.lane.b32.xlu0 %v513, 32
        %v803 = vpop.permute.xlu0 %802
        %804 = vrot.lane.b32.xlu0 %v515, 32
        %v805 = vpop.permute.xlu0 %804
        %806 = vrot.lane.b32.xlu0 %v514, 32
        %v807 = vpop.permute.xlu0 %806
        %808 = vrot.lane.b32.xlu0 %v516, 32
        %v809 = vpop.permute.xlu0 %808
        %vm810 = vcmp.lt.s32.totalorder %v530, 32
        %v811 = vsel %vm810, %v803, %v807
        %v812 = vsel %vm810, %v805, %v809
        %v813 = vsel %vm810, %v807, %v803
        %v814 = vsel %vm810, %v809, %v805
        %v815 = vperm.slane %v517, 1
        %v816 = vperm.slane %v518, 1
        %v817 = vmul.f32 %v815, %v813
        %v818 = vmul.f32 %v816, %v811
        %v819 = vmul.f32 %v815, %v814
        %v820 = vmul.f32 %v816, %v812
        %821 = vrot.lane.b32.xlu0 %v817, 3
        %v822 = vpop.permute.xlu0 %821
        %823 = vrot.lane.b32.xlu0 %v819, 3
        %v824 = vpop.permute.xlu0 %823
        %825 = vrot.lane.b32.xlu0 %v818, 3
        %v826 = vpop.permute.xlu0 %825
        %827 = vrot.lane.b32.xlu0 %v820, 3
        %v828 = vpop.permute.xlu0 %827
        %v829 = vsel %vm550, %v822, %v826
        %v830 = vsel %vm550, %v824, %v828
        %v831 = vsel %vm550, %v826, %v822
        %v832 = vsel %vm550, %v828, %v824
        %v833 = vmul.f32 %v555, %v831
        %v834 = vmul.f32 %v556, %v829
        %v835 = vmul.f32 %v555, %v832
        %v836 = vmul.f32 %v556, %v830
        %s837 = scalar_lea.vmem %s3, 112
        %v838 = vld [vmem:[%s837] sm:$0xff]
        %v839 = vld [vmem:[%s837 + $0x8] sm:$0xff]
        %841 = vset.pattern.permute.xlu0 0
        %842 = vperm.xlu0 %841, %v838
        %v843 = vpop.permute.xlu0 %842
        %846 = vset.pattern.permute.xlu0 0
        %847 = vperm.xlu0 %846, %v839
        %v848 = vpop.permute.xlu0 %847
        %v850 = vmul.f32 %v843, %v833
        %v851 = vmul.f32 %v843, %v834
        %v852 = vmul.f32 %v848, %v835
        %v853 = vmul.f32 %v848, %v836
        %v854 = vadd.f32 %v798, %v850
        %v855 = vadd.f32 %v799, %v851
        %v856 = vadd.f32 %v800, %v852
        %v857 = vadd.f32 %v801, %v853
        %858 = vrot.lane.b32.xlu0 %v817, 2
        %v859 = vpop.permute.xlu0 %858
        %860 = vrot.lane.b32.xlu0 %v819, 2
        %v861 = vpop.permute.xlu0 %860
        %862 = vrot.lane.b32.xlu0 %v818, 2
        %v863 = vpop.permute.xlu0 %862
        %864 = vrot.lane.b32.xlu0 %v820, 2
        %v865 = vpop.permute.xlu0 %864
        %v866 = vsel %vm589, %v859, %v863
        %v867 = vsel %vm589, %v861, %v865
        %v868 = vsel %vm589, %v863, %v859
        %v869 = vsel %vm589, %v865, %v861
        %v870 = vmul.f32 %v594, %v868
        %v871 = vmul.f32 %v595, %v866
        %v872 = vmul.f32 %v594, %v869
        %v873 = vmul.f32 %v595, %v867
        %s874 = scalar_lea.vmem %s3, 128
        %v875 = vld [vmem:[%s874] sm:$0xff]
        %v876 = vld [vmem:[%s874 + $0x8] sm:$0xff]
        %878 = vset.pattern.permute.xlu0 0
        %879 = vperm.xlu0 %878, %v875
        %v880 = vpop.permute.xlu0 %879
        %883 = vset.pattern.permute.xlu0 0
        %884 = vperm.xlu0 %883, %v876
        %v885 = vpop.permute.xlu0 %884
        %v887 = vmul.f32 %v880, %v870
        %v888 = vmul.f32 %v880, %v871
        %v889 = vmul.f32 %v885, %v872
        %v890 = vmul.f32 %v885, %v873
        %v891 = vadd.f32 %v854, %v887
        %v892 = vadd.f32 %v855, %v888
        %v893 = vadd.f32 %v856, %v889
        %v894 = vadd.f32 %v857, %v890
        %895 = vrot.lane.b32.xlu0 %v817, 1
        %v896 = vpop.permute.xlu0 %895
        %897 = vrot.lane.b32.xlu0 %v819, 1
        %v898 = vpop.permute.xlu0 %897
        %899 = vrot.lane.b32.xlu0 %v818, 1
        %v900 = vpop.permute.xlu0 %899
        %901 = vrot.lane.b32.xlu0 %v820, 1
        %v902 = vpop.permute.xlu0 %901
        %v903 = vsel %vm629, %v896, %v900
        %v904 = vsel %vm629, %v898, %v902
        %v905 = vsel %vm629, %v900, %v896
        %v906 = vsel %vm629, %v902, %v898
        %v907 = vmul.f32 %v634, %v905
        %v908 = vmul.f32 %v635, %v903
        %v909 = vmul.f32 %v634, %v906
        %v910 = vmul.f32 %v635, %v904
        %s911 = scalar_lea.vmem %s3, 144
        %v912 = vld [vmem:[%s911] sm:$0xff]
        %v913 = vld [vmem:[%s911 + $0x8] sm:$0xff]
        %915 = vset.pattern.permute.xlu0 0
        %916 = vperm.xlu0 %915, %v912
        %v917 = vpop.permute.xlu0 %916
        %920 = vset.pattern.permute.xlu0 0
        %921 = vperm.xlu0 %920, %v913
        %v922 = vpop.permute.xlu0 %921
        %v924 = vmul.f32 %v917, %v907
        %v925 = vmul.f32 %v917, %v908
        %v926 = vmul.f32 %v922, %v909
        %v927 = vmul.f32 %v922, %v910
        %v928 = vadd.f32 %v891, %v924
        %v929 = vadd.f32 %v892, %v925
        %v930 = vadd.f32 %v893, %v926
        %v931 = vadd.f32 %v894, %v927
        %s932 = scalar_lea.vmem %s3, 160
        %v933 = vld [vmem:[%s932] sm:$0xff]
        %v934 = vld [vmem:[%s932 + $0x8] sm:$0xff]
        %936 = vset.pattern.permute.xlu0 0
        %937 = vperm.xlu0 %936, %v933
        %v938 = vpop.permute.xlu0 %937
        %941 = vset.pattern.permute.xlu0 0
        %942 = vperm.xlu0 %941, %v934
        %v943 = vpop.permute.xlu0 %942
        %v945 = vmul.f32 %v938, %v817
        %v946 = vmul.f32 %v938, %v818
        %v947 = vmul.f32 %v943, %v819
        %v948 = vmul.f32 %v943, %v820
        %v949 = vadd.f32 %v928, %v945
        %v950 = vadd.f32 %v929, %v946
        %v951 = vadd.f32 %v930, %v947
        %v952 = vadd.f32 %v931, %v948
        %953 = vrot.lane.b32.xlu0 %v817, 127
        %v954 = vpop.permute.xlu0 %953
        %955 = vrot.lane.b32.xlu0 %v819, 127
        %v956 = vpop.permute.xlu0 %955
        %957 = vrot.lane.b32.xlu0 %v818, 127
        %v958 = vpop.permute.xlu0 %957
        %959 = vrot.lane.b32.xlu0 %v820, 127
        %v960 = vpop.permute.xlu0 %959
        %v961 = vsel %vm690, %v954, %v958
        %v962 = vsel %vm690, %v956, %v960
        %v963 = vsel %vm690, %v958, %v954
        %v964 = vsel %vm690, %v960, %v956
        %v965 = vmul.f32 %v695, %v961
        %v966 = vmul.f32 %v696, %v963
        %v967 = vmul.f32 %v695, %v962
        %v968 = vmul.f32 %v696, %v964
        %s969 = scalar_lea.vmem %s3, 176
        %v970 = vld [vmem:[%s969] sm:$0xff]
        %v971 = vld [vmem:[%s969 + $0x8] sm:$0xff]
        %973 = vset.pattern.permute.xlu0 0
        %974 = vperm.xlu0 %973, %v970
        %v975 = vpop.permute.xlu0 %974
        %978 = vset.pattern.permute.xlu0 0
        %979 = vperm.xlu0 %978, %v971
        %v980 = vpop.permute.xlu0 %979
        %v982 = vmul.f32 %v975, %v965
        %v983 = vmul.f32 %v975, %v966
        %v984 = vmul.f32 %v980, %v967
        %v985 = vmul.f32 %v980, %v968
        %v986 = vadd.f32 %v949, %v982
        %v987 = vadd.f32 %v950, %v983
        %v988 = vadd.f32 %v951, %v984
        %v989 = vadd.f32 %v952, %v985
        %990 = vrot.lane.b32.xlu0 %v817, 126
        %v991 = vpop.permute.xlu0 %990
        %992 = vrot.lane.b32.xlu0 %v819, 126
        %v993 = vpop.permute.xlu0 %992
        %994 = vrot.lane.b32.xlu0 %v818, 126
        %v995 = vpop.permute.xlu0 %994
        %996 = vrot.lane.b32.xlu0 %v820, 126
        %v997 = vpop.permute.xlu0 %996
        %v998 = vsel %vm730, %v991, %v995
        %v999 = vsel %vm730, %v993, %v997
        %v1000 = vsel %vm730, %v995, %v991
        %v1001 = vsel %vm730, %v997, %v993
        %v1002 = vmul.f32 %v735, %v998
        %v1003 = vmul.f32 %v736, %v1000
        %v1004 = vmul.f32 %v735, %v999
        %v1005 = vmul.f32 %v736, %v1001
        %s1006 = scalar_lea.vmem %s3, 192
        %v1007 = vld [vmem:[%s1006] sm:$0xff]
        %v1008 = vld [vmem:[%s1006 + $0x8] sm:$0xff]
        %1010 = vset.pattern.permute.xlu0 0
        %1011 = vperm.xlu0 %1010, %v1007
        %v1012 = vpop.permute.xlu0 %1011
        %1015 = vset.pattern.permute.xlu0 0
        %1016 = vperm.xlu0 %1015, %v1008
        %v1017 = vpop.permute.xlu0 %1016
        %v1019 = vmul.f32 %v1012, %v1002
        %v1020 = vmul.f32 %v1012, %v1003
        %v1021 = vmul.f32 %v1017, %v1004
        %v1022 = vmul.f32 %v1017, %v1005
        %v1023 = vadd.f32 %v986, %v1019
        %v1024 = vadd.f32 %v987, %v1020
        %v1025 = vadd.f32 %v988, %v1021
        %v1026 = vadd.f32 %v989, %v1022
        %1027 = vrot.lane.b32.xlu0 %v817, 125
        %v1028 = vpop.permute.xlu0 %1027
        %1029 = vrot.lane.b32.xlu0 %v819, 125
        %v1030 = vpop.permute.xlu0 %1029
        %1031 = vrot.lane.b32.xlu0 %v818, 125
        %v1032 = vpop.permute.xlu0 %1031
        %1033 = vrot.lane.b32.xlu0 %v820, 125
        %v1034 = vpop.permute.xlu0 %1033
        %v1035 = vsel %vm770, %v1028, %v1032
        %v1036 = vsel %vm770, %v1030, %v1034
        %v1037 = vsel %vm770, %v1032, %v1028
        %v1038 = vsel %vm770, %v1034, %v1030
        %v1039 = vmul.f32 %v775, %v1035
        %v1040 = vmul.f32 %v776, %v1037
        %v1041 = vmul.f32 %v775, %v1036
        %v1042 = vmul.f32 %v776, %v1038
        %s1043 = scalar_lea.vmem %s3, 208
        %v1044 = vld [vmem:[%s1043] sm:$0xff]
        %v1045 = vld [vmem:[%s1043 + $0x8] sm:$0xff]
        %1047 = vset.pattern.permute.xlu0 0
        %1048 = vperm.xlu0 %1047, %v1044
        %v1049 = vpop.permute.xlu0 %1048
        %1052 = vset.pattern.permute.xlu0 0
        %1053 = vperm.xlu0 %1052, %v1045
        %v1054 = vpop.permute.xlu0 %1053
        %v1056 = vmul.f32 %v1049, %v1039
        %v1057 = vmul.f32 %v1049, %v1040
        %v1058 = vmul.f32 %v1054, %v1041
        %v1059 = vmul.f32 %v1054, %v1042
        %v1060 = vadd.f32 %v1023, %v1056
        %v1061 = vadd.f32 %v1024, %v1057
        %v1062 = vadd.f32 %v1025, %v1058
        %v1063 = vadd.f32 %v1026, %v1059
        %1064 = vrot.lane.b32.xlu0 %v513, 16
        %v1065 = vpop.permute.xlu0 %1064
        %1066 = vrot.lane.b32.xlu0 %v515, 16
        %v1067 = vpop.permute.xlu0 %1066
        %1068 = vrot.lane.b32.xlu0 %v514, 16
        %v1069 = vpop.permute.xlu0 %1068
        %1070 = vrot.lane.b32.xlu0 %v516, 16
        %v1071 = vpop.permute.xlu0 %1070
        %vm1072 = vcmp.lt.s32.totalorder %v530, 16
        %v1073 = vsel %vm1072, %v1065, %v1069
        %v1074 = vsel %vm1072, %v1067, %v1071
        %v1075 = vsel %vm1072, %v1069, %v1065
        %v1076 = vsel %vm1072, %v1071, %v1067
        %v1077 = vperm.slane %v517, 2
        %v1078 = vperm.slane %v518, 2
        %v1079 = vmul.f32 %v1077, %v1075
        %v1080 = vmul.f32 %v1078, %v1073
        %v1081 = vmul.f32 %v1077, %v1076
        %v1082 = vmul.f32 %v1078, %v1074
        %1083 = vrot.lane.b32.xlu0 %v1079, 3
        %v1084 = vpop.permute.xlu0 %1083
        %1085 = vrot.lane.b32.xlu0 %v1081, 3
        %v1086 = vpop.permute.xlu0 %1085
        %1087 = vrot.lane.b32.xlu0 %v1080, 3
        %v1088 = vpop.permute.xlu0 %1087
        %1089 = vrot.lane.b32.xlu0 %v1082, 3
        %v1090 = vpop.permute.xlu0 %1089
        %v1091 = vsel %vm550, %v1084, %v1088
        %v1092 = vsel %vm550, %v1086, %v1090
        %v1093 = vsel %vm550, %v1088, %v1084
        %v1094 = vsel %vm550, %v1090, %v1086
        %v1095 = vmul.f32 %v555, %v1093
        %v1096 = vmul.f32 %v556, %v1091
        %v1097 = vmul.f32 %v555, %v1094
        %v1098 = vmul.f32 %v556, %v1092
        %s1099 = scalar_lea.vmem %s3, 224
        %v1100 = vld [vmem:[%s1099] sm:$0xff]
        %v1101 = vld [vmem:[%s1099 + $0x8] sm:$0xff]
        %1103 = vset.pattern.permute.xlu0 0
        %1104 = vperm.xlu0 %1103, %v1100
        %v1105 = vpop.permute.xlu0 %1104
        %1108 = vset.pattern.permute.xlu0 0
        %1109 = vperm.xlu0 %1108, %v1101
        %v1110 = vpop.permute.xlu0 %1109
        %v1112 = vmul.f32 %v1105, %v1095
        %v1113 = vmul.f32 %v1105, %v1096
        %v1114 = vmul.f32 %v1110, %v1097
        %v1115 = vmul.f32 %v1110, %v1098
        %v1116 = vadd.f32 %v1060, %v1112
        %v1117 = vadd.f32 %v1061, %v1113
        %v1118 = vadd.f32 %v1062, %v1114
        %v1119 = vadd.f32 %v1063, %v1115
        %1120 = vrot.lane.b32.xlu0 %v1079, 2
        %v1121 = vpop.permute.xlu0 %1120
        %1122 = vrot.lane.b32.xlu0 %v1081, 2
        %v1123 = vpop.permute.xlu0 %1122
        %1124 = vrot.lane.b32.xlu0 %v1080, 2
        %v1125 = vpop.permute.xlu0 %1124
        %1126 = vrot.lane.b32.xlu0 %v1082, 2
        %v1127 = vpop.permute.xlu0 %1126
        %v1128 = vsel %vm589, %v1121, %v1125
        %v1129 = vsel %vm589, %v1123, %v1127
        %v1130 = vsel %vm589, %v1125, %v1121
        %v1131 = vsel %vm589, %v1127, %v1123
        %v1132 = vmul.f32 %v594, %v1130
        %v1133 = vmul.f32 %v595, %v1128
        %v1134 = vmul.f32 %v594, %v1131
        %v1135 = vmul.f32 %v595, %v1129
        %s1136 = scalar_lea.vmem %s3, 240
        %v1137 = vld [vmem:[%s1136] sm:$0xff]
        %v1138 = vld [vmem:[%s1136 + $0x8] sm:$0xff]
        %1140 = vset.pattern.permute.xlu0 0
        %1141 = vperm.xlu0 %1140, %v1137
        %v1142 = vpop.permute.xlu0 %1141
        %1145 = vset.pattern.permute.xlu0 0
        %1146 = vperm.xlu0 %1145, %v1138
        %v1147 = vpop.permute.xlu0 %1146
        %v1149 = vmul.f32 %v1142, %v1132
        %v1150 = vmul.f32 %v1142, %v1133
        %v1151 = vmul.f32 %v1147, %v1134
        %v1152 = vmul.f32 %v1147, %v1135
        %v1153 = vadd.f32 %v1116, %v1149
        %v1154 = vadd.f32 %v1117, %v1150
        %v1155 = vadd.f32 %v1118, %v1151
        %v1156 = vadd.f32 %v1119, %v1152
        %1157 = vrot.lane.b32.xlu0 %v1079, 1
        %v1158 = vpop.permute.xlu0 %1157
        %1159 = vrot.lane.b32.xlu0 %v1081, 1
        %v1160 = vpop.permute.xlu0 %1159
        %1161 = vrot.lane.b32.xlu0 %v1080, 1
        %v1162 = vpop.permute.xlu0 %1161
        %1163 = vrot.lane.b32.xlu0 %v1082, 1
        %v1164 = vpop.permute.xlu0 %1163
        %v1165 = vsel %vm629, %v1158, %v1162
        %v1166 = vsel %vm629, %v1160, %v1164
        %v1167 = vsel %vm629, %v1162, %v1158
        %v1168 = vsel %vm629, %v1164, %v1160
        %v1169 = vmul.f32 %v634, %v1167
        %v1170 = vmul.f32 %v635, %v1165
        %v1171 = vmul.f32 %v634, %v1168
        %v1172 = vmul.f32 %v635, %v1166
        %s1173 = scalar_lea.vmem %s3, 256
        %v1174 = vld [vmem:[%s1173] sm:$0xff]
        %v1175 = vld [vmem:[%s1173 + $0x8] sm:$0xff]
        %1177 = vset.pattern.permute.xlu0 0
        %1178 = vperm.xlu0 %1177, %v1174
        %v1179 = vpop.permute.xlu0 %1178
        %1182 = vset.pattern.permute.xlu0 0
        %1183 = vperm.xlu0 %1182, %v1175
        %v1184 = vpop.permute.xlu0 %1183
        %v1186 = vmul.f32 %v1179, %v1169
        %v1187 = vmul.f32 %v1179, %v1170
        %v1188 = vmul.f32 %v1184, %v1171
        %v1189 = vmul.f32 %v1184, %v1172
        %v1190 = vadd.f32 %v1153, %v1186
        %v1191 = vadd.f32 %v1154, %v1187
        %v1192 = vadd.f32 %v1155, %v1188
        %v1193 = vadd.f32 %v1156, %v1189
        %s1194 = scalar_lea.vmem %s3, 272
        %v1195 = vld [vmem:[%s1194] sm:$0xff]
        %v1196 = vld [vmem:[%s1194 + $0x8] sm:$0xff]
        %1198 = vset.pattern.permute.xlu0 0
        %1199 = vperm.xlu0 %1198, %v1195
        %v1200 = vpop.permute.xlu0 %1199
        %1203 = vset.pattern.permute.xlu0 0
        %1204 = vperm.xlu0 %1203, %v1196
        %v1205 = vpop.permute.xlu0 %1204
        %v1207 = vmul.f32 %v1200, %v1079
        %v1208 = vmul.f32 %v1200, %v1080
        %v1209 = vmul.f32 %v1205, %v1081
        %v1210 = vmul.f32 %v1205, %v1082
        %v1211 = vadd.f32 %v1190, %v1207
        %v1212 = vadd.f32 %v1191, %v1208
        %v1213 = vadd.f32 %v1192, %v1209
        %v1214 = vadd.f32 %v1193, %v1210
        %1215 = vrot.lane.b32.xlu0 %v1079, 127
        %v1216 = vpop.permute.xlu0 %1215
        %1217 = vrot.lane.b32.xlu0 %v1081, 127
        %v1218 = vpop.permute.xlu0 %1217
        %1219 = vrot.lane.b32.xlu0 %v1080, 127
        %v1220 = vpop.permute.xlu0 %1219
        %1221 = vrot.lane.b32.xlu0 %v1082, 127
        %v1222 = vpop.permute.xlu0 %1221
        %v1223 = vsel %vm690, %v1216, %v1220
        %v1224 = vsel %vm690, %v1218, %v1222
        %v1225 = vsel %vm690, %v1220, %v1216
        %v1226 = vsel %vm690, %v1222, %v1218
        %v1227 = vmul.f32 %v695, %v1223
        %v1228 = vmul.f32 %v696, %v1225
        %v1229 = vmul.f32 %v695, %v1224
        %v1230 = vmul.f32 %v696, %v1226
        %s1231 = scalar_lea.vmem %s3, 288
        %v1232 = vld [vmem:[%s1231] sm:$0xff]
        %v1233 = vld [vmem:[%s1231 + $0x8] sm:$0xff]
        %1235 = vset.pattern.permute.xlu0 0
        %1236 = vperm.xlu0 %1235, %v1232
        %v1237 = vpop.permute.xlu0 %1236
        %1240 = vset.pattern.permute.xlu0 0
        %1241 = vperm.xlu0 %1240, %v1233
        %v1242 = vpop.permute.xlu0 %1241
        %v1244 = vmul.f32 %v1237, %v1227
        %v1245 = vmul.f32 %v1237, %v1228
        %v1246 = vmul.f32 %v1242, %v1229
        %v1247 = vmul.f32 %v1242, %v1230
        %v1248 = vadd.f32 %v1211, %v1244
        %v1249 = vadd.f32 %v1212, %v1245
        %v1250 = vadd.f32 %v1213, %v1246
        %v1251 = vadd.f32 %v1214, %v1247
        %1252 = vrot.lane.b32.xlu0 %v1079, 126
        %v1253 = vpop.permute.xlu0 %1252
        %1254 = vrot.lane.b32.xlu0 %v1081, 126
        %v1255 = vpop.permute.xlu0 %1254
        %1256 = vrot.lane.b32.xlu0 %v1080, 126
        %v1257 = vpop.permute.xlu0 %1256
        %1258 = vrot.lane.b32.xlu0 %v1082, 126
        %v1259 = vpop.permute.xlu0 %1258
        %v1260 = vsel %vm730, %v1253, %v1257
        %v1261 = vsel %vm730, %v1255, %v1259
        %v1262 = vsel %vm730, %v1257, %v1253
        %v1263 = vsel %vm730, %v1259, %v1255
        %v1264 = vmul.f32 %v735, %v1260
        %v1265 = vmul.f32 %v736, %v1262
        %v1266 = vmul.f32 %v735, %v1261
        %v1267 = vmul.f32 %v736, %v1263
        %s1268 = scalar_lea.vmem %s3, 304
        %v1269 = vld [vmem:[%s1268] sm:$0xff]
        %v1270 = vld [vmem:[%s1268 + $0x8] sm:$0xff]
        %1272 = vset.pattern.permute.xlu0 0
        %1273 = vperm.xlu0 %1272, %v1269
        %v1274 = vpop.permute.xlu0 %1273
        %1277 = vset.pattern.permute.xlu0 0
        %1278 = vperm.xlu0 %1277, %v1270
        %v1279 = vpop.permute.xlu0 %1278
        %v1281 = vmul.f32 %v1274, %v1264
        %v1282 = vmul.f32 %v1274, %v1265
        %v1283 = vmul.f32 %v1279, %v1266
        %v1284 = vmul.f32 %v1279, %v1267
        %v1285 = vadd.f32 %v1248, %v1281
        %v1286 = vadd.f32 %v1249, %v1282
        %v1287 = vadd.f32 %v1250, %v1283
        %v1288 = vadd.f32 %v1251, %v1284
        %1289 = vrot.lane.b32.xlu0 %v1079, 125
        %v1290 = vpop.permute.xlu0 %1289
        %1291 = vrot.lane.b32.xlu0 %v1081, 125
        %v1292 = vpop.permute.xlu0 %1291
        %1293 = vrot.lane.b32.xlu0 %v1080, 125
        %v1294 = vpop.permute.xlu0 %1293
        %1295 = vrot.lane.b32.xlu0 %v1082, 125
        %v1296 = vpop.permute.xlu0 %1295
        %v1297 = vsel %vm770, %v1290, %v1294
        %v1298 = vsel %vm770, %v1292, %v1296
        %v1299 = vsel %vm770, %v1294, %v1290
        %v1300 = vsel %vm770, %v1296, %v1292
        %v1301 = vmul.f32 %v775, %v1297
        %v1302 = vmul.f32 %v776, %v1299
        %v1303 = vmul.f32 %v775, %v1298
        %v1304 = vmul.f32 %v776, %v1300
        %s1305 = scalar_lea.vmem %s3, 320
        %v1306 = vld [vmem:[%s1305] sm:$0xff]
        %v1307 = vld [vmem:[%s1305 + $0x8] sm:$0xff]
        %1309 = vset.pattern.permute.xlu0 0
        %1310 = vperm.xlu0 %1309, %v1306
        %v1311 = vpop.permute.xlu0 %1310
        %1314 = vset.pattern.permute.xlu0 0
        %1315 = vperm.xlu0 %1314, %v1307
        %v1316 = vpop.permute.xlu0 %1315
        %v1318 = vmul.f32 %v1311, %v1301
        %v1319 = vmul.f32 %v1311, %v1302
        %v1320 = vmul.f32 %v1316, %v1303
        %v1321 = vmul.f32 %v1316, %v1304
        %v1322 = vadd.f32 %v1285, %v1318
        %v1323 = vadd.f32 %v1286, %v1319
        %v1324 = vadd.f32 %v1287, %v1320
        %v1325 = vadd.f32 %v1288, %v1321
        %1326 = vrot.lane.b32.xlu0 %v513, 3
        %v1327 = vpop.permute.xlu0 %1326
        %1328 = vrot.lane.b32.xlu0 %v515, 3
        %v1329 = vpop.permute.xlu0 %1328
        %1330 = vrot.lane.b32.xlu0 %v514, 3
        %v1331 = vpop.permute.xlu0 %1330
        %1332 = vrot.lane.b32.xlu0 %v516, 3
        %v1333 = vpop.permute.xlu0 %1332
        %v1334 = vsel %vm550, %v1327, %v1331
        %v1335 = vsel %vm550, %v1329, %v1333
        %v1336 = vsel %vm550, %v1331, %v1327
        %v1337 = vsel %vm550, %v1333, %v1329
        %v1338 = vmul.f32 %v555, %v1336
        %v1339 = vmul.f32 %v556, %v1334
        %v1340 = vmul.f32 %v555, %v1337
        %v1341 = vmul.f32 %v556, %v1335
        %s1342 = scalar_lea.vmem %s3, 336
        %v1343 = vld [vmem:[%s1342] sm:$0xff]
        %v1344 = vld [vmem:[%s1342 + $0x8] sm:$0xff]
        %1346 = vset.pattern.permute.xlu0 0
        %1347 = vperm.xlu0 %1346, %v1343
        %v1348 = vpop.permute.xlu0 %1347
        %1351 = vset.pattern.permute.xlu0 0
        %1352 = vperm.xlu0 %1351, %v1344
        %v1353 = vpop.permute.xlu0 %1352
        %v1355 = vmul.f32 %v1348, %v1338
        %v1356 = vmul.f32 %v1348, %v1339
        %v1357 = vmul.f32 %v1353, %v1340
        %v1358 = vmul.f32 %v1353, %v1341
        %v1359 = vadd.f32 %v1322, %v1355
        %v1360 = vadd.f32 %v1323, %v1356
        %v1361 = vadd.f32 %v1324, %v1357
        %v1362 = vadd.f32 %v1325, %v1358
        %1363 = vrot.lane.b32.xlu0 %v513, 2
        %v1364 = vpop.permute.xlu0 %1363
        %1365 = vrot.lane.b32.xlu0 %v515, 2
        %v1366 = vpop.permute.xlu0 %1365
        %1367 = vrot.lane.b32.xlu0 %v514, 2
        %v1368 = vpop.permute.xlu0 %1367
        %1369 = vrot.lane.b32.xlu0 %v516, 2
        %v1370 = vpop.permute.xlu0 %1369
        %v1371 = vsel %vm589, %v1364, %v1368
        %v1372 = vsel %vm589, %v1366, %v1370
        %v1373 = vsel %vm589, %v1368, %v1364
        %v1374 = vsel %vm589, %v1370, %v1366
        %v1375 = vmul.f32 %v594, %v1373
        %v1376 = vmul.f32 %v595, %v1371
        %v1377 = vmul.f32 %v594, %v1374
        %v1378 = vmul.f32 %v595, %v1372
        %s1379 = scalar_lea.vmem %s3, 352
        %v1380 = vld [vmem:[%s1379] sm:$0xff]
        %v1381 = vld [vmem:[%s1379 + $0x8] sm:$0xff]
        %1383 = vset.pattern.permute.xlu0 0
        %1384 = vperm.xlu0 %1383, %v1380
        %v1385 = vpop.permute.xlu0 %1384
        %1388 = vset.pattern.permute.xlu0 0
        %1389 = vperm.xlu0 %1388, %v1381
        %v1390 = vpop.permute.xlu0 %1389
        %v1392 = vmul.f32 %v1385, %v1375
        %v1393 = vmul.f32 %v1385, %v1376
        %v1394 = vmul.f32 %v1390, %v1377
        %v1395 = vmul.f32 %v1390, %v1378
        %v1396 = vadd.f32 %v1359, %v1392
        %v1397 = vadd.f32 %v1360, %v1393
        %v1398 = vadd.f32 %v1361, %v1394
        %v1399 = vadd.f32 %v1362, %v1395
        %1400 = vrot.lane.b32.xlu0 %v513, 1
        %v1401 = vpop.permute.xlu0 %1400
        %1402 = vrot.lane.b32.xlu0 %v515, 1
        %v1403 = vpop.permute.xlu0 %1402
        %1404 = vrot.lane.b32.xlu0 %v514, 1
        %v1405 = vpop.permute.xlu0 %1404
        %1406 = vrot.lane.b32.xlu0 %v516, 1
        %v1407 = vpop.permute.xlu0 %1406
        %v1408 = vsel %vm629, %v1401, %v1405
        %v1409 = vsel %vm629, %v1403, %v1407
        %v1410 = vsel %vm629, %v1405, %v1401
        %v1411 = vsel %vm629, %v1407, %v1403
        %v1412 = vmul.f32 %v634, %v1410
        %v1413 = vmul.f32 %v635, %v1408
        %v1414 = vmul.f32 %v634, %v1411
        %v1415 = vmul.f32 %v635, %v1409
        %s1416 = scalar_lea.vmem %s3, 368
        %v1417 = vld [vmem:[%s1416] sm:$0xff]
        %v1418 = vld [vmem:[%s1416 + $0x8] sm:$0xff]
        %1420 = vset.pattern.permute.xlu0 0
        %1421 = vperm.xlu0 %1420, %v1417
        %v1422 = vpop.permute.xlu0 %1421
        %1425 = vset.pattern.permute.xlu0 0
        %1426 = vperm.xlu0 %1425, %v1418
        %v1427 = vpop.permute.xlu0 %1426
        %v1429 = vmul.f32 %v1422, %v1412
        %v1430 = vmul.f32 %v1422, %v1413
        %v1431 = vmul.f32 %v1427, %v1414
        %v1432 = vmul.f32 %v1427, %v1415
        %v1433 = vadd.f32 %v1396, %v1429
        %v1434 = vadd.f32 %v1397, %v1430
        %v1435 = vadd.f32 %v1398, %v1431
        %v1436 = vadd.f32 %v1399, %v1432
        %s1437 = scalar_lea.vmem %s3, 384
        %v1438 = vld [vmem:[%s1437] sm:$0xff]
        %v1439 = vld [vmem:[%s1437 + $0x8] sm:$0xff]
        %1441 = vset.pattern.permute.xlu0 0
        %1442 = vperm.xlu0 %1441, %v1438
        %v1443 = vpop.permute.xlu0 %1442
        %1446 = vset.pattern.permute.xlu0 0
        %1447 = vperm.xlu0 %1446, %v1439
        %v1448 = vpop.permute.xlu0 %1447
        %v1450 = vmul.f32 %v1443, %v513
        %v1451 = vmul.f32 %v1443, %v514
        %v1452 = vmul.f32 %v1448, %v515
        %v1453 = vmul.f32 %v1448, %v516
        %v1454 = vadd.f32 %v1433, %v1450
        %v1455 = vadd.f32 %v1434, %v1451
        %v1456 = vadd.f32 %v1435, %v1452
        %v1457 = vadd.f32 %v1436, %v1453
        %1458 = vrot.lane.b32.xlu0 %v513, 127
        %v1459 = vpop.permute.xlu0 %1458
        %1460 = vrot.lane.b32.xlu0 %v515, 127
        %v1461 = vpop.permute.xlu0 %1460
        %1462 = vrot.lane.b32.xlu0 %v514, 127
        %v1463 = vpop.permute.xlu0 %1462
        %1464 = vrot.lane.b32.xlu0 %v516, 127
        %v1465 = vpop.permute.xlu0 %1464
        %v1466 = vsel %vm690, %v1459, %v1463
        %v1467 = vsel %vm690, %v1461, %v1465
        %v1468 = vsel %vm690, %v1463, %v1459
        %v1469 = vsel %vm690, %v1465, %v1461
        %v1470 = vmul.f32 %v695, %v1466
        %v1471 = vmul.f32 %v696, %v1468
        %v1472 = vmul.f32 %v695, %v1467
        %v1473 = vmul.f32 %v696, %v1469
        %s1474 = scalar_lea.vmem %s3, 400
        %v1475 = vld [vmem:[%s1474] sm:$0xff]
        %v1476 = vld [vmem:[%s1474 + $0x8] sm:$0xff]
        %1478 = vset.pattern.permute.xlu0 0
        %1479 = vperm.xlu0 %1478, %v1475
        %v1480 = vpop.permute.xlu0 %1479
        %1483 = vset.pattern.permute.xlu0 0
        %1484 = vperm.xlu0 %1483, %v1476
        %v1485 = vpop.permute.xlu0 %1484
        %v1487 = vmul.f32 %v1480, %v1470
        %v1488 = vmul.f32 %v1480, %v1471
        %v1489 = vmul.f32 %v1485, %v1472
        %v1490 = vmul.f32 %v1485, %v1473
        %v1491 = vadd.f32 %v1454, %v1487
        %v1492 = vadd.f32 %v1455, %v1488
        %v1493 = vadd.f32 %v1456, %v1489
        %v1494 = vadd.f32 %v1457, %v1490
        %1495 = vrot.lane.b32.xlu0 %v513, 126
        %v1496 = vpop.permute.xlu0 %1495
        %1497 = vrot.lane.b32.xlu0 %v515, 126
        %v1498 = vpop.permute.xlu0 %1497
        %1499 = vrot.lane.b32.xlu0 %v514, 126
        %v1500 = vpop.permute.xlu0 %1499
        %1501 = vrot.lane.b32.xlu0 %v516, 126
        %v1502 = vpop.permute.xlu0 %1501
        %v1503 = vsel %vm730, %v1496, %v1500
        %v1504 = vsel %vm730, %v1498, %v1502
        %v1505 = vsel %vm730, %v1500, %v1496
        %v1506 = vsel %vm730, %v1502, %v1498
        %v1507 = vmul.f32 %v735, %v1503
        %v1508 = vmul.f32 %v736, %v1505
        %v1509 = vmul.f32 %v735, %v1504
        %v1510 = vmul.f32 %v736, %v1506
        %s1511 = scalar_lea.vmem %s3, 416
        %v1512 = vld [vmem:[%s1511] sm:$0xff]
        %v1513 = vld [vmem:[%s1511 + $0x8] sm:$0xff]
        %1515 = vset.pattern.permute.xlu0 0
        %1516 = vperm.xlu0 %1515, %v1512
        %v1517 = vpop.permute.xlu0 %1516
        %1520 = vset.pattern.permute.xlu0 0
        %1521 = vperm.xlu0 %1520, %v1513
        %v1522 = vpop.permute.xlu0 %1521
        %v1524 = vmul.f32 %v1517, %v1507
        %v1525 = vmul.f32 %v1517, %v1508
        %v1526 = vmul.f32 %v1522, %v1509
        %v1527 = vmul.f32 %v1522, %v1510
        %v1528 = vadd.f32 %v1491, %v1524
        %v1529 = vadd.f32 %v1492, %v1525
        %v1530 = vadd.f32 %v1493, %v1526
        %v1531 = vadd.f32 %v1494, %v1527
        %1532 = vrot.lane.b32.xlu0 %v513, 125
        %v1533 = vpop.permute.xlu0 %1532
        %1534 = vrot.lane.b32.xlu0 %v515, 125
        %v1535 = vpop.permute.xlu0 %1534
        %1536 = vrot.lane.b32.xlu0 %v514, 125
        %v1537 = vpop.permute.xlu0 %1536
        %1538 = vrot.lane.b32.xlu0 %v516, 125
        %v1539 = vpop.permute.xlu0 %1538
        %v1540 = vsel %vm770, %v1533, %v1537
        %v1541 = vsel %vm770, %v1535, %v1539
        %v1542 = vsel %vm770, %v1537, %v1533
        %v1543 = vsel %vm770, %v1539, %v1535
        %v1544 = vmul.f32 %v775, %v1540
        %v1545 = vmul.f32 %v776, %v1542
        %v1546 = vmul.f32 %v775, %v1541
        %v1547 = vmul.f32 %v776, %v1543
        %s1548 = scalar_lea.vmem %s3, 432
        %v1549 = vld [vmem:[%s1548] sm:$0xff]
        %v1550 = vld [vmem:[%s1548 + $0x8] sm:$0xff]
        %1552 = vset.pattern.permute.xlu0 0
        %1553 = vperm.xlu0 %1552, %v1549
        %v1554 = vpop.permute.xlu0 %1553
        %1557 = vset.pattern.permute.xlu0 0
        %1558 = vperm.xlu0 %1557, %v1550
        %v1559 = vpop.permute.xlu0 %1558
        %v1561 = vmul.f32 %v1554, %v1544
        %v1562 = vmul.f32 %v1554, %v1545
        %v1563 = vmul.f32 %v1559, %v1546
        %v1564 = vmul.f32 %v1559, %v1547
        %v1565 = vadd.f32 %v1528, %v1561
        %v1566 = vadd.f32 %v1529, %v1562
        %v1567 = vadd.f32 %v1530, %v1563
        %v1568 = vadd.f32 %v1531, %v1564
        %1569 = vrot.lane.b32.xlu0 %v513, 112
        %v1570 = vpop.permute.xlu0 %1569
        %1571 = vrot.lane.b32.xlu0 %v515, 112
        %v1572 = vpop.permute.xlu0 %1571
        %1573 = vrot.lane.b32.xlu0 %v514, 112
        %v1574 = vpop.permute.xlu0 %1573
        %1575 = vrot.lane.b32.xlu0 %v516, 112
        %v1576 = vpop.permute.xlu0 %1575
        %vm1577 = vcmp.lt.s32.totalorder %v530, 112
        %v1578 = vsel %vm1577, %v1570, %v1574
        %v1579 = vsel %vm1577, %v1572, %v1576
        %v1580 = vsel %vm1577, %v1574, %v1570
        %v1581 = vsel %vm1577, %v1576, %v1572
        %v1582 = vperm.slane %v517, 4
        %v1583 = vperm.slane %v518, 4
        %v1584 = vmul.f32 %v1582, %v1578
        %v1585 = vmul.f32 %v1583, %v1580
        %v1586 = vmul.f32 %v1582, %v1579
        %v1587 = vmul.f32 %v1583, %v1581
        %1588 = vrot.lane.b32.xlu0 %v1584, 3
        %v1589 = vpop.permute.xlu0 %1588
        %1590 = vrot.lane.b32.xlu0 %v1586, 3
        %v1591 = vpop.permute.xlu0 %1590
        %1592 = vrot.lane.b32.xlu0 %v1585, 3
        %v1593 = vpop.permute.xlu0 %1592
        %1594 = vrot.lane.b32.xlu0 %v1587, 3
        %v1595 = vpop.permute.xlu0 %1594
        %v1596 = vsel %vm550, %v1589, %v1593
        %v1597 = vsel %vm550, %v1591, %v1595
        %v1598 = vsel %vm550, %v1593, %v1589
        %v1599 = vsel %vm550, %v1595, %v1591
        %v1600 = vmul.f32 %v555, %v1598
        %v1601 = vmul.f32 %v556, %v1596
        %v1602 = vmul.f32 %v555, %v1599
        %v1603 = vmul.f32 %v556, %v1597
        %s1604 = scalar_lea.vmem %s3, 448
        %v1605 = vld [vmem:[%s1604] sm:$0xff]
        %v1606 = vld [vmem:[%s1604 + $0x8] sm:$0xff]
        %1608 = vset.pattern.permute.xlu0 0
        %1609 = vperm.xlu0 %1608, %v1605
        %v1610 = vpop.permute.xlu0 %1609
        %1613 = vset.pattern.permute.xlu0 0
        %1614 = vperm.xlu0 %1613, %v1606
        %v1615 = vpop.permute.xlu0 %1614
        %v1617 = vmul.f32 %v1610, %v1600
        %v1618 = vmul.f32 %v1610, %v1601
        %v1619 = vmul.f32 %v1615, %v1602
        %v1620 = vmul.f32 %v1615, %v1603
        %v1621 = vadd.f32 %v1565, %v1617
        %v1622 = vadd.f32 %v1566, %v1618
        %v1623 = vadd.f32 %v1567, %v1619
        %v1624 = vadd.f32 %v1568, %v1620
        %1625 = vrot.lane.b32.xlu0 %v1584, 2
        %v1626 = vpop.permute.xlu0 %1625
        %1627 = vrot.lane.b32.xlu0 %v1586, 2
        %v1628 = vpop.permute.xlu0 %1627
        %1629 = vrot.lane.b32.xlu0 %v1585, 2
        %v1630 = vpop.permute.xlu0 %1629
        %1631 = vrot.lane.b32.xlu0 %v1587, 2
        %v1632 = vpop.permute.xlu0 %1631
        %v1633 = vsel %vm589, %v1626, %v1630
        %v1634 = vsel %vm589, %v1628, %v1632
        %v1635 = vsel %vm589, %v1630, %v1626
        %v1636 = vsel %vm589, %v1632, %v1628
        %v1637 = vmul.f32 %v594, %v1635
        %v1638 = vmul.f32 %v595, %v1633
        %v1639 = vmul.f32 %v594, %v1636
        %v1640 = vmul.f32 %v595, %v1634
        %s1641 = scalar_lea.vmem %s3, 464
        %v1642 = vld [vmem:[%s1641] sm:$0xff]
        %v1643 = vld [vmem:[%s1641 + $0x8] sm:$0xff]
        %1645 = vset.pattern.permute.xlu0 0
        %1646 = vperm.xlu0 %1645, %v1642
        %v1647 = vpop.permute.xlu0 %1646
        %1650 = vset.pattern.permute.xlu0 0
        %1651 = vperm.xlu0 %1650, %v1643
        %v1652 = vpop.permute.xlu0 %1651
        %v1654 = vmul.f32 %v1647, %v1637
        %v1655 = vmul.f32 %v1647, %v1638
        %v1656 = vmul.f32 %v1652, %v1639
        %v1657 = vmul.f32 %v1652, %v1640
        %v1658 = vadd.f32 %v1621, %v1654
        %v1659 = vadd.f32 %v1622, %v1655
        %v1660 = vadd.f32 %v1623, %v1656
        %v1661 = vadd.f32 %v1624, %v1657
        %1662 = vrot.lane.b32.xlu0 %v1584, 1
        %v1663 = vpop.permute.xlu0 %1662
        %1664 = vrot.lane.b32.xlu0 %v1586, 1
        %v1665 = vpop.permute.xlu0 %1664
        %1666 = vrot.lane.b32.xlu0 %v1585, 1
        %v1667 = vpop.permute.xlu0 %1666
        %1668 = vrot.lane.b32.xlu0 %v1587, 1
        %v1669 = vpop.permute.xlu0 %1668
        %v1670 = vsel %vm629, %v1663, %v1667
        %v1671 = vsel %vm629, %v1665, %v1669
        %v1672 = vsel %vm629, %v1667, %v1663
        %v1673 = vsel %vm629, %v1669, %v1665
        %v1674 = vmul.f32 %v634, %v1672
        %v1675 = vmul.f32 %v635, %v1670
        %v1676 = vmul.f32 %v634, %v1673
        %v1677 = vmul.f32 %v635, %v1671
        %s1678 = scalar_lea.vmem %s3, 480
        %v1679 = vld [vmem:[%s1678] sm:$0xff]
        %v1680 = vld [vmem:[%s1678 + $0x8] sm:$0xff]
        %1682 = vset.pattern.permute.xlu0 0
        %1683 = vperm.xlu0 %1682, %v1679
        %v1684 = vpop.permute.xlu0 %1683
        %1687 = vset.pattern.permute.xlu0 0
        %1688 = vperm.xlu0 %1687, %v1680
        %v1689 = vpop.permute.xlu0 %1688
        %v1691 = vmul.f32 %v1684, %v1674
        %v1692 = vmul.f32 %v1684, %v1675
        %v1693 = vmul.f32 %v1689, %v1676
        %v1694 = vmul.f32 %v1689, %v1677
        %v1695 = vadd.f32 %v1658, %v1691
        %v1696 = vadd.f32 %v1659, %v1692
        %v1697 = vadd.f32 %v1660, %v1693
        %v1698 = vadd.f32 %v1661, %v1694
        %s1699 = scalar_lea.vmem %s3, 496
        %v1700 = vld [vmem:[%s1699] sm:$0xff]
        %v1701 = vld [vmem:[%s1699 + $0x8] sm:$0xff]
        %1703 = vset.pattern.permute.xlu0 0
        %1704 = vperm.xlu0 %1703, %v1700
        %v1705 = vpop.permute.xlu0 %1704
        %1708 = vset.pattern.permute.xlu0 0
        %1709 = vperm.xlu0 %1708, %v1701
        %v1710 = vpop.permute.xlu0 %1709
        %v1712 = vmul.f32 %v1705, %v1584
        %v1713 = vmul.f32 %v1705, %v1585
        %v1714 = vmul.f32 %v1710, %v1586
        %v1715 = vmul.f32 %v1710, %v1587
        %v1716 = vadd.f32 %v1695, %v1712
        %v1717 = vadd.f32 %v1696, %v1713
        %v1718 = vadd.f32 %v1697, %v1714
        %v1719 = vadd.f32 %v1698, %v1715
        %1720 = vrot.lane.b32.xlu0 %v1584, 127
        %v1721 = vpop.permute.xlu0 %1720
        %1722 = vrot.lane.b32.xlu0 %v1586, 127
        %v1723 = vpop.permute.xlu0 %1722
        %1724 = vrot.lane.b32.xlu0 %v1585, 127
        %v1725 = vpop.permute.xlu0 %1724
        %1726 = vrot.lane.b32.xlu0 %v1587, 127
        %v1727 = vpop.permute.xlu0 %1726
        %v1728 = vsel %vm690, %v1721, %v1725
        %v1729 = vsel %vm690, %v1723, %v1727
        %v1730 = vsel %vm690, %v1725, %v1721
        %v1731 = vsel %vm690, %v1727, %v1723
        %v1732 = vmul.f32 %v695, %v1728
        %v1733 = vmul.f32 %v696, %v1730
        %v1734 = vmul.f32 %v695, %v1729
        %v1735 = vmul.f32 %v696, %v1731
        %s1736 = scalar_lea.vmem %s3, 512
        %v1737 = vld [vmem:[%s1736] sm:$0xff]
        %v1738 = vld [vmem:[%s1736 + $0x8] sm:$0xff]
        %1740 = vset.pattern.permute.xlu0 0
        %1741 = vperm.xlu0 %1740, %v1737
        %v1742 = vpop.permute.xlu0 %1741
        %1745 = vset.pattern.permute.xlu0 0
        %1746 = vperm.xlu0 %1745, %v1738
        %v1747 = vpop.permute.xlu0 %1746
        %v1749 = vmul.f32 %v1742, %v1732
        %v1750 = vmul.f32 %v1742, %v1733
        %v1751 = vmul.f32 %v1747, %v1734
        %v1752 = vmul.f32 %v1747, %v1735
        %v1753 = vadd.f32 %v1716, %v1749
        %v1754 = vadd.f32 %v1717, %v1750
        %v1755 = vadd.f32 %v1718, %v1751
        %v1756 = vadd.f32 %v1719, %v1752
        %1757 = vrot.lane.b32.xlu0 %v1584, 126
        %v1758 = vpop.permute.xlu0 %1757
        %1759 = vrot.lane.b32.xlu0 %v1586, 126
        %v1760 = vpop.permute.xlu0 %1759
        %1761 = vrot.lane.b32.xlu0 %v1585, 126
        %v1762 = vpop.permute.xlu0 %1761
        %1763 = vrot.lane.b32.xlu0 %v1587, 126
        %v1764 = vpop.permute.xlu0 %1763
        %v1765 = vsel %vm730, %v1758, %v1762
        %v1766 = vsel %vm730, %v1760, %v1764
        %v1767 = vsel %vm730, %v1762, %v1758
        %v1768 = vsel %vm730, %v1764, %v1760
        %v1769 = vmul.f32 %v735, %v1765
        %v1770 = vmul.f32 %v736, %v1767
        %v1771 = vmul.f32 %v735, %v1766
        %v1772 = vmul.f32 %v736, %v1768
        %s1773 = scalar_lea.vmem %s3, 528
        %v1774 = vld [vmem:[%s1773] sm:$0xff]
        %v1775 = vld [vmem:[%s1773 + $0x8] sm:$0xff]
        %1777 = vset.pattern.permute.xlu0 0
        %1778 = vperm.xlu0 %1777, %v1774
        %v1779 = vpop.permute.xlu0 %1778
        %1782 = vset.pattern.permute.xlu0 0
        %1783 = vperm.xlu0 %1782, %v1775
        %v1784 = vpop.permute.xlu0 %1783
        %v1786 = vmul.f32 %v1779, %v1769
        %v1787 = vmul.f32 %v1779, %v1770
        %v1788 = vmul.f32 %v1784, %v1771
        %v1789 = vmul.f32 %v1784, %v1772
        %v1790 = vadd.f32 %v1753, %v1786
        %v1791 = vadd.f32 %v1754, %v1787
        %v1792 = vadd.f32 %v1755, %v1788
        %v1793 = vadd.f32 %v1756, %v1789
        %1794 = vrot.lane.b32.xlu0 %v1584, 125
        %v1795 = vpop.permute.xlu0 %1794
        %1796 = vrot.lane.b32.xlu0 %v1586, 125
        %v1797 = vpop.permute.xlu0 %1796
        %1798 = vrot.lane.b32.xlu0 %v1585, 125
        %v1799 = vpop.permute.xlu0 %1798
        %1800 = vrot.lane.b32.xlu0 %v1587, 125
        %v1801 = vpop.permute.xlu0 %1800
        %v1802 = vsel %vm770, %v1795, %v1799
        %v1803 = vsel %vm770, %v1797, %v1801
        %v1804 = vsel %vm770, %v1799, %v1795
        %v1805 = vsel %vm770, %v1801, %v1797
        %v1806 = vmul.f32 %v775, %v1802
        %v1807 = vmul.f32 %v776, %v1804
        %v1808 = vmul.f32 %v775, %v1803
        %v1809 = vmul.f32 %v776, %v1805
        %s1810 = scalar_lea.vmem %s3, 544
        %v1811 = vld [vmem:[%s1810] sm:$0xff]
        %v1812 = vld [vmem:[%s1810 + $0x8] sm:$0xff]
        %1814 = vset.pattern.permute.xlu0 0
        %1815 = vperm.xlu0 %1814, %v1811
        %v1816 = vpop.permute.xlu0 %1815
        %1819 = vset.pattern.permute.xlu0 0
        %1820 = vperm.xlu0 %1819, %v1812
        %v1821 = vpop.permute.xlu0 %1820
        %v1823 = vmul.f32 %v1816, %v1806
        %v1824 = vmul.f32 %v1816, %v1807
        %v1825 = vmul.f32 %v1821, %v1808
        %v1826 = vmul.f32 %v1821, %v1809
        %v1827 = vadd.f32 %v1790, %v1823
        %v1828 = vadd.f32 %v1791, %v1824
        %v1829 = vadd.f32 %v1792, %v1825
        %v1830 = vadd.f32 %v1793, %v1826
        %1831 = vrot.lane.b32.xlu0 %v513, 96
        %v1832 = vpop.permute.xlu0 %1831
        %1833 = vrot.lane.b32.xlu0 %v515, 96
        %v1834 = vpop.permute.xlu0 %1833
        %1835 = vrot.lane.b32.xlu0 %v514, 96
        %v1836 = vpop.permute.xlu0 %1835
        %1837 = vrot.lane.b32.xlu0 %v516, 96
        %v1838 = vpop.permute.xlu0 %1837
        %vm1839 = vcmp.lt.s32.totalorder %v530, 96
        %v1840 = vsel %vm1839, %v1832, %v1836
        %v1841 = vsel %vm1839, %v1834, %v1838
        %v1842 = vsel %vm1839, %v1836, %v1832
        %v1843 = vsel %vm1839, %v1838, %v1834
        %v1844 = vperm.slane %v517, 5
        %v1845 = vperm.slane %v518, 5
        %v1846 = vmul.f32 %v1844, %v1840
        %v1847 = vmul.f32 %v1845, %v1842
        %v1848 = vmul.f32 %v1844, %v1841
        %v1849 = vmul.f32 %v1845, %v1843
        %1850 = vrot.lane.b32.xlu0 %v1846, 3
        %v1851 = vpop.permute.xlu0 %1850
        %1852 = vrot.lane.b32.xlu0 %v1848, 3
        %v1853 = vpop.permute.xlu0 %1852
        %1854 = vrot.lane.b32.xlu0 %v1847, 3
        %v1855 = vpop.permute.xlu0 %1854
        %1856 = vrot.lane.b32.xlu0 %v1849, 3
        %v1857 = vpop.permute.xlu0 %1856
        %v1858 = vsel %vm550, %v1851, %v1855
        %v1859 = vsel %vm550, %v1853, %v1857
        %v1860 = vsel %vm550, %v1855, %v1851
        %v1861 = vsel %vm550, %v1857, %v1853
        %v1862 = vmul.f32 %v555, %v1860
        %v1863 = vmul.f32 %v556, %v1858
        %v1864 = vmul.f32 %v555, %v1861
        %v1865 = vmul.f32 %v556, %v1859
        %s1866 = scalar_lea.vmem %s3, 560
        %v1867 = vld [vmem:[%s1866] sm:$0xff]
        %v1868 = vld [vmem:[%s1866 + $0x8] sm:$0xff]
        %1870 = vset.pattern.permute.xlu0 0
        %1871 = vperm.xlu0 %1870, %v1867
        %v1872 = vpop.permute.xlu0 %1871
        %1875 = vset.pattern.permute.xlu0 0
        %1876 = vperm.xlu0 %1875, %v1868
        %v1877 = vpop.permute.xlu0 %1876
        %v1879 = vmul.f32 %v1872, %v1862
        %v1880 = vmul.f32 %v1872, %v1863
        %v1881 = vmul.f32 %v1877, %v1864
        %v1882 = vmul.f32 %v1877, %v1865
        %v1883 = vadd.f32 %v1827, %v1879
        %v1884 = vadd.f32 %v1828, %v1880
        %v1885 = vadd.f32 %v1829, %v1881
        %v1886 = vadd.f32 %v1830, %v1882
        %1887 = vrot.lane.b32.xlu0 %v1846, 2
        %v1888 = vpop.permute.xlu0 %1887
        %1889 = vrot.lane.b32.xlu0 %v1848, 2
        %v1890 = vpop.permute.xlu0 %1889
        %1891 = vrot.lane.b32.xlu0 %v1847, 2
        %v1892 = vpop.permute.xlu0 %1891
        %1893 = vrot.lane.b32.xlu0 %v1849, 2
        %v1894 = vpop.permute.xlu0 %1893
        %v1895 = vsel %vm589, %v1888, %v1892
        %v1896 = vsel %vm589, %v1890, %v1894
        %v1897 = vsel %vm589, %v1892, %v1888
        %v1898 = vsel %vm589, %v1894, %v1890
        %v1899 = vmul.f32 %v594, %v1897
        %v1900 = vmul.f32 %v595, %v1895
        %v1901 = vmul.f32 %v594, %v1898
        %v1902 = vmul.f32 %v595, %v1896
        %s1903 = scalar_lea.vmem %s3, 576
        %v1904 = vld [vmem:[%s1903] sm:$0xff]
        %v1905 = vld [vmem:[%s1903 + $0x8] sm:$0xff]
        %1907 = vset.pattern.permute.xlu0 0
        %1908 = vperm.xlu0 %1907, %v1904
        %v1909 = vpop.permute.xlu0 %1908
        %1912 = vset.pattern.permute.xlu0 0
        %1913 = vperm.xlu0 %1912, %v1905
        %v1914 = vpop.permute.xlu0 %1913
        %v1916 = vmul.f32 %v1909, %v1899
        %v1917 = vmul.f32 %v1909, %v1900
        %v1918 = vmul.f32 %v1914, %v1901
        %v1919 = vmul.f32 %v1914, %v1902
        %v1920 = vadd.f32 %v1883, %v1916
        %v1921 = vadd.f32 %v1884, %v1917
        %v1922 = vadd.f32 %v1885, %v1918
        %v1923 = vadd.f32 %v1886, %v1919
        %1924 = vrot.lane.b32.xlu0 %v1846, 1
        %v1925 = vpop.permute.xlu0 %1924
        %1926 = vrot.lane.b32.xlu0 %v1848, 1
        %v1927 = vpop.permute.xlu0 %1926
        %1928 = vrot.lane.b32.xlu0 %v1847, 1
        %v1929 = vpop.permute.xlu0 %1928
        %1930 = vrot.lane.b32.xlu0 %v1849, 1
        %v1931 = vpop.permute.xlu0 %1930
        %v1932 = vsel %vm629, %v1925, %v1929
        %v1933 = vsel %vm629, %v1927, %v1931
        %v1934 = vsel %vm629, %v1929, %v1925
        %v1935 = vsel %vm629, %v1931, %v1927
        %v1936 = vmul.f32 %v634, %v1934
        %v1937 = vmul.f32 %v635, %v1932
        %v1938 = vmul.f32 %v634, %v1935
        %v1939 = vmul.f32 %v635, %v1933
        %s1940 = scalar_lea.vmem %s3, 592
        %v1941 = vld [vmem:[%s1940] sm:$0xff]
        %v1942 = vld [vmem:[%s1940 + $0x8] sm:$0xff]
        %1944 = vset.pattern.permute.xlu0 0
        %1945 = vperm.xlu0 %1944, %v1941
        %v1946 = vpop.permute.xlu0 %1945
        %1949 = vset.pattern.permute.xlu0 0
        %1950 = vperm.xlu0 %1949, %v1942
        %v1951 = vpop.permute.xlu0 %1950
        %v1953 = vmul.f32 %v1946, %v1936
        %v1954 = vmul.f32 %v1946, %v1937
        %v1955 = vmul.f32 %v1951, %v1938
        %v1956 = vmul.f32 %v1951, %v1939
        %v1957 = vadd.f32 %v1920, %v1953
        %v1958 = vadd.f32 %v1921, %v1954
        %v1959 = vadd.f32 %v1922, %v1955
        %v1960 = vadd.f32 %v1923, %v1956
        %s1961 = scalar_lea.vmem %s3, 608
        %v1962 = vld [vmem:[%s1961] sm:$0xff]
        %v1963 = vld [vmem:[%s1961 + $0x8] sm:$0xff]
        %1965 = vset.pattern.permute.xlu0 0
        %1966 = vperm.xlu0 %1965, %v1962
        %v1967 = vpop.permute.xlu0 %1966
        %1970 = vset.pattern.permute.xlu0 0
        %1971 = vperm.xlu0 %1970, %v1963
        %v1972 = vpop.permute.xlu0 %1971
        %v1974 = vmul.f32 %v1967, %v1846
        %v1975 = vmul.f32 %v1967, %v1847
        %v1976 = vmul.f32 %v1972, %v1848
        %v1977 = vmul.f32 %v1972, %v1849
        %v1978 = vadd.f32 %v1957, %v1974
        %v1979 = vadd.f32 %v1958, %v1975
        %v1980 = vadd.f32 %v1959, %v1976
        %v1981 = vadd.f32 %v1960, %v1977
        %1982 = vrot.lane.b32.xlu0 %v1846, 127
        %v1983 = vpop.permute.xlu0 %1982
        %1984 = vrot.lane.b32.xlu0 %v1848, 127
        %v1985 = vpop.permute.xlu0 %1984
        %1986 = vrot.lane.b32.xlu0 %v1847, 127
        %v1987 = vpop.permute.xlu0 %1986
        %1988 = vrot.lane.b32.xlu0 %v1849, 127
        %v1989 = vpop.permute.xlu0 %1988
        %v1990 = vsel %vm690, %v1983, %v1987
        %v1991 = vsel %vm690, %v1985, %v1989
        %v1992 = vsel %vm690, %v1987, %v1983
        %v1993 = vsel %vm690, %v1989, %v1985
        %v1994 = vmul.f32 %v695, %v1990
        %v1995 = vmul.f32 %v696, %v1992
        %v1996 = vmul.f32 %v695, %v1991
        %v1997 = vmul.f32 %v696, %v1993
        %s1998 = scalar_lea.vmem %s3, 624
        %v1999 = vld [vmem:[%s1998] sm:$0xff]
        %v2000 = vld [vmem:[%s1998 + $0x8] sm:$0xff]
        %2002 = vset.pattern.permute.xlu0 0
        %2003 = vperm.xlu0 %2002, %v1999
        %v2004 = vpop.permute.xlu0 %2003
        %2007 = vset.pattern.permute.xlu0 0
        %2008 = vperm.xlu0 %2007, %v2000
        %v2009 = vpop.permute.xlu0 %2008
        %v2011 = vmul.f32 %v2004, %v1994
        %v2012 = vmul.f32 %v2004, %v1995
        %v2013 = vmul.f32 %v2009, %v1996
        %v2014 = vmul.f32 %v2009, %v1997
        %v2015 = vadd.f32 %v1978, %v2011
        %v2016 = vadd.f32 %v1979, %v2012
        %v2017 = vadd.f32 %v1980, %v2013
        %v2018 = vadd.f32 %v1981, %v2014
        %2019 = vrot.lane.b32.xlu0 %v1846, 126
        %v2020 = vpop.permute.xlu0 %2019
        %2021 = vrot.lane.b32.xlu0 %v1848, 126
        %v2022 = vpop.permute.xlu0 %2021
        %2023 = vrot.lane.b32.xlu0 %v1847, 126
        %v2024 = vpop.permute.xlu0 %2023
        %2025 = vrot.lane.b32.xlu0 %v1849, 126
        %v2026 = vpop.permute.xlu0 %2025
        %v2027 = vsel %vm730, %v2020, %v2024
        %v2028 = vsel %vm730, %v2022, %v2026
        %v2029 = vsel %vm730, %v2024, %v2020
        %v2030 = vsel %vm730, %v2026, %v2022
        %v2031 = vmul.f32 %v735, %v2027
        %v2032 = vmul.f32 %v736, %v2029
        %v2033 = vmul.f32 %v735, %v2028
        %v2034 = vmul.f32 %v736, %v2030
        %s2035 = scalar_lea.vmem %s3, 640
        %v2036 = vld [vmem:[%s2035] sm:$0xff]
        %v2037 = vld [vmem:[%s2035 + $0x8] sm:$0xff]
        %2039 = vset.pattern.permute.xlu0 0
        %2040 = vperm.xlu0 %2039, %v2036
        %v2041 = vpop.permute.xlu0 %2040
        %2044 = vset.pattern.permute.xlu0 0
        %2045 = vperm.xlu0 %2044, %v2037
        %v2046 = vpop.permute.xlu0 %2045
        %v2048 = vmul.f32 %v2041, %v2031
        %v2049 = vmul.f32 %v2041, %v2032
        %v2050 = vmul.f32 %v2046, %v2033
        %v2051 = vmul.f32 %v2046, %v2034
        %v2052 = vadd.f32 %v2015, %v2048
        %v2053 = vadd.f32 %v2016, %v2049
        %v2054 = vadd.f32 %v2017, %v2050
        %v2055 = vadd.f32 %v2018, %v2051
        %2056 = vrot.lane.b32.xlu0 %v1846, 125
        %v2057 = vpop.permute.xlu0 %2056
        %2058 = vrot.lane.b32.xlu0 %v1848, 125
        %v2059 = vpop.permute.xlu0 %2058
        %2060 = vrot.lane.b32.xlu0 %v1847, 125
        %v2061 = vpop.permute.xlu0 %2060
        %2062 = vrot.lane.b32.xlu0 %v1849, 125
        %v2063 = vpop.permute.xlu0 %2062
        %v2064 = vsel %vm770, %v2057, %v2061
        %v2065 = vsel %vm770, %v2059, %v2063
        %v2066 = vsel %vm770, %v2061, %v2057
        %v2067 = vsel %vm770, %v2063, %v2059
        %v2068 = vmul.f32 %v775, %v2064
        %v2069 = vmul.f32 %v776, %v2066
        %v2070 = vmul.f32 %v775, %v2065
        %v2071 = vmul.f32 %v776, %v2067
        %s2072 = scalar_lea.vmem %s3, 656
        %v2073 = vld [vmem:[%s2072] sm:$0xff]
        %v2074 = vld [vmem:[%s2072 + $0x8] sm:$0xff]
        %2076 = vset.pattern.permute.xlu0 0
        %2077 = vperm.xlu0 %2076, %v2073
        %v2078 = vpop.permute.xlu0 %2077
        %2081 = vset.pattern.permute.xlu0 0
        %2082 = vperm.xlu0 %2081, %v2074
        %v2083 = vpop.permute.xlu0 %2082
        %v2085 = vmul.f32 %v2078, %v2068
        %v2086 = vmul.f32 %v2078, %v2069
        %v2087 = vmul.f32 %v2083, %v2070
        %v2088 = vmul.f32 %v2083, %v2071
        %v2089 = vadd.f32 %v2052, %v2085
        %v2090 = vadd.f32 %v2053, %v2086
        %v2091 = vadd.f32 %v2054, %v2087
        %v2092 = vadd.f32 %v2055, %v2088
        %2093 = vrot.lane.b32.xlu0 %v513, 80
        %v2094 = vpop.permute.xlu0 %2093
        %2095 = vrot.lane.b32.xlu0 %v515, 80
        %v2096 = vpop.permute.xlu0 %2095
        %2097 = vrot.lane.b32.xlu0 %v514, 80
        %v2098 = vpop.permute.xlu0 %2097
        %2099 = vrot.lane.b32.xlu0 %v516, 80
        %v2100 = vpop.permute.xlu0 %2099
        %vm2101 = vcmp.lt.s32.totalorder %v530, 80
        %v2102 = vsel %vm2101, %v2094, %v2098
        %v2103 = vsel %vm2101, %v2096, %v2100
        %v2104 = vsel %vm2101, %v2098, %v2094
        %v2105 = vsel %vm2101, %v2100, %v2096
        %v2106 = vperm.slane %v517, 6
        %v2107 = vperm.slane %v518, 6
        %v2108 = vmul.f32 %v2106, %v2102
        %v2109 = vmul.f32 %v2107, %v2104
        %v2110 = vmul.f32 %v2106, %v2103
        %v2111 = vmul.f32 %v2107, %v2105
        %2112 = vrot.lane.b32.xlu0 %v2108, 3
        %v2113 = vpop.permute.xlu0 %2112
        %2114 = vrot.lane.b32.xlu0 %v2110, 3
        %v2115 = vpop.permute.xlu0 %2114
        %2116 = vrot.lane.b32.xlu0 %v2109, 3
        %v2117 = vpop.permute.xlu0 %2116
        %2118 = vrot.lane.b32.xlu0 %v2111, 3
        %v2119 = vpop.permute.xlu0 %2118
        %v2120 = vsel %vm550, %v2113, %v2117
        %v2121 = vsel %vm550, %v2115, %v2119
        %v2122 = vsel %vm550, %v2117, %v2113
        %v2123 = vsel %vm550, %v2119, %v2115
        %v2124 = vmul.f32 %v555, %v2122
        %v2125 = vmul.f32 %v556, %v2120
        %v2126 = vmul.f32 %v555, %v2123
        %v2127 = vmul.f32 %v556, %v2121
        %s2128 = scalar_lea.vmem %s3, 672
        %v2129 = vld [vmem:[%s2128] sm:$0xff]
        %v2130 = vld [vmem:[%s2128 + $0x8] sm:$0xff]
        %2132 = vset.pattern.permute.xlu0 0
        %2133 = vperm.xlu0 %2132, %v2129
        %v2134 = vpop.permute.xlu0 %2133
        %2137 = vset.pattern.permute.xlu0 0
        %2138 = vperm.xlu0 %2137, %v2130
        %v2139 = vpop.permute.xlu0 %2138
        %v2141 = vmul.f32 %v2134, %v2124
        %v2142 = vmul.f32 %v2134, %v2125
        %v2143 = vmul.f32 %v2139, %v2126
        %v2144 = vmul.f32 %v2139, %v2127
        %v2145 = vadd.f32 %v2089, %v2141
        %v2146 = vadd.f32 %v2090, %v2142
        %v2147 = vadd.f32 %v2091, %v2143
        %v2148 = vadd.f32 %v2092, %v2144
        %2149 = vrot.lane.b32.xlu0 %v2108, 2
        %v2150 = vpop.permute.xlu0 %2149
        %2151 = vrot.lane.b32.xlu0 %v2110, 2
        %v2152 = vpop.permute.xlu0 %2151
        %2153 = vrot.lane.b32.xlu0 %v2109, 2
        %v2154 = vpop.permute.xlu0 %2153
        %2155 = vrot.lane.b32.xlu0 %v2111, 2
        %v2156 = vpop.permute.xlu0 %2155
        %v2157 = vsel %vm589, %v2150, %v2154
        %v2158 = vsel %vm589, %v2152, %v2156
        %v2159 = vsel %vm589, %v2154, %v2150
        %v2160 = vsel %vm589, %v2156, %v2152
        %v2161 = vmul.f32 %v594, %v2159
        %v2162 = vmul.f32 %v595, %v2157
        %v2163 = vmul.f32 %v594, %v2160
        %v2164 = vmul.f32 %v595, %v2158
        %s2165 = scalar_lea.vmem %s3, 688
        %v2166 = vld [vmem:[%s2165] sm:$0xff]
        %v2167 = vld [vmem:[%s2165 + $0x8] sm:$0xff]
        %2169 = vset.pattern.permute.xlu0 0
        %2170 = vperm.xlu0 %2169, %v2166
        %v2171 = vpop.permute.xlu0 %2170
        %2174 = vset.pattern.permute.xlu0 0
        %2175 = vperm.xlu0 %2174, %v2167
        %v2176 = vpop.permute.xlu0 %2175
        %v2178 = vmul.f32 %v2171, %v2161
        %v2179 = vmul.f32 %v2171, %v2162
        %v2180 = vmul.f32 %v2176, %v2163
        %v2181 = vmul.f32 %v2176, %v2164
        %v2182 = vadd.f32 %v2145, %v2178
        %v2183 = vadd.f32 %v2146, %v2179
        %v2184 = vadd.f32 %v2147, %v2180
        %v2185 = vadd.f32 %v2148, %v2181
        %2186 = vrot.lane.b32.xlu0 %v2108, 1
        %v2187 = vpop.permute.xlu0 %2186
        %2188 = vrot.lane.b32.xlu0 %v2110, 1
        %v2189 = vpop.permute.xlu0 %2188
        %2190 = vrot.lane.b32.xlu0 %v2109, 1
        %v2191 = vpop.permute.xlu0 %2190
        %2192 = vrot.lane.b32.xlu0 %v2111, 1
        %v2193 = vpop.permute.xlu0 %2192
        %v2194 = vsel %vm629, %v2187, %v2191
        %v2195 = vsel %vm629, %v2189, %v2193
        %v2196 = vsel %vm629, %v2191, %v2187
        %v2197 = vsel %vm629, %v2193, %v2189
        %v2198 = vmul.f32 %v634, %v2196
        %v2199 = vmul.f32 %v635, %v2194
        %v2200 = vmul.f32 %v634, %v2197
        %v2201 = vmul.f32 %v635, %v2195
        %s2202 = scalar_lea.vmem %s3, 704
        %v2203 = vld [vmem:[%s2202] sm:$0xff]
        %v2204 = vld [vmem:[%s2202 + $0x8] sm:$0xff]
        %2206 = vset.pattern.permute.xlu0 0
        %2207 = vperm.xlu0 %2206, %v2203
        %v2208 = vpop.permute.xlu0 %2207
        %2211 = vset.pattern.permute.xlu0 0
        %2212 = vperm.xlu0 %2211, %v2204
        %v2213 = vpop.permute.xlu0 %2212
        %v2215 = vmul.f32 %v2208, %v2198
        %v2216 = vmul.f32 %v2208, %v2199
        %v2217 = vmul.f32 %v2213, %v2200
        %v2218 = vmul.f32 %v2213, %v2201
        %v2219 = vadd.f32 %v2182, %v2215
        %v2220 = vadd.f32 %v2183, %v2216
        %v2221 = vadd.f32 %v2184, %v2217
        %v2222 = vadd.f32 %v2185, %v2218
        %s2223 = scalar_lea.vmem %s3, 720
        %v2224 = vld [vmem:[%s2223] sm:$0xff]
        %v2225 = vld [vmem:[%s2223 + $0x8] sm:$0xff]
        %2227 = vset.pattern.permute.xlu0 0
        %2228 = vperm.xlu0 %2227, %v2224
        %v2229 = vpop.permute.xlu0 %2228
        %2232 = vset.pattern.permute.xlu0 0
        %2233 = vperm.xlu0 %2232, %v2225
        %v2234 = vpop.permute.xlu0 %2233
        %v2236 = vmul.f32 %v2229, %v2108
        %v2237 = vmul.f32 %v2229, %v2109
        %v2238 = vmul.f32 %v2234, %v2110
        %v2239 = vmul.f32 %v2234, %v2111
        %v2240 = vadd.f32 %v2219, %v2236
        %v2241 = vadd.f32 %v2220, %v2237
        %v2242 = vadd.f32 %v2221, %v2238
        %v2243 = vadd.f32 %v2222, %v2239
        %2244 = vrot.lane.b32.xlu0 %v2108, 127
        %v2245 = vpop.permute.xlu0 %2244
        %2246 = vrot.lane.b32.xlu0 %v2110, 127
        %v2247 = vpop.permute.xlu0 %2246
        %2248 = vrot.lane.b32.xlu0 %v2109, 127
        %v2249 = vpop.permute.xlu0 %2248
        %2250 = vrot.lane.b32.xlu0 %v2111, 127
        %v2251 = vpop.permute.xlu0 %2250
        %v2252 = vsel %vm690, %v2245, %v2249
        %v2253 = vsel %vm690, %v2247, %v2251
        %v2254 = vsel %vm690, %v2249, %v2245
        %v2255 = vsel %vm690, %v2251, %v2247
        %v2256 = vmul.f32 %v695, %v2252
        %v2257 = vmul.f32 %v696, %v2254
        %v2258 = vmul.f32 %v695, %v2253
        %v2259 = vmul.f32 %v696, %v2255
        %s2260 = scalar_lea.vmem %s3, 736
        %v2261 = vld [vmem:[%s2260] sm:$0xff]
        %v2262 = vld [vmem:[%s2260 + $0x8] sm:$0xff]
        %2264 = vset.pattern.permute.xlu0 0
        %2265 = vperm.xlu0 %2264, %v2261
        %v2266 = vpop.permute.xlu0 %2265
        %2269 = vset.pattern.permute.xlu0 0
        %2270 = vperm.xlu0 %2269, %v2262
        %v2271 = vpop.permute.xlu0 %2270
        %v2273 = vmul.f32 %v2266, %v2256
        %v2274 = vmul.f32 %v2266, %v2257
        %v2275 = vmul.f32 %v2271, %v2258
        %v2276 = vmul.f32 %v2271, %v2259
        %v2277 = vadd.f32 %v2240, %v2273
        %v2278 = vadd.f32 %v2241, %v2274
        %v2279 = vadd.f32 %v2242, %v2275
        %v2280 = vadd.f32 %v2243, %v2276
        %2281 = vrot.lane.b32.xlu0 %v2108, 126
        %v2282 = vpop.permute.xlu0 %2281
        %2283 = vrot.lane.b32.xlu0 %v2110, 126
        %v2284 = vpop.permute.xlu0 %2283
        %2285 = vrot.lane.b32.xlu0 %v2109, 126
        %v2286 = vpop.permute.xlu0 %2285
        %2287 = vrot.lane.b32.xlu0 %v2111, 126
        %v2288 = vpop.permute.xlu0 %2287
        %v2289 = vsel %vm730, %v2282, %v2286
        %v2290 = vsel %vm730, %v2284, %v2288
        %v2291 = vsel %vm730, %v2286, %v2282
        %v2292 = vsel %vm730, %v2288, %v2284
        %v2293 = vmul.f32 %v735, %v2289
        %v2294 = vmul.f32 %v736, %v2291
        %v2295 = vmul.f32 %v735, %v2290
        %v2296 = vmul.f32 %v736, %v2292
        %s2297 = scalar_lea.vmem %s3, 752
        %v2298 = vld [vmem:[%s2297] sm:$0xff]
        %v2299 = vld [vmem:[%s2297 + $0x8] sm:$0xff]
        %2301 = vset.pattern.permute.xlu0 0
        %2302 = vperm.xlu0 %2301, %v2298
        %v2303 = vpop.permute.xlu0 %2302
        %2306 = vset.pattern.permute.xlu0 0
        %2307 = vperm.xlu0 %2306, %v2299
        %v2308 = vpop.permute.xlu0 %2307
        %v2310 = vmul.f32 %v2303, %v2293
        %v2311 = vmul.f32 %v2303, %v2294
        %v2312 = vmul.f32 %v2308, %v2295
        %v2313 = vmul.f32 %v2308, %v2296
        %v2314 = vadd.f32 %v2277, %v2310
        %v2315 = vadd.f32 %v2278, %v2311
        %v2316 = vadd.f32 %v2279, %v2312
        %v2317 = vadd.f32 %v2280, %v2313
        %2318 = vrot.lane.b32.xlu0 %v2108, 125
        %v2319 = vpop.permute.xlu0 %2318
        %2320 = vrot.lane.b32.xlu0 %v2110, 125
        %v2321 = vpop.permute.xlu0 %2320
        %2322 = vrot.lane.b32.xlu0 %v2109, 125
        %v2323 = vpop.permute.xlu0 %2322
        %2324 = vrot.lane.b32.xlu0 %v2111, 125
        %v2325 = vpop.permute.xlu0 %2324
        %v2326 = vsel %vm770, %v2319, %v2323
        %v2327 = vsel %vm770, %v2321, %v2325
        %v2328 = vsel %vm770, %v2323, %v2319
        %v2329 = vsel %vm770, %v2325, %v2321
        %v2330 = vmul.f32 %v775, %v2326
        %v2331 = vmul.f32 %v776, %v2328
        %v2332 = vmul.f32 %v775, %v2327
        %v2333 = vmul.f32 %v776, %v2329
        %s2334 = scalar_lea.vmem %s3, 768
        %v2335 = vld [vmem:[%s2334] sm:$0xff]
        %v2336 = vld [vmem:[%s2334 + $0x8] sm:$0xff]
        %2338 = vset.pattern.permute.xlu0 0
        %2339 = vperm.xlu0 %2338, %v2335
        %v2340 = vpop.permute.xlu0 %2339
        %2343 = vset.pattern.permute.xlu0 0
        %2344 = vperm.xlu0 %2343, %v2336
        %v2345 = vpop.permute.xlu0 %2344
        %v2347 = vmul.f32 %v2340, %v2330
        %v2348 = vmul.f32 %v2340, %v2331
        %v2349 = vmul.f32 %v2345, %v2332
        %v2350 = vmul.f32 %v2345, %v2333
        %v2351 = vadd.f32 %v2314, %v2347
        %v2352 = vadd.f32 %v2315, %v2348
        %v2353 = vadd.f32 %v2316, %v2349
        %v2354 = vadd.f32 %v2317, %v2350
        %v2355 = vld [vmem:[%s4] sm:$0xff]
        %v2356 = vld [vmem:[%s4 + $0x8] sm:$0xff]
        %2358 = vset.pattern.permute.xlu0 0
        %2359 = vperm.xlu0 %2358, %v2355
        %v2360 = vpop.permute.xlu0 %2359
        %2363 = vset.pattern.permute.xlu0 0
        %2364 = vperm.xlu0 %2363, %v2356
        %v2365 = vpop.permute.xlu0 %2364
        %v2367 = vadd.f32 %v2351, %v2360
        %v2368 = vadd.f32 %v2352, %v2360
        %v2369 = vadd.f32 %v2353, %v2365
        %v2370 = vadd.f32 %v2354, %v2365
        %v2371 = vld [vmem:[%s512] sm:$0xff]
        %v2372 = vld [vmem:[%s512 + $0x8] sm:$0xff]
        %2374 = vset.pattern.permute.xlu0 0
        %2375 = vperm.xlu0 %2374, %v2371
        %v2376 = vpop.permute.xlu0 %2375
        %2379 = vset.pattern.permute.xlu0 0
        %2380 = vperm.xlu0 %2379, %v2372
        %v2381 = vpop.permute.xlu0 %2380
        %v2383 = vadd.f32 %v2367, %v2376
        %v2384 = vadd.f32 %v2368, %v2376
        %v2385 = vadd.f32 %v2369, %v2381
        %v2386 = vadd.f32 %v2370, %v2381
        %v2387 = vld [vmem:[%s5] sm:$0xff]
        %v2388 = vld [vmem:[%s5 + $0x8] sm:$0xff]
        %v2389 = vld [vmem:[%s6] sm:$0xff]
        %v2390 = vld [vmem:[%s6 + $0x8] sm:$0xff]
        %v2391 = vadd.f32 %v2383, %v2384
        %2392 = vadd.xlane.f32.xlu0 %v2391
        %v2393 = vpop.xlane.xlu0 %2392
        %v2394 = vadd.f32 %v2385, %v2386
        %2395 = vadd.xlane.f32.xlu0 %v2394
        %v2396 = vpop.xlane.xlu0 %2395
        %v2397 = vadd.f32 %v2393, %v2396
        %v2398 = vrot.slane %v2397, 4
        %v2399 = vadd.f32 %v2397, %v2398
        %v2400 = vrot.slane %v2399, 2
        %v2401 = vadd.f32 %v2399, %v2400
        %v2402 = vrot.slane %v2401, 1
        %v2403 = vadd.f32 %v2401, %v2402
        %v2404 = vmul.f32 %v2383, %v2383
        %v2405 = vmul.f32 %v2384, %v2384
        %v2406 = vmul.f32 %v2385, %v2385
        %v2407 = vmul.f32 %v2386, %v2386
        %v2408 = vadd.f32 %v2404, %v2405
        %2409 = vadd.xlane.f32.xlu0 %v2408
        %v2410 = vpop.xlane.xlu0 %2409
        %v2411 = vadd.f32 %v2406, %v2407
        %2412 = vadd.xlane.f32.xlu0 %v2411
        %v2413 = vpop.xlane.xlu0 %2412
        %v2414 = vadd.f32 %v2410, %v2413
        %v2415 = vrot.slane %v2414, 4
        %v2416 = vadd.f32 %v2414, %v2415
        %v2417 = vrot.slane %v2416, 2
        %v2418 = vadd.f32 %v2416, %v2417
        %v2419 = vrot.slane %v2418, 1
        %v2420 = vadd.f32 %v2418, %v2419
        %v2421 = vmul.f32 %v2403, 0.00024414063
        %v2422 = vmul.f32 %v2420, 0.00024414063
        %v2423 = vmul.f32 %v2421, %v2421
        %v2424 = vsub.f32 %v2422, %v2423
        %v2425 = vadd.f32 %v2424, 1e-05
        %v2426 = vrsqrt.pop %v2425
        %v2427 = vmul.f32 %v2426, %v2425
        %v2428 = vmul.f32 %v2427, %v2426
        %v2429 = vmul.f32 0.5, %v2428
        %v2430 = vsub.f32 1.5, %v2429
        %v2431 = vmul.f32 %v2426, %v2430
        %vm2432 = vweird.f32 %v2425
        %vm2433 = vweird.f32 %v2426
        %vm2434 = vmor %vm2432, %vm2433
        %v2435 = vsel %vm2434, %v2426, %v2431
        %v2436 = vmul.f32 %v2435, %v2387
        %v2437 = vmul.f32 %v2435, %v2388
        %v2438 = vsub.f32 %v2383, %v2421
        %v2439 = vsub.f32 %v2384, %v2421
        %v2440 = vsub.f32 %v2385, %v2421
        %v2441 = vsub.f32 %v2386, %v2421
        %2443 = vset.pattern.permute.xlu0 0
        %2444 = vperm.xlu0 %2443, %v2436
        %v2445 = vpop.permute.xlu0 %2444
        %2448 = vset.pattern.permute.xlu0 0
        %2449 = vperm.xlu0 %2448, %v2437
        %v2450 = vpop.permute.xlu0 %2449
        %v2452 = vmul.f32 %v2438, %v2445
        %v2453 = vmul.f32 %v2439, %v2445
        %v2454 = vmul.f32 %v2440, %v2450
        %v2455 = vmul.f32 %v2441, %v2450
        %2457 = vset.pattern.permute.xlu0 0
        %2458 = vperm.xlu0 %2457, %v2389
        %v2459 = vpop.permute.xlu0 %2458
        %2462 = vset.pattern.permute.xlu0 0
        %2463 = vperm.xlu0 %2462, %v2390
        %v2464 = vpop.permute.xlu0 %2463
        %v2466 = vadd.f32 %v2452, %v2459
        %v2467 = vadd.f32 %v2453, %v2459
        %v2468 = vadd.f32 %v2454, %v2464
        %v2469 = vadd.f32 %v2455, %v2464
        %2470 = vrot.lane.b32.xlu0 %v2466, 16
        %v2471 = vpop.permute.xlu0 %2470
        %2472 = vrot.lane.b32.xlu0 %v2468, 16
        %v2473 = vpop.permute.xlu0 %2472
        %2474 = vrot.lane.b32.xlu0 %v2467, 16
        %v2475 = vpop.permute.xlu0 %2474
        %2476 = vrot.lane.b32.xlu0 %v2469, 16
        %v2477 = vpop.permute.xlu0 %2476
        %v2478 = vsel %vm1072, %v2471, %v2475
        %v2479 = vsel %vm1072, %v2473, %v2477
        %v2480 = vsel %vm1072, %v2475, %v2471
        %v2481 = vsel %vm1072, %v2477, %v2473
        %v2482 = vmul.f32 %v1077, %v2480
        %v2483 = vmul.f32 %v1078, %v2478
        %v2484 = vmul.f32 %v1077, %v2481
        %v2485 = vmul.f32 %v1078, %v2479
        %2486 = vrot.lane.b32.xlu0 %v2482, 1
        %v2487 = vpop.permute.xlu0 %2486
        %2488 = vrot.lane.b32.xlu0 %v2484, 1
        %v2489 = vpop.permute.xlu0 %2488
        %2490 = vrot.lane.b32.xlu0 %v2483, 1
        %v2491 = vpop.permute.xlu0 %2490
        %2492 = vrot.lane.b32.xlu0 %v2485, 1
        %v2493 = vpop.permute.xlu0 %2492
        %v2494 = vsel %vm629, %v2487, %v2491
        %v2495 = vsel %vm629, %v2489, %v2493
        %v2496 = vsel %vm629, %v2491, %v2487
        %v2497 = vsel %vm629, %v2493, %v2489
        %v2498 = vmul.f32 %v634, %v2496
        %v2499 = vmul.f32 %v635, %v2494
        %v2500 = vmul.f32 %v634, %v2497
        %v2501 = vmul.f32 %v635, %v2495
        %2502 = vst [vmem:[#allocation2] sm:$0xff] %v2498
        %2503 = vst [vmem:[#allocation2 + $0x8] sm:$0xff] %v2499
        %2504 = vst [vmem:[#allocation2 + $0x10] sm:$0xff] %v2500
        %2505 = vst [vmem:[#allocation2 + $0x18] sm:$0xff] %v2501
        %2506 = vst [vmem:[#allocation2 + $0x20] sm:$0xff] %v2482
        %2507 = vst [vmem:[#allocation2 + $0x28] sm:$0xff] %v2483
        %2508 = vst [vmem:[#allocation2 + $0x30] sm:$0xff] %v2484
        %2509 = vst [vmem:[#allocation2 + $0x38] sm:$0xff] %v2485
        %2510 = vrot.lane.b32.xlu0 %v2482, 127
        %v2511 = vpop.permute.xlu0 %2510
        %2512 = vrot.lane.b32.xlu0 %v2484, 127
        %v2513 = vpop.permute.xlu0 %2512
        %2514 = vrot.lane.b32.xlu0 %v2483, 127
        %v2515 = vpop.permute.xlu0 %2514
        %2516 = vrot.lane.b32.xlu0 %v2485, 127
        %v2517 = vpop.permute.xlu0 %2516
        %v2518 = vsel %vm690, %v2511, %v2515
        %v2519 = vsel %vm690, %v2513, %v2517
        %v2520 = vsel %vm690, %v2515, %v2511
        %v2521 = vsel %vm690, %v2517, %v2513
        %v2522 = vmul.f32 %v695, %v2518
        %v2523 = vmul.f32 %v696, %v2520
        %v2524 = vmul.f32 %v695, %v2519
        %v2525 = vmul.f32 %v696, %v2521
        %2526 = vst [vmem:[#allocation2 + $0x40] sm:$0xff] %v2522
        %2527 = vst [vmem:[#allocation2 + $0x48] sm:$0xff] %v2523
        %2528 = vst [vmem:[#allocation2 + $0x50] sm:$0xff] %v2524
        %2529 = vst [vmem:[#allocation2 + $0x58] sm:$0xff] %v2525
        %2530 = vrot.lane.b32.xlu0 %v2466, 1
        %v2531 = vpop.permute.xlu0 %2530
        %2532 = vrot.lane.b32.xlu0 %v2468, 1
        %v2533 = vpop.permute.xlu0 %2532
        %2534 = vrot.lane.b32.xlu0 %v2467, 1
        %v2535 = vpop.permute.xlu0 %2534
        %2536 = vrot.lane.b32.xlu0 %v2469, 1
        %v2537 = vpop.permute.xlu0 %2536
        %v2538 = vsel %vm629, %v2531, %v2535
        %v2539 = vsel %vm629, %v2533, %v2537
        %v2540 = vsel %vm629, %v2535, %v2531
        %v2541 = vsel %vm629, %v2537, %v2533
        %v2542 = vmul.f32 %v634, %v2540
        %v2543 = vmul.f32 %v635, %v2538
        %v2544 = vmul.f32 %v634, %v2541
        %v2545 = vmul.f32 %v635, %v2539
        %2546 = vst [vmem:[#allocation2 + $0x60] sm:$0xff] %v2542
        %2547 = vst [vmem:[#allocation2 + $0x68] sm:$0xff] %v2543
        %2548 = vst [vmem:[#allocation2 + $0x70] sm:$0xff] %v2544
        %2549 = vst [vmem:[#allocation2 + $0x78] sm:$0xff] %v2545
        %2550 = vst [vmem:[#allocation2 + $0x80] sm:$0xff] %v2466
        %2551 = vst [vmem:[#allocation2 + $0x88] sm:$0xff] %v2467
        %2552 = vst [vmem:[#allocation2 + $0x90] sm:$0xff] %v2468
        %2553 = vst [vmem:[#allocation2 + $0x98] sm:$0xff] %v2469
        %2554 = vrot.lane.b32.xlu0 %v2466, 127
        %v2555 = vpop.permute.xlu0 %2554
        %2556 = vrot.lane.b32.xlu0 %v2468, 127
        %v2557 = vpop.permute.xlu0 %2556
        %2558 = vrot.lane.b32.xlu0 %v2467, 127
        %v2559 = vpop.permute.xlu0 %2558
        %2560 = vrot.lane.b32.xlu0 %v2469, 127
        %v2561 = vpop.permute.xlu0 %2560
        %v2562 = vsel %vm690, %v2555, %v2559
        %v2563 = vsel %vm690, %v2557, %v2561
        %v2564 = vsel %vm690, %v2559, %v2555
        %v2565 = vsel %vm690, %v2561, %v2557
        %v2566 = vmul.f32 %v695, %v2562
        %v2567 = vmul.f32 %v696, %v2564
        %v2568 = vmul.f32 %v695, %v2563
        %v2569 = vmul.f32 %v696, %v2565
        %2570 = vst [vmem:[#allocation2 + $0xa0] sm:$0xff] %v2566
        %2571 = vst [vmem:[#allocation2 + $0xa8] sm:$0xff] %v2567
        %2572 = vst [vmem:[#allocation2 + $0xb0] sm:$0xff] %v2568
        %2573 = vst [vmem:[#allocation2 + $0xb8] sm:$0xff] %v2569
        %2574 = vrot.lane.b32.xlu0 %v2466, 112
        %v2575 = vpop.permute.xlu0 %2574
        %2576 = vrot.lane.b32.xlu0 %v2468, 112
        %v2577 = vpop.permute.xlu0 %2576
        %2578 = vrot.lane.b32.xlu0 %v2467, 112
        %v2579 = vpop.permute.xlu0 %2578
        %2580 = vrot.lane.b32.xlu0 %v2469, 112
        %v2581 = vpop.permute.xlu0 %2580
        %v2582 = vsel %vm1577, %v2575, %v2579
        %v2583 = vsel %vm1577, %v2577, %v2581
        %v2584 = vsel %vm1577, %v2579, %v2575
        %v2585 = vsel %vm1577, %v2581, %v2577
        %v2586 = vmul.f32 %v1582, %v2582
        %v2587 = vmul.f32 %v1583, %v2584
        %v2588 = vmul.f32 %v1582, %v2583
        %v2589 = vmul.f32 %v1583, %v2585
        %2590 = vrot.lane.b32.xlu0 %v2586, 1
        %v2591 = vpop.permute.xlu0 %2590
        %2592 = vrot.lane.b32.xlu0 %v2588, 1
        %v2593 = vpop.permute.xlu0 %2592
        %2594 = vrot.lane.b32.xlu0 %v2587, 1
        %v2595 = vpop.permute.xlu0 %2594
        %2596 = vrot.lane.b32.xlu0 %v2589, 1
        %v2597 = vpop.permute.xlu0 %2596
        %v2598 = vsel %vm629, %v2591, %v2595
        %v2599 = vsel %vm629, %v2593, %v2597
        %v2600 = vsel %vm629, %v2595, %v2591
        %v2601 = vsel %vm629, %v2597, %v2593
        %v2602 = vmul.f32 %v634, %v2600
        %v2603 = vmul.f32 %v635, %v2598
        %v2604 = vmul.f32 %v634, %v2601
        %v2605 = vmul.f32 %v635, %v2599
        %2606 = vst [vmem:[#allocation2 + $0xc0] sm:$0xff] %v2602
        %2607 = vst [vmem:[#allocation2 + $0xc8] sm:$0xff] %v2603
        %2608 = vst [vmem:[#allocation2 + $0xd0] sm:$0xff] %v2604
        %2609 = vst [vmem:[#allocation2 + $0xd8] sm:$0xff] %v2605
        %2610 = vst [vmem:[#allocation2 + $0xe0] sm:$0xff] %v2586
        %2611 = vst [vmem:[#allocation2 + $0xe8] sm:$0xff] %v2587
        %2612 = vst [vmem:[#allocation2 + $0xf0] sm:$0xff] %v2588
        %2613 = vst [vmem:[#allocation2 + $0xf8] sm:$0xff] %v2589
        %2614 = vrot.lane.b32.xlu0 %v2586, 127
        %v2615 = vpop.permute.xlu0 %2614
        %2616 = vrot.lane.b32.xlu0 %v2588, 127
        %v2617 = vpop.permute.xlu0 %2616
        %2618 = vrot.lane.b32.xlu0 %v2587, 127
        %v2619 = vpop.permute.xlu0 %2618
        %2620 = vrot.lane.b32.xlu0 %v2589, 127
        %v2621 = vpop.permute.xlu0 %2620
        %v2622 = vsel %vm690, %v2615, %v2619
        %v2623 = vsel %vm690, %v2617, %v2621
        %v2624 = vsel %vm690, %v2619, %v2615
        %v2625 = vsel %vm690, %v2621, %v2617
        %v2626 = vmul.f32 %v695, %v2622
        %v2627 = vmul.f32 %v696, %v2624
        %v2628 = vmul.f32 %v695, %v2623
        %v2629 = vmul.f32 %v696, %v2625
        %2630 = vst [vmem:[#allocation2 + $0x100] sm:$0xff] %v2626
        %2631 = vst [vmem:[#allocation2 + $0x108] sm:$0xff] %v2627
        %2632 = vst [vmem:[#allocation2 + $0x110] sm:$0xff] %v2628
        %2633 = vst [vmem:[#allocation2 + $0x118] sm:$0xff] %v2629
        %v2634 = vld [vmem:[%s7] sm:$0xff]
        %v2635 = vld [vmem:[%s7 + $0x8] sm:$0xff]
        %v2636 = vld [vmem:[%s7 + $0x10] sm:$0xff]
        %v2637 = vld [vmem:[%s7 + $0x18] sm:$0xff]
        %v2638 = vld [vmem:[%s7 + $0x20] sm:$0xff]
        %v2639 = vld [vmem:[%s7 + $0x28] sm:$0xff]
        %v2640 = vld [vmem:[%s7 + $0x30] sm:$0xff]
        %v2641 = vld [vmem:[%s7 + $0x38] sm:$0xff]
        %v2642 = vld [vmem:[%s7 + $0x40] sm:$0xff]
        %v2643 = vld [vmem:[%s7 + $0x48] sm:$0xff]
        %v2644 = vld [vmem:[%s7 + $0x50] sm:$0xff]
        %v2645 = vld [vmem:[%s7 + $0x58] sm:$0xff]
        %v2646 = vld [vmem:[%s7 + $0x60] sm:$0xff]
        %v2647 = vld [vmem:[%s7 + $0x68] sm:$0xff]
        %v2648 = vld [vmem:[%s7 + $0x70] sm:$0xff]
        %v2649 = vld [vmem:[%s7 + $0x78] sm:$0xff]
        %v2650 = vld [vmem:[#allocation2] sm:$0xff]
        %v2651 = vld [vmem:[#allocation2 + $0x8] sm:$0xff]
        %v2652 = vld [vmem:[#allocation2 + $0x10] sm:$0xff]
        %v2653 = vld [vmem:[#allocation2 + $0x18] sm:$0xff]
        %v2654 = vld [vmem:[#allocation2 + $0x20] sm:$0xff]
        %v2655 = vld [vmem:[#allocation2 + $0x28] sm:$0xff]
        %v2656 = vld [vmem:[#allocation2 + $0x30] sm:$0xff]
        %v2657 = vld [vmem:[#allocation2 + $0x38] sm:$0xff]
        %v2658 = vld [vmem:[#allocation2 + $0x40] sm:$0xff]
        %v2659 = vld [vmem:[#allocation2 + $0x48] sm:$0xff]
        %v2660 = vld [vmem:[#allocation2 + $0x50] sm:$0xff]
        %v2661 = vld [vmem:[#allocation2 + $0x58] sm:$0xff]
        %v2662 = vld [vmem:[#allocation2 + $0x60] sm:$0xff]
        %v2663 = vld [vmem:[#allocation2 + $0x68] sm:$0xff]
        %v2664 = vld [vmem:[#allocation2 + $0x70] sm:$0xff]
        %v2665 = vld [vmem:[#allocation2 + $0x78] sm:$0xff]
        %v2666 = vld [vmem:[#allocation2 + $0x80] sm:$0xff]
        %v2667 = vld [vmem:[#allocation2 + $0x88] sm:$0xff]
        %v2668 = vld [vmem:[#allocation2 + $0x90] sm:$0xff]
        %v2669 = vld [vmem:[#allocation2 + $0x98] sm:$0xff]
        %v2670 = vld [vmem:[#allocation2 + $0xa0] sm:$0xff]
        %v2671 = vld [vmem:[#allocation2 + $0xa8] sm:$0xff]
        %v2672 = vld [vmem:[#allocation2 + $0xb0] sm:$0xff]
        %v2673 = vld [vmem:[#allocation2 + $0xb8] sm:$0xff]
        %v2674 = vld [vmem:[#allocation2 + $0xc0] sm:$0xff]
        %v2675 = vld [vmem:[#allocation2 + $0xc8] sm:$0xff]
        %v2676 = vld [vmem:[#allocation2 + $0xd0] sm:$0xff]
        %v2677 = vld [vmem:[#allocation2 + $0xd8] sm:$0xff]
        %v2678 = vld [vmem:[#allocation2 + $0xe0] sm:$0xff]
        %v2679 = vld [vmem:[#allocation2 + $0xe8] sm:$0xff]
        %v2680 = vld [vmem:[#allocation2 + $0xf0] sm:$0xff]
        %v2681 = vld [vmem:[#allocation2 + $0xf8] sm:$0xff]
        %v2682 = vld [vmem:[#allocation2 + $0x100] sm:$0xff]
        %v2683 = vld [vmem:[#allocation2 + $0x108] sm:$0xff]
        %v2684 = vld [vmem:[#allocation2 + $0x110] sm:$0xff]
        %v2685 = vld [vmem:[#allocation2 + $0x118] sm:$0xff]
        %v2686 = vld [vmem:[%s8] sm:$0xff]
        %v2687 = vld [vmem:[%s8 + $0x8] sm:$0xff]
        %v2688 = vld [vmem:[%s8 + $0x10] sm:$0xff]
        %v2689 = vld [vmem:[%s8 + $0x18] sm:$0xff]
        %v2690 = vld [vmem:[%s8 + $0x20] sm:$0xff]
        %v2691 = vld [vmem:[%s8 + $0x28] sm:$0xff]
        %v2692 = vld [vmem:[%s8 + $0x30] sm:$0xff]
        %v2693 = vld [vmem:[%s8 + $0x38] sm:$0xff]
        %2695 = vset.pattern.permute.xlu0 0
        %2696 = vperm.xlu0 %2695, %v2686
        %v2697 = vpop.permute.xlu0 %2696
        %2700 = vset.pattern.permute.xlu0 0
        %2701 = vperm.xlu0 %2700, %v2687
        %v2702 = vpop.permute.xlu0 %2701
        %2705 = vset.pattern.permute.xlu0 0
        %2706 = vperm.xlu0 %2705, %v2688
        %v2707 = vpop.permute.xlu0 %2706
        %2710 = vset.pattern.permute.xlu0 0
        %2711 = vperm.xlu0 %2710, %v2689
        %v2712 = vpop.permute.xlu0 %2711
        %2715 = vset.pattern.permute.xlu0 0
        %2716 = vperm.xlu0 %2715, %v2690
        %v2717 = vpop.permute.xlu0 %2716
        %2720 = vset.pattern.permute.xlu0 0
        %2721 = vperm.xlu0 %2720, %v2691
        %v2722 = vpop.permute.xlu0 %2721
        %2725 = vset.pattern.permute.xlu0 0
        %2726 = vperm.xlu0 %2725, %v2692
        %v2727 = vpop.permute.xlu0 %2726
        %2730 = vset.pattern.permute.xlu0 0
        %2731 = vperm.xlu0 %2730, %v2693
        %v2732 = vpop.permute.xlu0 %2731
        %vm2734 = vcmask 130048
        %v2736 = vsel %vm2734, %v2635, 0
        %v2739 = vsel %vm2734, %v2637, 0
        %v2742 = vsel %vm2734, %v2639, 0
        %v2745 = vsel %vm2734, %v2641, 0
        %v2748 = vsel %vm2734, %v2643, 0
        %v2751 = vsel %vm2734, %v2645, 0
        %v2754 = vsel %vm2734, %v2647, 0
        %v2757 = vsel %vm2734, %v2649, 0
        %2759 = vmatpush.msra.mxu0 %v2680
        %2760 = vmatpush.msra.mxu0 %v2678
        %2761 = vmatpush.msra.mxu0 %v2676
        %2762 = vmatpush.msra.mxu0 %v2674
        %2763 = vmatpush.msra.mxu0 %v2672
        %2764 = vmatpush.msra.mxu0 %v2670
        %2765 = vmatpush.msra.mxu0 %v2668
        %2766 = vmatpush.msra.mxu0 %v2666
        %2767 = vmatpush.msra.mxu0 %v2664
        %2768 = vmatpush.msra.mxu0 %v2662
        %2769 = vmatpush.msra.mxu0 %v2660
        %2770 = vmatpush.msra.mxu0 %v2658
        %2771 = vmatpush.msra.mxu0 %v2656
        %2772 = vmatpush.msra.mxu0 %v2654
        %2773 = vmatpush.msra.mxu0 %v2652
        %2774 = vmatpush.msra.mxu0 %v2650
        %2775 = vmatmul.f32.gmra.mxu0 %v2634
        %v2776 = vpop.f32.mrf.mxu0
        %v2777 = vadd.f32 %v2697, %v2776
        %2778 = vmatmul.f32.gmra.mxu0 %v2636
        %v2779 = vpop.f32.mrf.mxu0
        %v2780 = vadd.f32 %v2702, %v2779
        %2781 = vmatmul.f32.gmra.mxu0 %v2638
        %v2782 = vpop.f32.mrf.mxu0
        %v2783 = vadd.f32 %v2707, %v2782
        %2784 = vmatmul.f32.gmra.mxu0 %v2640
        %v2785 = vpop.f32.mrf.mxu0
        %v2786 = vadd.f32 %v2712, %v2785
        %2787 = vmatmul.f32.gmra.mxu0 %v2642
        %v2788 = vpop.f32.mrf.mxu0
        %v2789 = vadd.f32 %v2717, %v2788
        %2790 = vmatmul.f32.gmra.mxu0 %v2644
        %v2791 = vpop.f32.mrf.mxu0
        %v2792 = vadd.f32 %v2722, %v2791
        %2793 = vmatmul.f32.gmra.mxu0 %v2646
        %v2794 = vpop.f32.mrf.mxu0
        %v2795 = vadd.f32 %v2727, %v2794
        %2796 = vmatmul.f32.gmra.mxu0 %v2648
        %v2797 = vpop.f32.mrf.mxu0
        %v2798 = vadd.f32 %v2732, %v2797
        %2799 = vdwg.mxu0
        %2800 = vmatpush.msra.mxu0 0.0
        %2801 = vmatpush.msra.mxu0 0.0
        %2802 = vmatpush.msra.mxu0 0.0
        %2803 = vmatpush.msra.mxu0 0.0
        %2804 = vmatpush.msra.mxu0 0.0
        %2805 = vmatpush.msra.mxu0 0.0
        %2806 = vmatpush.msra.mxu0 0.0
        %2807 = vmatpush.msra.mxu0 0.0
        %2808 = vmatpush.msra.mxu0 0.0
        %2809 = vmatpush.msra.mxu0 0.0
        %2810 = vmatpush.msra.mxu0 0.0
        %2811 = vmatpush.msra.mxu0 0.0
        %2812 = vmatpush.msra.mxu0 0.0
        %2813 = vmatpush.msra.mxu0 0.0
        %2814 = vmatpush.msra.mxu0 %v2684
        %2815 = vmatpush.msra.mxu0 %v2682
        %2816 = vmatmul.f32.gmra.mxu0 %v2736
        %v2817 = vpop.f32.mrf.mxu0
        %v2818 = vadd.f32 %v2777, %v2817
        %2819 = vmatmul.f32.gmra.mxu0 %v2739
        %v2820 = vpop.f32.mrf.mxu0
        %v2821 = vadd.f32 %v2780, %v2820
        %2822 = vmatmul.f32.gmra.mxu0 %v2742
        %v2823 = vpop.f32.mrf.mxu0
        %v2824 = vadd.f32 %v2783, %v2823
        %2825 = vmatmul.f32.gmra.mxu0 %v2745
        %v2826 = vpop.f32.mrf.mxu0
        %v2827 = vadd.f32 %v2786, %v2826
        %2828 = vmatmul.f32.gmra.mxu0 %v2748
        %v2829 = vpop.f32.mrf.mxu0
        %v2830 = vadd.f32 %v2789, %v2829
        %2831 = vmatmul.f32.gmra.mxu0 %v2751
        %v2832 = vpop.f32.mrf.mxu0
        %v2833 = vadd.f32 %v2792, %v2832
        %2834 = vmatmul.f32.gmra.mxu0 %v2754
        %v2835 = vpop.f32.mrf.mxu0
        %v2836 = vadd.f32 %v2795, %v2835
        %2837 = vmatmul.f32.gmra.mxu0 %v2757
        %v2838 = vpop.f32.mrf.mxu0
        %v2839 = vadd.f32 %v2798, %v2838
        %2840 = vdwg.mxu0
        %2841 = vmatpush.msra.mxu0 %v2681
        %2842 = vmatpush.msra.mxu0 %v2679
        %2843 = vmatpush.msra.mxu0 %v2677
        %2844 = vmatpush.msra.mxu0 %v2675
        %2845 = vmatpush.msra.mxu0 %v2673
        %2846 = vmatpush.msra.mxu0 %v2671
        %2847 = vmatpush.msra.mxu0 %v2669
        %2848 = vmatpush.msra.mxu0 %v2667
        %2849 = vmatpush.msra.mxu0 %v2665
        %2850 = vmatpush.msra.mxu0 %v2663
        %2851 = vmatpush.msra.mxu0 %v2661
        %2852 = vmatpush.msra.mxu0 %v2659
        %2853 = vmatpush.msra.mxu0 %v2657
        %2854 = vmatpush.msra.mxu0 %v2655
        %2855 = vmatpush.msra.mxu0 %v2653
        %2856 = vmatpush.msra.mxu0 %v2651
        %2857 = vmatmul.f32.gmra.mxu0 %v2634
        %v2858 = vpop.f32.mrf.mxu0
        %v2859 = vadd.f32 %v2697, %v2858
        %2860 = vmatmul.f32.gmra.mxu0 %v2636
        %v2861 = vpop.f32.mrf.mxu0
        %v2862 = vadd.f32 %v2702, %v2861
        %2863 = vmatmul.f32.gmra.mxu0 %v2638
        %v2864 = vpop.f32.mrf.mxu0
        %v2865 = vadd.f32 %v2707, %v2864
        %2866 = vmatmul.f32.gmra.mxu0 %v2640
        %v2867 = vpop.f32.mrf.mxu0
        %v2868 = vadd.f32 %v2712, %v2867
        %2869 = vmatmul.f32.gmra.mxu0 %v2642
        %v2870 = vpop.f32.mrf.mxu0
        %v2871 = vadd.f32 %v2717, %v2870
        %2872 = vmatmul.f32.gmra.mxu0 %v2644
        %v2873 = vpop.f32.mrf.mxu0
        %v2874 = vadd.f32 %v2722, %v2873
        %2875 = vmatmul.f32.gmra.mxu0 %v2646
        %v2876 = vpop.f32.mrf.mxu0
        %v2877 = vadd.f32 %v2727, %v2876
        %2878 = vmatmul.f32.gmra.mxu0 %v2648
        %v2879 = vpop.f32.mrf.mxu0
        %v2880 = vadd.f32 %v2732, %v2879
        %2881 = vdwg.mxu0
        %2882 = vmatpush.msra.mxu0 0.0
        %2883 = vmatpush.msra.mxu0 0.0
        %2884 = vmatpush.msra.mxu0 0.0
        %2885 = vmatpush.msra.mxu0 0.0
        %2886 = vmatpush.msra.mxu0 0.0
        %2887 = vmatpush.msra.mxu0 0.0
        %2888 = vmatpush.msra.mxu0 0.0
        %2889 = vmatpush.msra.mxu0 0.0
        %2890 = vmatpush.msra.mxu0 0.0
        %2891 = vmatpush.msra.mxu0 0.0
        %2892 = vmatpush.msra.mxu0 0.0
        %2893 = vmatpush.msra.mxu0 0.0
        %2894 = vmatpush.msra.mxu0 0.0
        %2895 = vmatpush.msra.mxu0 0.0
        %2896 = vmatpush.msra.mxu0 %v2685
        %2897 = vmatpush.msra.mxu0 %v2683
        %2898 = vmatmul.f32.gmra.mxu0 %v2736
        %v2899 = vpop.f32.mrf.mxu0
        %v2900 = vadd.f32 %v2859, %v2899
        %2901 = vmatmul.f32.gmra.mxu0 %v2739
        %v2902 = vpop.f32.mrf.mxu0
        %v2903 = vadd.f32 %v2862, %v2902
        %2904 = vmatmul.f32.gmra.mxu0 %v2742
        %v2905 = vpop.f32.mrf.mxu0
        %v2906 = vadd.f32 %v2865, %v2905
        %2907 = vmatmul.f32.gmra.mxu0 %v2745
        %v2908 = vpop.f32.mrf.mxu0
        %v2909 = vadd.f32 %v2868, %v2908
        %2910 = vmatmul.f32.gmra.mxu0 %v2748
        %v2911 = vpop.f32.mrf.mxu0
        %v2912 = vadd.f32 %v2871, %v2911
        %2913 = vmatmul.f32.gmra.mxu0 %v2751
        %v2914 = vpop.f32.mrf.mxu0
        %v2915 = vadd.f32 %v2874, %v2914
        %2916 = vmatmul.f32.gmra.mxu0 %v2754
        %v2917 = vpop.f32.mrf.mxu0
        %v2918 = vadd.f32 %v2877, %v2917
        %2919 = vmatmul.f32.gmra.mxu0 %v2757
        %v2920 = vpop.f32.mrf.mxu0
        %v2921 = vadd.f32 %v2880, %v2920
        %2922 = vdwg.mxu0
        %v2923 = vmul.f32 %v2818, 0.5
        %v2924 = vmul.f32 %v2900, 0.5
        %v2925 = vmul.f32 %v2821, 0.5
        %v2926 = vmul.f32 %v2903, 0.5
        %v2927 = vmul.f32 %v2824, 0.5
        %v2928 = vmul.f32 %v2906, 0.5
        %v2929 = vmul.f32 %v2827, 0.5
        %v2930 = vmul.f32 %v2909, 0.5
        %v2931 = vmul.f32 %v2830, 0.5
        %v2932 = vmul.f32 %v2912, 0.5
        %v2933 = vmul.f32 %v2833, 0.5
        %v2934 = vmul.f32 %v2915, 0.5
        %v2935 = vmul.f32 %v2836, 0.5
        %v2936 = vmul.f32 %v2918, 0.5
        %v2937 = vmul.f32 %v2839, 0.5
        %v2938 = vmul.f32 %v2921, 0.5
        %v2939 = vmul.f32 %v2818, 0.70710677
        %v2940 = vmul.f32 %v2900, 0.70710677
        %v2941 = vmul.f32 %v2821, 0.70710677
        %v2942 = vmul.f32 %v2903, 0.70710677
        %v2943 = vmul.f32 %v2824, 0.70710677
        %v2944 = vmul.f32 %v2906, 0.70710677
        %v2945 = vmul.f32 %v2827, 0.70710677
        %v2946 = vmul.f32 %v2909, 0.70710677
        %v2947 = vmul.f32 %v2830, 0.70710677
        %v2948 = vmul.f32 %v2912, 0.70710677
        %v2949 = vmul.f32 %v2833, 0.70710677
        %v2950 = vmul.f32 %v2915, 0.70710677
        %v2951 = vmul.f32 %v2836, 0.70710677
        %v2952 = vmul.f32 %v2918, 0.70710677
        %v2953 = vmul.f32 %v2839, 0.70710677
        %v2954 = vmul.f32 %v2921, 0.70710677
        %vm2955 = vcmp.ge.f32.partialorder %v2939, 0.0
        %vm2956 = vcmp.ge.f32.partialorder %v2940, 0.0
        %vm2957 = vcmp.ge.f32.partialorder %v2941, 0.0
        %vm2958 = vcmp.ge.f32.partialorder %v2942, 0.0
        %vm2959 = vcmp.ge.f32.partialorder %v2943, 0.0
        %vm2960 = vcmp.ge.f32.partialorder %v2944, 0.0
        %vm2961 = vcmp.ge.f32.partialorder %v2945, 0.0
        %vm2962 = vcmp.ge.f32.partialorder %v2946, 0.0
        %vm2963 = vcmp.ge.f32.partialorder %v2947, 0.0
        %vm2964 = vcmp.ge.f32.partialorder %v2948, 0.0
        %vm2965 = vcmp.ge.f32.partialorder %v2949, 0.0
        %vm2966 = vcmp.ge.f32.partialorder %v2950, 0.0
        %vm2967 = vcmp.ge.f32.partialorder %v2951, 0.0
        %vm2968 = vcmp.ge.f32.partialorder %v2952, 0.0
        %vm2969 = vcmp.ge.f32.partialorder %v2953, 0.0
        %vm2970 = vcmp.ge.f32.partialorder %v2954, 0.0
        %v2971 = vsel %vm2955, 1.0, -1.0
        %v2972 = vsel %vm2956, 1.0, -1.0
        %v2973 = vsel %vm2957, 1.0, -1.0
        %v2974 = vsel %vm2958, 1.0, -1.0
        %v2975 = vsel %vm2959, 1.0, -1.0
        %v2976 = vsel %vm2960, 1.0, -1.0
        %v2977 = vsel %vm2961, 1.0, -1.0
        %v2978 = vsel %vm2962, 1.0, -1.0
        %v2979 = vsel %vm2963, 1.0, -1.0
        %v2980 = vsel %vm2964, 1.0, -1.0
        %v2981 = vsel %vm2965, 1.0, -1.0
        %v2982 = vsel %vm2966, 1.0, -1.0
        %v2983 = vsel %vm2967, 1.0, -1.0
        %v2984 = vsel %vm2968, 1.0, -1.0
        %v2985 = vsel %vm2969, 1.0, -1.0
        %v2986 = vsel %vm2970, 1.0, -1.0
        %v2987 = vand.u32 2147483647, %v2939
        %v2988 = vand.u32 2147483647, %v2940
        %v2989 = vand.u32 2147483647, %v2941
        %v2990 = vand.u32 2147483647, %v2942
        %v2991 = vand.u32 2147483647, %v2943
        %v2992 = vand.u32 2147483647, %v2944
        %v2993 = vand.u32 2147483647, %v2945
        %v2994 = vand.u32 2147483647, %v2946
        %v2995 = vand.u32 2147483647, %v2947
        %v2996 = vand.u32 2147483647, %v2948
        %v2997 = vand.u32 2147483647, %v2949
        %v2998 = vand.u32 2147483647, %v2950
        %v2999 = vand.u32 2147483647, %v2951
        %v3000 = vand.u32 2147483647, %v2952
        %v3001 = vand.u32 2147483647, %v2953
        %v3002 = vand.u32 2147483647, %v2954
        %v3003 = vmul.f32 %v2987, 0.3275911
        %v3004 = vmul.f32 %v2988, 0.3275911
        %v3005 = vmul.f32 %v2989, 0.3275911
        %v3006 = vmul.f32 %v2990, 0.3275911
        %v3007 = vmul.f32 %v2991, 0.3275911
        %v3008 = vmul.f32 %v2992, 0.3275911
        %v3009 = vmul.f32 %v2993, 0.3275911
        %v3010 = vmul.f32 %v2994, 0.3275911
        %v3011 = vmul.f32 %v2995, 0.3275911
        %v3012 = vmul.f32 %v2996, 0.3275911
        %v3013 = vmul.f32 %v2997, 0.3275911
        %v3014 = vmul.f32 %v2998, 0.3275911
        %v3015 = vmul.f32 %v2999, 0.3275911
        %v3016 = vmul.f32 %v3000, 0.3275911
        %v3017 = vmul.f32 %v3001, 0.3275911
        %v3018 = vmul.f32 %v3002, 0.3275911
        %v3019 = vadd.f32 %v3003, 1.0
        %v3020 = vadd.f32 %v3004, 1.0
        %v3021 = vadd.f32 %v3005, 1.0
        %v3022 = vadd.f32 %v3006, 1.0
        %v3023 = vadd.f32 %v3007, 1.0
        %v3024 = vadd.f32 %v3008, 1.0
        %v3025 = vadd.f32 %v3009, 1.0
        %v3026 = vadd.f32 %v3010, 1.0
        %v3027 = vadd.f32 %v3011, 1.0
        %v3028 = vadd.f32 %v3012, 1.0
        %v3029 = vadd.f32 %v3013, 1.0
        %v3030 = vadd.f32 %v3014, 1.0
        %v3031 = vadd.f32 %v3015, 1.0
        %v3032 = vadd.f32 %v3016, 1.0
        %v3033 = vadd.f32 %v3017, 1.0
        %v3034 = vadd.f32 %v3018, 1.0
        %v3035 = vrcp.pop %v3019
        %v3036 = vmul.f32 %v3019, %v3035
        %v3037 = vsub.f32 1.0, %v3036
        %v3038 = vmul.f32 %v3035, %v3037
        %v3039 = vadd.f32 %v3035, %v3038
        %vm3040 = vweird.f32 %v3019
        %vm3041 = vweird.f32 %v3035
        %vm3042 = vmor %vm3040, %vm3041
        %v3043 = vsel %vm3042, %v3035, %v3039
        %v3044 = vand.u32 2147483647, %v3019
        %vm3045 = vcmp.eq.f32.partialorder %v3044, 8.507059e+37
        %v3046 = vand.u32 %v3019, 2147483648
        %v3047 = vor.u32 1.1754944e-38, %v3046
        %v3048 = vsel %vm3045, %v3047, %v3043
        %v3049 = vmul.f32 1.0, %v3048
        %v3050 = vrcp.pop %v3020
        %v3051 = vmul.f32 %v3020, %v3050
        %v3052 = vsub.f32 1.0, %v3051
        %v3053 = vmul.f32 %v3050, %v3052
        %v3054 = vadd.f32 %v3050, %v3053
        %vm3055 = vweird.f32 %v3020
        %vm3056 = vweird.f32 %v3050
        %vm3057 = vmor %vm3055, %vm3056
        %v3058 = vsel %vm3057, %v3050, %v3054
        %v3059 = vand.u32 2147483647, %v3020
        %vm3060 = vcmp.eq.f32.partialorder %v3059, 8.507059e+37
        %v3061 = vand.u32 %v3020, 2147483648
        %v3062 = vor.u32 1.1754944e-38, %v3061
        %v3063 = vsel %vm3060, %v3062, %v3058
        %v3064 = vmul.f32 1.0, %v3063
        %v3065 = vrcp.pop %v3021
        %v3066 = vmul.f32 %v3021, %v3065
        %v3067 = vsub.f32 1.0, %v3066
        %v3068 = vmul.f32 %v3065, %v3067
        %v3069 = vadd.f32 %v3065, %v3068
        %vm3070 = vweird.f32 %v3021
        %vm3071 = vweird.f32 %v3065
        %vm3072 = vmor %vm3070, %vm3071
        %v3073 = vsel %vm3072, %v3065, %v3069
        %v3074 = vand.u32 2147483647, %v3021
        %vm3075 = vcmp.eq.f32.partialorder %v3074, 8.507059e+37
        %v3076 = vand.u32 %v3021, 2147483648
        %v3077 = vor.u32 1.1754944e-38, %v3076
        %v3078 = vsel %vm3075, %v3077, %v3073
        %v3079 = vmul.f32 1.0, %v3078
        %v3080 = vrcp.pop %v3022
        %v3081 = vmul.f32 %v3022, %v3080
        %v3082 = vsub.f32 1.0, %v3081
        %v3083 = vmul.f32 %v3080, %v3082
        %v3084 = vadd.f32 %v3080, %v3083
        %vm3085 = vweird.f32 %v3022
        %vm3086 = vweird.f32 %v3080
        %vm3087 = vmor %vm3085, %vm3086
        %v3088 = vsel %vm3087, %v3080, %v3084
        %v3089 = vand.u32 2147483647, %v3022
        %vm3090 = vcmp.eq.f32.partialorder %v3089, 8.507059e+37
        %v3091 = vand.u32 %v3022, 2147483648
        %v3092 = vor.u32 1.1754944e-38, %v3091
        %v3093 = vsel %vm3090, %v3092, %v3088
        %v3094 = vmul.f32 1.0, %v3093
        %v3095 = vrcp.pop %v3023
        %v3096 = vmul.f32 %v3023, %v3095
        %v3097 = vsub.f32 1.0, %v3096
        %v3098 = vmul.f32 %v3095, %v3097
        %v3099 = vadd.f32 %v3095, %v3098
        %vm3100 = vweird.f32 %v3023
        %vm3101 = vweird.f32 %v3095
        %vm3102 = vmor %vm3100, %vm3101
        %v3103 = vsel %vm3102, %v3095, %v3099
        %v3104 = vand.u32 2147483647, %v3023
        %vm3105 = vcmp.eq.f32.partialorder %v3104, 8.507059e+37
        %v3106 = vand.u32 %v3023, 2147483648
        %v3107 = vor.u32 1.1754944e-38, %v3106
        %v3108 = vsel %vm3105, %v3107, %v3103
        %v3109 = vmul.f32 1.0, %v3108
        %v3110 = vrcp.pop %v3024
        %v3111 = vmul.f32 %v3024, %v3110
        %v3112 = vsub.f32 1.0, %v3111
        %v3113 = vmul.f32 %v3110, %v3112
        %v3114 = vadd.f32 %v3110, %v3113
        %vm3115 = vweird.f32 %v3024
        %vm3116 = vweird.f32 %v3110
        %vm3117 = vmor %vm3115, %vm3116
        %v3118 = vsel %vm3117, %v3110, %v3114
        %v3119 = vand.u32 2147483647, %v3024
        %vm3120 = vcmp.eq.f32.partialorder %v3119, 8.507059e+37
        %v3121 = vand.u32 %v3024, 2147483648
        %v3122 = vor.u32 1.1754944e-38, %v3121
        %v3123 = vsel %vm3120, %v3122, %v3118
        %v3124 = vmul.f32 1.0, %v3123
        %v3125 = vrcp.pop %v3025
        %v3126 = vmul.f32 %v3025, %v3125
        %v3127 = vsub.f32 1.0, %v3126
        %v3128 = vmul.f32 %v3125, %v3127
        %v3129 = vadd.f32 %v3125, %v3128
        %vm3130 = vweird.f32 %v3025
        %vm3131 = vweird.f32 %v3125
        %vm3132 = vmor %vm3130, %vm3131
        %v3133 = vsel %vm3132, %v3125, %v3129
        %v3134 = vand.u32 2147483647, %v3025
        %vm3135 = vcmp.eq.f32.partialorder %v3134, 8.507059e+37
        %v3136 = vand.u32 %v3025, 2147483648
        %v3137 = vor.u32 1.1754944e-38, %v3136
        %v3138 = vsel %vm3135, %v3137, %v3133
        %v3139 = vmul.f32 1.0, %v3138
        %v3140 = vrcp.pop %v3026
        %v3141 = vmul.f32 %v3026, %v3140
        %v3142 = vsub.f32 1.0, %v3141
        %v3143 = vmul.f32 %v3140, %v3142
        %v3144 = vadd.f32 %v3140, %v3143
        %vm3145 = vweird.f32 %v3026
        %vm3146 = vweird.f32 %v3140
        %vm3147 = vmor %vm3145, %vm3146
        %v3148 = vsel %vm3147, %v3140, %v3144
        %v3149 = vand.u32 2147483647, %v3026
        %vm3150 = vcmp.eq.f32.partialorder %v3149, 8.507059e+37
        %v3151 = vand.u32 %v3026, 2147483648
        %v3152 = vor.u32 1.1754944e-38, %v3151
        %v3153 = vsel %vm3150, %v3152, %v3148
        %v3154 = vmul.f32 1.0, %v3153
        %v3155 = vrcp.pop %v3027
        %v3156 = vmul.f32 %v3027, %v3155
        %v3157 = vsub.f32 1.0, %v3156
        %v3158 = vmul.f32 %v3155, %v3157
        %v3159 = vadd.f32 %v3155, %v3158
        %vm3160 = vweird.f32 %v3027
        %vm3161 = vweird.f32 %v3155
        %vm3162 = vmor %vm3160, %vm3161
        %v3163 = vsel %vm3162, %v3155, %v3159
        %v3164 = vand.u32 2147483647, %v3027
        %vm3165 = vcmp.eq.f32.partialorder %v3164, 8.507059e+37
        %v3166 = vand.u32 %v3027, 2147483648
        %v3167 = vor.u32 1.1754944e-38, %v3166
        %v3168 = vsel %vm3165, %v3167, %v3163
        %v3169 = vmul.f32 1.0, %v3168
        %v3170 = vrcp.pop %v3028
        %v3171 = vmul.f32 %v3028, %v3170
        %v3172 = vsub.f32 1.0, %v3171
        %v3173 = vmul.f32 %v3170, %v3172
        %v3174 = vadd.f32 %v3170, %v3173
        %vm3175 = vweird.f32 %v3028
        %vm3176 = vweird.f32 %v3170
        %vm3177 = vmor %vm3175, %vm3176
        %v3178 = vsel %vm3177, %v3170, %v3174
        %v3179 = vand.u32 2147483647, %v3028
        %vm3180 = vcmp.eq.f32.partialorder %v3179, 8.507059e+37
        %v3181 = vand.u32 %v3028, 2147483648
        %v3182 = vor.u32 1.1754944e-38, %v3181
        %v3183 = vsel %vm3180, %v3182, %v3178
        %v3184 = vmul.f32 1.0, %v3183
        %v3185 = vrcp.pop %v3029
        %v3186 = vmul.f32 %v3029, %v3185
        %v3187 = vsub.f32 1.0, %v3186
        %v3188 = vmul.f32 %v3185, %v3187
        %v3189 = vadd.f32 %v3185, %v3188
        %vm3190 = vweird.f32 %v3029
        %vm3191 = vweird.f32 %v3185
        %vm3192 = vmor %vm3190, %vm3191
        %v3193 = vsel %vm3192, %v3185, %v3189
        %v3194 = vand.u32 2147483647, %v3029
        %vm3195 = vcmp.eq.f32.partialorder %v3194, 8.507059e+37
        %v3196 = vand.u32 %v3029, 2147483648
        %v3197 = vor.u32 1.1754944e-38, %v3196
        %v3198 = vsel %vm3195, %v3197, %v3193
        %v3199 = vmul.f32 1.0, %v3198
        %v3200 = vrcp.pop %v3030
        %v3201 = vmul.f32 %v3030, %v3200
        %v3202 = vsub.f32 1.0, %v3201
        %v3203 = vmul.f32 %v3200, %v3202
        %v3204 = vadd.f32 %v3200, %v3203
        %vm3205 = vweird.f32 %v3030
        %vm3206 = vweird.f32 %v3200
        %vm3207 = vmor %vm3205, %vm3206
        %v3208 = vsel %vm3207, %v3200, %v3204
        %v3209 = vand.u32 2147483647, %v3030
        %vm3210 = vcmp.eq.f32.partialorder %v3209, 8.507059e+37
        %v3211 = vand.u32 %v3030, 2147483648
        %v3212 = vor.u32 1.1754944e-38, %v3211
        %v3213 = vsel %vm3210, %v3212, %v3208
        %v3214 = vmul.f32 1.0, %v3213
        %v3215 = vrcp.pop %v3031
        %v3216 = vmul.f32 %v3031, %v3215
        %v3217 = vsub.f32 1.0, %v3216
        %v3218 = vmul.f32 %v3215, %v3217
        %v3219 = vadd.f32 %v3215, %v3218
        %vm3220 = vweird.f32 %v3031
        %vm3221 = vweird.f32 %v3215
        %vm3222 = vmor %vm3220, %vm3221
        %v3223 = vsel %vm3222, %v3215, %v3219
        %v3224 = vand.u32 2147483647, %v3031
        %vm3225 = vcmp.eq.f32.partialorder %v3224, 8.507059e+37
        %v3226 = vand.u32 %v3031, 2147483648
        %v3227 = vor.u32 1.1754944e-38, %v3226
        %v3228 = vsel %vm3225, %v3227, %v3223
        %v3229 = vmul.f32 1.0, %v3228
        %v3230 = vrcp.pop %v3032
        %v3231 = vmul.f32 %v3032, %v3230
        %v3232 = vsub.f32 1.0, %v3231
        %v3233 = vmul.f32 %v3230, %v3232
        %v3234 = vadd.f32 %v3230, %v3233
        %vm3235 = vweird.f32 %v3032
        %vm3236 = vweird.f32 %v3230
        %vm3237 = vmor %vm3235, %vm3236
        %v3238 = vsel %vm3237, %v3230, %v3234
        %v3239 = vand.u32 2147483647, %v3032
        %vm3240 = vcmp.eq.f32.partialorder %v3239, 8.507059e+37
        %v3241 = vand.u32 %v3032, 2147483648
        %v3242 = vor.u32 1.1754944e-38, %v3241
        %v3243 = vsel %vm3240, %v3242, %v3238
        %v3244 = vmul.f32 1.0, %v3243
        %v3245 = vrcp.pop %v3033
        %v3246 = vmul.f32 %v3033, %v3245
        %v3247 = vsub.f32 1.0, %v3246
        %v3248 = vmul.f32 %v3245, %v3247
        %v3249 = vadd.f32 %v3245, %v3248
        %vm3250 = vweird.f32 %v3033
        %vm3251 = vweird.f32 %v3245
        %vm3252 = vmor %vm3250, %vm3251
        %v3253 = vsel %vm3252, %v3245, %v3249
        %v3254 = vand.u32 2147483647, %v3033
        %vm3255 = vcmp.eq.f32.partialorder %v3254, 8.507059e+37
        %v3256 = vand.u32 %v3033, 2147483648
        %v3257 = vor.u32 1.1754944e-38, %v3256
        %v3258 = vsel %vm3255, %v3257, %v3253
        %v3259 = vmul.f32 1.0, %v3258
        %v3260 = vrcp.pop %v3034
        %v3261 = vmul.f32 %v3034, %v3260
        %v3262 = vsub.f32 1.0, %v3261
        %v3263 = vmul.f32 %v3260, %v3262
        %v3264 = vadd.f32 %v3260, %v3263
        %vm3265 = vweird.f32 %v3034
        %vm3266 = vweird.f32 %v3260
        %vm3267 = vmor %vm3265, %vm3266
        %v3268 = vsel %vm3267, %v3260, %v3264
        %v3269 = vand.u32 2147483647, %v3034
        %vm3270 = vcmp.eq.f32.partialorder %v3269, 8.507059e+37
        %v3271 = vand.u32 %v3034, 2147483648
        %v3272 = vor.u32 1.1754944e-38, %v3271
        %v3273 = vsel %vm3270, %v3272, %v3268
        %v3274 = vmul.f32 1.0, %v3273
        %v3275 = vmul.f32 %v3049, 1.0614054
        %v3276 = vmul.f32 %v3064, 1.0614054
        %v3277 = vmul.f32 %v3079, 1.0614054
        %v3278 = vmul.f32 %v3094, 1.0614054
        %v3279 = vmul.f32 %v3109, 1.0614054
        %v3280 = vmul.f32 %v3124, 1.0614054
        %v3281 = vmul.f32 %v3139, 1.0614054
        %v3282 = vmul.f32 %v3154, 1.0614054
        %v3283 = vmul.f32 %v3169, 1.0614054
        %v3284 = vmul.f32 %v3184, 1.0614054
        %v3285 = vmul.f32 %v3199, 1.0614054
        %v3286 = vmul.f32 %v3214, 1.0614054
        %v3287 = vmul.f32 %v3229, 1.0614054
        %v3288 = vmul.f32 %v3244, 1.0614054
        %v3289 = vmul.f32 %v3259, 1.0614054
        %v3290 = vmul.f32 %v3274, 1.0614054
        %v3291 = vadd.f32 %v3275, -1.4531521
        %v3292 = vadd.f32 %v3276, -1.4531521
        %v3293 = vadd.f32 %v3277, -1.4531521
        %v3294 = vadd.f32 %v3278, -1.4531521
        %v3295 = vadd.f32 %v3279, -1.4531521
        %v3296 = vadd.f32 %v3280, -1.4531521
        %v3297 = vadd.f32 %v3281, -1.4531521
        %v3298 = vadd.f32 %v3282, -1.4531521
        %v3299 = vadd.f32 %v3283, -1.4531521
        %v3300 = vadd.f32 %v3284, -1.4531521
        %v3301 = vadd.f32 %v3285, -1.4531521
        %v3302 = vadd.f32 %v3286, -1.4531521
        %v3303 = vadd.f32 %v3287, -1.4531521
        %v3304 = vadd.f32 %v3288, -1.4531521
        %v3305 = vadd.f32 %v3289, -1.4531521
        %v3306 = vadd.f32 %v3290, -1.4531521
        %v3307 = vmul.f32 %v3291, %v3049
        %v3308 = vmul.f32 %v3292, %v3064
        %v3309 = vmul.f32 %v3293, %v3079
        %v3310 = vmul.f32 %v3294, %v3094
        %v3311 = vmul.f32 %v3295, %v3109
        %v3312 = vmul.f32 %v3296, %v3124
        %v3313 = vmul.f32 %v3297, %v3139
        %v3314 = vmul.f32 %v3298, %v3154
        %v3315 = vmul.f32 %v3299, %v3169
        %v3316 = vmul.f32 %v3300, %v3184
        %v3317 = vmul.f32 %v3301, %v3199
        %v3318 = vmul.f32 %v3302, %v3214
        %v3319 = vmul.f32 %v3303, %v3229
        %v3320 = vmul.f32 %v3304, %v3244
        %v3321 = vmul.f32 %v3305, %v3259
        %v3322 = vmul.f32 %v3306, %v3274
        %v3323 = vadd.f32 %v3307, 1.4214138
        %v3324 = vadd.f32 %v3308, 1.4214138
        %v3325 = vadd.f32 %v3309, 1.4214138
        %v3326 = vadd.f32 %v3310, 1.4214138
        %v3327 = vadd.f32 %v3311, 1.4214138
        %v3328 = vadd.f32 %v3312, 1.4214138
        %v3329 = vadd.f32 %v3313, 1.4214138
        %v3330 = vadd.f32 %v3314, 1.4214138
        %v3331 = vadd.f32 %v3315, 1.4214138
        %v3332 = vadd.f32 %v3316, 1.4214138
        %v3333 = vadd.f32 %v3317, 1.4214138
        %v3334 = vadd.f32 %v3318, 1.4214138
        %v3335 = vadd.f32 %v3319, 1.4214138
        %v3336 = vadd.f32 %v3320, 1.4214138
        %v3337 = vadd.f32 %v3321, 1.4214138
        %v3338 = vadd.f32 %v3322, 1.4214138
        %v3339 = vmul.f32 %v3323, %v3049
        %v3340 = vmul.f32 %v3324, %v3064
        %v3341 = vmul.f32 %v3325, %v3079
        %v3342 = vmul.f32 %v3326, %v3094
        %v3343 = vmul.f32 %v3327, %v3109
        %v3344 = vmul.f32 %v3328, %v3124
        %v3345 = vmul.f32 %v3329, %v3139
        %v3346 = vmul.f32 %v3330, %v3154
        %v3347 = vmul.f32 %v3331, %v3169
        %v3348 = vmul.f32 %v3332, %v3184
        %v3349 = vmul.f32 %v3333, %v3199
        %v3350 = vmul.f32 %v3334, %v3214
        %v3351 = vmul.f32 %v3335, %v3229
        %v3352 = vmul.f32 %v3336, %v3244
        %v3353 = vmul.f32 %v3337, %v3259
        %v3354 = vmul.f32 %v3338, %v3274
        %v3355 = vadd.f32 %v3339, -0.28449672
        %v3356 = vadd.f32 %v3340, -0.28449672
        %v3357 = vadd.f32 %v3341, -0.28449672
        %v3358 = vadd.f32 %v3342, -0.28449672
        %v3359 = vadd.f32 %v3343, -0.28449672
        %v3360 = vadd.f32 %v3344, -0.28449672
        %v3361 = vadd.f32 %v3345, -0.28449672
        %v3362 = vadd.f32 %v3346, -0.28449672
        %v3363 = vadd.f32 %v3347, -0.28449672
        %v3364 = vadd.f32 %v3348, -0.28449672
        %v3365 = vadd.f32 %v3349, -0.28449672
        %v3366 = vadd.f32 %v3350, -0.28449672
        %v3367 = vadd.f32 %v3351, -0.28449672
        %v3368 = vadd.f32 %v3352, -0.28449672
        %v3369 = vadd.f32 %v3353, -0.28449672
        %v3370 = vadd.f32 %v3354, -0.28449672
        %v3371 = vmul.f32 %v3355, %v3049
        %v3372 = vmul.f32 %v3356, %v3064
        %v3373 = vmul.f32 %v3357, %v3079
        %v3374 = vmul.f32 %v3358, %v3094
        %v3375 = vmul.f32 %v3359, %v3109
        %v3376 = vmul.f32 %v3360, %v3124
        %v3377 = vmul.f32 %v3361, %v3139
        %v3378 = vmul.f32 %v3362, %v3154
        %v3379 = vmul.f32 %v3363, %v3169
        %v3380 = vmul.f32 %v3364, %v3184
        %v3381 = vmul.f32 %v3365, %v3199
        %v3382 = vmul.f32 %v3366, %v3214
        %v3383 = vmul.f32 %v3367, %v3229
        %v3384 = vmul.f32 %v3368, %v3244
        %v3385 = vmul.f32 %v3369, %v3259
        %v3386 = vmul.f32 %v3370, %v3274
        %v3387 = vadd.f32 %v3371, 0.2548296
        %v3388 = vadd.f32 %v3372, 0.2548296
        %v3389 = vadd.f32 %v3373, 0.2548296
        %v3390 = vadd.f32 %v3374, 0.2548296
        %v3391 = vadd.f32 %v3375, 0.2548296
        %v3392 = vadd.f32 %v3376, 0.2548296
        %v3393 = vadd.f32 %v3377, 0.2548296
        %v3394 = vadd.f32 %v3378, 0.2548296
        %v3395 = vadd.f32 %v3379, 0.2548296
        %v3396 = vadd.f32 %v3380, 0.2548296
        %v3397 = vadd.f32 %v3381, 0.2548296
        %v3398 = vadd.f32 %v3382, 0.2548296
        %v3399 = vadd.f32 %v3383, 0.2548296
        %v3400 = vadd.f32 %v3384, 0.2548296
        %v3401 = vadd.f32 %v3385, 0.2548296
        %v3402 = vadd.f32 %v3386, 0.2548296
        %v3403 = vmul.f32 %v3387, %v3049
        %v3404 = vmul.f32 %v3388, %v3064
        %v3405 = vmul.f32 %v3389, %v3079
        %v3406 = vmul.f32 %v3390, %v3094
        %v3407 = vmul.f32 %v3391, %v3109
        %v3408 = vmul.f32 %v3392, %v3124
        %v3409 = vmul.f32 %v3393, %v3139
        %v3410 = vmul.f32 %v3394, %v3154
        %v3411 = vmul.f32 %v3395, %v3169
        %v3412 = vmul.f32 %v3396, %v3184
        %v3413 = vmul.f32 %v3397, %v3199
        %v3414 = vmul.f32 %v3398, %v3214
        %v3415 = vmul.f32 %v3399, %v3229
        %v3416 = vmul.f32 %v3400, %v3244
        %v3417 = vmul.f32 %v3401, %v3259
        %v3418 = vmul.f32 %v3402, %v3274
        %v3419 = vsub.f32 0.0, %v2987
        %v3420 = vsub.f32 0.0, %v2988
        %v3421 = vsub.f32 0.0, %v2989
        %v3422 = vsub.f32 0.0, %v2990
        %v3423 = vsub.f32 0.0, %v2991
        %v3424 = vsub.f32 0.0, %v2992
        %v3425 = vsub.f32 0.0, %v2993
        %v3426 = vsub.f32 0.0, %v2994
        %v3427 = vsub.f32 0.0, %v2995
        %v3428 = vsub.f32 0.0, %v2996
        %v3429 = vsub.f32 0.0, %v2997
        %v3430 = vsub.f32 0.0, %v2998
        %v3431 = vsub.f32 0.0, %v2999
        %v3432 = vsub.f32 0.0, %v3000
        %v3433 = vsub.f32 0.0, %v3001
        %v3434 = vsub.f32 0.0, %v3002
        %v3435 = vmul.f32 %v3419, %v2987
        %v3436 = vmul.f32 %v3420, %v2988
        %v3437 = vmul.f32 %v3421, %v2989
        %v3438 = vmul.f32 %v3422, %v2990
        %v3439 = vmul.f32 %v3423, %v2991
        %v3440 = vmul.f32 %v3424, %v2992
        %v3441 = vmul.f32 %v3425, %v2993
        %v3442 = vmul.f32 %v3426, %v2994
        %v3443 = vmul.f32 %v3427, %v2995
        %v3444 = vmul.f32 %v3428, %v2996
        %v3445 = vmul.f32 %v3429, %v2997
        %v3446 = vmul.f32 %v3430, %v2998
        %v3447 = vmul.f32 %v3431, %v2999
        %v3448 = vmul.f32 %v3432, %v3000
        %v3449 = vmul.f32 %v3433, %v3001
        %v3450 = vmul.f32 %v3434, %v3002
        %v3451 = vmul.f32 %v3435, 1.442695
        %v3452 = vpow.pop %v3451
        %v3453 = vmul.f32 %v3436, 1.442695
        %v3454 = vpow.pop %v3453
        %v3455 = vmul.f32 %v3437, 1.442695
        %v3456 = vpow.pop %v3455
        %v3457 = vmul.f32 %v3438, 1.442695
        %v3458 = vpow.pop %v3457
        %v3459 = vmul.f32 %v3439, 1.442695
        %v3460 = vpow.pop %v3459
        %v3461 = vmul.f32 %v3440, 1.442695
        %v3462 = vpow.pop %v3461
        %v3463 = vmul.f32 %v3441, 1.442695
        %v3464 = vpow.pop %v3463
        %v3465 = vmul.f32 %v3442, 1.442695
        %v3466 = vpow.pop %v3465
        %v3467 = vmul.f32 %v3443, 1.442695
        %v3468 = vpow.pop %v3467
        %v3469 = vmul.f32 %v3444, 1.442695
        %v3470 = vpow.pop %v3469
        %v3471 = vmul.f32 %v3445, 1.442695
        %v3472 = vpow.pop %v3471
        %v3473 = vmul.f32 %v3446, 1.442695
        %v3474 = vpow.pop %v3473
        %v3475 = vmul.f32 %v3447, 1.442695
        %v3476 = vpow.pop %v3475
        %v3477 = vmul.f32 %v3448, 1.442695
        %v3478 = vpow.pop %v3477
        %v3479 = vmul.f32 %v3449, 1.442695
        %v3480 = vpow.pop %v3479
        %v3481 = vmul.f32 %v3450, 1.442695
        %v3482 = vpow.pop %v3481
        %v3483 = vmul.f32 %v3403, %v3452
        %v3484 = vmul.f32 %v3404, %v3454
        %v3485 = vmul.f32 %v3405, %v3456
        %v3486 = vmul.f32 %v3406, %v3458
        %v3487 = vmul.f32 %v3407, %v3460
        %v3488 = vmul.f32 %v3408, %v3462
        %v3489 = vmul.f32 %v3409, %v3464
        %v3490 = vmul.f32 %v3410, %v3466
        %v3491 = vmul.f32 %v3411, %v3468
        %v3492 = vmul.f32 %v3412, %v3470
        %v3493 = vmul.f32 %v3413, %v3472
        %v3494 = vmul.f32 %v3414, %v3474
        %v3495 = vmul.f32 %v3415, %v3476
        %v3496 = vmul.f32 %v3416, %v3478
        %v3497 = vmul.f32 %v3417, %v3480
        %v3498 = vmul.f32 %v3418, %v3482
        %v3499 = vsub.f32 1.0, %v3483
        %v3500 = vsub.f32 1.0, %v3484
        %v3501 = vsub.f32 1.0, %v3485
        %v3502 = vsub.f32 1.0, %v3486
        %v3503 = vsub.f32 1.0, %v3487
        %v3504 = vsub.f32 1.0, %v3488
        %v3505 = vsub.f32 1.0, %v3489
        %v3506 = vsub.f32 1.0, %v3490
        %v3507 = vsub.f32 1.0, %v3491
        %v3508 = vsub.f32 1.0, %v3492
        %v3509 = vsub.f32 1.0, %v3493
        %v3510 = vsub.f32 1.0, %v3494
        %v3511 = vsub.f32 1.0, %v3495
        %v3512 = vsub.f32 1.0, %v3496
        %v3513 = vsub.f32 1.0, %v3497
        %v3514 = vsub.f32 1.0, %v3498
        %v3515 = vmul.f32 %v2971, %v3499
        %v3516 = vmul.f32 %v2972, %v3500
        %v3517 = vmul.f32 %v2973, %v3501
        %v3518 = vmul.f32 %v2974, %v3502
        %v3519 = vmul.f32 %v2975, %v3503
        %v3520 = vmul.f32 %v2976, %v3504
        %v3521 = vmul.f32 %v2977, %v3505
        %v3522 = vmul.f32 %v2978, %v3506
        %v3523 = vmul.f32 %v2979, %v3507
        %v3524 = vmul.f32 %v2980, %v3508
        %v3525 = vmul.f32 %v2981, %v3509
        %v3526 = vmul.f32 %v2982, %v3510
        %v3527 = vmul.f32 %v2983, %v3511
        %v3528 = vmul.f32 %v2984, %v3512
        %v3529 = vmul.f32 %v2985, %v3513
        %v3530 = vmul.f32 %v2986, %v3514
        %v3531 = vadd.f32 %v3515, 1.0
        %v3532 = vadd.f32 %v3516, 1.0
        %v3533 = vadd.f32 %v3517, 1.0
        %v3534 = vadd.f32 %v3518, 1.0
        %v3535 = vadd.f32 %v3519, 1.0
        %v3536 = vadd.f32 %v3520, 1.0
        %v3537 = vadd.f32 %v3521, 1.0
        %v3538 = vadd.f32 %v3522, 1.0
        %v3539 = vadd.f32 %v3523, 1.0
        %v3540 = vadd.f32 %v3524, 1.0
        %v3541 = vadd.f32 %v3525, 1.0
        %v3542 = vadd.f32 %v3526, 1.0
        %v3543 = vadd.f32 %v3527, 1.0
        %v3544 = vadd.f32 %v3528, 1.0
        %v3545 = vadd.f32 %v3529, 1.0
        %v3546 = vadd.f32 %v3530, 1.0
        %v3547 = vmul.f32 %v2923, %v3531
        %v3548 = vmul.f32 %v2924, %v3532
        %v3549 = vmul.f32 %v2925, %v3533
        %v3550 = vmul.f32 %v2926, %v3534
        %v3551 = vmul.f32 %v2927, %v3535
        %v3552 = vmul.f32 %v2928, %v3536
        %v3553 = vmul.f32 %v2929, %v3537
        %v3554 = vmul.f32 %v2930, %v3538
        %v3555 = vmul.f32 %v2931, %v3539
        %v3556 = vmul.f32 %v2932, %v3540
        %v3557 = vmul.f32 %v2933, %v3541
        %v3558 = vmul.f32 %v2934, %v3542
        %v3559 = vmul.f32 %v2935, %v3543
        %v3560 = vmul.f32 %v2936, %v3544
        %v3561 = vmul.f32 %v2937, %v3545
        %v3562 = vmul.f32 %v2938, %v3546
        %v3563 = vld [vmem:[%s9] sm:$0xff]
        %v3564 = vld [vmem:[%s9 + $0x8] sm:$0xff]
        %v3565 = vld [vmem:[%s9 + $0x10] sm:$0xff]
        %v3566 = vld [vmem:[%s9 + $0x18] sm:$0xff]
        %v3567 = vld [vmem:[%s9 + $0x20] sm:$0xff]
        %v3568 = vld [vmem:[%s9 + $0x28] sm:$0xff]
        %v3569 = vld [vmem:[%s9 + $0x30] sm:$0xff]
        %v3570 = vld [vmem:[%s9 + $0x38] sm:$0xff]
        %v3571 = vld [vmem:[%s10] sm:$0xff]
        %v3572 = vld [vmem:[%s10 + $0x8] sm:$0xff]
        %v3573 = vld [vmem:[%s10 + $0x10] sm:$0xff]
        %v3574 = vld [vmem:[%s10 + $0x18] sm:$0xff]
        %v3575 = vld [vmem:[%s10 + $0x20] sm:$0xff]
        %v3576 = vld [vmem:[%s10 + $0x28] sm:$0xff]
        %v3577 = vld [vmem:[%s10 + $0x30] sm:$0xff]
        %v3578 = vld [vmem:[%s10 + $0x38] sm:$0xff]
        %v3579 = vadd.f32 %v3547, %v3548
        %3580 = vadd.xlane.f32.xlu0 %v3579
        %v3581 = vpop.xlane.xlu0 %3580
        %v3582 = vadd.f32 %v3549, %v3550
        %3583 = vadd.xlane.f32.xlu0 %v3582
        %v3584 = vpop.xlane.xlu0 %3583
        %v3585 = vadd.f32 %v3551, %v3552
        %3586 = vadd.xlane.f32.xlu0 %v3585
        %v3587 = vpop.xlane.xlu0 %3586
        %v3588 = vadd.f32 %v3553, %v3554
        %3589 = vadd.xlane.f32.xlu0 %v3588
        %v3590 = vpop.xlane.xlu0 %3589
        %v3591 = vadd.f32 %v3555, %v3556
        %3592 = vadd.xlane.f32.xlu0 %v3591
        %v3593 = vpop.xlane.xlu0 %3592
        %v3594 = vadd.f32 %v3557, %v3558
        %3595 = vadd.xlane.f32.xlu0 %v3594
        %v3596 = vpop.xlane.xlu0 %3595
        %v3597 = vadd.f32 %v3559, %v3560
        %3598 = vadd.xlane.f32.xlu0 %v3597
        %v3599 = vpop.xlane.xlu0 %3598
        %v3600 = vadd.f32 %v3561, %v3562
        %3601 = vadd.xlane.f32.xlu0 %v3600
        %v3602 = vpop.xlane.xlu0 %3601
        %v3603 = vadd.f32 %v3581, %v3584
        %v3604 = vadd.f32 %v3603, %v3587
        %v3605 = vadd.f32 %v3604, %v3590
        %v3606 = vadd.f32 %v3605, %v3593
        %v3607 = vadd.f32 %v3606, %v3596
        %v3608 = vadd.f32 %v3607, %v3599
        %v3609 = vadd.f32 %v3608, %v3602
        %v3610 = vrot.slane %v3609, 4
        %v3611 = vadd.f32 %v3609, %v3610
        %v3612 = vrot.slane %v3611, 2
        %v3613 = vadd.f32 %v3611, %v3612
        %v3614 = vrot.slane %v3613, 1
        %v3615 = vadd.f32 %v3613, %v3614
        %v3616 = vmul.f32 %v3547, %v3547
        %v3617 = vmul.f32 %v3548, %v3548
        %v3618 = vmul.f32 %v3549, %v3549
        %v3619 = vmul.f32 %v3550, %v3550
        %v3620 = vmul.f32 %v3551, %v3551
        %v3621 = vmul.f32 %v3552, %v3552
        %v3622 = vmul.f32 %v3553, %v3553
        %v3623 = vmul.f32 %v3554, %v3554
        %v3624 = vmul.f32 %v3555, %v3555
        %v3625 = vmul.f32 %v3556, %v3556
        %v3626 = vmul.f32 %v3557, %v3557
        %v3627 = vmul.f32 %v3558, %v3558
        %v3628 = vmul.f32 %v3559, %v3559
        %v3629 = vmul.f32 %v3560, %v3560
        %v3630 = vmul.f32 %v3561, %v3561
        %v3631 = vmul.f32 %v3562, %v3562
        %v3632 = vadd.f32 %v3616, %v3617
        %3633 = vadd.xlane.f32.xlu0 %v3632
        %v3634 = vpop.xlane.xlu0 %3633
        %v3635 = vadd.f32 %v3618, %v3619
        %3636 = vadd.xlane.f32.xlu0 %v3635
        %v3637 = vpop.xlane.xlu0 %3636
        %v3638 = vadd.f32 %v3620, %v3621
        %3639 = vadd.xlane.f32.xlu0 %v3638
        %v3640 = vpop.xlane.xlu0 %3639
        %v3641 = vadd.f32 %v3622, %v3623
        %3642 = vadd.xlane.f32.xlu0 %v3641
        %v3643 = vpop.xlane.xlu0 %3642
        %v3644 = vadd.f32 %v3624, %v3625
        %3645 = vadd.xlane.f32.xlu0 %v3644
        %v3646 = vpop.xlane.xlu0 %3645
        %v3647 = vadd.f32 %v3626, %v3627
        %3648 = vadd.xlane.f32.xlu0 %v3647
        %v3649 = vpop.xlane.xlu0 %3648
        %v3650 = vadd.f32 %v3628, %v3629
        %3651 = vadd.xlane.f32.xlu0 %v3650
        %v3652 = vpop.xlane.xlu0 %3651
        %v3653 = vadd.f32 %v3630, %v3631
        %3654 = vadd.xlane.f32.xlu0 %v3653
        %v3655 = vpop.xlane.xlu0 %3654
        %v3656 = vadd.f32 %v3634, %v3637
        %v3657 = vadd.f32 %v3656, %v3640
        %v3658 = vadd.f32 %v3657, %v3643
        %v3659 = vadd.f32 %v3658, %v3646
        %v3660 = vadd.f32 %v3659, %v3649
        %v3661 = vadd.f32 %v3660, %v3652
        %v3662 = vadd.f32 %v3661, %v3655
        %v3663 = vrot.slane %v3662, 4
        %v3664 = vadd.f32 %v3662, %v3663
        %v3665 = vrot.slane %v3664, 2
        %v3666 = vadd.f32 %v3664, %v3665
        %v3667 = vrot.slane %v3666, 1
        %v3668 = vadd.f32 %v3666, %v3667
        %v3669 = vmul.f32 %v3615, 6.1035156e-05
        %v3670 = vmul.f32 %v3668, 6.1035156e-05
        %v3671 = vmul.f32 %v3669, %v3669
        %v3672 = vsub.f32 %v3670, %v3671
        %v3673 = vadd.f32 %v3672, 1e-05
        %v3674 = vrsqrt.pop %v3673
        %v3675 = vmul.f32 %v3674, %v3673
        %v3676 = vmul.f32 %v3675, %v3674
        %v3677 = vmul.f32 0.5, %v3676
        %v3678 = vsub.f32 1.5, %v3677
        %v3679 = vmul.f32 %v3674, %v3678
        %vm3680 = vweird.f32 %v3673
        %vm3681 = vweird.f32 %v3674
        %vm3682 = vmor %vm3680, %vm3681
        %v3683 = vsel %vm3682, %v3674, %v3679
        %v3684 = vmul.f32 %v3683, %v3563
        %v3685 = vmul.f32 %v3683, %v3564
        %v3686 = vmul.f32 %v3683, %v3565
        %v3687 = vmul.f32 %v3683, %v3566
        %v3688 = vmul.f32 %v3683, %v3567
        %v3689 = vmul.f32 %v3683, %v3568
        %v3690 = vmul.f32 %v3683, %v3569
        %v3691 = vmul.f32 %v3683, %v3570
        %v3692 = vsub.f32 %v3547, %v3669
        %v3693 = vsub.f32 %v3548, %v3669
        %v3694 = vsub.f32 %v3549, %v3669
        %v3695 = vsub.f32 %v3550, %v3669
        %v3696 = vsub.f32 %v3551, %v3669
        %v3697 = vsub.f32 %v3552, %v3669
        %v3698 = vsub.f32 %v3553, %v3669
        %v3699 = vsub.f32 %v3554, %v3669
        %v3700 = vsub.f32 %v3555, %v3669
        %v3701 = vsub.f32 %v3556, %v3669
        %v3702 = vsub.f32 %v3557, %v3669
        %v3703 = vsub.f32 %v3558, %v3669
        %v3704 = vsub.f32 %v3559, %v3669
        %v3705 = vsub.f32 %v3560, %v3669
        %v3706 = vsub.f32 %v3561, %v3669
        %v3707 = vsub.f32 %v3562, %v3669
        %3709 = vset.pattern.permute.xlu0 0
        %3710 = vperm.xlu0 %3709, %v3684
        %v3711 = vpop.permute.xlu0 %3710
        %3714 = vset.pattern.permute.xlu0 0
        %3715 = vperm.xlu0 %3714, %v3685
        %v3716 = vpop.permute.xlu0 %3715
        %3719 = vset.pattern.permute.xlu0 0
        %3720 = vperm.xlu0 %3719, %v3686
        %v3721 = vpop.permute.xlu0 %3720
        %3724 = vset.pattern.permute.xlu0 0
        %3725 = vperm.xlu0 %3724, %v3687
        %v3726 = vpop.permute.xlu0 %3725
        %3729 = vset.pattern.permute.xlu0 0
        %3730 = vperm.xlu0 %3729, %v3688
        %v3731 = vpop.permute.xlu0 %3730
        %3734 = vset.pattern.permute.xlu0 0
        %3735 = vperm.xlu0 %3734, %v3689
        %v3736 = vpop.permute.xlu0 %3735
        %3739 = vset.pattern.permute.xlu0 0
        %3740 = vperm.xlu0 %3739, %v3690
        %v3741 = vpop.permute.xlu0 %3740
        %3744 = vset.pattern.permute.xlu0 0
        %3745 = vperm.xlu0 %3744, %v3691
        %v3746 = vpop.permute.xlu0 %3745
        %v3748 = vmul.f32 %v3692, %v3711
        %v3749 = vmul.f32 %v3693, %v3711
        %v3750 = vmul.f32 %v3694, %v3716
        %v3751 = vmul.f32 %v3695, %v3716
        %v3752 = vmul.f32 %v3696, %v3721
        %v3753 = vmul.f32 %v3697, %v3721
        %v3754 = vmul.f32 %v3698, %v3726
        %v3755 = vmul.f32 %v3699, %v3726
        %v3756 = vmul.f32 %v3700, %v3731
        %v3757 = vmul.f32 %v3701, %v3731
        %v3758 = vmul.f32 %v3702, %v3736
        %v3759 = vmul.f32 %v3703, %v3736
        %v3760 = vmul.f32 %v3704, %v3741
        %v3761 = vmul.f32 %v3705, %v3741
        %v3762 = vmul.f32 %v3706, %v3746
        %v3763 = vmul.f32 %v3707, %v3746
        %3765 = vset.pattern.permute.xlu0 0
        %3766 = vperm.xlu0 %3765, %v3571
        %v3767 = vpop.permute.xlu0 %3766
        %3770 = vset.pattern.permute.xlu0 0
        %3771 = vperm.xlu0 %3770, %v3572
        %v3772 = vpop.permute.xlu0 %3771
        %3775 = vset.pattern.permute.xlu0 0
        %3776 = vperm.xlu0 %3775, %v3573
        %v3777 = vpop.permute.xlu0 %3776
        %3780 = vset.pattern.permute.xlu0 0
        %3781 = vperm.xlu0 %3780, %v3574
        %v3782 = vpop.permute.xlu0 %3781
        %3785 = vset.pattern.permute.xlu0 0
        %3786 = vperm.xlu0 %3785, %v3575
        %v3787 = vpop.permute.xlu0 %3786
        %3790 = vset.pattern.permute.xlu0 0
        %3791 = vperm.xlu0 %3790, %v3576
        %v3792 = vpop.permute.xlu0 %3791
        %3795 = vset.pattern.permute.xlu0 0
        %3796 = vperm.xlu0 %3795, %v3577
        %v3797 = vpop.permute.xlu0 %3796
        %3800 = vset.pattern.permute.xlu0 0
        %3801 = vperm.xlu0 %3800, %v3578
        %v3802 = vpop.permute.xlu0 %3801
        %v3804 = vadd.f32 %v3748, %v3767
        %v3805 = vadd.f32 %v3749, %v3767
        %v3806 = vadd.f32 %v3750, %v3772
        %v3807 = vadd.f32 %v3751, %v3772
        %v3808 = vadd.f32 %v3752, %v3777
        %v3809 = vadd.f32 %v3753, %v3777
        %v3810 = vadd.f32 %v3754, %v3782
        %v3811 = vadd.f32 %v3755, %v3782
        %v3812 = vadd.f32 %v3756, %v3787
        %v3813 = vadd.f32 %v3757, %v3787
        %v3814 = vadd.f32 %v3758, %v3792
        %v3815 = vadd.f32 %v3759, %v3792
        %v3816 = vadd.f32 %v3760, %v3797
        %v3817 = vadd.f32 %v3761, %v3797
        %v3818 = vadd.f32 %v3762, %v3802
        %v3819 = vadd.f32 %v3763, %v3802
        %3820 = vrot.lane.b32.xlu0 %v3804, 16
        %v3821 = vpop.permute.xlu0 %3820
        %3822 = vrot.lane.b32.xlu0 %v3806, 16
        %v3823 = vpop.permute.xlu0 %3822
        %3824 = vrot.lane.b32.xlu0 %v3808, 16
        %v3825 = vpop.permute.xlu0 %3824
        %3826 = vrot.lane.b32.xlu0 %v3810, 16
        %v3827 = vpop.permute.xlu0 %3826
        %3828 = vrot.lane.b32.xlu0 %v3812, 16
        %v3829 = vpop.permute.xlu0 %3828
        %3830 = vrot.lane.b32.xlu0 %v3814, 16
        %v3831 = vpop.permute.xlu0 %3830
        %3832 = vrot.lane.b32.xlu0 %v3816, 16
        %v3833 = vpop.permute.xlu0 %3832
        %3834 = vrot.lane.b32.xlu0 %v3818, 16
        %v3835 = vpop.permute.xlu0 %3834
        %3836 = vrot.lane.b32.xlu0 %v3805, 16
        %v3837 = vpop.permute.xlu0 %3836
        %3838 = vrot.lane.b32.xlu0 %v3807, 16
        %v3839 = vpop.permute.xlu0 %3838
        %3840 = vrot.lane.b32.xlu0 %v3809, 16
        %v3841 = vpop.permute.xlu0 %3840
        %3842 = vrot.lane.b32.xlu0 %v3811, 16
        %v3843 = vpop.permute.xlu0 %3842
        %3844 = vrot.lane.b32.xlu0 %v3813, 16
        %v3845 = vpop.permute.xlu0 %3844
        %3846 = vrot.lane.b32.xlu0 %v3815, 16
        %v3847 = vpop.permute.xlu0 %3846
        %3848 = vrot.lane.b32.xlu0 %v3817, 16
        %v3849 = vpop.permute.xlu0 %3848
        %3850 = vrot.lane.b32.xlu0 %v3819, 16
        %v3851 = vpop.permute.xlu0 %3850
        %v3852 = vsel %vm1072, %v3821, %v3837
        %v3853 = vsel %vm1072, %v3823, %v3839
        %v3854 = vsel %vm1072, %v3825, %v3841
        %v3855 = vsel %vm1072, %v3827, %v3843
        %v3856 = vsel %vm1072, %v3829, %v3845
        %v3857 = vsel %vm1072, %v3831, %v3847
        %v3858 = vsel %vm1072, %v3833, %v3849
        %v3859 = vsel %vm1072, %v3835, %v3851
        %v3860 = vsel %vm1072, %v3837, %v3821
        %v3861 = vsel %vm1072, %v3839, %v3823
        %v3862 = vsel %vm1072, %v3841, %v3825
        %v3863 = vsel %vm1072, %v3843, %v3827
        %v3864 = vsel %vm1072, %v3845, %v3829
        %v3865 = vsel %vm1072, %v3847, %v3831
        %v3866 = vsel %vm1072, %v3849, %v3833
        %v3867 = vsel %vm1072, %v3851, %v3835
        %v3868 = vmul.f32 %v1077, %v3860
        %v3869 = vmul.f32 %v1078, %v3852
        %v3870 = vmul.f32 %v1077, %v3861
        %v3871 = vmul.f32 %v1078, %v3853
        %v3872 = vmul.f32 %v1077, %v3862
        %v3873 = vmul.f32 %v1078, %v3854
        %v3874 = vmul.f32 %v1077, %v3863
        %v3875 = vmul.f32 %v1078, %v3855
        %v3876 = vmul.f32 %v1077, %v3864
        %v3877 = vmul.f32 %v1078, %v3856
        %v3878 = vmul.f32 %v1077, %v3865
        %v3879 = vmul.f32 %v1078, %v3857
        %v3880 = vmul.f32 %v1077, %v3866
        %v3881 = vmul.f32 %v1078, %v3858
        %v3882 = vmul.f32 %v1077, %v3867
        %v3883 = vmul.f32 %v1078, %v3859
        %3884 = vrot.lane.b32.xlu0 %v3868, 1
        %v3885 = vpop.permute.xlu0 %3884
        %3886 = vrot.lane.b32.xlu0 %v3870, 1
        %v3887 = vpop.permute.xlu0 %3886
        %3888 = vrot.lane.b32.xlu0 %v3872, 1
        %v3889 = vpop.permute.xlu0 %3888
        %3890 = vrot.lane.b32.xlu0 %v3874, 1
        %v3891 = vpop.permute.xlu0 %3890
        %3892 = vrot.lane.b32.xlu0 %v3876, 1
        %v3893 = vpop.permute.xlu0 %3892
        %3894 = vrot.lane.b32.xlu0 %v3878, 1
        %v3895 = vpop.permute.xlu0 %3894
        %3896 = vrot.lane.b32.xlu0 %v3880, 1
        %v3897 = vpop.permute.xlu0 %3896
        %3898 = vrot.lane.b32.xlu0 %v3882, 1
        %v3899 = vpop.permute.xlu0 %3898
        %3900 = vrot.lane.b32.xlu0 %v3869, 1
        %v3901 = vpop.permute.xlu0 %3900
        %3902 = vrot.lane.b32.xlu0 %v3871, 1
        %v3903 = vpop.permute.xlu0 %3902
        %3904 = vrot.lane.b32.xlu0 %v3873, 1
        %v3905 = vpop.permute.xlu0 %3904
        %3906 = vrot.lane.b32.xlu0 %v3875, 1
        %v3907 = vpop.permute.xlu0 %3906
        %3908 = vrot.lane.b32.xlu0 %v3877, 1
        %v3909 = vpop.permute.xlu0 %3908
        %3910 = vrot.lane.b32.xlu0 %v3879, 1
        %v3911 = vpop.permute.xlu0 %3910
        %3912 = vrot.lane.b32.xlu0 %v3881, 1
        %v3913 = vpop.permute.xlu0 %3912
        %3914 = vrot.lane.b32.xlu0 %v3883, 1
        %v3915 = vpop.permute.xlu0 %3914
        %v3916 = vsel %vm629, %v3885, %v3901
        %v3917 = vsel %vm629, %v3887, %v3903
        %v3918 = vsel %vm629, %v3889, %v3905
        %v3919 = vsel %vm629, %v3891, %v3907
        %v3920 = vsel %vm629, %v3893, %v3909
        %v3921 = vsel %vm629, %v3895, %v3911
        %v3922 = vsel %vm629, %v3897, %v3913
        %v3923 = vsel %vm629, %v3899, %v3915
        %v3924 = vsel %vm629, %v3901, %v3885
        %v3925 = vsel %vm629, %v3903, %v3887
        %v3926 = vsel %vm629, %v3905, %v3889
        %v3927 = vsel %vm629, %v3907, %v3891
        %v3928 = vsel %vm629, %v3909, %v3893
        %v3929 = vsel %vm629, %v3911, %v3895
        %v3930 = vsel %vm629, %v3913, %v3897
        %v3931 = vsel %vm629, %v3915, %v3899
        %v3932 = vmul.f32 %v634, %v3924
        %v3933 = vmul.f32 %v635, %v3916
        %v3934 = vmul.f32 %v634, %v3925
        %v3935 = vmul.f32 %v635, %v3917
        %v3936 = vmul.f32 %v634, %v3926
        %v3937 = vmul.f32 %v635, %v3918
        %v3938 = vmul.f32 %v634, %v3927
        %v3939 = vmul.f32 %v635, %v3919
        %v3940 = vmul.f32 %v634, %v3928
        %v3941 = vmul.f32 %v635, %v3920
        %v3942 = vmul.f32 %v634, %v3929
        %v3943 = vmul.f32 %v635, %v3921
        %v3944 = vmul.f32 %v634, %v3930
        %v3945 = vmul.f32 %v635, %v3922
        %v3946 = vmul.f32 %v634, %v3931
        %v3947 = vmul.f32 %v635, %v3923
        %3948 = vst [vmem:[#allocation3] sm:$0xff] %v3932
        %3949 = vst [vmem:[#allocation3 + $0x8] sm:$0xff] %v3933
        %3950 = vst [vmem:[#allocation3 + $0x10] sm:$0xff] %v3934
        %3951 = vst [vmem:[#allocation3 + $0x18] sm:$0xff] %v3935
        %3952 = vst [vmem:[#allocation3 + $0x20] sm:$0xff] %v3936
        %3953 = vst [vmem:[#allocation3 + $0x28] sm:$0xff] %v3937
        %3954 = vst [vmem:[#allocation3 + $0x30] sm:$0xff] %v3938
        %3955 = vst [vmem:[#allocation3 + $0x38] sm:$0xff] %v3939
        %3956 = vst [vmem:[#allocation3 + $0x40] sm:$0xff] %v3940
        %3957 = vst [vmem:[#allocation3 + $0x48] sm:$0xff] %v3941
        %3958 = vst [vmem:[#allocation3 + $0x50] sm:$0xff] %v3942
        %3959 = vst [vmem:[#allocation3 + $0x58] sm:$0xff] %v3943
        %3960 = vst [vmem:[#allocation3 + $0x60] sm:$0xff] %v3944
        %3961 = vst [vmem:[#allocation3 + $0x68] sm:$0xff] %v3945
        %3962 = vst [vmem:[#allocation3 + $0x70] sm:$0xff] %v3946
        %3963 = vst [vmem:[#allocation3 + $0x78] sm:$0xff] %v3947
        %3964 = vst [vmem:[#allocation3 + $0x80] sm:$0xff] %v3868
        %3965 = vst [vmem:[#allocation3 + $0x88] sm:$0xff] %v3869
        %3966 = vst [vmem:[#allocation3 + $0x90] sm:$0xff] %v3870
        %3967 = vst [vmem:[#allocation3 + $0x98] sm:$0xff] %v3871
        %3968 = vst [vmem:[#allocation3 + $0xa0] sm:$0xff] %v3872
        %3969 = vst [vmem:[#allocation3 + $0xa8] sm:$0xff] %v3873
        %3970 = vst [vmem:[#allocation3 + $0xb0] sm:$0xff] %v3874
        %3971 = vst [vmem:[#allocation3 + $0xb8] sm:$0xff] %v3875
        %3972 = vst [vmem:[#allocation3 + $0xc0] sm:$0xff] %v3876
        %3973 = vst [vmem:[#allocation3 + $0xc8] sm:$0xff] %v3877
        %3974 = vst [vmem:[#allocation3 + $0xd0] sm:$0xff] %v3878
        %3975 = vst [vmem:[#allocation3 + $0xd8] sm:$0xff] %v3879
        %3976 = vst [vmem:[#allocation3 + $0xe0] sm:$0xff] %v3880
        %3977 = vst [vmem:[#allocation3 + $0xe8] sm:$0xff] %v3881
        %3978 = vst [vmem:[#allocation3 + $0xf0] sm:$0xff] %v3882
        %3979 = vst [vmem:[#allocation3 + $0xf8] sm:$0xff] %v3883
        %3980 = vrot.lane.b32.xlu0 %v3868, 127
        %v3981 = vpop.permute.xlu0 %3980
        %3982 = vrot.lane.b32.xlu0 %v3870, 127
        %v3983 = vpop.permute.xlu0 %3982
        %3984 = vrot.lane.b32.xlu0 %v3872, 127
        %v3985 = vpop.permute.xlu0 %3984
        %3986 = vrot.lane.b32.xlu0 %v3874, 127
        %v3987 = vpop.permute.xlu0 %3986
        %3988 = vrot.lane.b32.xlu0 %v3876, 127
        %v3989 = vpop.permute.xlu0 %3988
        %3990 = vrot.lane.b32.xlu0 %v3878, 127
        %v3991 = vpop.permute.xlu0 %3990
        %3992 = vrot.lane.b32.xlu0 %v3880, 127
        %v3993 = vpop.permute.xlu0 %3992
        %3994 = vrot.lane.b32.xlu0 %v3882, 127
        %v3995 = vpop.permute.xlu0 %3994
        %3996 = vrot.lane.b32.xlu0 %v3869, 127
        %v3997 = vpop.permute.xlu0 %3996
        %3998 = vrot.lane.b32.xlu0 %v3871, 127
        %v3999 = vpop.permute.xlu0 %3998
        %4000 = vrot.lane.b32.xlu0 %v3873, 127
        %v4001 = vpop.permute.xlu0 %4000
        %4002 = vrot.lane.b32.xlu0 %v3875, 127
        %v4003 = vpop.permute.xlu0 %4002
        %4004 = vrot.lane.b32.xlu0 %v3877, 127
        %v4005 = vpop.permute.xlu0 %4004
        %4006 = vrot.lane.b32.xlu0 %v3879, 127
        %v4007 = vpop.permute.xlu0 %4006
        %4008 = vrot.lane.b32.xlu0 %v3881, 127
        %v4009 = vpop.permute.xlu0 %4008
        %4010 = vrot.lane.b32.xlu0 %v3883, 127
        %v4011 = vpop.permute.xlu0 %4010
        %v4012 = vsel %vm690, %v3981, %v3997
        %v4013 = vsel %vm690, %v3983, %v3999
        %v4014 = vsel %vm690, %v3985, %v4001
        %v4015 = vsel %vm690, %v3987, %v4003
        %v4016 = vsel %vm690, %v3989, %v4005
        %v4017 = vsel %vm690, %v3991, %v4007
        %v4018 = vsel %vm690, %v3993, %v4009
        %v4019 = vsel %vm690, %v3995, %v4011
        %v4020 = vsel %vm690, %v3997, %v3981
        %v4021 = vsel %vm690, %v3999, %v3983
        %v4022 = vsel %vm690, %v4001, %v3985
        %v4023 = vsel %vm690, %v4003, %v3987
        %v4024 = vsel %vm690, %v4005, %v3989
        %v4025 = vsel %vm690, %v4007, %v3991
        %v4026 = vsel %vm690, %v4009, %v3993
        %v4027 = vsel %vm690, %v4011, %v3995
        %v4028 = vmul.f32 %v695, %v4012
        %v4029 = vmul.f32 %v696, %v4020
        %v4030 = vmul.f32 %v695, %v4013
        %v4031 = vmul.f32 %v696, %v4021
        %v4032 = vmul.f32 %v695, %v4014
        %v4033 = vmul.f32 %v696, %v4022
        %v4034 = vmul.f32 %v695, %v4015
        %v4035 = vmul.f32 %v696, %v4023
        %v4036 = vmul.f32 %v695, %v4016
        %v4037 = vmul.f32 %v696, %v4024
        %v4038 = vmul.f32 %v695, %v4017
        %v4039 = vmul.f32 %v696, %v4025
        %v4040 = vmul.f32 %v695, %v4018
        %v4041 = vmul.f32 %v696, %v4026
        %v4042 = vmul.f32 %v695, %v4019
        %v4043 = vmul.f32 %v696, %v4027
        %4044 = vst [vmem:[#allocation3 + $0x100] sm:$0xff] %v4028
        %4045 = vst [vmem:[#allocation3 + $0x108] sm:$0xff] %v4029
        %4046 = vst [vmem:[#allocation3 + $0x110] sm:$0xff] %v4030
        %4047 = vst [vmem:[#allocation3 + $0x118] sm:$0xff] %v4031
        %4048 = vst [vmem:[#allocation3 + $0x120] sm:$0xff] %v4032
        %4049 = vst [vmem:[#allocation3 + $0x128] sm:$0xff] %v4033
        %4050 = vst [vmem:[#allocation3 + $0x130] sm:$0xff] %v4034
        %4051 = vst [vmem:[#allocation3 + $0x138] sm:$0xff] %v4035
        %4052 = vst [vmem:[#allocation3 + $0x140] sm:$0xff] %v4036
        %4053 = vst [vmem:[#allocation3 + $0x148] sm:$0xff] %v4037
        %4054 = vst [vmem:[#allocation3 + $0x150] sm:$0xff] %v4038
        %4055 = vst [vmem:[#allocation3 + $0x158] sm:$0xff] %v4039
        %4056 = vst [vmem:[#allocation3 + $0x160] sm:$0xff] %v4040
        %4057 = vst [vmem:[#allocation3 + $0x168] sm:$0xff] %v4041
        %4058 = vst [vmem:[#allocation3 + $0x170] sm:$0xff] %v4042
        %4059 = vst [vmem:[#allocation3 + $0x178] sm:$0xff] %v4043
        %4060 = vrot.lane.b32.xlu0 %v3804, 1
        %v4061 = vpop.permute.xlu0 %4060
        %4062 = vrot.lane.b32.xlu0 %v3806, 1
        %v4063 = vpop.permute.xlu0 %4062
        %4064 = vrot.lane.b32.xlu0 %v3808, 1
        %v4065 = vpop.permute.xlu0 %4064
        %4066 = vrot.lane.b32.xlu0 %v3810, 1
        %v4067 = vpop.permute.xlu0 %4066
        %4068 = vrot.lane.b32.xlu0 %v3812, 1
        %v4069 = vpop.permute.xlu0 %4068
        %4070 = vrot.lane.b32.xlu0 %v3814, 1
        %v4071 = vpop.permute.xlu0 %4070
        %4072 = vrot.lane.b32.xlu0 %v3816, 1
        %v4073 = vpop.permute.xlu0 %4072
        %4074 = vrot.lane.b32.xlu0 %v3818, 1
        %v4075 = vpop.permute.xlu0 %4074
        %4076 = vrot.lane.b32.xlu0 %v3805, 1
        %v4077 = vpop.permute.xlu0 %4076
        %4078 = vrot.lane.b32.xlu0 %v3807, 1
        %v4079 = vpop.permute.xlu0 %4078
        %4080 = vrot.lane.b32.xlu0 %v3809, 1
        %v4081 = vpop.permute.xlu0 %4080
        %4082 = vrot.lane.b32.xlu0 %v3811, 1
        %v4083 = vpop.permute.xlu0 %4082
        %4084 = vrot.lane.b32.xlu0 %v3813, 1
        %v4085 = vpop.permute.xlu0 %4084
        %4086 = vrot.lane.b32.xlu0 %v3815, 1
        %v4087 = vpop.permute.xlu0 %4086
        %4088 = vrot.lane.b32.xlu0 %v3817, 1
        %v4089 = vpop.permute.xlu0 %4088
        %4090 = vrot.lane.b32.xlu0 %v3819, 1
        %v4091 = vpop.permute.xlu0 %4090
        %v4092 = vsel %vm629, %v4061, %v4077
        %v4093 = vsel %vm629, %v4063, %v4079
        %v4094 = vsel %vm629, %v4065, %v4081
        %v4095 = vsel %vm629, %v4067, %v4083
        %v4096 = vsel %vm629, %v4069, %v4085
        %v4097 = vsel %vm629, %v4071, %v4087
        %v4098 = vsel %vm629, %v4073, %v4089
        %v4099 = vsel %vm629, %v4075, %v4091
        %v4100 = vsel %vm629, %v4077, %v4061
        %v4101 = vsel %vm629, %v4079, %v4063
        %v4102 = vsel %vm629, %v4081, %v4065
        %v4103 = vsel %vm629, %v4083, %v4067
        %v4104 = vsel %vm629, %v4085, %v4069
        %v4105 = vsel %vm629, %v4087, %v4071
        %v4106 = vsel %vm629, %v4089, %v4073
        %v4107 = vsel %vm629, %v4091, %v4075
        %v4108 = vmul.f32 %v634, %v4100
        %v4109 = vmul.f32 %v635, %v4092
        %v4110 = vmul.f32 %v634, %v4101
        %v4111 = vmul.f32 %v635, %v4093
        %v4112 = vmul.f32 %v634, %v4102
        %v4113 = vmul.f32 %v635, %v4094
        %v4114 = vmul.f32 %v634, %v4103
        %v4115 = vmul.f32 %v635, %v4095
        %v4116 = vmul.f32 %v634, %v4104
        %v4117 = vmul.f32 %v635, %v4096
        %v4118 = vmul.f32 %v634, %v4105
        %v4119 = vmul.f32 %v635, %v4097
        %v4120 = vmul.f32 %v634, %v4106
        %v4121 = vmul.f32 %v635, %v4098
        %v4122 = vmul.f32 %v634, %v4107
        %v4123 = vmul.f32 %v635, %v4099
        %4124 = vst [vmem:[#allocation3 + $0x180] sm:$0xff] %v4108
        %4125 = vst [vmem:[#allocation3 + $0x188] sm:$0xff] %v4109
        %4126 = vst [vmem:[#allocation3 + $0x190] sm:$0xff] %v4110
        %4127 = vst [vmem:[#allocation3 + $0x198] sm:$0xff] %v4111
        %4128 = vst [vmem:[#allocation3 + $0x1a0] sm:$0xff] %v4112
        %4129 = vst [vmem:[#allocation3 + $0x1a8] sm:$0xff] %v4113
        %4130 = vst [vmem:[#allocation3 + $0x1b0] sm:$0xff] %v4114
        %4131 = vst [vmem:[#allocation3 + $0x1b8] sm:$0xff] %v4115
        %4132 = vst [vmem:[#allocation3 + $0x1c0] sm:$0xff] %v4116
        %4133 = vst [vmem:[#allocation3 + $0x1c8] sm:$0xff] %v4117
        %4134 = vst [vmem:[#allocation3 + $0x1d0] sm:$0xff] %v4118
        %4135 = vst [vmem:[#allocation3 + $0x1d8] sm:$0xff] %v4119
        %4136 = vst [vmem:[#allocation3 + $0x1e0] sm:$0xff] %v4120
        %4137 = vst [vmem:[#allocation3 + $0x1e8] sm:$0xff] %v4121
        %4138 = vst [vmem:[#allocation3 + $0x1f0] sm:$0xff] %v4122
        %4139 = vst [vmem:[#allocation3 + $0x1f8] sm:$0xff] %v4123
        %4140 = vst [vmem:[#allocation3 + $0x200] sm:$0xff] %v3804
        %4141 = vst [vmem:[#allocation3 + $0x208] sm:$0xff] %v3805
        %4142 = vst [vmem:[#allocation3 + $0x210] sm:$0xff] %v3806
        %4143 = vst [vmem:[#allocation3 + $0x218] sm:$0xff] %v3807
        %4144 = vst [vmem:[#allocation3 + $0x220] sm:$0xff] %v3808
        %4145 = vst [vmem:[#allocation3 + $0x228] sm:$0xff] %v3809
        %4146 = vst [vmem:[#allocation3 + $0x230] sm:$0xff] %v3810
        %4147 = vst [vmem:[#allocation3 + $0x238] sm:$0xff] %v3811
        %4148 = vst [vmem:[#allocation3 + $0x240] sm:$0xff] %v3812
        %4149 = vst [vmem:[#allocation3 + $0x248] sm:$0xff] %v3813
        %4150 = vst [vmem:[#allocation3 + $0x250] sm:$0xff] %v3814
        %4151 = vst [vmem:[#allocation3 + $0x258] sm:$0xff] %v3815
        %4152 = vst [vmem:[#allocation3 + $0x260] sm:$0xff] %v3816
        %4153 = vst [vmem:[#allocation3 + $0x268] sm:$0xff] %v3817
        %4154 = vst [vmem:[#allocation3 + $0x270] sm:$0xff] %v3818
        %4155 = vst [vmem:[#allocation3 + $0x278] sm:$0xff] %v3819
        %4156 = vrot.lane.b32.xlu0 %v3804, 127
        %v4157 = vpop.permute.xlu0 %4156
        %4158 = vrot.lane.b32.xlu0 %v3806, 127
        %v4159 = vpop.permute.xlu0 %4158
        %4160 = vrot.lane.b32.xlu0 %v3808, 127
        %v4161 = vpop.permute.xlu0 %4160
        %4162 = vrot.lane.b32.xlu0 %v3810, 127
        %v4163 = vpop.permute.xlu0 %4162
        %4164 = vrot.lane.b32.xlu0 %v3812, 127
        %v4165 = vpop.permute.xlu0 %4164
        %4166 = vrot.lane.b32.xlu0 %v3814, 127
        %v4167 = vpop.permute.xlu0 %4166
        %4168 = vrot.lane.b32.xlu0 %v3816, 127
        %v4169 = vpop.permute.xlu0 %4168
        %4170 = vrot.lane.b32.xlu0 %v3818, 127
        %v4171 = vpop.permute.xlu0 %4170
        %4172 = vrot.lane.b32.xlu0 %v3805, 127
        %v4173 = vpop.permute.xlu0 %4172
        %4174 = vrot.lane.b32.xlu0 %v3807, 127
        %v4175 = vpop.permute.xlu0 %4174
        %4176 = vrot.lane.b32.xlu0 %v3809, 127
        %v4177 = vpop.permute.xlu0 %4176
        %4178 = vrot.lane.b32.xlu0 %v3811, 127
        %v4179 = vpop.permute.xlu0 %4178
        %4180 = vrot.lane.b32.xlu0 %v3813, 127
        %v4181 = vpop.permute.xlu0 %4180
        %4182 = vrot.lane.b32.xlu0 %v3815, 127
        %v4183 = vpop.permute.xlu0 %4182
        %4184 = vrot.lane.b32.xlu0 %v3817, 127
        %v4185 = vpop.permute.xlu0 %4184
        %4186 = vrot.lane.b32.xlu0 %v3819, 127
        %v4187 = vpop.permute.xlu0 %4186
        %v4188 = vsel %vm690, %v4157, %v4173
        %v4189 = vsel %vm690, %v4159, %v4175
        %v4190 = vsel %vm690, %v4161, %v4177
        %v4191 = vsel %vm690, %v4163, %v4179
        %v4192 = vsel %vm690, %v4165, %v4181
        %v4193 = vsel %vm690, %v4167, %v4183
        %v4194 = vsel %vm690, %v4169, %v4185
        %v4195 = vsel %vm690, %v4171, %v4187
        %v4196 = vsel %vm690, %v4173, %v4157
        %v4197 = vsel %vm690, %v4175, %v4159
        %v4198 = vsel %vm690, %v4177, %v4161
        %v4199 = vsel %vm690, %v4179, %v4163
        %v4200 = vsel %vm690, %v4181, %v4165
        %v4201 = vsel %vm690, %v4183, %v4167
        %v4202 = vsel %vm690, %v4185, %v4169
        %v4203 = vsel %vm690, %v4187, %v4171
        %v4204 = vmul.f32 %v695, %v4188
        %v4205 = vmul.f32 %v696, %v4196
        %v4206 = vmul.f32 %v695, %v4189
        %v4207 = vmul.f32 %v696, %v4197
        %v4208 = vmul.f32 %v695, %v4190
        %v4209 = vmul.f32 %v696, %v4198
        %v4210 = vmul.f32 %v695, %v4191
        %v4211 = vmul.f32 %v696, %v4199
        %v4212 = vmul.f32 %v695, %v4192
        %v4213 = vmul.f32 %v696, %v4200
        %v4214 = vmul.f32 %v695, %v4193
        %v4215 = vmul.f32 %v696, %v4201
        %v4216 = vmul.f32 %v695, %v4194
        %v4217 = vmul.f32 %v696, %v4202
        %v4218 = vmul.f32 %v695, %v4195
        %v4219 = vmul.f32 %v696, %v4203
        %4220 = vst [vmem:[#allocation3 + $0x280] sm:$0xff] %v4204
        %4221 = vst [vmem:[#allocation3 + $0x288] sm:$0xff] %v4205
        %4222 = vst [vmem:[#allocation3 + $0x290] sm:$0xff] %v4206
        %4223 = vst [vmem:[#allocation3 + $0x298] sm:$0xff] %v4207
        %4224 = vst [vmem:[#allocation3 + $0x2a0] sm:$0xff] %v4208
        %4225 = vst [vmem:[#allocation3 + $0x2a8] sm:$0xff] %v4209
        %4226 = vst [vmem:[#allocation3 + $0x2b0] sm:$0xff] %v4210
        %4227 = vst [vmem:[#allocation3 + $0x2b8] sm:$0xff] %v4211
        %4228 = vst [vmem:[#allocation3 + $0x2c0] sm:$0xff] %v4212
        %4229 = vst [vmem:[#allocation3 + $0x2c8] sm:$0xff] %v4213
        %4230 = vst [vmem:[#allocation3 + $0x2d0] sm:$0xff] %v4214
        %4231 = vst [vmem:[#allocation3 + $0x2d8] sm:$0xff] %v4215
        %4232 = vst [vmem:[#allocation3 + $0x2e0] sm:$0xff] %v4216
        %4233 = vst [vmem:[#allocation3 + $0x2e8] sm:$0xff] %v4217
        %4234 = vst [vmem:[#allocation3 + $0x2f0] sm:$0xff] %v4218
        %4235 = vst [vmem:[#allocation3 + $0x2f8] sm:$0xff] %v4219
        %4236 = vrot.lane.b32.xlu0 %v3804, 112
        %v4237 = vpop.permute.xlu0 %4236
        %4238 = vrot.lane.b32.xlu0 %v3806, 112
        %v4239 = vpop.permute.xlu0 %4238
        %4240 = vrot.lane.b32.xlu0 %v3808, 112
        %v4241 = vpop.permute.xlu0 %4240
        %4242 = vrot.lane.b32.xlu0 %v3810, 112
        %v4243 = vpop.permute.xlu0 %4242
        %4244 = vrot.lane.b32.xlu0 %v3812, 112
        %v4245 = vpop.permute.xlu0 %4244
        %4246 = vrot.lane.b32.xlu0 %v3814, 112
        %v4247 = vpop.permute.xlu0 %4246
        %4248 = vrot.lane.b32.xlu0 %v3816, 112
        %v4249 = vpop.permute.xlu0 %4248
        %4250 = vrot.lane.b32.xlu0 %v3818, 112
        %v4251 = vpop.permute.xlu0 %4250
        %4252 = vrot.lane.b32.xlu0 %v3805, 112
        %v4253 = vpop.permute.xlu0 %4252
        %4254 = vrot.lane.b32.xlu0 %v3807, 112
        %v4255 = vpop.permute.xlu0 %4254
        %4256 = vrot.lane.b32.xlu0 %v3809, 112
        %v4257 = vpop.permute.xlu0 %4256
        %4258 = vrot.lane.b32.xlu0 %v3811, 112
        %v4259 = vpop.permute.xlu0 %4258
        %4260 = vrot.lane.b32.xlu0 %v3813, 112
        %v4261 = vpop.permute.xlu0 %4260
        %4262 = vrot.lane.b32.xlu0 %v3815, 112
        %v4263 = vpop.permute.xlu0 %4262
        %4264 = vrot.lane.b32.xlu0 %v3817, 112
        %v4265 = vpop.permute.xlu0 %4264
        %4266 = vrot.lane.b32.xlu0 %v3819, 112
        %v4267 = vpop.permute.xlu0 %4266
        %v4268 = vsel %vm1577, %v4237, %v4253
        %v4269 = vsel %vm1577, %v4239, %v4255
        %v4270 = vsel %vm1577, %v4241, %v4257
        %v4271 = vsel %vm1577, %v4243, %v4259
        %v4272 = vsel %vm1577, %v4245, %v4261
        %v4273 = vsel %vm1577, %v4247, %v4263
        %v4274 = vsel %vm1577, %v4249, %v4265
        %v4275 = vsel %vm1577, %v4251, %v4267
        %v4276 = vsel %vm1577, %v4253, %v4237
        %v4277 = vsel %vm1577, %v4255, %v4239
        %v4278 = vsel %vm1577, %v4257, %v4241
        %v4279 = vsel %vm1577, %v4259, %v4243
        %v4280 = vsel %vm1577, %v4261, %v4245
        %v4281 = vsel %vm1577, %v4263, %v4247
        %v4282 = vsel %vm1577, %v4265, %v4249
        %v4283 = vsel %vm1577, %v4267, %v4251
        %v4284 = vmul.f32 %v1582, %v4268
        %v4285 = vmul.f32 %v1583, %v4276
        %v4286 = vmul.f32 %v1582, %v4269
        %v4287 = vmul.f32 %v1583, %v4277
        %v4288 = vmul.f32 %v1582, %v4270
        %v4289 = vmul.f32 %v1583, %v4278
        %v4290 = vmul.f32 %v1582, %v4271
        %v4291 = vmul.f32 %v1583, %v4279
        %v4292 = vmul.f32 %v1582, %v4272
        %v4293 = vmul.f32 %v1583, %v4280
        %v4294 = vmul.f32 %v1582, %v4273
        %v4295 = vmul.f32 %v1583, %v4281
        %v4296 = vmul.f32 %v1582, %v4274
        %v4297 = vmul.f32 %v1583, %v4282
        %v4298 = vmul.f32 %v1582, %v4275
        %v4299 = vmul.f32 %v1583, %v4283
        %4300 = vrot.lane.b32.xlu0 %v4284, 1
        %v4301 = vpop.permute.xlu0 %4300
        %4302 = vrot.lane.b32.xlu0 %v4286, 1
        %v4303 = vpop.permute.xlu0 %4302
        %4304 = vrot.lane.b32.xlu0 %v4288, 1
        %v4305 = vpop.permute.xlu0 %4304
        %4306 = vrot.lane.b32.xlu0 %v4290, 1
        %v4307 = vpop.permute.xlu0 %4306
        %4308 = vrot.lane.b32.xlu0 %v4292, 1
        %v4309 = vpop.permute.xlu0 %4308
        %4310 = vrot.lane.b32.xlu0 %v4294, 1
        %v4311 = vpop.permute.xlu0 %4310
        %4312 = vrot.lane.b32.xlu0 %v4296, 1
        %v4313 = vpop.permute.xlu0 %4312
        %4314 = vrot.lane.b32.xlu0 %v4298, 1
        %v4315 = vpop.permute.xlu0 %4314
        %4316 = vrot.lane.b32.xlu0 %v4285, 1
        %v4317 = vpop.permute.xlu0 %4316
        %4318 = vrot.lane.b32.xlu0 %v4287, 1
        %v4319 = vpop.permute.xlu0 %4318
        %4320 = vrot.lane.b32.xlu0 %v4289, 1
        %v4321 = vpop.permute.xlu0 %4320
        %4322 = vrot.lane.b32.xlu0 %v4291, 1
        %v4323 = vpop.permute.xlu0 %4322
        %4324 = vrot.lane.b32.xlu0 %v4293, 1
        %v4325 = vpop.permute.xlu0 %4324
        %4326 = vrot.lane.b32.xlu0 %v4295, 1
        %v4327 = vpop.permute.xlu0 %4326
        %4328 = vrot.lane.b32.xlu0 %v4297, 1
        %v4329 = vpop.permute.xlu0 %4328
        %4330 = vrot.lane.b32.xlu0 %v4299, 1
        %v4331 = vpop.permute.xlu0 %4330
        %v4332 = vsel %vm629, %v4301, %v4317
        %v4333 = vsel %vm629, %v4303, %v4319
        %v4334 = vsel %vm629, %v4305, %v4321
        %v4335 = vsel %vm629, %v4307, %v4323
        %v4336 = vsel %vm629, %v4309, %v4325
        %v4337 = vsel %vm629, %v4311, %v4327
        %v4338 = vsel %vm629, %v4313, %v4329
        %v4339 = vsel %vm629, %v4315, %v4331
        %v4340 = vsel %vm629, %v4317, %v4301
        %v4341 = vsel %vm629, %v4319, %v4303
        %v4342 = vsel %vm629, %v4321, %v4305
        %v4343 = vsel %vm629, %v4323, %v4307
        %v4344 = vsel %vm629, %v4325, %v4309
        %v4345 = vsel %vm629, %v4327, %v4311
        %v4346 = vsel %vm629, %v4329, %v4313
        %v4347 = vsel %vm629, %v4331, %v4315
        %v4348 = vmul.f32 %v634, %v4340
        %v4349 = vmul.f32 %v635, %v4332
        %v4350 = vmul.f32 %v634, %v4341
        %v4351 = vmul.f32 %v635, %v4333
        %v4352 = vmul.f32 %v634, %v4342
        %v4353 = vmul.f32 %v635, %v4334
        %v4354 = vmul.f32 %v634, %v4343
        %v4355 = vmul.f32 %v635, %v4335
        %v4356 = vmul.f32 %v634, %v4344
        %v4357 = vmul.f32 %v635, %v4336
        %v4358 = vmul.f32 %v634, %v4345
        %v4359 = vmul.f32 %v635, %v4337
        %v4360 = vmul.f32 %v634, %v4346
        %v4361 = vmul.f32 %v635, %v4338
        %v4362 = vmul.f32 %v634, %v4347
        %v4363 = vmul.f32 %v635, %v4339
        %4364 = vst [vmem:[#allocation3 + $0x300] sm:$0xff] %v4348
        %4365 = vst [vmem:[#allocation3 + $0x308] sm:$0xff] %v4349
        %4366 = vst [vmem:[#allocation3 + $0x310] sm:$0xff] %v4350
        %4367 = vst [vmem:[#allocation3 + $0x318] sm:$0xff] %v4351
        %4368 = vst [vmem:[#allocation3 + $0x320] sm:$0xff] %v4352
        %4369 = vst [vmem:[#allocation3 + $0x328] sm:$0xff] %v4353
        %4370 = vst [vmem:[#allocation3 + $0x330] sm:$0xff] %v4354
        %4371 = vst [vmem:[#allocation3 + $0x338] sm:$0xff] %v4355
        %4372 = vst [vmem:[#allocation3 + $0x340] sm:$0xff] %v4356
        %4373 = vst [vmem:[#allocation3 + $0x348] sm:$0xff] %v4357
        %4374 = vst [vmem:[#allocation3 + $0x350] sm:$0xff] %v4358
        %4375 = vst [vmem:[#allocation3 + $0x358] sm:$0xff] %v4359
        %4376 = vst [vmem:[#allocation3 + $0x360] sm:$0xff] %v4360
        %4377 = vst [vmem:[#allocation3 + $0x368] sm:$0xff] %v4361
        %4378 = vst [vmem:[#allocation3 + $0x370] sm:$0xff] %v4362
        %4379 = vst [vmem:[#allocation3 + $0x378] sm:$0xff] %v4363
        %4380 = vst [vmem:[#allocation3 + $0x380] sm:$0xff] %v4284
        %4381 = vst [vmem:[#allocation3 + $0x388] sm:$0xff] %v4285
        %4382 = vst [vmem:[#allocation3 + $0x390] sm:$0xff] %v4286
        %4383 = vst [vmem:[#allocation3 + $0x398] sm:$0xff] %v4287
        %4384 = vst [vmem:[#allocation3 + $0x3a0] sm:$0xff] %v4288
        %4385 = vst [vmem:[#allocation3 + $0x3a8] sm:$0xff] %v4289
        %4386 = vst [vmem:[#allocation3 + $0x3b0] sm:$0xff] %v4290
        %4387 = vst [vmem:[#allocation3 + $0x3b8] sm:$0xff] %v4291
        %4388 = vst [vmem:[#allocation3 + $0x3c0] sm:$0xff] %v4292
        %4389 = vst [vmem:[#allocation3 + $0x3c8] sm:$0xff] %v4293
        %4390 = vst [vmem:[#allocation3 + $0x3d0] sm:$0xff] %v4294
        %4391 = vst [vmem:[#allocation3 + $0x3d8] sm:$0xff] %v4295
        %4392 = vst [vmem:[#allocation3 + $0x3e0] sm:$0xff] %v4296
        %4393 = vst [vmem:[#allocation3 + $0x3e8] sm:$0xff] %v4297
        %4394 = vst [vmem:[#allocation3 + $0x3f0] sm:$0xff] %v4298
        %4395 = vst [vmem:[#allocation3 + $0x3f8] sm:$0xff] %v4299
        %4396 = vrot.lane.b32.xlu0 %v4284, 127
        %v4397 = vpop.permute.xlu0 %4396
        %4398 = vrot.lane.b32.xlu0 %v4286, 127
        %v4399 = vpop.permute.xlu0 %4398
        %4400 = vrot.lane.b32.xlu0 %v4288, 127
        %v4401 = vpop.permute.xlu0 %4400
        %4402 = vrot.lane.b32.xlu0 %v4290, 127
        %v4403 = vpop.permute.xlu0 %4402
        %4404 = vrot.lane.b32.xlu0 %v4292, 127
        %v4405 = vpop.permute.xlu0 %4404
        %4406 = vrot.lane.b32.xlu0 %v4294, 127
        %v4407 = vpop.permute.xlu0 %4406
        %4408 = vrot.lane.b32.xlu0 %v4296, 127
        %v4409 = vpop.permute.xlu0 %4408
        %4410 = vrot.lane.b32.xlu0 %v4298, 127
        %v4411 = vpop.permute.xlu0 %4410
        %4412 = vrot.lane.b32.xlu0 %v4285, 127
        %v4413 = vpop.permute.xlu0 %4412
        %4414 = vrot.lane.b32.xlu0 %v4287, 127
        %v4415 = vpop.permute.xlu0 %4414
        %4416 = vrot.lane.b32.xlu0 %v4289, 127
        %v4417 = vpop.permute.xlu0 %4416
        %4418 = vrot.lane.b32.xlu0 %v4291, 127
        %v4419 = vpop.permute.xlu0 %4418
        %4420 = vrot.lane.b32.xlu0 %v4293, 127
        %v4421 = vpop.permute.xlu0 %4420
        %4422 = vrot.lane.b32.xlu0 %v4295, 127
        %v4423 = vpop.permute.xlu0 %4422
        %4424 = vrot.lane.b32.xlu0 %v4297, 127
        %v4425 = vpop.permute.xlu0 %4424
        %4426 = vrot.lane.b32.xlu0 %v4299, 127
        %v4427 = vpop.permute.xlu0 %4426
        %v4428 = vsel %vm690, %v4397, %v4413
        %v4429 = vsel %vm690, %v4399, %v4415
        %v4430 = vsel %vm690, %v4401, %v4417
        %v4431 = vsel %vm690, %v4403, %v4419
        %v4432 = vsel %vm690, %v4405, %v4421
        %v4433 = vsel %vm690, %v4407, %v4423
        %v4434 = vsel %vm690, %v4409, %v4425
        %v4435 = vsel %vm690, %v4411, %v4427
        %v4436 = vsel %vm690, %v4413, %v4397
        %v4437 = vsel %vm690, %v4415, %v4399
        %v4438 = vsel %vm690, %v4417, %v4401
        %v4439 = vsel %vm690, %v4419, %v4403
        %v4440 = vsel %vm690, %v4421, %v4405
        %v4441 = vsel %vm690, %v4423, %v4407
        %v4442 = vsel %vm690, %v4425, %v4409
        %v4443 = vsel %vm690, %v4427, %v4411
        %v4444 = vmul.f32 %v695, %v4428
        %v4445 = vmul.f32 %v696, %v4436
        %v4446 = vmul.f32 %v695, %v4429
        %v4447 = vmul.f32 %v696, %v4437
        %v4448 = vmul.f32 %v695, %v4430
        %v4449 = vmul.f32 %v696, %v4438
        %v4450 = vmul.f32 %v695, %v4431
        %v4451 = vmul.f32 %v696, %v4439
        %v4452 = vmul.f32 %v695, %v4432
        %v4453 = vmul.f32 %v696, %v4440
        %v4454 = vmul.f32 %v695, %v4433
        %v4455 = vmul.f32 %v696, %v4441
        %v4456 = vmul.f32 %v695, %v4434
        %v4457 = vmul.f32 %v696, %v4442
        %v4458 = vmul.f32 %v695, %v4435
        %v4459 = vmul.f32 %v696, %v4443
        %4460 = vst [vmem:[#allocation3 + $0x400] sm:$0xff] %v4444
        %4461 = vst [vmem:[#allocation3 + $0x408] sm:$0xff] %v4445
        %4462 = vst [vmem:[#allocation3 + $0x410] sm:$0xff] %v4446
        %4463 = vst [vmem:[#allocation3 + $0x418] sm:$0xff] %v4447
        %4464 = vst [vmem:[#allocation3 + $0x420] sm:$0xff] %v4448
        %4465 = vst [vmem:[#allocation3 + $0x428] sm:$0xff] %v4449
        %4466 = vst [vmem:[#allocation3 + $0x430] sm:$0xff] %v4450
        %4467 = vst [vmem:[#allocation3 + $0x438] sm:$0xff] %v4451
        %4468 = vst [vmem:[#allocation3 + $0x440] sm:$0xff] %v4452
        %4469 = vst [vmem:[#allocation3 + $0x448] sm:$0xff] %v4453
        %4470 = vst [vmem:[#allocation3 + $0x450] sm:$0xff] %v4454
        %4471 = vst [vmem:[#allocation3 + $0x458] sm:$0xff] %v4455
        %4472 = vst [vmem:[#allocation3 + $0x460] sm:$0xff] %v4456
        %4473 = vst [vmem:[#allocation3 + $0x468] sm:$0xff] %v4457
        %4474 = vst [vmem:[#allocation3 + $0x470] sm:$0xff] %v4458
        %4475 = vst [vmem:[#allocation3 + $0x478] sm:$0xff] %v4459
        %v4476 = vld [vmem:[%s11] sm:$0xff]
        %v4477 = vld [vmem:[%s11 + $0x8] sm:$0xff]
        %v4478 = vld [vmem:[%s11 + $0x10] sm:$0xff]
        %v4479 = vld [vmem:[%s11 + $0x18] sm:$0xff]
        %v4480 = vld [vmem:[%s11 + $0x20] sm:$0xff]
        %v4481 = vld [vmem:[%s11 + $0x28] sm:$0xff]
        %v4482 = vld [vmem:[%s11 + $0x30] sm:$0xff]
        %v4483 = vld [vmem:[%s11 + $0x38] sm:$0xff]
        %v4484 = vld [vmem:[%s11 + $0x40] sm:$0xff]
        %v4485 = vld [vmem:[%s11 + $0x48] sm:$0xff]
        %v4486 = vld [vmem:[%s11 + $0x50] sm:$0xff]
        %v4487 = vld [vmem:[%s11 + $0x58] sm:$0xff]
        %v4488 = vld [vmem:[%s11 + $0x60] sm:$0xff]
        %v4489 = vld [vmem:[%s11 + $0x68] sm:$0xff]
        %v4490 = vld [vmem:[%s11 + $0x70] sm:$0xff]
        %v4491 = vld [vmem:[%s11 + $0x78] sm:$0xff]
        %v4492 = vld [vmem:[%s11 + $0x80] sm:$0xff]
        %v4493 = vld [vmem:[%s11 + $0x88] sm:$0xff]
        %v4494 = vld [vmem:[%s11 + $0x90] sm:$0xff]
        %v4495 = vld [vmem:[%s11 + $0x98] sm:$0xff]
        %v4496 = vld [vmem:[#allocation3] sm:$0xff]
        %v4497 = vld [vmem:[#allocation3 + $0x8] sm:$0xff]
        %v4498 = vld [vmem:[#allocation3 + $0x10] sm:$0xff]
        %v4499 = vld [vmem:[#allocation3 + $0x18] sm:$0xff]
        %v4500 = vld [vmem:[#allocation3 + $0x20] sm:$0xff]
        %v4501 = vld [vmem:[#allocation3 + $0x28] sm:$0xff]
        %v4502 = vld [vmem:[#allocation3 + $0x30] sm:$0xff]
        %v4503 = vld [vmem:[#allocation3 + $0x38] sm:$0xff]
        %v4504 = vld [vmem:[#allocation3 + $0x40] sm:$0xff]
        %v4505 = vld [vmem:[#allocation3 + $0x48] sm:$0xff]
        %v4506 = vld [vmem:[#allocation3 + $0x50] sm:$0xff]
        %v4507 = vld [vmem:[#allocation3 + $0x58] sm:$0xff]
        %v4508 = vld [vmem:[#allocation3 + $0x60] sm:$0xff]
        %v4509 = vld [vmem:[#allocation3 + $0x68] sm:$0xff]
        %v4510 = vld [vmem:[#allocation3 + $0x70] sm:$0xff]
        %v4511 = vld [vmem:[#allocation3 + $0x78] sm:$0xff]
        %v4512 = vld [vmem:[#allocation3 + $0x80] sm:$0xff]
        %v4513 = vld [vmem:[#allocation3 + $0x88] sm:$0xff]
        %v4514 = vld [vmem:[#allocation3 + $0x90] sm:$0xff]
        %v4515 = vld [vmem:[#allocation3 + $0x98] sm:$0xff]
        %v4516 = vld [vmem:[#allocation3 + $0xa0] sm:$0xff]
        %v4517 = vld [vmem:[#allocation3 + $0xa8] sm:$0xff]
        %v4518 = vld [vmem:[#allocation3 + $0xb0] sm:$0xff]
        %v4519 = vld [vmem:[#allocation3 + $0xb8] sm:$0xff]
        %v4520 = vld [vmem:[#allocation3 + $0xc0] sm:$0xff]
        %v4521 = vld [vmem:[#allocation3 + $0xc8] sm:$0xff]
        %v4522 = vld [vmem:[#allocation3 + $0xd0] sm:$0xff]
        %v4523 = vld [vmem:[#allocation3 + $0xd8] sm:$0xff]
        %v4524 = vld [vmem:[#allocation3 + $0xe0] sm:$0xff]
        %v4525 = vld [vmem:[#allocation3 + $0xe8] sm:$0xff]
        %v4526 = vld [vmem:[#allocation3 + $0xf0] sm:$0xff]
        %v4527 = vld [vmem:[#allocation3 + $0xf8] sm:$0xff]
        %v4528 = vld [vmem:[#allocation3 + $0x100] sm:$0xff]
        %v4529 = vld [vmem:[#allocation3 + $0x108] sm:$0xff]
        %v4530 = vld [vmem:[#allocation3 + $0x110] sm:$0xff]
        %v4531 = vld [vmem:[#allocation3 + $0x118] sm:$0xff]
        %v4532 = vld [vmem:[#allocation3 + $0x120] sm:$0xff]
        %v4533 = vld [vmem:[#allocation3 + $0x128] sm:$0xff]
        %v4534 = vld [vmem:[#allocation3 + $0x130] sm:$0xff]
        %v4535 = vld [vmem:[#allocation3 + $0x138] sm:$0xff]
        %v4536 = vld [vmem:[#allocation3 + $0x140] sm:$0xff]
        %v4537 = vld [vmem:[#allocation3 + $0x148] sm:$0xff]
        %v4538 = vld [vmem:[#allocation3 + $0x150] sm:$0xff]
        %v4539 = vld [vmem:[#allocation3 + $0x158] sm:$0xff]
        %v4540 = vld [vmem:[#allocation3 + $0x160] sm:$0xff]
        %v4541 = vld [vmem:[#allocation3 + $0x168] sm:$0xff]
        %v4542 = vld [vmem:[#allocation3 + $0x170] sm:$0xff]
        %v4543 = vld [vmem:[#allocation3 + $0x178] sm:$0xff]
        %v4544 = vld [vmem:[#allocation3 + $0x180] sm:$0xff]
        %v4545 = vld [vmem:[#allocation3 + $0x188] sm:$0xff]
        %v4546 = vld [vmem:[#allocation3 + $0x190] sm:$0xff]
        %v4547 = vld [vmem:[#allocation3 + $0x198] sm:$0xff]
        %v4548 = vld [vmem:[#allocation3 + $0x1a0] sm:$0xff]
        %v4549 = vld [vmem:[#allocation3 + $0x1a8] sm:$0xff]
        %v4550 = vld [vmem:[#allocation3 + $0x1b0] sm:$0xff]
        %v4551 = vld [vmem:[#allocation3 + $0x1b8] sm:$0xff]
        %v4552 = vld [vmem:[#allocation3 + $0x1c0] sm:$0xff]
        %v4553 = vld [vmem:[#allocation3 + $0x1c8] sm:$0xff]
        %v4554 = vld [vmem:[#allocation3 + $0x1d0] sm:$0xff]
        %v4555 = vld [vmem:[#allocation3 + $0x1d8] sm:$0xff]
        %v4556 = vld [vmem:[#allocation3 + $0x1e0] sm:$0xff]
        %v4557 = vld [vmem:[#allocation3 + $0x1e8] sm:$0xff]
        %v4558 = vld [vmem:[#allocation3 + $0x1f0] sm:$0xff]
        %v4559 = vld [vmem:[#allocation3 + $0x1f8] sm:$0xff]
        %v4560 = vld [vmem:[#allocation3 + $0x200] sm:$0xff]
        %v4561 = vld [vmem:[#allocation3 + $0x208] sm:$0xff]
        %v4562 = vld [vmem:[#allocation3 + $0x210] sm:$0xff]
        %v4563 = vld [vmem:[#allocation3 + $0x218] sm:$0xff]
        %v4564 = vld [vmem:[#allocation3 + $0x220] sm:$0xff]
        %v4565 = vld [vmem:[#allocation3 + $0x228] sm:$0xff]
        %v4566 = vld [vmem:[#allocation3 + $0x230] sm:$0xff]
        %v4567 = vld [vmem:[#allocation3 + $0x238] sm:$0xff]
        %v4568 = vld [vmem:[#allocation3 + $0x240] sm:$0xff]
        %v4569 = vld [vmem:[#allocation3 + $0x248] sm:$0xff]
        %v4570 = vld [vmem:[#allocation3 + $0x250] sm:$0xff]
        %v4571 = vld [vmem:[#allocation3 + $0x258] sm:$0xff]
        %v4572 = vld [vmem:[#allocation3 + $0x260] sm:$0xff]
        %v4573 = vld [vmem:[#allocation3 + $0x268] sm:$0xff]
        %v4574 = vld [vmem:[#allocation3 + $0x270] sm:$0xff]
        %v4575 = vld [vmem:[#allocation3 + $0x278] sm:$0xff]
        %v4576 = vld [vmem:[#allocation3 + $0x280] sm:$0xff]
        %v4577 = vld [vmem:[#allocation3 + $0x288] sm:$0xff]
        %v4578 = vld [vmem:[#allocation3 + $0x290] sm:$0xff]
        %v4579 = vld [vmem:[#allocation3 + $0x298] sm:$0xff]
        %v4580 = vld [vmem:[#allocation3 + $0x2a0] sm:$0xff]
        %v4581 = vld [vmem:[#allocation3 + $0x2a8] sm:$0xff]
        %v4582 = vld [vmem:[#allocation3 + $0x2b0] sm:$0xff]
        %v4583 = vld [vmem:[#allocation3 + $0x2b8] sm:$0xff]
        %v4584 = vld [vmem:[#allocation3 + $0x2c0] sm:$0xff]
        %v4585 = vld [vmem:[#allocation3 + $0x2c8] sm:$0xff]
        %v4586 = vld [vmem:[#allocation3 + $0x2d0] sm:$0xff]
        %v4587 = vld [vmem:[#allocation3 + $0x2d8] sm:$0xff]
        %v4588 = vld [vmem:[#allocation3 + $0x2e0] sm:$0xff]
        %v4589 = vld [vmem:[#allocation3 + $0x2e8] sm:$0xff]
        %v4590 = vld [vmem:[#allocation3 + $0x2f0] sm:$0xff]
        %v4591 = vld [vmem:[#allocation3 + $0x2f8] sm:$0xff]
        %v4592 = vld [vmem:[#allocation3 + $0x300] sm:$0xff]
        %v4593 = vld [vmem:[#allocation3 + $0x308] sm:$0xff]
        %v4594 = vld [vmem:[#allocation3 + $0x310] sm:$0xff]
        %v4595 = vld [vmem:[#allocation3 + $0x318] sm:$0xff]
        %v4596 = vld [vmem:[#allocation3 + $0x320] sm:$0xff]
        %v4597 = vld [vmem:[#allocation3 + $0x328] sm:$0xff]
        %v4598 = vld [vmem:[#allocation3 + $0x330] sm:$0xff]
        %v4599 = vld [vmem:[#allocation3 + $0x338] sm:$0xff]
        %v4600 = vld [vmem:[#allocation3 + $0x340] sm:$0xff]
        %v4601 = vld [vmem:[#allocation3 + $0x348] sm:$0xff]
        %v4602 = vld [vmem:[#allocation3 + $0x350] sm:$0xff]
        %v4603 = vld [vmem:[#allocation3 + $0x358] sm:$0xff]
        %v4604 = vld [vmem:[#allocation3 + $0x360] sm:$0xff]
        %v4605 = vld [vmem:[#allocation3 + $0x368] sm:$0xff]
        %v4606 = vld [vmem:[#allocation3 + $0x370] sm:$0xff]
        %v4607 = vld [vmem:[#allocation3 + $0x378] sm:$0xff]
        %v4608 = vld [vmem:[#allocation3 + $0x380] sm:$0xff]
        %v4609 = vld [vmem:[#allocation3 + $0x388] sm:$0xff]
        %v4610 = vld [vmem:[#allocation3 + $0x390] sm:$0xff]
        %v4611 = vld [vmem:[#allocation3 + $0x398] sm:$0xff]
        %v4612 = vld [vmem:[#allocation3 + $0x3a0] sm:$0xff]
        %v4613 = vld [vmem:[#allocation3 + $0x3a8] sm:$0xff]
        %v4614 = vld [vmem:[#allocation3 + $0x3b0] sm:$0xff]
        %v4615 = vld [vmem:[#allocation3 + $0x3b8] sm:$0xff]
        %v4616 = vld [vmem:[#allocation3 + $0x3c0] sm:$0xff]
        %v4617 = vld [vmem:[#allocation3 + $0x3c8] sm:$0xff]
        %v4618 = vld [vmem:[#allocation3 + $0x3d0] sm:$0xff]
        %v4619 = vld [vmem:[#allocation3 + $0x3d8] sm:$0xff]
        %v4620 = vld [vmem:[#allocation3 + $0x3e0] sm:$0xff]
        %v4621 = vld [vmem:[#allocation3 + $0x3e8] sm:$0xff]
        %v4622 = vld [vmem:[#allocation3 + $0x3f0] sm:$0xff]
        %v4623 = vld [vmem:[#allocation3 + $0x3f8] sm:$0xff]
        %v4624 = vld [vmem:[#allocation3 + $0x400] sm:$0xff]
        %v4625 = vld [vmem:[#allocation3 + $0x408] sm:$0xff]
        %v4626 = vld [vmem:[#allocation3 + $0x410] sm:$0xff]
        %v4627 = vld [vmem:[#allocation3 + $0x418] sm:$0xff]
        %v4628 = vld [vmem:[#allocation3 + $0x420] sm:$0xff]
        %v4629 = vld [vmem:[#allocation3 + $0x428] sm:$0xff]
        %v4630 = vld [vmem:[#allocation3 + $0x430] sm:$0xff]
        %v4631 = vld [vmem:[#allocation3 + $0x438] sm:$0xff]
        %v4632 = vld [vmem:[#allocation3 + $0x440] sm:$0xff]
        %v4633 = vld [vmem:[#allocation3 + $0x448] sm:$0xff]
        %v4634 = vld [vmem:[#allocation3 + $0x450] sm:$0xff]
        %v4635 = vld [vmem:[#allocation3 + $0x458] sm:$0xff]
        %v4636 = vld [vmem:[#allocation3 + $0x460] sm:$0xff]
        %v4637 = vld [vmem:[#allocation3 + $0x468] sm:$0xff]
        %v4638 = vld [vmem:[#allocation3 + $0x470] sm:$0xff]
        %v4639 = vld [vmem:[#allocation3 + $0x478] sm:$0xff]
        %v4640 = vld [vmem:[%s12] sm:$0xff]
        %v4641 = vld [vmem:[%s12 + $0x8] sm:$0xff]
        %v4642 = vld [vmem:[%s12 + $0x10] sm:$0xff]
        %v4643 = vld [vmem:[%s12 + $0x18] sm:$0xff]
        %4645 = vset.pattern.permute.xlu0 0
        %4646 = vperm.xlu0 %4645, %v4640
        %v4647 = vpop.permute.xlu0 %4646
        %4650 = vset.pattern.permute.xlu0 0
        %4651 = vperm.xlu0 %4650, %v4641
        %v4652 = vpop.permute.xlu0 %4651
        %4655 = vset.pattern.permute.xlu0 0
        %4656 = vperm.xlu0 %4655, %v4642
        %v4657 = vpop.permute.xlu0 %4656
        %4660 = vset.pattern.permute.xlu0 0
        %4661 = vperm.xlu0 %4660, %v4643
        %v4662 = vpop.permute.xlu0 %4661
        %vm4664 = vcmask 523264
        %v4666 = vsel %vm4664, %v4480, 0
        %v4669 = vsel %vm4664, %v4485, 0
        %v4672 = vsel %vm4664, %v4490, 0
        %v4675 = vsel %vm4664, %v4495, 0
        %4677 = vmatpush.msra.mxu0 %v4526
        %4678 = vmatpush.msra.mxu0 %v4524
        %4679 = vmatpush.msra.mxu0 %v4522
        %4680 = vmatpush.msra.mxu0 %v4520
        %4681 = vmatpush.msra.mxu0 %v4518
        %4682 = vmatpush.msra.mxu0 %v4516
        %4683 = vmatpush.msra.mxu0 %v4514
        %4684 = vmatpush.msra.mxu0 %v4512
        %4685 = vmatpush.msra.mxu0 %v4510
        %4686 = vmatpush.msra.mxu0 %v4508
        %4687 = vmatpush.msra.mxu0 %v4506
        %4688 = vmatpush.msra.mxu0 %v4504
        %4689 = vmatpush.msra.mxu0 %v4502
        %4690 = vmatpush.msra.mxu0 %v4500
        %4691 = vmatpush.msra.mxu0 %v4498
        %4692 = vmatpush.msra.mxu0 %v4496
        %4693 = vmatmul.f32.gmra.mxu0 %v4476
        %v4694 = vpop.f32.mrf.mxu0
        %v4695 = vadd.f32 %v4647, %v4694
        %4696 = vmatmul.f32.gmra.mxu0 %v4481
        %v4697 = vpop.f32.mrf.mxu0
        %v4698 = vadd.f32 %v4652, %v4697
        %4699 = vmatmul.f32.gmra.mxu0 %v4486
        %v4700 = vpop.f32.mrf.mxu0
        %v4701 = vadd.f32 %v4657, %v4700
        %4702 = vmatmul.f32.gmra.mxu0 %v4491
        %v4703 = vpop.f32.mrf.mxu0
        %v4704 = vadd.f32 %v4662, %v4703
        %4705 = vdwg.mxu0
        %4706 = vmatpush.msra.mxu0 %v4558
        %4707 = vmatpush.msra.mxu0 %v4556
        %4708 = vmatpush.msra.mxu0 %v4554
        %4709 = vmatpush.msra.mxu0 %v4552
        %4710 = vmatpush.msra.mxu0 %v4550
        %4711 = vmatpush.msra.mxu0 %v4548
        %4712 = vmatpush.msra.mxu0 %v4546
        %4713 = vmatpush.msra.mxu0 %v4544
        %4714 = vmatpush.msra.mxu0 %v4542
        %4715 = vmatpush.msra.mxu0 %v4540
        %4716 = vmatpush.msra.mxu0 %v4538
        %4717 = vmatpush.msra.mxu0 %v4536
        %4718 = vmatpush.msra.mxu0 %v4534
        %4719 = vmatpush.msra.mxu0 %v4532
        %4720 = vmatpush.msra.mxu0 %v4530
        %4721 = vmatpush.msra.mxu0 %v4528
        %4722 = vmatmul.f32.gmra.mxu0 %v4477
        %v4723 = vpop.f32.mrf.mxu0
        %v4724 = vadd.f32 %v4695, %v4723
        %4725 = vmatmul.f32.gmra.mxu0 %v4482
        %v4726 = vpop.f32.mrf.mxu0
        %v4727 = vadd.f32 %v4698, %v4726
        %4728 = vmatmul.f32.gmra.mxu0 %v4487
        %v4729 = vpop.f32.mrf.mxu0
        %v4730 = vadd.f32 %v4701, %v4729
        %4731 = vmatmul.f32.gmra.mxu0 %v4492
        %v4732 = vpop.f32.mrf.mxu0
        %v4733 = vadd.f32 %v4704, %v4732
        %4734 = vdwg.mxu0
        %4735 = vmatpush.msra.mxu0 %v4590
        %4736 = vmatpush.msra.mxu0 %v4588
        %4737 = vmatpush.msra.mxu0 %v4586
        %4738 = vmatpush.msra.mxu0 %v4584
        %4739 = vmatpush.msra.mxu0 %v4582
        %4740 = vmatpush.msra.mxu0 %v4580
        %4741 = vmatpush.msra.mxu0 %v4578
        %4742 = vmatpush.msra.mxu0 %v4576
        %4743 = vmatpush.msra.mxu0 %v4574
        %4744 = vmatpush.msra.mxu0 %v4572
        %4745 = vmatpush.msra.mxu0 %v4570
        %4746 = vmatpush.msra.mxu0 %v4568
        %4747 = vmatpush.msra.mxu0 %v4566
        %4748 = vmatpush.msra.mxu0 %v4564
        %4749 = vmatpush.msra.mxu0 %v4562
        %4750 = vmatpush.msra.mxu0 %v4560
        %4751 = vmatmul.f32.gmra.mxu0 %v4478
        %v4752 = vpop.f32.mrf.mxu0
        %v4753 = vadd.f32 %v4724, %v4752
        %4754 = vmatmul.f32.gmra.mxu0 %v4483
        %v4755 = vpop.f32.mrf.mxu0
        %v4756 = vadd.f32 %v4727, %v4755
        %4757 = vmatmul.f32.gmra.mxu0 %v4488
        %v4758 = vpop.f32.mrf.mxu0
        %v4759 = vadd.f32 %v4730, %v4758
        %4760 = vmatmul.f32.gmra.mxu0 %v4493
        %v4761 = vpop.f32.mrf.mxu0
        %v4762 = vadd.f32 %v4733, %v4761
        %4763 = vdwg.mxu0
        %4764 = vmatpush.msra.mxu0 %v4622
        %4765 = vmatpush.msra.mxu0 %v4620
        %4766 = vmatpush.msra.mxu0 %v4618
        %4767 = vmatpush.msra.mxu0 %v4616
        %4768 = vmatpush.msra.mxu0 %v4614
        %4769 = vmatpush.msra.mxu0 %v4612
        %4770 = vmatpush.msra.mxu0 %v4610
        %4771 = vmatpush.msra.mxu0 %v4608
        %4772 = vmatpush.msra.mxu0 %v4606
        %4773 = vmatpush.msra.mxu0 %v4604
        %4774 = vmatpush.msra.mxu0 %v4602
        %4775 = vmatpush.msra.mxu0 %v4600
        %4776 = vmatpush.msra.mxu0 %v4598
        %4777 = vmatpush.msra.mxu0 %v4596
        %4778 = vmatpush.msra.mxu0 %v4594
        %4779 = vmatpush.msra.mxu0 %v4592
        %4780 = vmatmul.f32.gmra.mxu0 %v4479
        %v4781 = vpop.f32.mrf.mxu0
        %v4782 = vadd.f32 %v4753, %v4781
        %4783 = vmatmul.f32.gmra.mxu0 %v4484
        %v4784 = vpop.f32.mrf.mxu0
        %v4785 = vadd.f32 %v4756, %v4784
        %4786 = vmatmul.f32.gmra.mxu0 %v4489
        %v4787 = vpop.f32.mrf.mxu0
        %v4788 = vadd.f32 %v4759, %v4787
        %4789 = vmatmul.f32.gmra.mxu0 %v4494
        %v4790 = vpop.f32.mrf.mxu0
        %v4791 = vadd.f32 %v4762, %v4790
        %4792 = vdwg.mxu0
        %4793 = vmatpush.msra.mxu0 0.0
        %4794 = vmatpush.msra.mxu0 0.0
        %4795 = vmatpush.msra.mxu0 0.0
        %4796 = vmatpush.msra.mxu0 0.0
        %4797 = vmatpush.msra.mxu0 0.0
        %4798 = vmatpush.msra.mxu0 0.0
        %4799 = vmatpush.msra.mxu0 0.0
        %4800 = vmatpush.msra.mxu0 0.0
        %4801 = vmatpush.msra.mxu0 %v4638
        %4802 = vmatpush.msra.mxu0 %v4636
        %4803 = vmatpush.msra.mxu0 %v4634
        %4804 = vmatpush.msra.mxu0 %v4632
        %4805 = vmatpush.msra.mxu0 %v4630
        %4806 = vmatpush.msra.mxu0 %v4628
        %4807 = vmatpush.msra.mxu0 %v4626
        %4808 = vmatpush.msra.mxu0 %v4624
        %4809 = vmatmul.f32.gmra.mxu0 %v4666
        %v4810 = vpop.f32.mrf.mxu0
        %v4811 = vadd.f32 %v4782, %v4810
        %4812 = vmatmul.f32.gmra.mxu0 %v4669
        %v4813 = vpop.f32.mrf.mxu0
        %v4814 = vadd.f32 %v4785, %v4813
        %4815 = vmatmul.f32.gmra.mxu0 %v4672
        %v4816 = vpop.f32.mrf.mxu0
        %v4817 = vadd.f32 %v4788, %v4816
        %4818 = vmatmul.f32.gmra.mxu0 %v4675
        %v4819 = vpop.f32.mrf.mxu0
        %v4820 = vadd.f32 %v4791, %v4819
        %4821 = vdwg.mxu0
        %4822 = vmatpush.msra.mxu0 %v4527
        %4823 = vmatpush.msra.mxu0 %v4525
        %4824 = vmatpush.msra.mxu0 %v4523
        %4825 = vmatpush.msra.mxu0 %v4521
        %4826 = vmatpush.msra.mxu0 %v4519
        %4827 = vmatpush.msra.mxu0 %v4517
        %4828 = vmatpush.msra.mxu0 %v4515
        %4829 = vmatpush.msra.mxu0 %v4513
        %4830 = vmatpush.msra.mxu0 %v4511
        %4831 = vmatpush.msra.mxu0 %v4509
        %4832 = vmatpush.msra.mxu0 %v4507
        %4833 = vmatpush.msra.mxu0 %v4505
        %4834 = vmatpush.msra.mxu0 %v4503
        %4835 = vmatpush.msra.mxu0 %v4501
        %4836 = vmatpush.msra.mxu0 %v4499
        %4837 = vmatpush.msra.mxu0 %v4497
        %4838 = vmatmul.f32.gmra.mxu0 %v4476
        %v4839 = vpop.f32.mrf.mxu0
        %v4840 = vadd.f32 %v4647, %v4839
        %4841 = vmatmul.f32.gmra.mxu0 %v4481
        %v4842 = vpop.f32.mrf.mxu0
        %v4843 = vadd.f32 %v4652, %v4842
        %4844 = vmatmul.f32.gmra.mxu0 %v4486
        %v4845 = vpop.f32.mrf.mxu0
        %v4846 = vadd.f32 %v4657, %v4845
        %4847 = vmatmul.f32.gmra.mxu0 %v4491
        %v4848 = vpop.f32.mrf.mxu0
        %v4849 = vadd.f32 %v4662, %v4848
        %4850 = vdwg.mxu0
        %4851 = vmatpush.msra.mxu0 %v4559
        %4852 = vmatpush.msra.mxu0 %v4557
        %4853 = vmatpush.msra.mxu0 %v4555
        %4854 = vmatpush.msra.mxu0 %v4553
        %4855 = vmatpush.msra.mxu0 %v4551
        %4856 = vmatpush.msra.mxu0 %v4549
        %4857 = vmatpush.msra.mxu0 %v4547
        %4858 = vmatpush.msra.mxu0 %v4545
        %4859 = vmatpush.msra.mxu0 %v4543
        %4860 = vmatpush.msra.mxu0 %v4541
        %4861 = vmatpush.msra.mxu0 %v4539
        %4862 = vmatpush.msra.mxu0 %v4537
        %4863 = vmatpush.msra.mxu0 %v4535
        %4864 = vmatpush.msra.mxu0 %v4533
        %4865 = vmatpush.msra.mxu0 %v4531
        %4866 = vmatpush.msra.mxu0 %v4529
        %4867 = vmatmul.f32.gmra.mxu0 %v4477
        %v4868 = vpop.f32.mrf.mxu0
        %v4869 = vadd.f32 %v4840, %v4868
        %4870 = vmatmul.f32.gmra.mxu0 %v4482
        %v4871 = vpop.f32.mrf.mxu0
        %v4872 = vadd.f32 %v4843, %v4871
        %4873 = vmatmul.f32.gmra.mxu0 %v4487
        %v4874 = vpop.f32.mrf.mxu0
        %v4875 = vadd.f32 %v4846, %v4874
        %4876 = vmatmul.f32.gmra.mxu0 %v4492
        %v4877 = vpop.f32.mrf.mxu0
        %v4878 = vadd.f32 %v4849, %v4877
        %4879 = vdwg.mxu0
        %4880 = vmatpush.msra.mxu0 %v4591
        %4881 = vmatpush.msra.mxu0 %v4589
        %4882 = vmatpush.msra.mxu0 %v4587
        %4883 = vmatpush.msra.mxu0 %v4585
        %4884 = vmatpush.msra.mxu0 %v4583
        %4885 = vmatpush.msra.mxu0 %v4581
        %4886 = vmatpush.msra.mxu0 %v4579
        %4887 = vmatpush.msra.mxu0 %v4577
        %4888 = vmatpush.msra.mxu0 %v4575
        %4889 = vmatpush.msra.mxu0 %v4573
        %4890 = vmatpush.msra.mxu0 %v4571
        %4891 = vmatpush.msra.mxu0 %v4569
        %4892 = vmatpush.msra.mxu0 %v4567
        %4893 = vmatpush.msra.mxu0 %v4565
        %4894 = vmatpush.msra.mxu0 %v4563
        %4895 = vmatpush.msra.mxu0 %v4561
        %4896 = vmatmul.f32.gmra.mxu0 %v4478
        %v4897 = vpop.f32.mrf.mxu0
        %v4898 = vadd.f32 %v4869, %v4897
        %4899 = vmatmul.f32.gmra.mxu0 %v4483
        %v4900 = vpop.f32.mrf.mxu0
        %v4901 = vadd.f32 %v4872, %v4900
        %4902 = vmatmul.f32.gmra.mxu0 %v4488
        %v4903 = vpop.f32.mrf.mxu0
        %v4904 = vadd.f32 %v4875, %v4903
        %4905 = vmatmul.f32.gmra.mxu0 %v4493
        %v4906 = vpop.f32.mrf.mxu0
        %v4907 = vadd.f32 %v4878, %v4906
        %4908 = vdwg.mxu0
        %4909 = vmatpush.msra.mxu0 %v4623
        %4910 = vmatpush.msra.mxu0 %v4621
        %4911 = vmatpush.msra.mxu0 %v4619
        %4912 = vmatpush.msra.mxu0 %v4617
        %4913 = vmatpush.msra.mxu0 %v4615
        %4914 = vmatpush.msra.mxu0 %v4613
        %4915 = vmatpush.msra.mxu0 %v4611
        %4916 = vmatpush.msra.mxu0 %v4609
        %4917 = vmatpush.msra.mxu0 %v4607
        %4918 = vmatpush.msra.mxu0 %v4605
        %4919 = vmatpush.msra.mxu0 %v4603
        %4920 = vmatpush.msra.mxu0 %v4601
        %4921 = vmatpush.msra.mxu0 %v4599
        %4922 = vmatpush.msra.mxu0 %v4597
        %4923 = vmatpush.msra.mxu0 %v4595
        %4924 = vmatpush.msra.mxu0 %v4593
        %4925 = vmatmul.f32.gmra.mxu0 %v4479
        %v4926 = vpop.f32.mrf.mxu0
        %v4927 = vadd.f32 %v4898, %v4926
        %4928 = vmatmul.f32.gmra.mxu0 %v4484
        %v4929 = vpop.f32.mrf.mxu0
        %v4930 = vadd.f32 %v4901, %v4929
        %4931 = vmatmul.f32.gmra.mxu0 %v4489
        %v4932 = vpop.f32.mrf.mxu0
        %v4933 = vadd.f32 %v4904, %v4932
        %4934 = vmatmul.f32.gmra.mxu0 %v4494
        %v4935 = vpop.f32.mrf.mxu0
        %v4936 = vadd.f32 %v4907, %v4935
        %4937 = vdwg.mxu0
        %4938 = vmatpush.msra.mxu0 0.0
        %4939 = vmatpush.msra.mxu0 0.0
        %4940 = vmatpush.msra.mxu0 0.0
        %4941 = vmatpush.msra.mxu0 0.0
        %4942 = vmatpush.msra.mxu0 0.0
        %4943 = vmatpush.msra.mxu0 0.0
        %4944 = vmatpush.msra.mxu0 0.0
        %4945 = vmatpush.msra.mxu0 0.0
        %4946 = vmatpush.msra.mxu0 %v4639
        %4947 = vmatpush.msra.mxu0 %v4637
        %4948 = vmatpush.msra.mxu0 %v4635
        %4949 = vmatpush.msra.mxu0 %v4633
        %4950 = vmatpush.msra.mxu0 %v4631
        %4951 = vmatpush.msra.mxu0 %v4629
        %4952 = vmatpush.msra.mxu0 %v4627
        %4953 = vmatpush.msra.mxu0 %v4625
        %4954 = vmatmul.f32.gmra.mxu0 %v4666
        %v4955 = vpop.f32.mrf.mxu0
        %v4956 = vadd.f32 %v4927, %v4955
        %4957 = vmatmul.f32.gmra.mxu0 %v4669
        %v4958 = vpop.f32.mrf.mxu0
        %v4959 = vadd.f32 %v4930, %v4958
        %4960 = vmatmul.f32.gmra.mxu0 %v4672
        %v4961 = vpop.f32.mrf.mxu0
        %v4962 = vadd.f32 %v4933, %v4961
        %4963 = vmatmul.f32.gmra.mxu0 %v4675
        %v4964 = vpop.f32.mrf.mxu0
        %v4965 = vadd.f32 %v4936, %v4964
        %4966 = vdwg.mxu0
        %v4967 = vld [vmem:[%s13] sm:$0xff]
        %v4968 = vld [vmem:[%s13 + $0x8] sm:$0xff]
        %v4969 = vld [vmem:[%s13 + $0x10] sm:$0xff]
        %v4970 = vld [vmem:[%s13 + $0x18] sm:$0xff]
        %v4971 = vld [vmem:[%s14] sm:$0xff]
        %v4972 = vld [vmem:[%s14 + $0x8] sm:$0xff]
        %v4973 = vld [vmem:[%s14 + $0x10] sm:$0xff]
        %v4974 = vld [vmem:[%s14 + $0x18] sm:$0xff]
        %4976 = vset.pattern.permute.xlu0 0
        %4977 = vperm.xlu0 %4976, %v4971
        %v4978 = vpop.permute.xlu0 %4977
        %4981 = vset.pattern.permute.xlu0 0
        %4982 = vperm.xlu0 %4981, %v4972
        %v4983 = vpop.permute.xlu0 %4982
        %4986 = vset.pattern.permute.xlu0 0
        %4987 = vperm.xlu0 %4986, %v4973
        %v4988 = vpop.permute.xlu0 %4987
        %4991 = vset.pattern.permute.xlu0 0
        %4992 = vperm.xlu0 %4991, %v4974
        %v4993 = vpop.permute.xlu0 %4992
        %v4996 = vsel %vm2734, %v4967, 0
        %v4999 = vsel %vm2734, %v4968, 0
        %v5002 = vsel %vm2734, %v4969, 0
        %v5005 = vsel %vm2734, %v4970, 0
        %5007 = vmatpush.msra.mxu0 0.0
        %5008 = vmatpush.msra.mxu0 0.0
        %5009 = vmatpush.msra.mxu0 0.0
        %5010 = vmatpush.msra.mxu0 0.0
        %5011 = vmatpush.msra.mxu0 0.0
        %5012 = vmatpush.msra.mxu0 0.0
        %5013 = vmatpush.msra.mxu0 0.0
        %5014 = vmatpush.msra.mxu0 0.0
        %5015 = vmatpush.msra.mxu0 0.0
        %5016 = vmatpush.msra.mxu0 0.0
        %5017 = vmatpush.msra.mxu0 0.0
        %5018 = vmatpush.msra.mxu0 0.0
        %5019 = vmatpush.msra.mxu0 0.0
        %5020 = vmatpush.msra.mxu0 0.0
        %5021 = vmatpush.msra.mxu0 %v515
        %5022 = vmatpush.msra.mxu0 %v513
        %5023 = vmatmul.f32.gmra.mxu0 %v4996
        %v5024 = vpop.f32.mrf.mxu0
        %v5025 = vadd.f32 %v4978, %v5024
        %5026 = vmatmul.f32.gmra.mxu0 %v4999
        %v5027 = vpop.f32.mrf.mxu0
        %v5028 = vadd.f32 %v4983, %v5027
        %5029 = vmatmul.f32.gmra.mxu0 %v5002
        %v5030 = vpop.f32.mrf.mxu0
        %v5031 = vadd.f32 %v4988, %v5030
        %5032 = vmatmul.f32.gmra.mxu0 %v5005
        %v5033 = vpop.f32.mrf.mxu0
        %v5034 = vadd.f32 %v4993, %v5033
        %5035 = vdwg.mxu0
        %5036 = vmatpush.msra.mxu0 0.0
        %5037 = vmatpush.msra.mxu0 0.0
        %5038 = vmatpush.msra.mxu0 0.0
        %5039 = vmatpush.msra.mxu0 0.0
        %5040 = vmatpush.msra.mxu0 0.0
        %5041 = vmatpush.msra.mxu0 0.0
        %5042 = vmatpush.msra.mxu0 0.0
        %5043 = vmatpush.msra.mxu0 0.0
        %5044 = vmatpush.msra.mxu0 0.0
        %5045 = vmatpush.msra.mxu0 0.0
        %5046 = vmatpush.msra.mxu0 0.0
        %5047 = vmatpush.msra.mxu0 0.0
        %5048 = vmatpush.msra.mxu0 0.0
        %5049 = vmatpush.msra.mxu0 0.0
        %5050 = vmatpush.msra.mxu0 %v516
        %5051 = vmatpush.msra.mxu0 %v514
        %5052 = vmatmul.f32.gmra.mxu0 %v4996
        %v5053 = vpop.f32.mrf.mxu0
        %v5054 = vadd.f32 %v4978, %v5053
        %5055 = vmatmul.f32.gmra.mxu0 %v4999
        %v5056 = vpop.f32.mrf.mxu0
        %v5057 = vadd.f32 %v4983, %v5056
        %5058 = vmatmul.f32.gmra.mxu0 %v5002
        %v5059 = vpop.f32.mrf.mxu0
        %v5060 = vadd.f32 %v4988, %v5059
        %5061 = vmatmul.f32.gmra.mxu0 %v5005
        %v5062 = vpop.f32.mrf.mxu0
        %v5063 = vadd.f32 %v4993, %v5062
        %5064 = vdwg.mxu0
        %v5065 = vadd.f32 %v4811, %v5025
        %v5066 = vadd.f32 %v4956, %v5054
        %v5067 = vadd.f32 %v4814, %v5028
        %v5068 = vadd.f32 %v4959, %v5057
        %v5069 = vadd.f32 %v4817, %v5031
        %v5070 = vadd.f32 %v4962, %v5060
        %v5071 = vadd.f32 %v4820, %v5034
        %v5072 = vadd.f32 %v4965, %v5063
        %5073 = vst [vmem:[%s502] sm:$0xff] %v5065
        %5074 = vst [vmem:[%s502 + $0x8] sm:$0xff] %v5066
        %5075 = vst [vmem:[%s502 + $0x10] sm:$0xff] %v5067
        %5076 = vst [vmem:[%s502 + $0x18] sm:$0xff] %v5068
        %5077 = vst [vmem:[%s502 + $0x20] sm:$0xff] %v5069
        %5078 = vst [vmem:[%s502 + $0x28] sm:$0xff] %v5070
        %5079 = vst [vmem:[%s502 + $0x30] sm:$0xff] %v5071
        %5080 = vst [vmem:[%s502 + $0x38] sm:$0xff] %v5072
        %s5081 = sand.u32 %s362, 1
        %s5082 = scalar_lea.sflag [#allocation5], %s5081
        %s5083 = sand.u32 %s362, 1
        %s5084 = smul.addr %s5083, 64
        %s5085 = scalar_lea.vmem [#allocation4], %s5084
        // Predicated region
        $region81: #{tpu_custom_call.1} parent=79 // pred_check
          %p5086 = pneg %p372
        $region82: #{tpu_custom_call.1} parent=79 // pred_check_branch
          %5088 = sbr.rel (%p5086) target = $region84
        $region83: #{tpu_custom_call.1} parent=79 // pred_region
          %5090 = vsyncadd %s5082, 0
          %s5091 = smul.addr %s29, 8
          %s5092 = smul.addr %s5091, 8
          %s5093 = scalar_lea.hbm %s15, %s5092
          %s5094 = sshll.u32 %s5085, 4
          %s5095 = int_to_ptr.vmem [resolvable:$true] %s5094
          %s5096 = sshll.u32 %s5093, 4
          %s5097 = int_to_ptr.hbm [resolvable:$true] %s5096
          %5102 = dma.vmem_to_hbm [thread:$0]  %s5095, 1024, %s5097, %s5082, 256, 256, 16
        $region84: #{tpu_custom_call.1} parent=79 // pred_fallthru
          _
      $region80: #{tpu_custom_call.1} parent=5 // pred_fallthru
        _
      %p5103 = scmp.le.s32.totalorder 2, %s24
      // Predicated region
      $region85: #{tpu_custom_call.1} parent=5 // pred_check
        %p5104 = pneg %p5103
      $region86: #{tpu_custom_call.1} parent=5 // pred_check_branch
        %5106 = sbr.rel (%p5104) target = $region88
      $region87: #{tpu_custom_call.1} parent=5 // pred_region
        %s5107 = ssub.s32 %s24, 2
        // Predicated region
        $region89: #{tpu_custom_call.1} parent=87 // pred_check
          %p5108 = pneg %p378
        $region90: #{tpu_custom_call.1} parent=87 // pred_check_branch
          %5110 = sbr.rel (%p5108) target = $region92
        $region91: #{tpu_custom_call.1} parent=87 // pred_region
          %s5111 = sand.u32 %s363, 1
          %s5112 = scalar_lea.sflag [#allocation5], %s5111
          %s5113 = sand.u32 %s363, 1
          %s5114 = smul.addr %s5113, 64
          %s5115 = scalar_lea.vmem [#allocation4], %s5114
          %5117 = dma.done %s5112, 1024
        $region92: #{tpu_custom_call.1} parent=87 // pred_fallthru
          _
      $region88: #{tpu_custom_call.1} parent=5 // pred_fallthru
        _
    $region6: #{tpu_custom_call.1} parent=1 // loop_footer
      %s28 = sadd.s32 1, %s24
    $region7: #{tpu_custom_call.1} parent=1 // loop_footer_branch
      %23 = sbr.rel target = $region3
    $region8: #{tpu_custom_call.1} parent=1 // loop_exit
      _
    %5118 = vsyncpa [#allocation5], 1
    %s5119 = scalar_lea.sflag [#allocation5], 1
    %5120 = vsyncpa %s5119, 1

</llo_original>
